<compile_context>
chip_gen: v6e
topology: v6e:2x2x1
jax: 0.10.0
libtpu: 0.0.40
codegen_flags: <defaults>
</compile_context>

<pallas_src>
import jax
import jax.numpy as jnp
from jax.experimental import pallas as pl
from jax.experimental.pallas import tpu as pltpu

# ----------------------------- model sizes ---------------------------------
SRC_V = 37          # source_vocab_size
TGT_V = 41          # target_vocab_size
SRC_E = 24          # source_emb_size
TGT_E = 24          # target_emb_size
HS = 32 // 2        # source_hidden_size // 2 (per-direction encoder hidden)
HT = 32             # target_hidden_size
VPAD = 128          # lane-dense padded vocab dim for the output store


# ----------------------------- fused Pallas kernel --------------------------
def fused_nmt_kernel(
        x2_ref, y2_ref, mask_ref,
        wih0f_ref, whh0f_ref, b0f_ref,
        wih0b_ref, whh0b_ref, b0b_ref,
        wih1f_ref, whh1f_ref, b1f_ref,
        wih1b_ref, whh1b_ref, b1b_ref,
        wihd_ref, whhd_ref, bd_ref,
        wth_ref, wtc_ref, watt_ref, wcat_ref, wvoc_ref, bvoc_ref,
        out_ref,
        l0_sc, enc_sc, dec_sc):
    """Whole Attention_NMT forward.  All recurrences unrolled; no grid."""
    B, S, HS2 = enc_sc.shape
    Hs = HS2 // 2
    T, Ht = dec_sc.shape[1], dec_sc.shape[2]
    f32 = jnp.float32

    def cell(gx, h, c, whh):
        # gx = x @ W_ih + b precomputed (hoisted).  PyTorch gate order i,f,g,o.
        g = gx + jnp.dot(h, whh, preferred_element_type=f32)
        H = h.shape[-1]
        i = jax.nn.sigmoid(g[:, 0 * H:1 * H])
        fgt = jax.nn.sigmoid(g[:, 1 * H:2 * H])
        u = jnp.tanh(g[:, 2 * H:3 * H])
        o = jax.nn.sigmoid(g[:, 3 * H:4 * H])
        c_new = fgt * c + i * u
        h_new = o * jnp.tanh(c_new)
        return h_new, c_new

    # ---------------- encoder layer 0 (bidirectional) ----------------
    x2 = x2_ref[...]                                    # (S*B, SRC_E), rows (t, b)
    g0f = jnp.dot(x2, wih0f_ref[...], preferred_element_type=f32) + b0f_ref[...]
    g0b = jnp.dot(x2, wih0b_ref[...], preferred_element_type=f32) + b0b_ref[...]
    whh0f = whh0f_ref[...]
    whh0b = whh0b_ref[...]

    z = jnp.zeros((B, Hs), f32)
    hf, cf, hb, cb = z, z, z, z
    for t in range(S):                                  # fully unrolled, fwd+bwd per step
        tb = S - 1 - t
        hf, cf = cell(g0f[t * B:(t + 1) * B], hf, cf, whh0f)
        hb, cb = cell(g0b[tb * B:(tb + 1) * B], hb, cb, whh0b)
        l0_sc[t * B:(t + 1) * B, 0:Hs] = hf             # layer-0 output, time-major rows
        l0_sc[tb * B:(tb + 1) * B, Hs:HS2] = hb

    # ---------------- encoder layer 1 (bidirectional) ----------------
    l0 = l0_sc[...]                                     # (S*B, 2*Hs)
    g1f = jnp.dot(l0, wih1f_ref[...], preferred_element_type=f32) + b1f_ref[...]
    g1b = jnp.dot(l0, wih1b_ref[...], preferred_element_type=f32) + b1b_ref[...]
    whh1f = whh1f_ref[...]
    whh1b = whh1b_ref[...]

    hf, cf, hb, cb = z, z, z, z
    for t in range(S):
        tb = S - 1 - t
        hf, cf = cell(g1f[t * B:(t + 1) * B], hf, cf, whh1f)
        hb, cb = cell(g1b[tb * B:(tb + 1) * B], hb, cb, whh1b)
        enc_sc[:, t, 0:Hs] = hf                         # encoder output (B, S, 2*Hs)
        enc_sc[:, tb, Hs:HS2] = hb

    # final states: PyTorch hidden[-1] = layer1-backward, hidden[-2] = layer1-forward
    h_cat = jnp.concatenate([hb, hf], axis=1)           # (B, 2*Hs)
    c_cat = jnp.concatenate([cb, cf], axis=1)
    hd = jnp.dot(h_cat, wth_ref[...], preferred_element_type=f32)   # decoder h0 (B, Ht)
    cd = jnp.dot(c_cat, wtc_ref[...], preferred_element_type=f32)   # decoder c0

    # ---------------- decoder LSTM ----------------
    y2 = y2_ref[...]                                    # (T*B, TGT_E), rows (t, b)
    gd = jnp.dot(y2, wihd_ref[...], preferred_element_type=f32) + bd_ref[...]
    whhd = whhd_ref[...]
    for t in range(T):
        hd, cd = cell(gd[t * B:(t + 1) * B], hd, cd, whhd)
        dec_sc[:, t, :] = hd                            # decoder output (B, T, Ht)

    # ---------------- attention + output projection ----------------
    watt = watt_ref[...]
    wcat = wcat_ref[...]
    wvoc = wvoc_ref[...]                                # (Ht, VPAD), zero-padded cols
    bvoc = bvoc_ref[...]                                # (1, VPAD)
    for b in range(B):                                  # B == 2, unrolled
        dec_b = dec_sc[b]                               # (T, Ht)
        enc_b = enc_sc[b]                               # (S, 2*Hs)
        m_b = mask_ref[b]                               # (1, S)
        at = jnp.dot(dec_b, watt, preferred_element_type=f32)          # (T, 2*Hs)
        logits = jax.lax.dot_general(at, enc_b, (((1,), (1,)), ((), ())),
                                     preferred_element_type=f32)       # (T, S)
        masked = (1.0 - m_b) * (-1e30) + logits
        mx = jnp.max(masked, axis=-1, keepdims=True)
        p = jnp.exp(masked - mx)
        score = p / jnp.sum(p, axis=-1, keepdims=True)                  # softmax over S
        ctx = jnp.dot(score, enc_b, preferred_element_type=f32)         # (T, 2*Hs)
        cat = jnp.concatenate([ctx, dec_b], axis=-1)                     # (T, 2*Hs+Ht)
        fh = jnp.tanh(jnp.dot(cat, wcat, preferred_element_type=f32))    # (T, Ht)
        out_ref[b] = jnp.dot(fh, wvoc, preferred_element_type=f32) + bvoc  # (T, VPAD)


# ----------------------------- wrapper / model glue --------------------------
def forward(params, enc_ids, enc_mask, dec_ids):
    B, S = enc_ids.shape
    T = dec_ids.shape[1]

    # Embedding gathers + time-major flattening: plain-JAX glue.
    x = jnp.take(params['src_emb'], enc_ids, axis=0)            # (B, S, SRC_E)
    y = jnp.take(params['tgt_emb'], dec_ids, axis=0)            # (B, T, TGT_E)
    x2 = jnp.transpose(x, (1, 0, 2)).reshape(S * B, SRC_E)      # rows (t, b)
    y2 = jnp.transpose(y, (1, 0, 2)).reshape(T * B, TGT_E)
    mask3 = enc_mask.astype(jnp.float32).reshape(B, 1, S)

    out = pl.pallas_call(
        fused_nmt_kernel,
        out_shape=jax.ShapeDtypeStruct((B, T, VPAD), jnp.float32),
        scratch_shapes=[
            pltpu.VMEM((S * B, 2 * HS), jnp.float32),   # layer-0 output (time-major)
            pltpu.VMEM((B, S, 2 * HS), jnp.float32),    # encoder output
            pltpu.VMEM((B, T, HT), jnp.float32),        # decoder output
        ],
    )(x2, y2, mask3,
      *params['enc_l0_f'], *params['enc_l0_b'],
      *params['enc_l1_f'], *params['enc_l1_b'],
      *params['dec_lstm'],
      params['w_trans_h'], params['w_trans_c'],
      params['w_att'], params['w_cat'],
      params['w_voc_pad'], params['b_voc_pad'])

    return out[:, :, :TGT_V]                            # strip vocab lane padding


# ----------------------------- parameter init -------------------------------
def init_params(key):
    ks = jax.random.split(key, 16)

    def w(k, shape, scale=0.1):
        return jax.random.normal(k, shape, jnp.float32) * scale

    def lstm_p(k, in_dim, h):
        k1, k2, k3 = jax.random.split(k, 3)
        # W_ih (in,4h), W_hh (h,4h), combined bias (1,4h); gate order i,f,g,o.
        # (PyTorch has separate b_ih/b_hh; a checkpoint loader must sum them.)
        return (w(k1, (in_dim, 4 * h)), w(k2, (h, 4 * h)), w(k3, (1, 4 * h)))

    params = {
        'src_emb': w(ks[0], (SRC_V, SRC_E)).at[0].set(0.0),     # padding_idx=0
        'tgt_emb': w(ks[1], (TGT_V, TGT_E)).at[0].set(0.0),
        'enc_l0_f': lstm_p(ks[2], SRC_E, HS),
        'enc_l0_b': lstm_p(ks[3], SRC_E, HS),
        'enc_l1_f': lstm_p(ks[4], 2 * HS, HS),
        'enc_l1_b': lstm_p(ks[5], 2 * HS, HS),
        'dec_lstm': lstm_p(ks[6], TGT_E, HT),
        'w_trans_h': w(ks[7], (2 * HS, HT)),
        'w_trans_c': w(ks[8], (2 * HS, HT)),
        'w_att': w(ks[9], (HT, 2 * HS)),
        'w_cat': w(ks[10], (2 * HS + HT, HT)),
        # target2vocab weight/bias zero-padded to 128 lanes for a lane-dense
        # output store; only the first TGT_V columns are meaningful.
        'w_voc_pad': jnp.pad(w(ks[11], (HT, TGT_V)), ((0, 0), (0, VPAD - TGT_V))),
        'b_voc_pad': jnp.pad(w(ks[12], (1, TGT_V)), ((0, 0), (0, VPAD - TGT_V))),
    }
    return params


# TODO(synk): compute_loss / compute_prob (training utilities) are not part of
# the forward() contract and are not implemented here.
# TODO(synk): inter-layer dropout (drop_rate > 0) not implemented; the module's
# default drop_rate=0 makes it a no-op for this forward pass.

if __name__ == "__main__":
    key = jax.random.PRNGKey(0)
    pkey, k1, k2 = jax.random.split(key, 3)
    params = init_params(pkey)

    B, S, T = 2, 8, 7
    enc_ids = jax.random.randint(k1, (B, S), 1, SRC_V).astype(jnp.int32)
    enc_ids = enc_ids.at[1, 5:].set(0)                  # pad tail of batch row 1
    enc_mask = (enc_ids != 0).astype(jnp.float32)
    dec_ids = jax.random.randint(k2, (B, T), 1, TGT_V).astype(jnp.int32)

    logits = jax.jit(forward)(params, enc_ids, enc_mask, dec_ids)
    jax.block_until_ready(logits)
    assert logits.shape == (B, T, TGT_V), logits.shape
    assert bool(jnp.all(jnp.isfinite(logits)))
    print("KERNEL_OK")
</pallas_src>

<mosaic_0001>
module attributes {stable_mosaic.version = 11 : i64} {
  func.func @fused_nmt_kernel(%arg0: memref<16x24xf32, #tpu.memory_space<vmem>>, %arg1: memref<14x24xf32, #tpu.memory_space<vmem>>, %arg2: memref<2x1x8xf32, #tpu.memory_space<vmem>>, %arg3: memref<24x64xf32, #tpu.memory_space<vmem>>, %arg4: memref<16x64xf32, #tpu.memory_space<vmem>>, %arg5: memref<1x64xf32, #tpu.memory_space<vmem>>, %arg6: memref<24x64xf32, #tpu.memory_space<vmem>>, %arg7: memref<16x64xf32, #tpu.memory_space<vmem>>, %arg8: memref<1x64xf32, #tpu.memory_space<vmem>>, %arg9: memref<32x64xf32, #tpu.memory_space<vmem>>, %arg10: memref<16x64xf32, #tpu.memory_space<vmem>>, %arg11: memref<1x64xf32, #tpu.memory_space<vmem>>, %arg12: memref<32x64xf32, #tpu.memory_space<vmem>>, %arg13: memref<16x64xf32, #tpu.memory_space<vmem>>, %arg14: memref<1x64xf32, #tpu.memory_space<vmem>>, %arg15: memref<24x128xf32, #tpu.memory_space<vmem>>, %arg16: memref<32x128xf32, #tpu.memory_space<vmem>>, %arg17: memref<1x128xf32, #tpu.memory_space<vmem>>, %arg18: memref<32x32xf32, #tpu.memory_space<vmem>>, %arg19: memref<32x32xf32, #tpu.memory_space<vmem>>, %arg20: memref<32x32xf32, #tpu.memory_space<vmem>>, %arg21: memref<64x32xf32, #tpu.memory_space<vmem>>, %arg22: memref<32x128xf32, #tpu.memory_space<vmem>>, %arg23: memref<1x128xf32, #tpu.memory_space<vmem>>, %arg24: memref<2x7x128xf32, #tpu.memory_space<vmem>>, %arg25: memref<16x32xf32, #tpu.memory_space<vmem>>, %arg26: memref<2x8x32xf32, #tpu.memory_space<vmem>>, %arg27: memref<2x7x32xf32, #tpu.memory_space<vmem>>) attributes {dimension_semantics = [], scalar_prefetch = 0 : i64, scratch_operands = 3 : i64, tpu.core_type = #tpu.core_type<tc>} {
    %c0 = arith.constant 0 : index
    %c0_0 = arith.constant 0 : index
    %0 = vector.load %arg0[%c0, %c0_0] : memref<16x24xf32, #tpu.memory_space<vmem>>, vector<16x24xf32>
    %c0_1 = arith.constant 0 : index
    %c0_2 = arith.constant 0 : index
    %1 = vector.load %arg3[%c0_1, %c0_2] : memref<24x64xf32, #tpu.memory_space<vmem>>, vector<24x64xf32>
    %cst = arith.constant dense<0.000000e+00> : vector<16x64xf32>
    %2 = tpu.matmul %0, %1, %cst {dimension_numbers = #tpu.dot_dimension_numbers<[1], [0], [0], [1], [0, 0, 1, 1], [], []>} : vector<16x24xf32>, vector<24x64xf32>, vector<16x64xf32> -> vector<16x64xf32>
    %c0_3 = arith.constant 0 : index
    %c0_4 = arith.constant 0 : index
    %3 = vector.load %arg5[%c0_3, %c0_4] : memref<1x64xf32, #tpu.memory_space<vmem>>, vector<1x64xf32>
    %4 = vector.broadcast %3 : vector<1x64xf32> to vector<16x64xf32>
    %5 = arith.addf %2, %4 : vector<16x64xf32>
    %c0_5 = arith.constant 0 : index
    %c0_6 = arith.constant 0 : index
    %6 = vector.load %arg6[%c0_5, %c0_6] : memref<24x64xf32, #tpu.memory_space<vmem>>, vector<24x64xf32>
    %cst_7 = arith.constant dense<0.000000e+00> : vector<16x64xf32>
    %7 = tpu.matmul %0, %6, %cst_7 {dimension_numbers = #tpu.dot_dimension_numbers<[1], [0], [0], [1], [0, 0, 1, 1], [], []>} : vector<16x24xf32>, vector<24x64xf32>, vector<16x64xf32> -> vector<16x64xf32>
    %c0_8 = arith.constant 0 : index
    %c0_9 = arith.constant 0 : index
    %8 = vector.load %arg8[%c0_8, %c0_9] : memref<1x64xf32, #tpu.memory_space<vmem>>, vector<1x64xf32>
    %9 = vector.broadcast %8 : vector<1x64xf32> to vector<16x64xf32>
    %10 = arith.addf %7, %9 : vector<16x64xf32>
    %c0_10 = arith.constant 0 : index
    %c0_11 = arith.constant 0 : index
    %11 = vector.load %arg4[%c0_10, %c0_11] : memref<16x64xf32, #tpu.memory_space<vmem>>, vector<16x64xf32>
    %c0_12 = arith.constant 0 : index
    %c0_13 = arith.constant 0 : index
    %12 = vector.load %arg7[%c0_12, %c0_13] : memref<16x64xf32, #tpu.memory_space<vmem>>, vector<16x64xf32>
    %cst_14 = arith.constant 0.000000e+00 : f32
    %13 = vector.broadcast %cst_14 : f32 to vector<2x16xf32>
    %14 = vector.extract_strided_slice %5 {offsets = [0, 0], sizes = [2, 64], strides = [1, 1]} : vector<16x64xf32> to vector<2x64xf32>
    %cst_15 = arith.constant dense<0.000000e+00> : vector<2x64xf32>
    %15 = tpu.matmul %13, %11, %cst_15 {dimension_numbers = #tpu.dot_dimension_numbers<[1], [0], [0], [1], [0, 0, 1, 1], [], []>} : vector<2x16xf32>, vector<16x64xf32>, vector<2x64xf32> -> vector<2x64xf32>
    %16 = arith.addf %14, %15 : vector<2x64xf32>
    %17 = vector.extract_strided_slice %16 {offsets = [0, 0], sizes = [2, 16], strides = [1, 1]} : vector<2x64xf32> to vector<2x16xf32>
    %18 = arith.negf %17 : vector<2x16xf32>
    %19 = math.exp %18 : vector<2x16xf32>
    %cst_16 = arith.constant 1.000000e+00 : f32
    %20 = vector.broadcast %cst_16 : f32 to vector<2x16xf32>
    %21 = arith.addf %20, %19 : vector<2x16xf32>
    %22 = arith.divf %20, %21 : vector<2x16xf32>
    %23 = vector.extract_strided_slice %16 {offsets = [0, 16], sizes = [2, 16], strides = [1, 1]} : vector<2x64xf32> to vector<2x16xf32>
    %24 = arith.negf %23 : vector<2x16xf32>
    %25 = math.exp %24 : vector<2x16xf32>
    %cst_17 = arith.constant 1.000000e+00 : f32
    %26 = vector.broadcast %cst_17 : f32 to vector<2x16xf32>
    %27 = arith.addf %26, %25 : vector<2x16xf32>
    %28 = arith.divf %26, %27 : vector<2x16xf32>
    %29 = vector.extract_strided_slice %16 {offsets = [0, 32], sizes = [2, 16], strides = [1, 1]} : vector<2x64xf32> to vector<2x16xf32>
    %30 = math.tanh %29 : vector<2x16xf32>
    %31 = vector.extract_strided_slice %16 {offsets = [0, 48], sizes = [2, 16], strides = [1, 1]} : vector<2x64xf32> to vector<2x16xf32>
    %32 = arith.negf %31 : vector<2x16xf32>
    %33 = math.exp %32 : vector<2x16xf32>
    %cst_18 = arith.constant 1.000000e+00 : f32
    %34 = vector.broadcast %cst_18 : f32 to vector<2x16xf32>
    %35 = arith.addf %34, %33 : vector<2x16xf32>
    %36 = arith.divf %34, %35 : vector<2x16xf32>
    %37 = arith.mulf %28, %13 : vector<2x16xf32>
    %38 = arith.mulf %22, %30 : vector<2x16xf32>
    %39 = arith.addf %37, %38 : vector<2x16xf32>
    %40 = math.tanh %39 : vector<2x16xf32>
    %41 = arith.mulf %36, %40 : vector<2x16xf32>
    %42 = vector.extract_strided_slice %10 {offsets = [14, 0], sizes = [2, 64], strides = [1, 1]} : vector<16x64xf32> to vector<2x64xf32>
    %cst_19 = arith.constant dense<0.000000e+00> : vector<2x64xf32>
    %43 = tpu.matmul %13, %12, %cst_19 {dimension_numbers = #tpu.dot_dimension_numbers<[1], [0], [0], [1], [0, 0, 1, 1], [], []>} : vector<2x16xf32>, vector<16x64xf32>, vector<2x64xf32> -> vector<2x64xf32>
    %44 = arith.addf %42, %43 : vector<2x64xf32>
    %45 = vector.extract_strided_slice %44 {offsets = [0, 0], sizes = [2, 16], strides = [1, 1]} : vector<2x64xf32> to vector<2x16xf32>
    %46 = arith.negf %45 : vector<2x16xf32>
    %47 = math.exp %46 : vector<2x16xf32>
    %cst_20 = arith.constant 1.000000e+00 : f32
    %48 = vector.broadcast %cst_20 : f32 to vector<2x16xf32>
    %49 = arith.addf %48, %47 : vector<2x16xf32>
    %50 = arith.divf %48, %49 : vector<2x16xf32>
    %51 = vector.extract_strided_slice %44 {offsets = [0, 16], sizes = [2, 16], strides = [1, 1]} : vector<2x64xf32> to vector<2x16xf32>
    %52 = arith.negf %51 : vector<2x16xf32>
    %53 = math.exp %52 : vector<2x16xf32>
    %cst_21 = arith.constant 1.000000e+00 : f32
    %54 = vector.broadcast %cst_21 : f32 to vector<2x16xf32>
    %55 = arith.addf %54, %53 : vector<2x16xf32>
    %56 = arith.divf %54, %55 : vector<2x16xf32>
    %57 = vector.extract_strided_slice %44 {offsets = [0, 32], sizes = [2, 16], strides = [1, 1]} : vector<2x64xf32> to vector<2x16xf32>
    %58 = math.tanh %57 : vector<2x16xf32>
    %59 = vector.extract_strided_slice %44 {offsets = [0, 48], sizes = [2, 16], strides = [1, 1]} : vector<2x64xf32> to vector<2x16xf32>
    %60 = arith.negf %59 : vector<2x16xf32>
    %61 = math.exp %60 : vector<2x16xf32>
    %cst_22 = arith.constant 1.000000e+00 : f32
    %62 = vector.broadcast %cst_22 : f32 to vector<2x16xf32>
    %63 = arith.addf %62, %61 : vector<2x16xf32>
    %64 = arith.divf %62, %63 : vector<2x16xf32>
    %65 = arith.mulf %56, %13 : vector<2x16xf32>
    %66 = arith.mulf %50, %58 : vector<2x16xf32>
    %67 = arith.addf %65, %66 : vector<2x16xf32>
    %68 = math.tanh %67 : vector<2x16xf32>
    %69 = arith.mulf %64, %68 : vector<2x16xf32>
    %c0_23 = arith.constant 0 : index
    %c0_24 = arith.constant 0 : index
    %70 = vector.load %arg25[%c0_23, %c0_24] : memref<16x32xf32, #tpu.memory_space<vmem>>, vector<2x16xf32>
    tpu.vector_store %arg25[%c0_23, %c0_24], %41 {strides = array<i32>} : memref<16x32xf32, #tpu.memory_space<vmem>>, vector<2x16xf32>,
    %c14 = arith.constant 14 : index
    %c16 = arith.constant 16 : index
    %71 = vector.load %arg25[%c14, %c16] : memref<16x32xf32, #tpu.memory_space<vmem>>, vector<2x16xf32>
    tpu.vector_store %arg25[%c14, %c16], %69 {strides = array<i32>} : memref<16x32xf32, #tpu.memory_space<vmem>>, vector<2x16xf32>,
    %72 = vector.extract_strided_slice %5 {offsets = [2, 0], sizes = [2, 64], strides = [1, 1]} : vector<16x64xf32> to vector<2x64xf32>
    %cst_25 = arith.constant dense<0.000000e+00> : vector<2x64xf32>
    %73 = tpu.matmul %41, %11, %cst_25 {dimension_numbers = #tpu.dot_dimension_numbers<[1], [0], [0], [1], [0, 0, 1, 1], [], []>} : vector<2x16xf32>, vector<16x64xf32>, vector<2x64xf32> -> vector<2x64xf32>
    %74 = arith.addf %72, %73 : vector<2x64xf32>
    %75 = vector.extract_strided_slice %74 {offsets = [0, 0], sizes = [2, 16], strides = [1, 1]} : vector<2x64xf32> to vector<2x16xf32>
    %76 = arith.negf %75 : vector<2x16xf32>
    %77 = math.exp %76 : vector<2x16xf32>
    %cst_26 = arith.constant 1.000000e+00 : f32
    %78 = vector.broadcast %cst_26 : f32 to vector<2x16xf32>
    %79 = arith.addf %78, %77 : vector<2x16xf32>
    %80 = arith.divf %78, %79 : vector<2x16xf32>
    %81 = vector.extract_strided_slice %74 {offsets = [0, 16], sizes = [2, 16], strides = [1, 1]} : vector<2x64xf32> to vector<2x16xf32>
    %82 = arith.negf %81 : vector<2x16xf32>
    %83 = math.exp %82 : vector<2x16xf32>
    %cst_27 = arith.constant 1.000000e+00 : f32
    %84 = vector.broadcast %cst_27 : f32 to vector<2x16xf32>
    %85 = arith.addf %84, %83 : vector<2x16xf32>
    %86 = arith.divf %84, %85 : vector<2x16xf32>
    %87 = vector.extract_strided_slice %74 {offsets = [0, 32], sizes = [2, 16], strides = [1, 1]} : vector<2x64xf32> to vector<2x16xf32>
    %88 = math.tanh %87 : vector<2x16xf32>
    %89 = vector.extract_strided_slice %74 {offsets = [0, 48], sizes = [2, 16], strides = [1, 1]} : vector<2x64xf32> to vector<2x16xf32>
    %90 = arith.negf %89 : vector<2x16xf32>
    %91 = math.exp %90 : vector<2x16xf32>
    %cst_28 = arith.constant 1.000000e+00 : f32
    %92 = vector.broadcast %cst_28 : f32 to vector<2x16xf32>
    %93 = arith.addf %92, %91 : vector<2x16xf32>
    %94 = arith.divf %92, %93 : vector<2x16xf32>
    %95 = arith.mulf %86, %39 : vector<2x16xf32>
    %96 = arith.mulf %80, %88 : vector<2x16xf32>
    %97 = arith.addf %95, %96 : vector<2x16xf32>
    %98 = math.tanh %97 : vector<2x16xf32>
    %99 = arith.mulf %94, %98 : vector<2x16xf32>
    %100 = vector.extract_strided_slice %10 {offsets = [12, 0], sizes = [2, 64], strides = [1, 1]} : vector<16x64xf32> to vector<2x64xf32>
    %cst_29 = arith.constant dense<0.000000e+00> : vector<2x64xf32>
    %101 = tpu.matmul %69, %12, %cst_29 {dimension_numbers = #tpu.dot_dimension_numbers<[1], [0], [0], [1], [0, 0, 1, 1], [], []>} : vector<2x16xf32>, vector<16x64xf32>, vector<2x64xf32> -> vector<2x64xf32>
    %102 = arith.addf %100, %101 : vector<2x64xf32>
    %103 = vector.extract_strided_slice %102 {offsets = [0, 0], sizes = [2, 16], strides = [1, 1]} : vector<2x64xf32> to vector<2x16xf32>
    %104 = arith.negf %103 : vector<2x16xf32>
    %105 = math.exp %104 : vector<2x16xf32>
    %cst_30 = arith.constant 1.000000e+00 : f32
    %106 = vector.broadcast %cst_30 : f32 to vector<2x16xf32>
    %107 = arith.addf %106, %105 : vector<2x16xf32>
    %108 = arith.divf %106, %107 : vector<2x16xf32>
    %109 = vector.extract_strided_slice %102 {offsets = [0, 16], sizes = [2, 16], strides = [1, 1]} : vector<2x64xf32> to vector<2x16xf32>
    %110 = arith.negf %109 : vector<2x16xf32>
    %111 = math.exp %110 : vector<2x16xf32>
    %cst_31 = arith.constant 1.000000e+00 : f32
    %112 = vector.broadcast %cst_31 : f32 to vector<2x16xf32>
    %113 = arith.addf %112, %111 : vector<2x16xf32>
    %114 = arith.divf %112, %113 : vector<2x16xf32>
    %115 = vector.extract_strided_slice %102 {offsets = [0, 32], sizes = [2, 16], strides = [1, 1]} : vector<2x64xf32> to vector<2x16xf32>
    %116 = math.tanh %115 : vector<2x16xf32>
    %117 = vector.extract_strided_slice %102 {offsets = [0, 48], sizes = [2, 16], strides = [1, 1]} : vector<2x64xf32> to vector<2x16xf32>
    %118 = arith.negf %117 : vector<2x16xf32>
    %119 = math.exp %118 : vector<2x16xf32>
    %cst_32 = arith.constant 1.000000e+00 : f32
    %120 = vector.broadcast %cst_32 : f32 to vector<2x16xf32>
    %121 = arith.addf %120, %119 : vector<2x16xf32>
    %122 = arith.divf %120, %121 : vector<2x16xf32>
    %123 = arith.mulf %114, %67 : vector<2x16xf32>
    %124 = arith.mulf %108, %116 : vector<2x16xf32>
    %125 = arith.addf %123, %124 : vector<2x16xf32>
    %126 = math.tanh %125 : vector<2x16xf32>
    %127 = arith.mulf %122, %126 : vector<2x16xf32>
    %c2 = arith.constant 2 : index
    %c0_33 = arith.constant 0 : index
    %128 = vector.load %arg25[%c2, %c0_33] : memref<16x32xf32, #tpu.memory_space<vmem>>, vector<2x16xf32>
    tpu.vector_store %arg25[%c2, %c0_33], %99 {strides = array<i32>} : memref<16x32xf32, #tpu.memory_space<vmem>>, vector<2x16xf32>,
    %c12 = arith.constant 12 : index
    %c16_34 = arith.constant 16 : index
    %129 = vector.load %arg25[%c12, %c16_34] : memref<16x32xf32, #tpu.memory_space<vmem>>, vector<2x16xf32>
    tpu.vector_store %arg25[%c12, %c16_34], %127 {strides = array<i32>} : memref<16x32xf32, #tpu.memory_space<vmem>>, vector<2x16xf32>,
    %130 = vector.extract_strided_slice %5 {offsets = [4, 0], sizes = [2, 64], strides = [1, 1]} : vector<16x64xf32> to vector<2x64xf32>
    %cst_35 = arith.constant dense<0.000000e+00> : vector<2x64xf32>
    %131 = tpu.matmul %99, %11, %cst_35 {dimension_numbers = #tpu.dot_dimension_numbers<[1], [0], [0], [1], [0, 0, 1, 1], [], []>} : vector<2x16xf32>, vector<16x64xf32>, vector<2x64xf32> -> vector<2x64xf32>
    %132 = arith.addf %130, %131 : vector<2x64xf32>
    %133 = vector.extract_strided_slice %132 {offsets = [0, 0], sizes = [2, 16], strides = [1, 1]} : vector<2x64xf32> to vector<2x16xf32>
    %134 = arith.negf %133 : vector<2x16xf32>
    %135 = math.exp %134 : vector<2x16xf32>
    %cst_36 = arith.constant 1.000000e+00 : f32
    %136 = vector.broadcast %cst_36 : f32 to vector<2x16xf32>
    %137 = arith.addf %136, %135 : vector<2x16xf32>
    %138 = arith.divf %136, %137 : vector<2x16xf32>
    %139 = vector.extract_strided_slice %132 {offsets = [0, 16], sizes = [2, 16], strides = [1, 1]} : vector<2x64xf32> to vector<2x16xf32>
    %140 = arith.negf %139 : vector<2x16xf32>
    %141 = math.exp %140 : vector<2x16xf32>
    %cst_37 = arith.constant 1.000000e+00 : f32
    %142 = vector.broadcast %cst_37 : f32 to vector<2x16xf32>
    %143 = arith.addf %142, %141 : vector<2x16xf32>
    %144 = arith.divf %142, %143 : vector<2x16xf32>
    %145 = vector.extract_strided_slice %132 {offsets = [0, 32], sizes = [2, 16], strides = [1, 1]} : vector<2x64xf32> to vector<2x16xf32>
    %146 = math.tanh %145 : vector<2x16xf32>
    %147 = vector.extract_strided_slice %132 {offsets = [0, 48], sizes = [2, 16], strides = [1, 1]} : vector<2x64xf32> to vector<2x16xf32>
    %148 = arith.negf %147 : vector<2x16xf32>
    %149 = math.exp %148 : vector<2x16xf32>
    %cst_38 = arith.constant 1.000000e+00 : f32
    %150 = vector.broadcast %cst_38 : f32 to vector<2x16xf32>
    %151 = arith.addf %150, %149 : vector<2x16xf32>
    %152 = arith.divf %150, %151 : vector<2x16xf32>
    %153 = arith.mulf %144, %97 : vector<2x16xf32>
    %154 = arith.mulf %138, %146 : vector<2x16xf32>
    %155 = arith.addf %153, %154 : vector<2x16xf32>
    %156 = math.tanh %155 : vector<2x16xf32>
    %157 = arith.mulf %152, %156 : vector<2x16xf32>
    %158 = vector.extract_strided_slice %10 {offsets = [10, 0], sizes = [2, 64], strides = [1, 1]} : vector<16x64xf32> to vector<2x64xf32>
    %cst_39 = arith.constant dense<0.000000e+00> : vector<2x64xf32>
    %159 = tpu.matmul %127, %12, %cst_39 {dimension_numbers = #tpu.dot_dimension_numbers<[1], [0], [0], [1], [0, 0, 1, 1], [], []>} : vector<2x16xf32>, vector<16x64xf32>, vector<2x64xf32> -> vector<2x64xf32>
    %160 = arith.addf %158, %159 : vector<2x64xf32>
    %161 = vector.extract_strided_slice %160 {offsets = [0, 0], sizes = [2, 16], strides = [1, 1]} : vector<2x64xf32> to vector<2x16xf32>
    %162 = arith.negf %161 : vector<2x16xf32>
    %163 = math.exp %162 : vector<2x16xf32>
    %cst_40 = arith.constant 1.000000e+00 : f32
    %164 = vector.broadcast %cst_40 : f32 to vector<2x16xf32>
    %165 = arith.addf %164, %163 : vector<2x16xf32>
    %166 = arith.divf %164, %165 : vector<2x16xf32>
    %167 = vector.extract_strided_slice %160 {offsets = [0, 16], sizes = [2, 16], strides = [1, 1]} : vector<2x64xf32> to vector<2x16xf32>
    %168 = arith.negf %167 : vector<2x16xf32>
    %169 = math.exp %168 : vector<2x16xf32>
    %cst_41 = arith.constant 1.000000e+00 : f32
    %170 = vector.broadcast %cst_41 : f32 to vector<2x16xf32>
    %171 = arith.addf %170, %169 : vector<2x16xf32>
    %172 = arith.divf %170, %171 : vector<2x16xf32>
    %173 = vector.extract_strided_slice %160 {offsets = [0, 32], sizes = [2, 16], strides = [1, 1]} : vector<2x64xf32> to vector<2x16xf32>
    %174 = math.tanh %173 : vector<2x16xf32>
    %175 = vector.extract_strided_slice %160 {offsets = [0, 48], sizes = [2, 16], strides = [1, 1]} : vector<2x64xf32> to vector<2x16xf32>
    %176 = arith.negf %175 : vector<2x16xf32>
    %177 = math.exp %176 : vector<2x16xf32>
    %cst_42 = arith.constant 1.000000e+00 : f32
    %178 = vector.broadcast %cst_42 : f32 to vector<2x16xf32>
    %179 = arith.addf %178, %177 : vector<2x16xf32>
    %180 = arith.divf %178, %179 : vector<2x16xf32>
    %181 = arith.mulf %172, %125 : vector<2x16xf32>
    %182 = arith.mulf %166, %174 : vector<2x16xf32>
    %183 = arith.addf %181, %182 : vector<2x16xf32>
    %184 = math.tanh %183 : vector<2x16xf32>
    %185 = arith.mulf %180, %184 : vector<2x16xf32>
    %c4 = arith.constant 4 : index
    %c0_43 = arith.constant 0 : index
    %186 = vector.load %arg25[%c4, %c0_43] : memref<16x32xf32, #tpu.memory_space<vmem>>, vector<2x16xf32>
    tpu.vector_store %arg25[%c4, %c0_43], %157 {strides = array<i32>} : memref<16x32xf32, #tpu.memory_space<vmem>>, vector<2x16xf32>,
    %c10 = arith.constant 10 : index
    %c16_44 = arith.constant 16 : index
    %187 = vector.load %arg25[%c10, %c16_44] : memref<16x32xf32, #tpu.memory_space<vmem>>, vector<2x16xf32>
    tpu.vector_store %arg25[%c10, %c16_44], %185 {strides = array<i32>} : memref<16x32xf32, #tpu.memory_space<vmem>>, vector<2x16xf32>,
    %188 = vector.extract_strided_slice %5 {offsets = [6, 0], sizes = [2, 64], strides = [1, 1]} : vector<16x64xf32> to vector<2x64xf32>
    %cst_45 = arith.constant dense<0.000000e+00> : vector<2x64xf32>
    %189 = tpu.matmul %157, %11, %cst_45 {dimension_numbers = #tpu.dot_dimension_numbers<[1], [0], [0], [1], [0, 0, 1, 1], [], []>} : vector<2x16xf32>, vector<16x64xf32>, vector<2x64xf32> -> vector<2x64xf32>
    %190 = arith.addf %188, %189 : vector<2x64xf32>
    %191 = vector.extract_strided_slice %190 {offsets = [0, 0], sizes = [2, 16], strides = [1, 1]} : vector<2x64xf32> to vector<2x16xf32>
    %192 = arith.negf %191 : vector<2x16xf32>
    %193 = math.exp %192 : vector<2x16xf32>
    %cst_46 = arith.constant 1.000000e+00 : f32
    %194 = vector.broadcast %cst_46 : f32 to vector<2x16xf32>
    %195 = arith.addf %194, %193 : vector<2x16xf32>
    %196 = arith.divf %194, %195 : vector<2x16xf32>
    %197 = vector.extract_strided_slice %190 {offsets = [0, 16], sizes = [2, 16], strides = [1, 1]} : vector<2x64xf32> to vector<2x16xf32>
    %198 = arith.negf %197 : vector<2x16xf32>
    %199 = math.exp %198 : vector<2x16xf32>
    %cst_47 = arith.constant 1.000000e+00 : f32
    %200 = vector.broadcast %cst_47 : f32 to vector<2x16xf32>
    %201 = arith.addf %200, %199 : vector<2x16xf32>
    %202 = arith.divf %200, %201 : vector<2x16xf32>
    %203 = vector.extract_strided_slice %190 {offsets = [0, 32], sizes = [2, 16], strides = [1, 1]} : vector<2x64xf32> to vector<2x16xf32>
    %204 = math.tanh %203 : vector<2x16xf32>
    %205 = vector.extract_strided_slice %190 {offsets = [0, 48], sizes = [2, 16], strides = [1, 1]} : vector<2x64xf32> to vector<2x16xf32>
    %206 = arith.negf %205 : vector<2x16xf32>
    %207 = math.exp %206 : vector<2x16xf32>
    %cst_48 = arith.constant 1.000000e+00 : f32
    %208 = vector.broadcast %cst_48 : f32 to vector<2x16xf32>
    %209 = arith.addf %208, %207 : vector<2x16xf32>
    %210 = arith.divf %208, %209 : vector<2x16xf32>
    %211 = arith.mulf %202, %155 : vector<2x16xf32>
    %212 = arith.mulf %196, %204 : vector<2x16xf32>
    %213 = arith.addf %211, %212 : vector<2x16xf32>
    %214 = math.tanh %213 : vector<2x16xf32>
    %215 = arith.mulf %210, %214 : vector<2x16xf32>
    %216 = vector.extract_strided_slice %10 {offsets = [8, 0], sizes = [2, 64], strides = [1, 1]} : vector<16x64xf32> to vector<2x64xf32>
    %cst_49 = arith.constant dense<0.000000e+00> : vector<2x64xf32>
    %217 = tpu.matmul %185, %12, %cst_49 {dimension_numbers = #tpu.dot_dimension_numbers<[1], [0], [0], [1], [0, 0, 1, 1], [], []>} : vector<2x16xf32>, vector<16x64xf32>, vector<2x64xf32> -> vector<2x64xf32>
    %218 = arith.addf %216, %217 : vector<2x64xf32>
    %219 = vector.extract_strided_slice %218 {offsets = [0, 0], sizes = [2, 16], strides = [1, 1]} : vector<2x64xf32> to vector<2x16xf32>
    %220 = arith.negf %219 : vector<2x16xf32>
    %221 = math.exp %220 : vector<2x16xf32>
    %cst_50 = arith.constant 1.000000e+00 : f32
    %222 = vector.broadcast %cst_50 : f32 to vector<2x16xf32>
    %223 = arith.addf %222, %221 : vector<2x16xf32>
    %224 = arith.divf %222, %223 : vector<2x16xf32>
    %225 = vector.extract_strided_slice %218 {offsets = [0, 16], sizes = [2, 16], strides = [1, 1]} : vector<2x64xf32> to vector<2x16xf32>
    %226 = arith.negf %225 : vector<2x16xf32>
    %227 = math.exp %226 : vector<2x16xf32>
    %cst_51 = arith.constant 1.000000e+00 : f32
    %228 = vector.broadcast %cst_51 : f32 to vector<2x16xf32>
    %229 = arith.addf %228, %227 : vector<2x16xf32>
    %230 = arith.divf %228, %229 : vector<2x16xf32>
    %231 = vector.extract_strided_slice %218 {offsets = [0, 32], sizes = [2, 16], strides = [1, 1]} : vector<2x64xf32> to vector<2x16xf32>
    %232 = math.tanh %231 : vector<2x16xf32>
    %233 = vector.extract_strided_slice %218 {offsets = [0, 48], sizes = [2, 16], strides = [1, 1]} : vector<2x64xf32> to vector<2x16xf32>
    %234 = arith.negf %233 : vector<2x16xf32>
    %235 = math.exp %234 : vector<2x16xf32>
    %cst_52 = arith.constant 1.000000e+00 : f32
    %236 = vector.broadcast %cst_52 : f32 to vector<2x16xf32>
    %237 = arith.addf %236, %235 : vector<2x16xf32>
    %238 = arith.divf %236, %237 : vector<2x16xf32>
    %239 = arith.mulf %230, %183 : vector<2x16xf32>
    %240 = arith.mulf %224, %232 : vector<2x16xf32>
    %241 = arith.addf %239, %240 : vector<2x16xf32>
    %242 = math.tanh %241 : vector<2x16xf32>
    %243 = arith.mulf %238, %242 : vector<2x16xf32>
    %c6 = arith.constant 6 : index
    %c0_53 = arith.constant 0 : index
    %244 = vector.load %arg25[%c6, %c0_53] : memref<16x32xf32, #tpu.memory_space<vmem>>, vector<2x16xf32>
    tpu.vector_store %arg25[%c6, %c0_53], %215 {strides = array<i32>} : memref<16x32xf32, #tpu.memory_space<vmem>>, vector<2x16xf32>,
    %c8 = arith.constant 8 : index
    %c16_54 = arith.constant 16 : index
    %245 = vector.load %arg25[%c8, %c16_54] : memref<16x32xf32, #tpu.memory_space<vmem>>, vector<2x16xf32>
    tpu.vector_store %arg25[%c8, %c16_54], %243 {strides = array<i32>} : memref<16x32xf32, #tpu.memory_space<vmem>>, vector<2x16xf32>,
    %246 = vector.extract_strided_slice %5 {offsets = [8, 0], sizes = [2, 64], strides = [1, 1]} : vector<16x64xf32> to vector<2x64xf32>
    %cst_55 = arith.constant dense<0.000000e+00> : vector<2x64xf32>
    %247 = tpu.matmul %215, %11, %cst_55 {dimension_numbers = #tpu.dot_dimension_numbers<[1], [0], [0], [1], [0, 0, 1, 1], [], []>} : vector<2x16xf32>, vector<16x64xf32>, vector<2x64xf32> -> vector<2x64xf32>
    %248 = arith.addf %246, %247 : vector<2x64xf32>
    %249 = vector.extract_strided_slice %248 {offsets = [0, 0], sizes = [2, 16], strides = [1, 1]} : vector<2x64xf32> to vector<2x16xf32>
    %250 = arith.negf %249 : vector<2x16xf32>
    %251 = math.exp %250 : vector<2x16xf32>
    %cst_56 = arith.constant 1.000000e+00 : f32
    %252 = vector.broadcast %cst_56 : f32 to vector<2x16xf32>
    %253 = arith.addf %252, %251 : vector<2x16xf32>
    %254 = arith.divf %252, %253 : vector<2x16xf32>
    %255 = vector.extract_strided_slice %248 {offsets = [0, 16], sizes = [2, 16], strides = [1, 1]} : vector<2x64xf32> to vector<2x16xf32>
    %256 = arith.negf %255 : vector<2x16xf32>
    %257 = math.exp %256 : vector<2x16xf32>
    %cst_57 = arith.constant 1.000000e+00 : f32
    %258 = vector.broadcast %cst_57 : f32 to vector<2x16xf32>
    %259 = arith.addf %258, %257 : vector<2x16xf32>
    %260 = arith.divf %258, %259 : vector<2x16xf32>
    %261 = vector.extract_strided_slice %248 {offsets = [0, 32], sizes = [2, 16], strides = [1, 1]} : vector<2x64xf32> to vector<2x16xf32>
    %262 = math.tanh %261 : vector<2x16xf32>
    %263 = vector.extract_strided_slice %248 {offsets = [0, 48], sizes = [2, 16], strides = [1, 1]} : vector<2x64xf32> to vector<2x16xf32>
    %264 = arith.negf %263 : vector<2x16xf32>
    %265 = math.exp %264 : vector<2x16xf32>
    %cst_58 = arith.constant 1.000000e+00 : f32
    %266 = vector.broadcast %cst_58 : f32 to vector<2x16xf32>
    %267 = arith.addf %266, %265 : vector<2x16xf32>
    %268 = arith.divf %266, %267 : vector<2x16xf32>
    %269 = arith.mulf %260, %213 : vector<2x16xf32>
    %270 = arith.mulf %254, %262 : vector<2x16xf32>
    %271 = arith.addf %269, %270 : vector<2x16xf32>
    %272 = math.tanh %271 : vector<2x16xf32>
    %273 = arith.mulf %268, %272 : vector<2x16xf32>
    %274 = vector.extract_strided_slice %10 {offsets = [6, 0], sizes = [2, 64], strides = [1, 1]} : vector<16x64xf32> to vector<2x64xf32>
    %cst_59 = arith.constant dense<0.000000e+00> : vector<2x64xf32>
    %275 = tpu.matmul %243, %12, %cst_59 {dimension_numbers = #tpu.dot_dimension_numbers<[1], [0], [0], [1], [0, 0, 1, 1], [], []>} : vector<2x16xf32>, vector<16x64xf32>, vector<2x64xf32> -> vector<2x64xf32>
    %276 = arith.addf %274, %275 : vector<2x64xf32>
    %277 = vector.extract_strided_slice %276 {offsets = [0, 0], sizes = [2, 16], strides = [1, 1]} : vector<2x64xf32> to vector<2x16xf32>
    %278 = arith.negf %277 : vector<2x16xf32>
    %279 = math.exp %278 : vector<2x16xf32>
    %cst_60 = arith.constant 1.000000e+00 : f32
    %280 = vector.broadcast %cst_60 : f32 to vector<2x16xf32>
    %281 = arith.addf %280, %279 : vector<2x16xf32>
    %282 = arith.divf %280, %281 : vector<2x16xf32>
    %283 = vector.extract_strided_slice %276 {offsets = [0, 16], sizes = [2, 16], strides = [1, 1]} : vector<2x64xf32> to vector<2x16xf32>
    %284 = arith.negf %283 : vector<2x16xf32>
    %285 = math.exp %284 : vector<2x16xf32>
    %cst_61 = arith.constant 1.000000e+00 : f32
    %286 = vector.broadcast %cst_61 : f32 to vector<2x16xf32>
    %287 = arith.addf %286, %285 : vector<2x16xf32>
    %288 = arith.divf %286, %287 : vector<2x16xf32>
    %289 = vector.extract_strided_slice %276 {offsets = [0, 32], sizes = [2, 16], strides = [1, 1]} : vector<2x64xf32> to vector<2x16xf32>
    %290 = math.tanh %289 : vector<2x16xf32>
    %291 = vector.extract_strided_slice %276 {offsets = [0, 48], sizes = [2, 16], strides = [1, 1]} : vector<2x64xf32> to vector<2x16xf32>
    %292 = arith.negf %291 : vector<2x16xf32>
    %293 = math.exp %292 : vector<2x16xf32>
    %cst_62 = arith.constant 1.000000e+00 : f32
    %294 = vector.broadcast %cst_62 : f32 to vector<2x16xf32>
    %295 = arith.addf %294, %293 : vector<2x16xf32>
    %296 = arith.divf %294, %295 : vector<2x16xf32>
    %297 = arith.mulf %288, %241 : vector<2x16xf32>
    %298 = arith.mulf %282, %290 : vector<2x16xf32>
    %299 = arith.addf %297, %298 : vector<2x16xf32>
    %300 = math.tanh %299 : vector<2x16xf32>
    %301 = arith.mulf %296, %300 : vector<2x16xf32>
    %c8_63 = arith.constant 8 : index
    %c0_64 = arith.constant 0 : index
    %302 = vector.load %arg25[%c8_63, %c0_64] : memref<16x32xf32, #tpu.memory_space<vmem>>, vector<2x16xf32>
    tpu.vector_store %arg25[%c8_63, %c0_64], %273 {strides = array<i32>} : memref<16x32xf32, #tpu.memory_space<vmem>>, vector<2x16xf32>,
    %c6_65 = arith.constant 6 : index
    %c16_66 = arith.constant 16 : index
    %303 = vector.load %arg25[%c6_65, %c16_66] : memref<16x32xf32, #tpu.memory_space<vmem>>, vector<2x16xf32>
    tpu.vector_store %arg25[%c6_65, %c16_66], %301 {strides = array<i32>} : memref<16x32xf32, #tpu.memory_space<vmem>>, vector<2x16xf32>,
    %304 = vector.extract_strided_slice %5 {offsets = [10, 0], sizes = [2, 64], strides = [1, 1]} : vector<16x64xf32> to vector<2x64xf32>
    %cst_67 = arith.constant dense<0.000000e+00> : vector<2x64xf32>
    %305 = tpu.matmul %273, %11, %cst_67 {dimension_numbers = #tpu.dot_dimension_numbers<[1], [0], [0], [1], [0, 0, 1, 1], [], []>} : vector<2x16xf32>, vector<16x64xf32>, vector<2x64xf32> -> vector<2x64xf32>
    %306 = arith.addf %304, %305 : vector<2x64xf32>
    %307 = vector.extract_strided_slice %306 {offsets = [0, 0], sizes = [2, 16], strides = [1, 1]} : vector<2x64xf32> to vector<2x16xf32>
    %308 = arith.negf %307 : vector<2x16xf32>
    %309 = math.exp %308 : vector<2x16xf32>
    %cst_68 = arith.constant 1.000000e+00 : f32
    %310 = vector.broadcast %cst_68 : f32 to vector<2x16xf32>
    %311 = arith.addf %310, %309 : vector<2x16xf32>
    %312 = arith.divf %310, %311 : vector<2x16xf32>
    %313 = vector.extract_strided_slice %306 {offsets = [0, 16], sizes = [2, 16], strides = [1, 1]} : vector<2x64xf32> to vector<2x16xf32>
    %314 = arith.negf %313 : vector<2x16xf32>
    %315 = math.exp %314 : vector<2x16xf32>
    %cst_69 = arith.constant 1.000000e+00 : f32
    %316 = vector.broadcast %cst_69 : f32 to vector<2x16xf32>
    %317 = arith.addf %316, %315 : vector<2x16xf32>
    %318 = arith.divf %316, %317 : vector<2x16xf32>
    %319 = vector.extract_strided_slice %306 {offsets = [0, 32], sizes = [2, 16], strides = [1, 1]} : vector<2x64xf32> to vector<2x16xf32>
    %320 = math.tanh %319 : vector<2x16xf32>
    %321 = vector.extract_strided_slice %306 {offsets = [0, 48], sizes = [2, 16], strides = [1, 1]} : vector<2x64xf32> to vector<2x16xf32>
    %322 = arith.negf %321 : vector<2x16xf32>
    %323 = math.exp %322 : vector<2x16xf32>
    %cst_70 = arith.constant 1.000000e+00 : f32
    %324 = vector.broadcast %cst_70 : f32 to vector<2x16xf32>
    %325 = arith.addf %324, %323 : vector<2x16xf32>
    %326 = arith.divf %324, %325 : vector<2x16xf32>
    %327 = arith.mulf %318, %271 : vector<2x16xf32>
    %328 = arith.mulf %312, %320 : vector<2x16xf32>
    %329 = arith.addf %327, %328 : vector<2x16xf32>
    %330 = math.tanh %329 : vector<2x16xf32>
    %331 = arith.mulf %326, %330 : vector<2x16xf32>
    %332 = vector.extract_strided_slice %10 {offsets = [4, 0], sizes = [2, 64], strides = [1, 1]} : vector<16x64xf32> to vector<2x64xf32>
    %cst_71 = arith.constant dense<0.000000e+00> : vector<2x64xf32>
    %333 = tpu.matmul %301, %12, %cst_71 {dimension_numbers = #tpu.dot_dimension_numbers<[1], [0], [0], [1], [0, 0, 1, 1], [], []>} : vector<2x16xf32>, vector<16x64xf32>, vector<2x64xf32> -> vector<2x64xf32>
    %334 = arith.addf %332, %333 : vector<2x64xf32>
    %335 = vector.extract_strided_slice %334 {offsets = [0, 0], sizes = [2, 16], strides = [1, 1]} : vector<2x64xf32> to vector<2x16xf32>
    %336 = arith.negf %335 : vector<2x16xf32>
    %337 = math.exp %336 : vector<2x16xf32>
    %cst_72 = arith.constant 1.000000e+00 : f32
    %338 = vector.broadcast %cst_72 : f32 to vector<2x16xf32>
    %339 = arith.addf %338, %337 : vector<2x16xf32>
    %340 = arith.divf %338, %339 : vector<2x16xf32>
    %341 = vector.extract_strided_slice %334 {offsets = [0, 16], sizes = [2, 16], strides = [1, 1]} : vector<2x64xf32> to vector<2x16xf32>
    %342 = arith.negf %341 : vector<2x16xf32>
    %343 = math.exp %342 : vector<2x16xf32>
    %cst_73 = arith.constant 1.000000e+00 : f32
    %344 = vector.broadcast %cst_73 : f32 to vector<2x16xf32>
    %345 = arith.addf %344, %343 : vector<2x16xf32>
    %346 = arith.divf %344, %345 : vector<2x16xf32>
    %347 = vector.extract_strided_slice %334 {offsets = [0, 32], sizes = [2, 16], strides = [1, 1]} : vector<2x64xf32> to vector<2x16xf32>
    %348 = math.tanh %347 : vector<2x16xf32>
    %349 = vector.extract_strided_slice %334 {offsets = [0, 48], sizes = [2, 16], strides = [1, 1]} : vector<2x64xf32> to vector<2x16xf32>
    %350 = arith.negf %349 : vector<2x16xf32>
    %351 = math.exp %350 : vector<2x16xf32>
    %cst_74 = arith.constant 1.000000e+00 : f32
    %352 = vector.broadcast %cst_74 : f32 to vector<2x16xf32>
    %353 = arith.addf %352, %351 : vector<2x16xf32>
    %354 = arith.divf %352, %353 : vector<2x16xf32>
    %355 = arith.mulf %346, %299 : vector<2x16xf32>
    %356 = arith.mulf %340, %348 : vector<2x16xf32>
    %357 = arith.addf %355, %356 : vector<2x16xf32>
    %358 = math.tanh %357 : vector<2x16xf32>
    %359 = arith.mulf %354, %358 : vector<2x16xf32>
    %c10_75 = arith.constant 10 : index
    %c0_76 = arith.constant 0 : index
    %360 = vector.load %arg25[%c10_75, %c0_76] : memref<16x32xf32, #tpu.memory_space<vmem>>, vector<2x16xf32>
    tpu.vector_store %arg25[%c10_75, %c0_76], %331 {strides = array<i32>} : memref<16x32xf32, #tpu.memory_space<vmem>>, vector<2x16xf32>,
    %c4_77 = arith.constant 4 : index
    %c16_78 = arith.constant 16 : index
    %361 = vector.load %arg25[%c4_77, %c16_78] : memref<16x32xf32, #tpu.memory_space<vmem>>, vector<2x16xf32>
    tpu.vector_store %arg25[%c4_77, %c16_78], %359 {strides = array<i32>} : memref<16x32xf32, #tpu.memory_space<vmem>>, vector<2x16xf32>,
    %362 = vector.extract_strided_slice %5 {offsets = [12, 0], sizes = [2, 64], strides = [1, 1]} : vector<16x64xf32> to vector<2x64xf32>
    %cst_79 = arith.constant dense<0.000000e+00> : vector<2x64xf32>
    %363 = tpu.matmul %331, %11, %cst_79 {dimension_numbers = #tpu.dot_dimension_numbers<[1], [0], [0], [1], [0, 0, 1, 1], [], []>} : vector<2x16xf32>, vector<16x64xf32>, vector<2x64xf32> -> vector<2x64xf32>
    %364 = arith.addf %362, %363 : vector<2x64xf32>
    %365 = vector.extract_strided_slice %364 {offsets = [0, 0], sizes = [2, 16], strides = [1, 1]} : vector<2x64xf32> to vector<2x16xf32>
    %366 = arith.negf %365 : vector<2x16xf32>
    %367 = math.exp %366 : vector<2x16xf32>
    %cst_80 = arith.constant 1.000000e+00 : f32
    %368 = vector.broadcast %cst_80 : f32 to vector<2x16xf32>
    %369 = arith.addf %368, %367 : vector<2x16xf32>
    %370 = arith.divf %368, %369 : vector<2x16xf32>
    %371 = vector.extract_strided_slice %364 {offsets = [0, 16], sizes = [2, 16], strides = [1, 1]} : vector<2x64xf32> to vector<2x16xf32>
    %372 = arith.negf %371 : vector<2x16xf32>
    %373 = math.exp %372 : vector<2x16xf32>
    %cst_81 = arith.constant 1.000000e+00 : f32
    %374 = vector.broadcast %cst_81 : f32 to vector<2x16xf32>
    %375 = arith.addf %374, %373 : vector<2x16xf32>
    %376 = arith.divf %374, %375 : vector<2x16xf32>
    %377 = vector.extract_strided_slice %364 {offsets = [0, 32], sizes = [2, 16], strides = [1, 1]} : vector<2x64xf32> to vector<2x16xf32>
    %378 = math.tanh %377 : vector<2x16xf32>
    %379 = vector.extract_strided_slice %364 {offsets = [0, 48], sizes = [2, 16], strides = [1, 1]} : vector<2x64xf32> to vector<2x16xf32>
    %380 = arith.negf %379 : vector<2x16xf32>
    %381 = math.exp %380 : vector<2x16xf32>
    %cst_82 = arith.constant 1.000000e+00 : f32
    %382 = vector.broadcast %cst_82 : f32 to vector<2x16xf32>
    %383 = arith.addf %382, %381 : vector<2x16xf32>
    %384 = arith.divf %382, %383 : vector<2x16xf32>
    %385 = arith.mulf %376, %329 : vector<2x16xf32>
    %386 = arith.mulf %370, %378 : vector<2x16xf32>
    %387 = arith.addf %385, %386 : vector<2x16xf32>
    %388 = math.tanh %387 : vector<2x16xf32>
    %389 = arith.mulf %384, %388 : vector<2x16xf32>
    %390 = vector.extract_strided_slice %10 {offsets = [2, 0], sizes = [2, 64], strides = [1, 1]} : vector<16x64xf32> to vector<2x64xf32>
    %cst_83 = arith.constant dense<0.000000e+00> : vector<2x64xf32>
    %391 = tpu.matmul %359, %12, %cst_83 {dimension_numbers = #tpu.dot_dimension_numbers<[1], [0], [0], [1], [0, 0, 1, 1], [], []>} : vector<2x16xf32>, vector<16x64xf32>, vector<2x64xf32> -> vector<2x64xf32>
    %392 = arith.addf %390, %391 : vector<2x64xf32>
    %393 = vector.extract_strided_slice %392 {offsets = [0, 0], sizes = [2, 16], strides = [1, 1]} : vector<2x64xf32> to vector<2x16xf32>
    %394 = arith.negf %393 : vector<2x16xf32>
    %395 = math.exp %394 : vector<2x16xf32>
    %cst_84 = arith.constant 1.000000e+00 : f32
    %396 = vector.broadcast %cst_84 : f32 to vector<2x16xf32>
    %397 = arith.addf %396, %395 : vector<2x16xf32>
    %398 = arith.divf %396, %397 : vector<2x16xf32>
    %399 = vector.extract_strided_slice %392 {offsets = [0, 16], sizes = [2, 16], strides = [1, 1]} : vector<2x64xf32> to vector<2x16xf32>
    %400 = arith.negf %399 : vector<2x16xf32>
    %401 = math.exp %400 : vector<2x16xf32>
    %cst_85 = arith.constant 1.000000e+00 : f32
    %402 = vector.broadcast %cst_85 : f32 to vector<2x16xf32>
    %403 = arith.addf %402, %401 : vector<2x16xf32>
    %404 = arith.divf %402, %403 : vector<2x16xf32>
    %405 = vector.extract_strided_slice %392 {offsets = [0, 32], sizes = [2, 16], strides = [1, 1]} : vector<2x64xf32> to vector<2x16xf32>
    %406 = math.tanh %405 : vector<2x16xf32>
    %407 = vector.extract_strided_slice %392 {offsets = [0, 48], sizes = [2, 16], strides = [1, 1]} : vector<2x64xf32> to vector<2x16xf32>
    %408 = arith.negf %407 : vector<2x16xf32>
    %409 = math.exp %408 : vector<2x16xf32>
    %cst_86 = arith.constant 1.000000e+00 : f32
    %410 = vector.broadcast %cst_86 : f32 to vector<2x16xf32>
    %411 = arith.addf %410, %409 : vector<2x16xf32>
    %412 = arith.divf %410, %411 : vector<2x16xf32>
    %413 = arith.mulf %404, %357 : vector<2x16xf32>
    %414 = arith.mulf %398, %406 : vector<2x16xf32>
    %415 = arith.addf %413, %414 : vector<2x16xf32>
    %416 = math.tanh %415 : vector<2x16xf32>
    %417 = arith.mulf %412, %416 : vector<2x16xf32>
    %c12_87 = arith.constant 12 : index
    %c0_88 = arith.constant 0 : index
    %418 = vector.load %arg25[%c12_87, %c0_88] : memref<16x32xf32, #tpu.memory_space<vmem>>, vector<2x16xf32>
    tpu.vector_store %arg25[%c12_87, %c0_88], %389 {strides = array<i32>} : memref<16x32xf32, #tpu.memory_space<vmem>>, vector<2x16xf32>,
    %c2_89 = arith.constant 2 : index
    %c16_90 = arith.constant 16 : index
    %419 = vector.load %arg25[%c2_89, %c16_90] : memref<16x32xf32, #tpu.memory_space<vmem>>, vector<2x16xf32>
    tpu.vector_store %arg25[%c2_89, %c16_90], %417 {strides = array<i32>} : memref<16x32xf32, #tpu.memory_space<vmem>>, vector<2x16xf32>,
    %420 = vector.extract_strided_slice %5 {offsets = [14, 0], sizes = [2, 64], strides = [1, 1]} : vector<16x64xf32> to vector<2x64xf32>
    %cst_91 = arith.constant dense<0.000000e+00> : vector<2x64xf32>
    %421 = tpu.matmul %389, %11, %cst_91 {dimension_numbers = #tpu.dot_dimension_numbers<[1], [0], [0], [1], [0, 0, 1, 1], [], []>} : vector<2x16xf32>, vector<16x64xf32>, vector<2x64xf32> -> vector<2x64xf32>
    %422 = arith.addf %420, %421 : vector<2x64xf32>
    %423 = vector.extract_strided_slice %422 {offsets = [0, 0], sizes = [2, 16], strides = [1, 1]} : vector<2x64xf32> to vector<2x16xf32>
    %424 = arith.negf %423 : vector<2x16xf32>
    %425 = math.exp %424 : vector<2x16xf32>
    %cst_92 = arith.constant 1.000000e+00 : f32
    %426 = vector.broadcast %cst_92 : f32 to vector<2x16xf32>
    %427 = arith.addf %426, %425 : vector<2x16xf32>
    %428 = arith.divf %426, %427 : vector<2x16xf32>
    %429 = vector.extract_strided_slice %422 {offsets = [0, 16], sizes = [2, 16], strides = [1, 1]} : vector<2x64xf32> to vector<2x16xf32>
    %430 = arith.negf %429 : vector<2x16xf32>
    %431 = math.exp %430 : vector<2x16xf32>
    %cst_93 = arith.constant 1.000000e+00 : f32
    %432 = vector.broadcast %cst_93 : f32 to vector<2x16xf32>
    %433 = arith.addf %432, %431 : vector<2x16xf32>
    %434 = arith.divf %432, %433 : vector<2x16xf32>
    %435 = vector.extract_strided_slice %422 {offsets = [0, 32], sizes = [2, 16], strides = [1, 1]} : vector<2x64xf32> to vector<2x16xf32>
    %436 = math.tanh %435 : vector<2x16xf32>
    %437 = vector.extract_strided_slice %422 {offsets = [0, 48], sizes = [2, 16], strides = [1, 1]} : vector<2x64xf32> to vector<2x16xf32>
    %438 = arith.negf %437 : vector<2x16xf32>
    %439 = math.exp %438 : vector<2x16xf32>
    %cst_94 = arith.constant 1.000000e+00 : f32
    %440 = vector.broadcast %cst_94 : f32 to vector<2x16xf32>
    %441 = arith.addf %440, %439 : vector<2x16xf32>
    %442 = arith.divf %440, %441 : vector<2x16xf32>
    %443 = arith.mulf %434, %387 : vector<2x16xf32>
    %444 = arith.mulf %428, %436 : vector<2x16xf32>
    %445 = arith.addf %443, %444 : vector<2x16xf32>
    %446 = math.tanh %445 : vector<2x16xf32>
    %447 = arith.mulf %442, %446 : vector<2x16xf32>
    %448 = vector.extract_strided_slice %10 {offsets = [0, 0], sizes = [2, 64], strides = [1, 1]} : vector<16x64xf32> to vector<2x64xf32>
    %cst_95 = arith.constant dense<0.000000e+00> : vector<2x64xf32>
    %449 = tpu.matmul %417, %12, %cst_95 {dimension_numbers = #tpu.dot_dimension_numbers<[1], [0], [0], [1], [0, 0, 1, 1], [], []>} : vector<2x16xf32>, vector<16x64xf32>, vector<2x64xf32> -> vector<2x64xf32>
    %450 = arith.addf %448, %449 : vector<2x64xf32>
    %451 = vector.extract_strided_slice %450 {offsets = [0, 0], sizes = [2, 16], strides = [1, 1]} : vector<2x64xf32> to vector<2x16xf32>
    %452 = arith.negf %451 : vector<2x16xf32>
    %453 = math.exp %452 : vector<2x16xf32>
    %cst_96 = arith.constant 1.000000e+00 : f32
    %454 = vector.broadcast %cst_96 : f32 to vector<2x16xf32>
    %455 = arith.addf %454, %453 : vector<2x16xf32>
    %456 = arith.divf %454, %455 : vector<2x16xf32>
    %457 = vector.extract_strided_slice %450 {offsets = [0, 16], sizes = [2, 16], strides = [1, 1]} : vector<2x64xf32> to vector<2x16xf32>
    %458 = arith.negf %457 : vector<2x16xf32>
    %459 = math.exp %458 : vector<2x16xf32>
    %cst_97 = arith.constant 1.000000e+00 : f32
    %460 = vector.broadcast %cst_97 : f32 to vector<2x16xf32>
    %461 = arith.addf %460, %459 : vector<2x16xf32>
    %462 = arith.divf %460, %461 : vector<2x16xf32>
    %463 = vector.extract_strided_slice %450 {offsets = [0, 32], sizes = [2, 16], strides = [1, 1]} : vector<2x64xf32> to vector<2x16xf32>
    %464 = math.tanh %463 : vector<2x16xf32>
    %465 = vector.extract_strided_slice %450 {offsets = [0, 48], sizes = [2, 16], strides = [1, 1]} : vector<2x64xf32> to vector<2x16xf32>
    %466 = arith.negf %465 : vector<2x16xf32>
    %467 = math.exp %466 : vector<2x16xf32>
    %cst_98 = arith.constant 1.000000e+00 : f32
    %468 = vector.broadcast %cst_98 : f32 to vector<2x16xf32>
    %469 = arith.addf %468, %467 : vector<2x16xf32>
    %470 = arith.divf %468, %469 : vector<2x16xf32>
    %471 = arith.mulf %462, %415 : vector<2x16xf32>
    %472 = arith.mulf %456, %464 : vector<2x16xf32>
    %473 = arith.addf %471, %472 : vector<2x16xf32>
    %474 = math.tanh %473 : vector<2x16xf32>
    %475 = arith.mulf %470, %474 : vector<2x16xf32>
    %c14_99 = arith.constant 14 : index
    %c0_100 = arith.constant 0 : index
    %476 = vector.load %arg25[%c14_99, %c0_100] : memref<16x32xf32, #tpu.memory_space<vmem>>, vector<2x16xf32>
    tpu.vector_store %arg25[%c14_99, %c0_100], %447 {strides = array<i32>} : memref<16x32xf32, #tpu.memory_space<vmem>>, vector<2x16xf32>,
    %c0_101 = arith.constant 0 : index
    %c16_102 = arith.constant 16 : index
    %477 = vector.load %arg25[%c0_101, %c16_102] : memref<16x32xf32, #tpu.memory_space<vmem>>, vector<2x16xf32>
    tpu.vector_store %arg25[%c0_101, %c16_102], %475 {strides = array<i32>} : memref<16x32xf32, #tpu.memory_space<vmem>>, vector<2x16xf32>,
    %c0_103 = arith.constant 0 : index
    %c0_104 = arith.constant 0 : index
    %478 = vector.load %arg25[%c0_103, %c0_104] : memref<16x32xf32, #tpu.memory_space<vmem>>, vector<16x32xf32>
    %c0_105 = arith.constant 0 : index
    %c0_106 = arith.constant 0 : index
    %479 = vector.load %arg9[%c0_105, %c0_106] : memref<32x64xf32, #tpu.memory_space<vmem>>, vector<32x64xf32>
    %cst_107 = arith.constant dense<0.000000e+00> : vector<16x64xf32>
    %480 = tpu.matmul %478, %479, %cst_107 {dimension_numbers = #tpu.dot_dimension_numbers<[1], [0], [0], [1], [0, 0, 1, 1], [], []>} : vector<16x32xf32>, vector<32x64xf32>, vector<16x64xf32> -> vector<16x64xf32>
    %c0_108 = arith.constant 0 : index
    %c0_109 = arith.constant 0 : index
    %481 = vector.load %arg11[%c0_108, %c0_109] : memref<1x64xf32, #tpu.memory_space<vmem>>, vector<1x64xf32>
    %482 = vector.broadcast %481 : vector<1x64xf32> to vector<16x64xf32>
    %483 = arith.addf %480, %482 : vector<16x64xf32>
    %c0_110 = arith.constant 0 : index
    %c0_111 = arith.constant 0 : index
    %484 = vector.load %arg12[%c0_110, %c0_111] : memref<32x64xf32, #tpu.memory_space<vmem>>, vector<32x64xf32>
    %cst_112 = arith.constant dense<0.000000e+00> : vector<16x64xf32>
    %485 = tpu.matmul %478, %484, %cst_112 {dimension_numbers = #tpu.dot_dimension_numbers<[1], [0], [0], [1], [0, 0, 1, 1], [], []>} : vector<16x32xf32>, vector<32x64xf32>, vector<16x64xf32> -> vector<16x64xf32>
    %c0_113 = arith.constant 0 : index
    %c0_114 = arith.constant 0 : index
    %486 = vector.load %arg14[%c0_113, %c0_114] : memref<1x64xf32, #tpu.memory_space<vmem>>, vector<1x64xf32>
    %487 = vector.broadcast %486 : vector<1x64xf32> to vector<16x64xf32>
    %488 = arith.addf %485, %487 : vector<16x64xf32>
    %c0_115 = arith.constant 0 : index
    %c0_116 = arith.constant 0 : index
    %489 = vector.load %arg10[%c0_115, %c0_116] : memref<16x64xf32, #tpu.memory_space<vmem>>, vector<16x64xf32>
    %c0_117 = arith.constant 0 : index
    %c0_118 = arith.constant 0 : index
    %490 = vector.load %arg13[%c0_117, %c0_118] : memref<16x64xf32, #tpu.memory_space<vmem>>, vector<16x64xf32>
    %491 = vector.extract_strided_slice %483 {offsets = [0, 0], sizes = [2, 64], strides = [1, 1]} : vector<16x64xf32> to vector<2x64xf32>
    %cst_119 = arith.constant dense<0.000000e+00> : vector<2x64xf32>
    %492 = tpu.matmul %13, %489, %cst_119 {dimension_numbers = #tpu.dot_dimension_numbers<[1], [0], [0], [1], [0, 0, 1, 1], [], []>} : vector<2x16xf32>, vector<16x64xf32>, vector<2x64xf32> -> vector<2x64xf32>
    %493 = arith.addf %491, %492 : vector<2x64xf32>
    %494 = vector.extract_strided_slice %493 {offsets = [0, 0], sizes = [2, 16], strides = [1, 1]} : vector<2x64xf32> to vector<2x16xf32>
    %495 = arith.negf %494 : vector<2x16xf32>
    %496 = math.exp %495 : vector<2x16xf32>
    %cst_120 = arith.constant 1.000000e+00 : f32
    %497 = vector.broadcast %cst_120 : f32 to vector<2x16xf32>
    %498 = arith.addf %497, %496 : vector<2x16xf32>
    %499 = arith.divf %497, %498 : vector<2x16xf32>
    %500 = vector.extract_strided_slice %493 {offsets = [0, 16], sizes = [2, 16], strides = [1, 1]} : vector<2x64xf32> to vector<2x16xf32>
    %501 = arith.negf %500 : vector<2x16xf32>
    %502 = math.exp %501 : vector<2x16xf32>
    %cst_121 = arith.constant 1.000000e+00 : f32
    %503 = vector.broadcast %cst_121 : f32 to vector<2x16xf32>
    %504 = arith.addf %503, %502 : vector<2x16xf32>
    %505 = arith.divf %503, %504 : vector<2x16xf32>
    %506 = vector.extract_strided_slice %493 {offsets = [0, 32], sizes = [2, 16], strides = [1, 1]} : vector<2x64xf32> to vector<2x16xf32>
    %507 = math.tanh %506 : vector<2x16xf32>
    %508 = vector.extract_strided_slice %493 {offsets = [0, 48], sizes = [2, 16], strides = [1, 1]} : vector<2x64xf32> to vector<2x16xf32>
    %509 = arith.negf %508 : vector<2x16xf32>
    %510 = math.exp %509 : vector<2x16xf32>
    %cst_122 = arith.constant 1.000000e+00 : f32
    %511 = vector.broadcast %cst_122 : f32 to vector<2x16xf32>
    %512 = arith.addf %511, %510 : vector<2x16xf32>
    %513 = arith.divf %511, %512 : vector<2x16xf32>
    %514 = arith.mulf %505, %13 : vector<2x16xf32>
    %515 = arith.mulf %499, %507 : vector<2x16xf32>
    %516 = arith.addf %514, %515 : vector<2x16xf32>
    %517 = math.tanh %516 : vector<2x16xf32>
    %518 = arith.mulf %513, %517 : vector<2x16xf32>
    %519 = vector.extract_strided_slice %488 {offsets = [14, 0], sizes = [2, 64], strides = [1, 1]} : vector<16x64xf32> to vector<2x64xf32>
    %cst_123 = arith.constant dense<0.000000e+00> : vector<2x64xf32>
    %520 = tpu.matmul %13, %490, %cst_123 {dimension_numbers = #tpu.dot_dimension_numbers<[1], [0], [0], [1], [0, 0, 1, 1], [], []>} : vector<2x16xf32>, vector<16x64xf32>, vector<2x64xf32> -> vector<2x64xf32>
    %521 = arith.addf %519, %520 : vector<2x64xf32>
    %522 = vector.extract_strided_slice %521 {offsets = [0, 0], sizes = [2, 16], strides = [1, 1]} : vector<2x64xf32> to vector<2x16xf32>
    %523 = arith.negf %522 : vector<2x16xf32>
    %524 = math.exp %523 : vector<2x16xf32>
    %cst_124 = arith.constant 1.000000e+00 : f32
    %525 = vector.broadcast %cst_124 : f32 to vector<2x16xf32>
    %526 = arith.addf %525, %524 : vector<2x16xf32>
    %527 = arith.divf %525, %526 : vector<2x16xf32>
    %528 = vector.extract_strided_slice %521 {offsets = [0, 16], sizes = [2, 16], strides = [1, 1]} : vector<2x64xf32> to vector<2x16xf32>
    %529 = arith.negf %528 : vector<2x16xf32>
    %530 = math.exp %529 : vector<2x16xf32>
    %cst_125 = arith.constant 1.000000e+00 : f32
    %531 = vector.broadcast %cst_125 : f32 to vector<2x16xf32>
    %532 = arith.addf %531, %530 : vector<2x16xf32>
    %533 = arith.divf %531, %532 : vector<2x16xf32>
    %534 = vector.extract_strided_slice %521 {offsets = [0, 32], sizes = [2, 16], strides = [1, 1]} : vector<2x64xf32> to vector<2x16xf32>
    %535 = math.tanh %534 : vector<2x16xf32>
    %536 = vector.extract_strided_slice %521 {offsets = [0, 48], sizes = [2, 16], strides = [1, 1]} : vector<2x64xf32> to vector<2x16xf32>
    %537 = arith.negf %536 : vector<2x16xf32>
    %538 = math.exp %537 : vector<2x16xf32>
    %cst_126 = arith.constant 1.000000e+00 : f32
    %539 = vector.broadcast %cst_126 : f32 to vector<2x16xf32>
    %540 = arith.addf %539, %538 : vector<2x16xf32>
    %541 = arith.divf %539, %540 : vector<2x16xf32>
    %542 = arith.mulf %533, %13 : vector<2x16xf32>
    %543 = arith.mulf %527, %535 : vector<2x16xf32>
    %544 = arith.addf %542, %543 : vector<2x16xf32>
    %545 = math.tanh %544 : vector<2x16xf32>
    %546 = arith.mulf %541, %545 : vector<2x16xf32>
    %c0_127 = arith.constant 0 : index
    %c0_128 = arith.constant 0 : index
    %c0_129 = arith.constant 0 : index
    %547 = vector.load %arg26[%c0_127, %c0_128, %c0_129] : memref<2x8x32xf32, #tpu.memory_space<vmem>>, vector<2x1x16xf32>
    %548 = vector.shape_cast %547 : vector<2x1x16xf32> to vector<2x16xf32>
    %549 = vector.shape_cast %518 : vector<2x16xf32> to vector<2x1x16xf32>
    tpu.vector_store %arg26[%c0_127, %c0_128, %c0_129], %549 {strides = array<i32>} : memref<2x8x32xf32, #tpu.memory_space<vmem>>, vector<2x1x16xf32>,
    %c0_130 = arith.constant 0 : index
    %c7 = arith.constant 7 : index
    %c16_131 = arith.constant 16 : index
    %550 = vector.load %arg26[%c0_130, %c7, %c16_131] : memref<2x8x32xf32, #tpu.memory_space<vmem>>, vector<2x1x16xf32>
    %551 = vector.shape_cast %550 : vector<2x1x16xf32> to vector<2x16xf32>
    %552 = vector.shape_cast %546 : vector<2x16xf32> to vector<2x1x16xf32>
    tpu.vector_store %arg26[%c0_130, %c7, %c16_131], %552 {strides = array<i32>} : memref<2x8x32xf32, #tpu.memory_space<vmem>>, vector<2x1x16xf32>,
    %553 = vector.extract_strided_slice %483 {offsets = [2, 0], sizes = [2, 64], strides = [1, 1]} : vector<16x64xf32> to vector<2x64xf32>
    %cst_132 = arith.constant dense<0.000000e+00> : vector<2x64xf32>
    %554 = tpu.matmul %518, %489, %cst_132 {dimension_numbers = #tpu.dot_dimension_numbers<[1], [0], [0], [1], [0, 0, 1, 1], [], []>} : vector<2x16xf32>, vector<16x64xf32>, vector<2x64xf32> -> vector<2x64xf32>
    %555 = arith.addf %553, %554 : vector<2x64xf32>
    %556 = vector.extract_strided_slice %555 {offsets = [0, 0], sizes = [2, 16], strides = [1, 1]} : vector<2x64xf32> to vector<2x16xf32>
    %557 = arith.negf %556 : vector<2x16xf32>
    %558 = math.exp %557 : vector<2x16xf32>
    %cst_133 = arith.constant 1.000000e+00 : f32
    %559 = vector.broadcast %cst_133 : f32 to vector<2x16xf32>
    %560 = arith.addf %559, %558 : vector<2x16xf32>
    %561 = arith.divf %559, %560 : vector<2x16xf32>
    %562 = vector.extract_strided_slice %555 {offsets = [0, 16], sizes = [2, 16], strides = [1, 1]} : vector<2x64xf32> to vector<2x16xf32>
    %563 = arith.negf %562 : vector<2x16xf32>
    %564 = math.exp %563 : vector<2x16xf32>
    %cst_134 = arith.constant 1.000000e+00 : f32
    %565 = vector.broadcast %cst_134 : f32 to vector<2x16xf32>
    %566 = arith.addf %565, %564 : vector<2x16xf32>
    %567 = arith.divf %565, %566 : vector<2x16xf32>
    %568 = vector.extract_strided_slice %555 {offsets = [0, 32], sizes = [2, 16], strides = [1, 1]} : vector<2x64xf32> to vector<2x16xf32>
    %569 = math.tanh %568 : vector<2x16xf32>
    %570 = vector.extract_strided_slice %555 {offsets = [0, 48], sizes = [2, 16], strides = [1, 1]} : vector<2x64xf32> to vector<2x16xf32>
    %571 = arith.negf %570 : vector<2x16xf32>
    %572 = math.exp %571 : vector<2x16xf32>
    %cst_135 = arith.constant 1.000000e+00 : f32
    %573 = vector.broadcast %cst_135 : f32 to vector<2x16xf32>
    %574 = arith.addf %573, %572 : vector<2x16xf32>
    %575 = arith.divf %573, %574 : vector<2x16xf32>
    %576 = arith.mulf %567, %516 : vector<2x16xf32>
    %577 = arith.mulf %561, %569 : vector<2x16xf32>
    %578 = arith.addf %576, %577 : vector<2x16xf32>
    %579 = math.tanh %578 : vector<2x16xf32>
    %580 = arith.mulf %575, %579 : vector<2x16xf32>
    %581 = vector.extract_strided_slice %488 {offsets = [12, 0], sizes = [2, 64], strides = [1, 1]} : vector<16x64xf32> to vector<2x64xf32>
    %cst_136 = arith.constant dense<0.000000e+00> : vector<2x64xf32>
    %582 = tpu.matmul %546, %490, %cst_136 {dimension_numbers = #tpu.dot_dimension_numbers<[1], [0], [0], [1], [0, 0, 1, 1], [], []>} : vector<2x16xf32>, vector<16x64xf32>, vector<2x64xf32> -> vector<2x64xf32>
    %583 = arith.addf %581, %582 : vector<2x64xf32>
    %584 = vector.extract_strided_slice %583 {offsets = [0, 0], sizes = [2, 16], strides = [1, 1]} : vector<2x64xf32> to vector<2x16xf32>
    %585 = arith.negf %584 : vector<2x16xf32>
    %586 = math.exp %585 : vector<2x16xf32>
    %cst_137 = arith.constant 1.000000e+00 : f32
    %587 = vector.broadcast %cst_137 : f32 to vector<2x16xf32>
    %588 = arith.addf %587, %586 : vector<2x16xf32>
    %589 = arith.divf %587, %588 : vector<2x16xf32>
    %590 = vector.extract_strided_slice %583 {offsets = [0, 16], sizes = [2, 16], strides = [1, 1]} : vector<2x64xf32> to vector<2x16xf32>
    %591 = arith.negf %590 : vector<2x16xf32>
    %592 = math.exp %591 : vector<2x16xf32>
    %cst_138 = arith.constant 1.000000e+00 : f32
    %593 = vector.broadcast %cst_138 : f32 to vector<2x16xf32>
    %594 = arith.addf %593, %592 : vector<2x16xf32>
    %595 = arith.divf %593, %594 : vector<2x16xf32>
    %596 = vector.extract_strided_slice %583 {offsets = [0, 32], sizes = [2, 16], strides = [1, 1]} : vector<2x64xf32> to vector<2x16xf32>
    %597 = math.tanh %596 : vector<2x16xf32>
    %598 = vector.extract_strided_slice %583 {offsets = [0, 48], sizes = [2, 16], strides = [1, 1]} : vector<2x64xf32> to vector<2x16xf32>
    %599 = arith.negf %598 : vector<2x16xf32>
    %600 = math.exp %599 : vector<2x16xf32>
    %cst_139 = arith.constant 1.000000e+00 : f32
    %601 = vector.broadcast %cst_139 : f32 to vector<2x16xf32>
    %602 = arith.addf %601, %600 : vector<2x16xf32>
    %603 = arith.divf %601, %602 : vector<2x16xf32>
    %604 = arith.mulf %595, %544 : vector<2x16xf32>
    %605 = arith.mulf %589, %597 : vector<2x16xf32>
    %606 = arith.addf %604, %605 : vector<2x16xf32>
    %607 = math.tanh %606 : vector<2x16xf32>
    %608 = arith.mulf %603, %607 : vector<2x16xf32>
    %c0_140 = arith.constant 0 : index
    %c1 = arith.constant 1 : index
    %c0_141 = arith.constant 0 : index
    %609 = vector.load %arg26[%c0_140, %c1, %c0_141] : memref<2x8x32xf32, #tpu.memory_space<vmem>>, vector<2x1x16xf32>
    %610 = vector.shape_cast %609 : vector<2x1x16xf32> to vector<2x16xf32>
    %611 = vector.shape_cast %580 : vector<2x16xf32> to vector<2x1x16xf32>
    tpu.vector_store %arg26[%c0_140, %c1, %c0_141], %611 {strides = array<i32>} : memref<2x8x32xf32, #tpu.memory_space<vmem>>, vector<2x1x16xf32>,
    %c0_142 = arith.constant 0 : index
    %c6_143 = arith.constant 6 : index
    %c16_144 = arith.constant 16 : index
    %612 = vector.load %arg26[%c0_142, %c6_143, %c16_144] : memref<2x8x32xf32, #tpu.memory_space<vmem>>, vector<2x1x16xf32>
    %613 = vector.shape_cast %612 : vector<2x1x16xf32> to vector<2x16xf32>
    %614 = vector.shape_cast %608 : vector<2x16xf32> to vector<2x1x16xf32>
    tpu.vector_store %arg26[%c0_142, %c6_143, %c16_144], %614 {strides = array<i32>} : memref<2x8x32xf32, #tpu.memory_space<vmem>>, vector<2x1x16xf32>,
    %615 = vector.extract_strided_slice %483 {offsets = [4, 0], sizes = [2, 64], strides = [1, 1]} : vector<16x64xf32> to vector<2x64xf32>
    %cst_145 = arith.constant dense<0.000000e+00> : vector<2x64xf32>
    %616 = tpu.matmul %580, %489, %cst_145 {dimension_numbers = #tpu.dot_dimension_numbers<[1], [0], [0], [1], [0, 0, 1, 1], [], []>} : vector<2x16xf32>, vector<16x64xf32>, vector<2x64xf32> -> vector<2x64xf32>
    %617 = arith.addf %615, %616 : vector<2x64xf32>
    %618 = vector.extract_strided_slice %617 {offsets = [0, 0], sizes = [2, 16], strides = [1, 1]} : vector<2x64xf32> to vector<2x16xf32>
    %619 = arith.negf %618 : vector<2x16xf32>
    %620 = math.exp %619 : vector<2x16xf32>
    %cst_146 = arith.constant 1.000000e+00 : f32
    %621 = vector.broadcast %cst_146 : f32 to vector<2x16xf32>
    %622 = arith.addf %621, %620 : vector<2x16xf32>
    %623 = arith.divf %621, %622 : vector<2x16xf32>
    %624 = vector.extract_strided_slice %617 {offsets = [0, 16], sizes = [2, 16], strides = [1, 1]} : vector<2x64xf32> to vector<2x16xf32>
    %625 = arith.negf %624 : vector<2x16xf32>
    %626 = math.exp %625 : vector<2x16xf32>
    %cst_147 = arith.constant 1.000000e+00 : f32
    %627 = vector.broadcast %cst_147 : f32 to vector<2x16xf32>
    %628 = arith.addf %627, %626 : vector<2x16xf32>
    %629 = arith.divf %627, %628 : vector<2x16xf32>
    %630 = vector.extract_strided_slice %617 {offsets = [0, 32], sizes = [2, 16], strides = [1, 1]} : vector<2x64xf32> to vector<2x16xf32>
    %631 = math.tanh %630 : vector<2x16xf32>
    %632 = vector.extract_strided_slice %617 {offsets = [0, 48], sizes = [2, 16], strides = [1, 1]} : vector<2x64xf32> to vector<2x16xf32>
    %633 = arith.negf %632 : vector<2x16xf32>
    %634 = math.exp %633 : vector<2x16xf32>
    %cst_148 = arith.constant 1.000000e+00 : f32
    %635 = vector.broadcast %cst_148 : f32 to vector<2x16xf32>
    %636 = arith.addf %635, %634 : vector<2x16xf32>
    %637 = arith.divf %635, %636 : vector<2x16xf32>
    %638 = arith.mulf %629, %578 : vector<2x16xf32>
    %639 = arith.mulf %623, %631 : vector<2x16xf32>
    %640 = arith.addf %638, %639 : vector<2x16xf32>
    %641 = math.tanh %640 : vector<2x16xf32>
    %642 = arith.mulf %637, %641 : vector<2x16xf32>
    %643 = vector.extract_strided_slice %488 {offsets = [10, 0], sizes = [2, 64], strides = [1, 1]} : vector<16x64xf32> to vector<2x64xf32>
    %cst_149 = arith.constant dense<0.000000e+00> : vector<2x64xf32>
    %644 = tpu.matmul %608, %490, %cst_149 {dimension_numbers = #tpu.dot_dimension_numbers<[1], [0], [0], [1], [0, 0, 1, 1], [], []>} : vector<2x16xf32>, vector<16x64xf32>, vector<2x64xf32> -> vector<2x64xf32>
    %645 = arith.addf %643, %644 : vector<2x64xf32>
    %646 = vector.extract_strided_slice %645 {offsets = [0, 0], sizes = [2, 16], strides = [1, 1]} : vector<2x64xf32> to vector<2x16xf32>
    %647 = arith.negf %646 : vector<2x16xf32>
    %648 = math.exp %647 : vector<2x16xf32>
    %cst_150 = arith.constant 1.000000e+00 : f32
    %649 = vector.broadcast %cst_150 : f32 to vector<2x16xf32>
    %650 = arith.addf %649, %648 : vector<2x16xf32>
    %651 = arith.divf %649, %650 : vector<2x16xf32>
    %652 = vector.extract_strided_slice %645 {offsets = [0, 16], sizes = [2, 16], strides = [1, 1]} : vector<2x64xf32> to vector<2x16xf32>
    %653 = arith.negf %652 : vector<2x16xf32>
    %654 = math.exp %653 : vector<2x16xf32>
    %cst_151 = arith.constant 1.000000e+00 : f32
    %655 = vector.broadcast %cst_151 : f32 to vector<2x16xf32>
    %656 = arith.addf %655, %654 : vector<2x16xf32>
    %657 = arith.divf %655, %656 : vector<2x16xf32>
    %658 = vector.extract_strided_slice %645 {offsets = [0, 32], sizes = [2, 16], strides = [1, 1]} : vector<2x64xf32> to vector<2x16xf32>
    %659 = math.tanh %658 : vector<2x16xf32>
    %660 = vector.extract_strided_slice %645 {offsets = [0, 48], sizes = [2, 16], strides = [1, 1]} : vector<2x64xf32> to vector<2x16xf32>
    %661 = arith.negf %660 : vector<2x16xf32>
    %662 = math.exp %661 : vector<2x16xf32>
    %cst_152 = arith.constant 1.000000e+00 : f32
    %663 = vector.broadcast %cst_152 : f32 to vector<2x16xf32>
    %664 = arith.addf %663, %662 : vector<2x16xf32>
    %665 = arith.divf %663, %664 : vector<2x16xf32>
    %666 = arith.mulf %657, %606 : vector<2x16xf32>
    %667 = arith.mulf %651, %659 : vector<2x16xf32>
    %668 = arith.addf %666, %667 : vector<2x16xf32>
    %669 = math.tanh %668 : vector<2x16xf32>
    %670 = arith.mulf %665, %669 : vector<2x16xf32>
    %c0_153 = arith.constant 0 : index
    %c2_154 = arith.constant 2 : index
    %c0_155 = arith.constant 0 : index
    %671 = vector.load %arg26[%c0_153, %c2_154, %c0_155] : memref<2x8x32xf32, #tpu.memory_space<vmem>>, vector<2x1x16xf32>
    %672 = vector.shape_cast %671 : vector<2x1x16xf32> to vector<2x16xf32>
    %673 = vector.shape_cast %642 : vector<2x16xf32> to vector<2x1x16xf32>
    tpu.vector_store %arg26[%c0_153, %c2_154, %c0_155], %673 {strides = array<i32>} : memref<2x8x32xf32, #tpu.memory_space<vmem>>, vector<2x1x16xf32>,
    %c0_156 = arith.constant 0 : index
    %c5 = arith.constant 5 : index
    %c16_157 = arith.constant 16 : index
    %674 = vector.load %arg26[%c0_156, %c5, %c16_157] : memref<2x8x32xf32, #tpu.memory_space<vmem>>, vector<2x1x16xf32>
    %675 = vector.shape_cast %674 : vector<2x1x16xf32> to vector<2x16xf32>
    %676 = vector.shape_cast %670 : vector<2x16xf32> to vector<2x1x16xf32>
    tpu.vector_store %arg26[%c0_156, %c5, %c16_157], %676 {strides = array<i32>} : memref<2x8x32xf32, #tpu.memory_space<vmem>>, vector<2x1x16xf32>,
    %677 = vector.extract_strided_slice %483 {offsets = [6, 0], sizes = [2, 64], strides = [1, 1]} : vector<16x64xf32> to vector<2x64xf32>
    %cst_158 = arith.constant dense<0.000000e+00> : vector<2x64xf32>
    %678 = tpu.matmul %642, %489, %cst_158 {dimension_numbers = #tpu.dot_dimension_numbers<[1], [0], [0], [1], [0, 0, 1, 1], [], []>} : vector<2x16xf32>, vector<16x64xf32>, vector<2x64xf32> -> vector<2x64xf32>
    %679 = arith.addf %677, %678 : vector<2x64xf32>
    %680 = vector.extract_strided_slice %679 {offsets = [0, 0], sizes = [2, 16], strides = [1, 1]} : vector<2x64xf32> to vector<2x16xf32>
    %681 = arith.negf %680 : vector<2x16xf32>
    %682 = math.exp %681 : vector<2x16xf32>
    %cst_159 = arith.constant 1.000000e+00 : f32
    %683 = vector.broadcast %cst_159 : f32 to vector<2x16xf32>
    %684 = arith.addf %683, %682 : vector<2x16xf32>
    %685 = arith.divf %683, %684 : vector<2x16xf32>
    %686 = vector.extract_strided_slice %679 {offsets = [0, 16], sizes = [2, 16], strides = [1, 1]} : vector<2x64xf32> to vector<2x16xf32>
    %687 = arith.negf %686 : vector<2x16xf32>
    %688 = math.exp %687 : vector<2x16xf32>
    %cst_160 = arith.constant 1.000000e+00 : f32
    %689 = vector.broadcast %cst_160 : f32 to vector<2x16xf32>
    %690 = arith.addf %689, %688 : vector<2x16xf32>
    %691 = arith.divf %689, %690 : vector<2x16xf32>
    %692 = vector.extract_strided_slice %679 {offsets = [0, 32], sizes = [2, 16], strides = [1, 1]} : vector<2x64xf32> to vector<2x16xf32>
    %693 = math.tanh %692 : vector<2x16xf32>
    %694 = vector.extract_strided_slice %679 {offsets = [0, 48], sizes = [2, 16], strides = [1, 1]} : vector<2x64xf32> to vector<2x16xf32>
    %695 = arith.negf %694 : vector<2x16xf32>
    %696 = math.exp %695 : vector<2x16xf32>
    %cst_161 = arith.constant 1.000000e+00 : f32
    %697 = vector.broadcast %cst_161 : f32 to vector<2x16xf32>
    %698 = arith.addf %697, %696 : vector<2x16xf32>
    %699 = arith.divf %697, %698 : vector<2x16xf32>
    %700 = arith.mulf %691, %640 : vector<2x16xf32>
    %701 = arith.mulf %685, %693 : vector<2x16xf32>
    %702 = arith.addf %700, %701 : vector<2x16xf32>
    %703 = math.tanh %702 : vector<2x16xf32>
    %704 = arith.mulf %699, %703 : vector<2x16xf32>
    %705 = vector.extract_strided_slice %488 {offsets = [8, 0], sizes = [2, 64], strides = [1, 1]} : vector<16x64xf32> to vector<2x64xf32>
    %cst_162 = arith.constant dense<0.000000e+00> : vector<2x64xf32>
    %706 = tpu.matmul %670, %490, %cst_162 {dimension_numbers = #tpu.dot_dimension_numbers<[1], [0], [0], [1], [0, 0, 1, 1], [], []>} : vector<2x16xf32>, vector<16x64xf32>, vector<2x64xf32> -> vector<2x64xf32>
    %707 = arith.addf %705, %706 : vector<2x64xf32>
    %708 = vector.extract_strided_slice %707 {offsets = [0, 0], sizes = [2, 16], strides = [1, 1]} : vector<2x64xf32> to vector<2x16xf32>
    %709 = arith.negf %708 : vector<2x16xf32>
    %710 = math.exp %709 : vector<2x16xf32>
    %cst_163 = arith.constant 1.000000e+00 : f32
    %711 = vector.broadcast %cst_163 : f32 to vector<2x16xf32>
    %712 = arith.addf %711, %710 : vector<2x16xf32>
    %713 = arith.divf %711, %712 : vector<2x16xf32>
    %714 = vector.extract_strided_slice %707 {offsets = [0, 16], sizes = [2, 16], strides = [1, 1]} : vector<2x64xf32> to vector<2x16xf32>
    %715 = arith.negf %714 : vector<2x16xf32>
    %716 = math.exp %715 : vector<2x16xf32>
    %cst_164 = arith.constant 1.000000e+00 : f32
    %717 = vector.broadcast %cst_164 : f32 to vector<2x16xf32>
    %718 = arith.addf %717, %716 : vector<2x16xf32>
    %719 = arith.divf %717, %718 : vector<2x16xf32>
    %720 = vector.extract_strided_slice %707 {offsets = [0, 32], sizes = [2, 16], strides = [1, 1]} : vector<2x64xf32> to vector<2x16xf32>
    %721 = math.tanh %720 : vector<2x16xf32>
    %722 = vector.extract_strided_slice %707 {offsets = [0, 48], sizes = [2, 16], strides = [1, 1]} : vector<2x64xf32> to vector<2x16xf32>
    %723 = arith.negf %722 : vector<2x16xf32>
    %724 = math.exp %723 : vector<2x16xf32>
    %cst_165 = arith.constant 1.000000e+00 : f32
    %725 = vector.broadcast %cst_165 : f32 to vector<2x16xf32>
    %726 = arith.addf %725, %724 : vector<2x16xf32>
    %727 = arith.divf %725, %726 : vector<2x16xf32>
    %728 = arith.mulf %719, %668 : vector<2x16xf32>
    %729 = arith.mulf %713, %721 : vector<2x16xf32>
    %730 = arith.addf %728, %729 : vector<2x16xf32>
    %731 = math.tanh %730 : vector<2x16xf32>
    %732 = arith.mulf %727, %731 : vector<2x16xf32>
    %c0_166 = arith.constant 0 : index
    %c3 = arith.constant 3 : index
    %c0_167 = arith.constant 0 : index
    %733 = vector.load %arg26[%c0_166, %c3, %c0_167] : memref<2x8x32xf32, #tpu.memory_space<vmem>>, vector<2x1x16xf32>
    %734 = vector.shape_cast %733 : vector<2x1x16xf32> to vector<2x16xf32>
    %735 = vector.shape_cast %704 : vector<2x16xf32> to vector<2x1x16xf32>
    tpu.vector_store %arg26[%c0_166, %c3, %c0_167], %735 {strides = array<i32>} : memref<2x8x32xf32, #tpu.memory_space<vmem>>, vector<2x1x16xf32>,
    %c0_168 = arith.constant 0 : index
    %c4_169 = arith.constant 4 : index
    %c16_170 = arith.constant 16 : index
    %736 = vector.load %arg26[%c0_168, %c4_169, %c16_170] : memref<2x8x32xf32, #tpu.memory_space<vmem>>, vector<2x1x16xf32>
    %737 = vector.shape_cast %736 : vector<2x1x16xf32> to vector<2x16xf32>
    %738 = vector.shape_cast %732 : vector<2x16xf32> to vector<2x1x16xf32>
    tpu.vector_store %arg26[%c0_168, %c4_169, %c16_170], %738 {strides = array<i32>} : memref<2x8x32xf32, #tpu.memory_space<vmem>>, vector<2x1x16xf32>,
    %739 = vector.extract_strided_slice %483 {offsets = [8, 0], sizes = [2, 64], strides = [1, 1]} : vector<16x64xf32> to vector<2x64xf32>
    %cst_171 = arith.constant dense<0.000000e+00> : vector<2x64xf32>
    %740 = tpu.matmul %704, %489, %cst_171 {dimension_numbers = #tpu.dot_dimension_numbers<[1], [0], [0], [1], [0, 0, 1, 1], [], []>} : vector<2x16xf32>, vector<16x64xf32>, vector<2x64xf32> -> vector<2x64xf32>
    %741 = arith.addf %739, %740 : vector<2x64xf32>
    %742 = vector.extract_strided_slice %741 {offsets = [0, 0], sizes = [2, 16], strides = [1, 1]} : vector<2x64xf32> to vector<2x16xf32>
    %743 = arith.negf %742 : vector<2x16xf32>
    %744 = math.exp %743 : vector<2x16xf32>
    %cst_172 = arith.constant 1.000000e+00 : f32
    %745 = vector.broadcast %cst_172 : f32 to vector<2x16xf32>
    %746 = arith.addf %745, %744 : vector<2x16xf32>
    %747 = arith.divf %745, %746 : vector<2x16xf32>
    %748 = vector.extract_strided_slice %741 {offsets = [0, 16], sizes = [2, 16], strides = [1, 1]} : vector<2x64xf32> to vector<2x16xf32>
    %749 = arith.negf %748 : vector<2x16xf32>
    %750 = math.exp %749 : vector<2x16xf32>
    %cst_173 = arith.constant 1.000000e+00 : f32
    %751 = vector.broadcast %cst_173 : f32 to vector<2x16xf32>
    %752 = arith.addf %751, %750 : vector<2x16xf32>
    %753 = arith.divf %751, %752 : vector<2x16xf32>
    %754 = vector.extract_strided_slice %741 {offsets = [0, 32], sizes = [2, 16], strides = [1, 1]} : vector<2x64xf32> to vector<2x16xf32>
    %755 = math.tanh %754 : vector<2x16xf32>
    %756 = vector.extract_strided_slice %741 {offsets = [0, 48], sizes = [2, 16], strides = [1, 1]} : vector<2x64xf32> to vector<2x16xf32>
    %757 = arith.negf %756 : vector<2x16xf32>
    %758 = math.exp %757 : vector<2x16xf32>
    %cst_174 = arith.constant 1.000000e+00 : f32
    %759 = vector.broadcast %cst_174 : f32 to vector<2x16xf32>
    %760 = arith.addf %759, %758 : vector<2x16xf32>
    %761 = arith.divf %759, %760 : vector<2x16xf32>
    %762 = arith.mulf %753, %702 : vector<2x16xf32>
    %763 = arith.mulf %747, %755 : vector<2x16xf32>
    %764 = arith.addf %762, %763 : vector<2x16xf32>
    %765 = math.tanh %764 : vector<2x16xf32>
    %766 = arith.mulf %761, %765 : vector<2x16xf32>
    %767 = vector.extract_strided_slice %488 {offsets = [6, 0], sizes = [2, 64], strides = [1, 1]} : vector<16x64xf32> to vector<2x64xf32>
    %cst_175 = arith.constant dense<0.000000e+00> : vector<2x64xf32>
    %768 = tpu.matmul %732, %490, %cst_175 {dimension_numbers = #tpu.dot_dimension_numbers<[1], [0], [0], [1], [0, 0, 1, 1], [], []>} : vector<2x16xf32>, vector<16x64xf32>, vector<2x64xf32> -> vector<2x64xf32>
    %769 = arith.addf %767, %768 : vector<2x64xf32>
    %770 = vector.extract_strided_slice %769 {offsets = [0, 0], sizes = [2, 16], strides = [1, 1]} : vector<2x64xf32> to vector<2x16xf32>
    %771 = arith.negf %770 : vector<2x16xf32>
    %772 = math.exp %771 : vector<2x16xf32>
    %cst_176 = arith.constant 1.000000e+00 : f32
    %773 = vector.broadcast %cst_176 : f32 to vector<2x16xf32>
    %774 = arith.addf %773, %772 : vector<2x16xf32>
    %775 = arith.divf %773, %774 : vector<2x16xf32>
    %776 = vector.extract_strided_slice %769 {offsets = [0, 16], sizes = [2, 16], strides = [1, 1]} : vector<2x64xf32> to vector<2x16xf32>
    %777 = arith.negf %776 : vector<2x16xf32>
    %778 = math.exp %777 : vector<2x16xf32>
    %cst_177 = arith.constant 1.000000e+00 : f32
    %779 = vector.broadcast %cst_177 : f32 to vector<2x16xf32>
    %780 = arith.addf %779, %778 : vector<2x16xf32>
    %781 = arith.divf %779, %780 : vector<2x16xf32>
    %782 = vector.extract_strided_slice %769 {offsets = [0, 32], sizes = [2, 16], strides = [1, 1]} : vector<2x64xf32> to vector<2x16xf32>
    %783 = math.tanh %782 : vector<2x16xf32>
    %784 = vector.extract_strided_slice %769 {offsets = [0, 48], sizes = [2, 16], strides = [1, 1]} : vector<2x64xf32> to vector<2x16xf32>
    %785 = arith.negf %784 : vector<2x16xf32>
    %786 = math.exp %785 : vector<2x16xf32>
    %cst_178 = arith.constant 1.000000e+00 : f32
    %787 = vector.broadcast %cst_178 : f32 to vector<2x16xf32>
    %788 = arith.addf %787, %786 : vector<2x16xf32>
    %789 = arith.divf %787, %788 : vector<2x16xf32>
    %790 = arith.mulf %781, %730 : vector<2x16xf32>
    %791 = arith.mulf %775, %783 : vector<2x16xf32>
    %792 = arith.addf %790, %791 : vector<2x16xf32>
    %793 = math.tanh %792 : vector<2x16xf32>
    %794 = arith.mulf %789, %793 : vector<2x16xf32>
    %c0_179 = arith.constant 0 : index
    %c4_180 = arith.constant 4 : index
    %c0_181 = arith.constant 0 : index
    %795 = vector.load %arg26[%c0_179, %c4_180, %c0_181] : memref<2x8x32xf32, #tpu.memory_space<vmem>>, vector<2x1x16xf32>
    %796 = vector.shape_cast %795 : vector<2x1x16xf32> to vector<2x16xf32>
    %797 = vector.shape_cast %766 : vector<2x16xf32> to vector<2x1x16xf32>
    tpu.vector_store %arg26[%c0_179, %c4_180, %c0_181], %797 {strides = array<i32>} : memref<2x8x32xf32, #tpu.memory_space<vmem>>, vector<2x1x16xf32>,
    %c0_182 = arith.constant 0 : index
    %c3_183 = arith.constant 3 : index
    %c16_184 = arith.constant 16 : index
    %798 = vector.load %arg26[%c0_182, %c3_183, %c16_184] : memref<2x8x32xf32, #tpu.memory_space<vmem>>, vector<2x1x16xf32>
    %799 = vector.shape_cast %798 : vector<2x1x16xf32> to vector<2x16xf32>
    %800 = vector.shape_cast %794 : vector<2x16xf32> to vector<2x1x16xf32>
    tpu.vector_store %arg26[%c0_182, %c3_183, %c16_184], %800 {strides = array<i32>} : memref<2x8x32xf32, #tpu.memory_space<vmem>>, vector<2x1x16xf32>,
    %801 = vector.extract_strided_slice %483 {offsets = [10, 0], sizes = [2, 64], strides = [1, 1]} : vector<16x64xf32> to vector<2x64xf32>
    %cst_185 = arith.constant dense<0.000000e+00> : vector<2x64xf32>
    %802 = tpu.matmul %766, %489, %cst_185 {dimension_numbers = #tpu.dot_dimension_numbers<[1], [0], [0], [1], [0, 0, 1, 1], [], []>} : vector<2x16xf32>, vector<16x64xf32>, vector<2x64xf32> -> vector<2x64xf32>
    %803 = arith.addf %801, %802 : vector<2x64xf32>
    %804 = vector.extract_strided_slice %803 {offsets = [0, 0], sizes = [2, 16], strides = [1, 1]} : vector<2x64xf32> to vector<2x16xf32>
    %805 = arith.negf %804 : vector<2x16xf32>
    %806 = math.exp %805 : vector<2x16xf32>
    %cst_186 = arith.constant 1.000000e+00 : f32
    %807 = vector.broadcast %cst_186 : f32 to vector<2x16xf32>
    %808 = arith.addf %807, %806 : vector<2x16xf32>
    %809 = arith.divf %807, %808 : vector<2x16xf32>
    %810 = vector.extract_strided_slice %803 {offsets = [0, 16], sizes = [2, 16], strides = [1, 1]} : vector<2x64xf32> to vector<2x16xf32>
    %811 = arith.negf %810 : vector<2x16xf32>
    %812 = math.exp %811 : vector<2x16xf32>
    %cst_187 = arith.constant 1.000000e+00 : f32
    %813 = vector.broadcast %cst_187 : f32 to vector<2x16xf32>
    %814 = arith.addf %813, %812 : vector<2x16xf32>
    %815 = arith.divf %813, %814 : vector<2x16xf32>
    %816 = vector.extract_strided_slice %803 {offsets = [0, 32], sizes = [2, 16], strides = [1, 1]} : vector<2x64xf32> to vector<2x16xf32>
    %817 = math.tanh %816 : vector<2x16xf32>
    %818 = vector.extract_strided_slice %803 {offsets = [0, 48], sizes = [2, 16], strides = [1, 1]} : vector<2x64xf32> to vector<2x16xf32>
    %819 = arith.negf %818 : vector<2x16xf32>
    %820 = math.exp %819 : vector<2x16xf32>
    %cst_188 = arith.constant 1.000000e+00 : f32
    %821 = vector.broadcast %cst_188 : f32 to vector<2x16xf32>
    %822 = arith.addf %821, %820 : vector<2x16xf32>
    %823 = arith.divf %821, %822 : vector<2x16xf32>
    %824 = arith.mulf %815, %764 : vector<2x16xf32>
    %825 = arith.mulf %809, %817 : vector<2x16xf32>
    %826 = arith.addf %824, %825 : vector<2x16xf32>
    %827 = math.tanh %826 : vector<2x16xf32>
    %828 = arith.mulf %823, %827 : vector<2x16xf32>
    %829 = vector.extract_strided_slice %488 {offsets = [4, 0], sizes = [2, 64], strides = [1, 1]} : vector<16x64xf32> to vector<2x64xf32>
    %cst_189 = arith.constant dense<0.000000e+00> : vector<2x64xf32>
    %830 = tpu.matmul %794, %490, %cst_189 {dimension_numbers = #tpu.dot_dimension_numbers<[1], [0], [0], [1], [0, 0, 1, 1], [], []>} : vector<2x16xf32>, vector<16x64xf32>, vector<2x64xf32> -> vector<2x64xf32>
    %831 = arith.addf %829, %830 : vector<2x64xf32>
    %832 = vector.extract_strided_slice %831 {offsets = [0, 0], sizes = [2, 16], strides = [1, 1]} : vector<2x64xf32> to vector<2x16xf32>
    %833 = arith.negf %832 : vector<2x16xf32>
    %834 = math.exp %833 : vector<2x16xf32>
    %cst_190 = arith.constant 1.000000e+00 : f32
    %835 = vector.broadcast %cst_190 : f32 to vector<2x16xf32>
    %836 = arith.addf %835, %834 : vector<2x16xf32>
    %837 = arith.divf %835, %836 : vector<2x16xf32>
    %838 = vector.extract_strided_slice %831 {offsets = [0, 16], sizes = [2, 16], strides = [1, 1]} : vector<2x64xf32> to vector<2x16xf32>
    %839 = arith.negf %838 : vector<2x16xf32>
    %840 = math.exp %839 : vector<2x16xf32>
    %cst_191 = arith.constant 1.000000e+00 : f32
    %841 = vector.broadcast %cst_191 : f32 to vector<2x16xf32>
    %842 = arith.addf %841, %840 : vector<2x16xf32>
    %843 = arith.divf %841, %842 : vector<2x16xf32>
    %844 = vector.extract_strided_slice %831 {offsets = [0, 32], sizes = [2, 16], strides = [1, 1]} : vector<2x64xf32> to vector<2x16xf32>
    %845 = math.tanh %844 : vector<2x16xf32>
    %846 = vector.extract_strided_slice %831 {offsets = [0, 48], sizes = [2, 16], strides = [1, 1]} : vector<2x64xf32> to vector<2x16xf32>
    %847 = arith.negf %846 : vector<2x16xf32>
    %848 = math.exp %847 : vector<2x16xf32>
    %cst_192 = arith.constant 1.000000e+00 : f32
    %849 = vector.broadcast %cst_192 : f32 to vector<2x16xf32>
    %850 = arith.addf %849, %848 : vector<2x16xf32>
    %851 = arith.divf %849, %850 : vector<2x16xf32>
    %852 = arith.mulf %843, %792 : vector<2x16xf32>
    %853 = arith.mulf %837, %845 : vector<2x16xf32>
    %854 = arith.addf %852, %853 : vector<2x16xf32>
    %855 = math.tanh %854 : vector<2x16xf32>
    %856 = arith.mulf %851, %855 : vector<2x16xf32>
    %c0_193 = arith.constant 0 : index
    %c5_194 = arith.constant 5 : index
    %c0_195 = arith.constant 0 : index
    %857 = vector.load %arg26[%c0_193, %c5_194, %c0_195] : memref<2x8x32xf32, #tpu.memory_space<vmem>>, vector<2x1x16xf32>
    %858 = vector.shape_cast %857 : vector<2x1x16xf32> to vector<2x16xf32>
    %859 = vector.shape_cast %828 : vector<2x16xf32> to vector<2x1x16xf32>
    tpu.vector_store %arg26[%c0_193, %c5_194, %c0_195], %859 {strides = array<i32>} : memref<2x8x32xf32, #tpu.memory_space<vmem>>, vector<2x1x16xf32>,
    %c0_196 = arith.constant 0 : index
    %c2_197 = arith.constant 2 : index
    %c16_198 = arith.constant 16 : index
    %860 = vector.load %arg26[%c0_196, %c2_197, %c16_198] : memref<2x8x32xf32, #tpu.memory_space<vmem>>, vector<2x1x16xf32>
    %861 = vector.shape_cast %860 : vector<2x1x16xf32> to vector<2x16xf32>
    %862 = vector.shape_cast %856 : vector<2x16xf32> to vector<2x1x16xf32>
    tpu.vector_store %arg26[%c0_196, %c2_197, %c16_198], %862 {strides = array<i32>} : memref<2x8x32xf32, #tpu.memory_space<vmem>>, vector<2x1x16xf32>,
    %863 = vector.extract_strided_slice %483 {offsets = [12, 0], sizes = [2, 64], strides = [1, 1]} : vector<16x64xf32> to vector<2x64xf32>
    %cst_199 = arith.constant dense<0.000000e+00> : vector<2x64xf32>
    %864 = tpu.matmul %828, %489, %cst_199 {dimension_numbers = #tpu.dot_dimension_numbers<[1], [0], [0], [1], [0, 0, 1, 1], [], []>} : vector<2x16xf32>, vector<16x64xf32>, vector<2x64xf32> -> vector<2x64xf32>
    %865 = arith.addf %863, %864 : vector<2x64xf32>
    %866 = vector.extract_strided_slice %865 {offsets = [0, 0], sizes = [2, 16], strides = [1, 1]} : vector<2x64xf32> to vector<2x16xf32>
    %867 = arith.negf %866 : vector<2x16xf32>
    %868 = math.exp %867 : vector<2x16xf32>
    %cst_200 = arith.constant 1.000000e+00 : f32
    %869 = vector.broadcast %cst_200 : f32 to vector<2x16xf32>
    %870 = arith.addf %869, %868 : vector<2x16xf32>
    %871 = arith.divf %869, %870 : vector<2x16xf32>
    %872 = vector.extract_strided_slice %865 {offsets = [0, 16], sizes = [2, 16], strides = [1, 1]} : vector<2x64xf32> to vector<2x16xf32>
    %873 = arith.negf %872 : vector<2x16xf32>
    %874 = math.exp %873 : vector<2x16xf32>
    %cst_201 = arith.constant 1.000000e+00 : f32
    %875 = vector.broadcast %cst_201 : f32 to vector<2x16xf32>
    %876 = arith.addf %875, %874 : vector<2x16xf32>
    %877 = arith.divf %875, %876 : vector<2x16xf32>
    %878 = vector.extract_strided_slice %865 {offsets = [0, 32], sizes = [2, 16], strides = [1, 1]} : vector<2x64xf32> to vector<2x16xf32>
    %879 = math.tanh %878 : vector<2x16xf32>
    %880 = vector.extract_strided_slice %865 {offsets = [0, 48], sizes = [2, 16], strides = [1, 1]} : vector<2x64xf32> to vector<2x16xf32>
    %881 = arith.negf %880 : vector<2x16xf32>
    %882 = math.exp %881 : vector<2x16xf32>
    %cst_202 = arith.constant 1.000000e+00 : f32
    %883 = vector.broadcast %cst_202 : f32 to vector<2x16xf32>
    %884 = arith.addf %883, %882 : vector<2x16xf32>
    %885 = arith.divf %883, %884 : vector<2x16xf32>
    %886 = arith.mulf %877, %826 : vector<2x16xf32>
    %887 = arith.mulf %871, %879 : vector<2x16xf32>
    %888 = arith.addf %886, %887 : vector<2x16xf32>
    %889 = math.tanh %888 : vector<2x16xf32>
    %890 = arith.mulf %885, %889 : vector<2x16xf32>
    %891 = vector.extract_strided_slice %488 {offsets = [2, 0], sizes = [2, 64], strides = [1, 1]} : vector<16x64xf32> to vector<2x64xf32>
    %cst_203 = arith.constant dense<0.000000e+00> : vector<2x64xf32>
    %892 = tpu.matmul %856, %490, %cst_203 {dimension_numbers = #tpu.dot_dimension_numbers<[1], [0], [0], [1], [0, 0, 1, 1], [], []>} : vector<2x16xf32>, vector<16x64xf32>, vector<2x64xf32> -> vector<2x64xf32>
    %893 = arith.addf %891, %892 : vector<2x64xf32>
    %894 = vector.extract_strided_slice %893 {offsets = [0, 0], sizes = [2, 16], strides = [1, 1]} : vector<2x64xf32> to vector<2x16xf32>
    %895 = arith.negf %894 : vector<2x16xf32>
    %896 = math.exp %895 : vector<2x16xf32>
    %cst_204 = arith.constant 1.000000e+00 : f32
    %897 = vector.broadcast %cst_204 : f32 to vector<2x16xf32>
    %898 = arith.addf %897, %896 : vector<2x16xf32>
    %899 = arith.divf %897, %898 : vector<2x16xf32>
    %900 = vector.extract_strided_slice %893 {offsets = [0, 16], sizes = [2, 16], strides = [1, 1]} : vector<2x64xf32> to vector<2x16xf32>
    %901 = arith.negf %900 : vector<2x16xf32>
    %902 = math.exp %901 : vector<2x16xf32>
    %cst_205 = arith.constant 1.000000e+00 : f32
    %903 = vector.broadcast %cst_205 : f32 to vector<2x16xf32>
    %904 = arith.addf %903, %902 : vector<2x16xf32>
    %905 = arith.divf %903, %904 : vector<2x16xf32>
    %906 = vector.extract_strided_slice %893 {offsets = [0, 32], sizes = [2, 16], strides = [1, 1]} : vector<2x64xf32> to vector<2x16xf32>
    %907 = math.tanh %906 : vector<2x16xf32>
    %908 = vector.extract_strided_slice %893 {offsets = [0, 48], sizes = [2, 16], strides = [1, 1]} : vector<2x64xf32> to vector<2x16xf32>
    %909 = arith.negf %908 : vector<2x16xf32>
    %910 = math.exp %909 : vector<2x16xf32>
    %cst_206 = arith.constant 1.000000e+00 : f32
    %911 = vector.broadcast %cst_206 : f32 to vector<2x16xf32>
    %912 = arith.addf %911, %910 : vector<2x16xf32>
    %913 = arith.divf %911, %912 : vector<2x16xf32>
    %914 = arith.mulf %905, %854 : vector<2x16xf32>
    %915 = arith.mulf %899, %907 : vector<2x16xf32>
    %916 = arith.addf %914, %915 : vector<2x16xf32>
    %917 = math.tanh %916 : vector<2x16xf32>
    %918 = arith.mulf %913, %917 : vector<2x16xf32>
    %c0_207 = arith.constant 0 : index
    %c6_208 = arith.constant 6 : index
    %c0_209 = arith.constant 0 : index
    %919 = vector.load %arg26[%c0_207, %c6_208, %c0_209] : memref<2x8x32xf32, #tpu.memory_space<vmem>>, vector<2x1x16xf32>
    %920 = vector.shape_cast %919 : vector<2x1x16xf32> to vector<2x16xf32>
    %921 = vector.shape_cast %890 : vector<2x16xf32> to vector<2x1x16xf32>
    tpu.vector_store %arg26[%c0_207, %c6_208, %c0_209], %921 {strides = array<i32>} : memref<2x8x32xf32, #tpu.memory_space<vmem>>, vector<2x1x16xf32>,
    %c0_210 = arith.constant 0 : index
    %c1_211 = arith.constant 1 : index
    %c16_212 = arith.constant 16 : index
    %922 = vector.load %arg26[%c0_210, %c1_211, %c16_212] : memref<2x8x32xf32, #tpu.memory_space<vmem>>, vector<2x1x16xf32>
    %923 = vector.shape_cast %922 : vector<2x1x16xf32> to vector<2x16xf32>
    %924 = vector.shape_cast %918 : vector<2x16xf32> to vector<2x1x16xf32>
    tpu.vector_store %arg26[%c0_210, %c1_211, %c16_212], %924 {strides = array<i32>} : memref<2x8x32xf32, #tpu.memory_space<vmem>>, vector<2x1x16xf32>,
    %925 = vector.extract_strided_slice %483 {offsets = [14, 0], sizes = [2, 64], strides = [1, 1]} : vector<16x64xf32> to vector<2x64xf32>
    %cst_213 = arith.constant dense<0.000000e+00> : vector<2x64xf32>
    %926 = tpu.matmul %890, %489, %cst_213 {dimension_numbers = #tpu.dot_dimension_numbers<[1], [0], [0], [1], [0, 0, 1, 1], [], []>} : vector<2x16xf32>, vector<16x64xf32>, vector<2x64xf32> -> vector<2x64xf32>
    %927 = arith.addf %925, %926 : vector<2x64xf32>
    %928 = vector.extract_strided_slice %927 {offsets = [0, 0], sizes = [2, 16], strides = [1, 1]} : vector<2x64xf32> to vector<2x16xf32>
    %929 = arith.negf %928 : vector<2x16xf32>
    %930 = math.exp %929 : vector<2x16xf32>
    %cst_214 = arith.constant 1.000000e+00 : f32
    %931 = vector.broadcast %cst_214 : f32 to vector<2x16xf32>
    %932 = arith.addf %931, %930 : vector<2x16xf32>
    %933 = arith.divf %931, %932 : vector<2x16xf32>
    %934 = vector.extract_strided_slice %927 {offsets = [0, 16], sizes = [2, 16], strides = [1, 1]} : vector<2x64xf32> to vector<2x16xf32>
    %935 = arith.negf %934 : vector<2x16xf32>
    %936 = math.exp %935 : vector<2x16xf32>
    %cst_215 = arith.constant 1.000000e+00 : f32
    %937 = vector.broadcast %cst_215 : f32 to vector<2x16xf32>
    %938 = arith.addf %937, %936 : vector<2x16xf32>
    %939 = arith.divf %937, %938 : vector<2x16xf32>
    %940 = vector.extract_strided_slice %927 {offsets = [0, 32], sizes = [2, 16], strides = [1, 1]} : vector<2x64xf32> to vector<2x16xf32>
    %941 = math.tanh %940 : vector<2x16xf32>
    %942 = vector.extract_strided_slice %927 {offsets = [0, 48], sizes = [2, 16], strides = [1, 1]} : vector<2x64xf32> to vector<2x16xf32>
    %943 = arith.negf %942 : vector<2x16xf32>
    %944 = math.exp %943 : vector<2x16xf32>
    %cst_216 = arith.constant 1.000000e+00 : f32
    %945 = vector.broadcast %cst_216 : f32 to vector<2x16xf32>
    %946 = arith.addf %945, %944 : vector<2x16xf32>
    %947 = arith.divf %945, %946 : vector<2x16xf32>
    %948 = arith.mulf %939, %888 : vector<2x16xf32>
    %949 = arith.mulf %933, %941 : vector<2x16xf32>
    %950 = arith.addf %948, %949 : vector<2x16xf32>
    %951 = math.tanh %950 : vector<2x16xf32>
    %952 = arith.mulf %947, %951 : vector<2x16xf32>
    %953 = vector.extract_strided_slice %488 {offsets = [0, 0], sizes = [2, 64], strides = [1, 1]} : vector<16x64xf32> to vector<2x64xf32>
    %cst_217 = arith.constant dense<0.000000e+00> : vector<2x64xf32>
    %954 = tpu.matmul %918, %490, %cst_217 {dimension_numbers = #tpu.dot_dimension_numbers<[1], [0], [0], [1], [0, 0, 1, 1], [], []>} : vector<2x16xf32>, vector<16x64xf32>, vector<2x64xf32> -> vector<2x64xf32>
    %955 = arith.addf %953, %954 : vector<2x64xf32>
    %956 = vector.extract_strided_slice %955 {offsets = [0, 0], sizes = [2, 16], strides = [1, 1]} : vector<2x64xf32> to vector<2x16xf32>
    %957 = arith.negf %956 : vector<2x16xf32>
    %958 = math.exp %957 : vector<2x16xf32>
    %cst_218 = arith.constant 1.000000e+00 : f32
    %959 = vector.broadcast %cst_218 : f32 to vector<2x16xf32>
    %960 = arith.addf %959, %958 : vector<2x16xf32>
    %961 = arith.divf %959, %960 : vector<2x16xf32>
    %962 = vector.extract_strided_slice %955 {offsets = [0, 16], sizes = [2, 16], strides = [1, 1]} : vector<2x64xf32> to vector<2x16xf32>
    %963 = arith.negf %962 : vector<2x16xf32>
    %964 = math.exp %963 : vector<2x16xf32>
    %cst_219 = arith.constant 1.000000e+00 : f32
    %965 = vector.broadcast %cst_219 : f32 to vector<2x16xf32>
    %966 = arith.addf %965, %964 : vector<2x16xf32>
    %967 = arith.divf %965, %966 : vector<2x16xf32>
    %968 = vector.extract_strided_slice %955 {offsets = [0, 32], sizes = [2, 16], strides = [1, 1]} : vector<2x64xf32> to vector<2x16xf32>
    %969 = math.tanh %968 : vector<2x16xf32>
    %970 = vector.extract_strided_slice %955 {offsets = [0, 48], sizes = [2, 16], strides = [1, 1]} : vector<2x64xf32> to vector<2x16xf32>
    %971 = arith.negf %970 : vector<2x16xf32>
    %972 = math.exp %971 : vector<2x16xf32>
    %cst_220 = arith.constant 1.000000e+00 : f32
    %973 = vector.broadcast %cst_220 : f32 to vector<2x16xf32>
    %974 = arith.addf %973, %972 : vector<2x16xf32>
    %975 = arith.divf %973, %974 : vector<2x16xf32>
    %976 = arith.mulf %967, %916 : vector<2x16xf32>
    %977 = arith.mulf %961, %969 : vector<2x16xf32>
    %978 = arith.addf %976, %977 : vector<2x16xf32>
    %979 = math.tanh %978 : vector<2x16xf32>
    %980 = arith.mulf %975, %979 : vector<2x16xf32>
    %c0_221 = arith.constant 0 : index
    %c7_222 = arith.constant 7 : index
    %c0_223 = arith.constant 0 : index
    %981 = vector.load %arg26[%c0_221, %c7_222, %c0_223] : memref<2x8x32xf32, #tpu.memory_space<vmem>>, vector<2x1x16xf32>
    %982 = vector.shape_cast %981 : vector<2x1x16xf32> to vector<2x16xf32>
    %983 = vector.shape_cast %952 : vector<2x16xf32> to vector<2x1x16xf32>
    tpu.vector_store %arg26[%c0_221, %c7_222, %c0_223], %983 {strides = array<i32>} : memref<2x8x32xf32, #tpu.memory_space<vmem>>, vector<2x1x16xf32>,
    %c0_224 = arith.constant 0 : index
    %c0_225 = arith.constant 0 : index
    %c16_226 = arith.constant 16 : index
    %984 = vector.load %arg26[%c0_224, %c0_225, %c16_226] : memref<2x8x32xf32, #tpu.memory_space<vmem>>, vector<2x1x16xf32>
    %985 = vector.shape_cast %984 : vector<2x1x16xf32> to vector<2x16xf32>
    %986 = vector.shape_cast %980 : vector<2x16xf32> to vector<2x1x16xf32>
    tpu.vector_store %arg26[%c0_224, %c0_225, %c16_226], %986 {strides = array<i32>} : memref<2x8x32xf32, #tpu.memory_space<vmem>>, vector<2x1x16xf32>,
    %987 = tpu.concatenate %980, %952 in 1 : vector<2x16xf32>, vector<2x16xf32> -> vector<2x32xf32>
    %988 = tpu.concatenate %978, %950 in 1 : vector<2x16xf32>, vector<2x16xf32> -> vector<2x32xf32>
    %c0_227 = arith.constant 0 : index
    %c0_228 = arith.constant 0 : index
    %989 = vector.load %arg18[%c0_227, %c0_228] : memref<32x32xf32, #tpu.memory_space<vmem>>, vector<32x32xf32>
    %cst_229 = arith.constant dense<0.000000e+00> : vector<2x32xf32>
    %990 = tpu.matmul %987, %989, %cst_229 {dimension_numbers = #tpu.dot_dimension_numbers<[1], [0], [0], [1], [0, 0, 1, 1], [], []>} : vector<2x32xf32>, vector<32x32xf32>, vector<2x32xf32> -> vector<2x32xf32>
    %c0_230 = arith.constant 0 : index
    %c0_231 = arith.constant 0 : index
    %991 = vector.load %arg19[%c0_230, %c0_231] : memref<32x32xf32, #tpu.memory_space<vmem>>, vector<32x32xf32>
    %cst_232 = arith.constant dense<0.000000e+00> : vector<2x32xf32>
    %992 = tpu.matmul %988, %991, %cst_232 {dimension_numbers = #tpu.dot_dimension_numbers<[1], [0], [0], [1], [0, 0, 1, 1], [], []>} : vector<2x32xf32>, vector<32x32xf32>, vector<2x32xf32> -> vector<2x32xf32>
    %c0_233 = arith.constant 0 : index
    %c0_234 = arith.constant 0 : index
    %993 = vector.load %arg1[%c0_233, %c0_234] : memref<14x24xf32, #tpu.memory_space<vmem>>, vector<14x24xf32>
    %c0_235 = arith.constant 0 : index
    %c0_236 = arith.constant 0 : index
    %994 = vector.load %arg15[%c0_235, %c0_236] : memref<24x128xf32, #tpu.memory_space<vmem>>, vector<24x128xf32>
    %cst_237 = arith.constant dense<0.000000e+00> : vector<14x128xf32>
    %995 = tpu.matmul %993, %994, %cst_237 {dimension_numbers = #tpu.dot_dimension_numbers<[1], [0], [0], [1], [0, 0, 1, 1], [], []>} : vector<14x24xf32>, vector<24x128xf32>, vector<14x128xf32> -> vector<14x128xf32>
    %c0_238 = arith.constant 0 : index
    %c0_239 = arith.constant 0 : index
    %996 = vector.load %arg17[%c0_238, %c0_239] : memref<1x128xf32, #tpu.memory_space<vmem>>, vector<1x128xf32>
    %997 = vector.broadcast %996 : vector<1x128xf32> to vector<14x128xf32>
    %998 = arith.addf %995, %997 : vector<14x128xf32>
    %c0_240 = arith.constant 0 : index
    %c0_241 = arith.constant 0 : index
    %999 = vector.load %arg16[%c0_240, %c0_241] : memref<32x128xf32, #tpu.memory_space<vmem>>, vector<32x128xf32>
    %1000 = vector.extract_strided_slice %998 {offsets = [0, 0], sizes = [2, 128], strides = [1, 1]} : vector<14x128xf32> to vector<2x128xf32>
    %cst_242 = arith.constant dense<0.000000e+00> : vector<2x128xf32>
    %1001 = tpu.matmul %990, %999, %cst_242 {dimension_numbers = #tpu.dot_dimension_numbers<[1], [0], [0], [1], [0, 0, 1, 1], [], []>} : vector<2x32xf32>, vector<32x128xf32>, vector<2x128xf32> -> vector<2x128xf32>
    %1002 = arith.addf %1000, %1001 : vector<2x128xf32>
    %1003 = vector.extract_strided_slice %1002 {offsets = [0, 0], sizes = [2, 32], strides = [1, 1]} : vector<2x128xf32> to vector<2x32xf32>
    %1004 = arith.negf %1003 : vector<2x32xf32>
    %1005 = math.exp %1004 : vector<2x32xf32>
    %cst_243 = arith.constant 1.000000e+00 : f32
    %1006 = vector.broadcast %cst_243 : f32 to vector<2x32xf32>
    %1007 = arith.addf %1006, %1005 : vector<2x32xf32>
    %1008 = arith.divf %1006, %1007 : vector<2x32xf32>
    %1009 = vector.extract_strided_slice %1002 {offsets = [0, 32], sizes = [2, 32], strides = [1, 1]} : vector<2x128xf32> to vector<2x32xf32>
    %1010 = arith.negf %1009 : vector<2x32xf32>
    %1011 = math.exp %1010 : vector<2x32xf32>
    %cst_244 = arith.constant 1.000000e+00 : f32
    %1012 = vector.broadcast %cst_244 : f32 to vector<2x32xf32>
    %1013 = arith.addf %1012, %1011 : vector<2x32xf32>
    %1014 = arith.divf %1012, %1013 : vector<2x32xf32>
    %1015 = vector.extract_strided_slice %1002 {offsets = [0, 64], sizes = [2, 32], strides = [1, 1]} : vector<2x128xf32> to vector<2x32xf32>
    %1016 = math.tanh %1015 : vector<2x32xf32>
    %1017 = vector.extract_strided_slice %1002 {offsets = [0, 96], sizes = [2, 32], strides = [1, 1]} : vector<2x128xf32> to vector<2x32xf32>
    %1018 = arith.negf %1017 : vector<2x32xf32>
    %1019 = math.exp %1018 : vector<2x32xf32>
    %cst_245 = arith.constant 1.000000e+00 : f32
    %1020 = vector.broadcast %cst_245 : f32 to vector<2x32xf32>
    %1021 = arith.addf %1020, %1019 : vector<2x32xf32>
    %1022 = arith.divf %1020, %1021 : vector<2x32xf32>
    %1023 = arith.mulf %1014, %992 : vector<2x32xf32>
    %1024 = arith.mulf %1008, %1016 : vector<2x32xf32>
    %1025 = arith.addf %1023, %1024 : vector<2x32xf32>
    %1026 = math.tanh %1025 : vector<2x32xf32>
    %1027 = arith.mulf %1022, %1026 : vector<2x32xf32>
    %c0_246 = arith.constant 0 : index
    %c0_247 = arith.constant 0 : index
    %c0_248 = arith.constant 0 : index
    %1028 = vector.load %arg27[%c0_246, %c0_247, %c0_248] : memref<2x7x32xf32, #tpu.memory_space<vmem>>, vector<2x1x32xf32>
    %1029 = vector.shape_cast %1028 : vector<2x1x32xf32> to vector<2x32xf32>
    %1030 = vector.shape_cast %1027 : vector<2x32xf32> to vector<2x1x32xf32>
    tpu.vector_store %arg27[%c0_246, %c0_247, %c0_248], %1030 {strides = array<i32>} : memref<2x7x32xf32, #tpu.memory_space<vmem>>, vector<2x1x32xf32>,
    %1031 = vector.extract_strided_slice %998 {offsets = [2, 0], sizes = [2, 128], strides = [1, 1]} : vector<14x128xf32> to vector<2x128xf32>
    %cst_249 = arith.constant dense<0.000000e+00> : vector<2x128xf32>
    %1032 = tpu.matmul %1027, %999, %cst_249 {dimension_numbers = #tpu.dot_dimension_numbers<[1], [0], [0], [1], [0, 0, 1, 1], [], []>} : vector<2x32xf32>, vector<32x128xf32>, vector<2x128xf32> -> vector<2x128xf32>
    %1033 = arith.addf %1031, %1032 : vector<2x128xf32>
    %1034 = vector.extract_strided_slice %1033 {offsets = [0, 0], sizes = [2, 32], strides = [1, 1]} : vector<2x128xf32> to vector<2x32xf32>
    %1035 = arith.negf %1034 : vector<2x32xf32>
    %1036 = math.exp %1035 : vector<2x32xf32>
    %cst_250 = arith.constant 1.000000e+00 : f32
    %1037 = vector.broadcast %cst_250 : f32 to vector<2x32xf32>
    %1038 = arith.addf %1037, %1036 : vector<2x32xf32>
    %1039 = arith.divf %1037, %1038 : vector<2x32xf32>
    %1040 = vector.extract_strided_slice %1033 {offsets = [0, 32], sizes = [2, 32], strides = [1, 1]} : vector<2x128xf32> to vector<2x32xf32>
    %1041 = arith.negf %1040 : vector<2x32xf32>
    %1042 = math.exp %1041 : vector<2x32xf32>
    %cst_251 = arith.constant 1.000000e+00 : f32
    %1043 = vector.broadcast %cst_251 : f32 to vector<2x32xf32>
    %1044 = arith.addf %1043, %1042 : vector<2x32xf32>
    %1045 = arith.divf %1043, %1044 : vector<2x32xf32>
    %1046 = vector.extract_strided_slice %1033 {offsets = [0, 64], sizes = [2, 32], strides = [1, 1]} : vector<2x128xf32> to vector<2x32xf32>
    %1047 = math.tanh %1046 : vector<2x32xf32>
    %1048 = vector.extract_strided_slice %1033 {offsets = [0, 96], sizes = [2, 32], strides = [1, 1]} : vector<2x128xf32> to vector<2x32xf32>
    %1049 = arith.negf %1048 : vector<2x32xf32>
    %1050 = math.exp %1049 : vector<2x32xf32>
    %cst_252 = arith.constant 1.000000e+00 : f32
    %1051 = vector.broadcast %cst_252 : f32 to vector<2x32xf32>
    %1052 = arith.addf %1051, %1050 : vector<2x32xf32>
    %1053 = arith.divf %1051, %1052 : vector<2x32xf32>
    %1054 = arith.mulf %1045, %1025 : vector<2x32xf32>
    %1055 = arith.mulf %1039, %1047 : vector<2x32xf32>
    %1056 = arith.addf %1054, %1055 : vector<2x32xf32>
    %1057 = math.tanh %1056 : vector<2x32xf32>
    %1058 = arith.mulf %1053, %1057 : vector<2x32xf32>
    %c0_253 = arith.constant 0 : index
    %c1_254 = arith.constant 1 : index
    %c0_255 = arith.constant 0 : index
    %1059 = vector.load %arg27[%c0_253, %c1_254, %c0_255] : memref<2x7x32xf32, #tpu.memory_space<vmem>>, vector<2x1x32xf32>
    %1060 = vector.shape_cast %1059 : vector<2x1x32xf32> to vector<2x32xf32>
    %1061 = vector.shape_cast %1058 : vector<2x32xf32> to vector<2x1x32xf32>
    tpu.vector_store %arg27[%c0_253, %c1_254, %c0_255], %1061 {strides = array<i32>} : memref<2x7x32xf32, #tpu.memory_space<vmem>>, vector<2x1x32xf32>,
    %1062 = vector.extract_strided_slice %998 {offsets = [4, 0], sizes = [2, 128], strides = [1, 1]} : vector<14x128xf32> to vector<2x128xf32>
    %cst_256 = arith.constant dense<0.000000e+00> : vector<2x128xf32>
    %1063 = tpu.matmul %1058, %999, %cst_256 {dimension_numbers = #tpu.dot_dimension_numbers<[1], [0], [0], [1], [0, 0, 1, 1], [], []>} : vector<2x32xf32>, vector<32x128xf32>, vector<2x128xf32> -> vector<2x128xf32>
    %1064 = arith.addf %1062, %1063 : vector<2x128xf32>
    %1065 = vector.extract_strided_slice %1064 {offsets = [0, 0], sizes = [2, 32], strides = [1, 1]} : vector<2x128xf32> to vector<2x32xf32>
    %1066 = arith.negf %1065 : vector<2x32xf32>
    %1067 = math.exp %1066 : vector<2x32xf32>
    %cst_257 = arith.constant 1.000000e+00 : f32
    %1068 = vector.broadcast %cst_257 : f32 to vector<2x32xf32>
    %1069 = arith.addf %1068, %1067 : vector<2x32xf32>
    %1070 = arith.divf %1068, %1069 : vector<2x32xf32>
    %1071 = vector.extract_strided_slice %1064 {offsets = [0, 32], sizes = [2, 32], strides = [1, 1]} : vector<2x128xf32> to vector<2x32xf32>
    %1072 = arith.negf %1071 : vector<2x32xf32>
    %1073 = math.exp %1072 : vector<2x32xf32>
    %cst_258 = arith.constant 1.000000e+00 : f32
    %1074 = vector.broadcast %cst_258 : f32 to vector<2x32xf32>
    %1075 = arith.addf %1074, %1073 : vector<2x32xf32>
    %1076 = arith.divf %1074, %1075 : vector<2x32xf32>
    %1077 = vector.extract_strided_slice %1064 {offsets = [0, 64], sizes = [2, 32], strides = [1, 1]} : vector<2x128xf32> to vector<2x32xf32>
    %1078 = math.tanh %1077 : vector<2x32xf32>
    %1079 = vector.extract_strided_slice %1064 {offsets = [0, 96], sizes = [2, 32], strides = [1, 1]} : vector<2x128xf32> to vector<2x32xf32>
    %1080 = arith.negf %1079 : vector<2x32xf32>
    %1081 = math.exp %1080 : vector<2x32xf32>
    %cst_259 = arith.constant 1.000000e+00 : f32
    %1082 = vector.broadcast %cst_259 : f32 to vector<2x32xf32>
    %1083 = arith.addf %1082, %1081 : vector<2x32xf32>
    %1084 = arith.divf %1082, %1083 : vector<2x32xf32>
    %1085 = arith.mulf %1076, %1056 : vector<2x32xf32>
    %1086 = arith.mulf %1070, %1078 : vector<2x32xf32>
    %1087 = arith.addf %1085, %1086 : vector<2x32xf32>
    %1088 = math.tanh %1087 : vector<2x32xf32>
    %1089 = arith.mulf %1084, %1088 : vector<2x32xf32>
    %c0_260 = arith.constant 0 : index
    %c2_261 = arith.constant 2 : index
    %c0_262 = arith.constant 0 : index
    %1090 = vector.load %arg27[%c0_260, %c2_261, %c0_262] : memref<2x7x32xf32, #tpu.memory_space<vmem>>, vector<2x1x32xf32>
    %1091 = vector.shape_cast %1090 : vector<2x1x32xf32> to vector<2x32xf32>
    %1092 = vector.shape_cast %1089 : vector<2x32xf32> to vector<2x1x32xf32>
    tpu.vector_store %arg27[%c0_260, %c2_261, %c0_262], %1092 {strides = array<i32>} : memref<2x7x32xf32, #tpu.memory_space<vmem>>, vector<2x1x32xf32>,
    %1093 = vector.extract_strided_slice %998 {offsets = [6, 0], sizes = [2, 128], strides = [1, 1]} : vector<14x128xf32> to vector<2x128xf32>
    %cst_263 = arith.constant dense<0.000000e+00> : vector<2x128xf32>
    %1094 = tpu.matmul %1089, %999, %cst_263 {dimension_numbers = #tpu.dot_dimension_numbers<[1], [0], [0], [1], [0, 0, 1, 1], [], []>} : vector<2x32xf32>, vector<32x128xf32>, vector<2x128xf32> -> vector<2x128xf32>
    %1095 = arith.addf %1093, %1094 : vector<2x128xf32>
    %1096 = vector.extract_strided_slice %1095 {offsets = [0, 0], sizes = [2, 32], strides = [1, 1]} : vector<2x128xf32> to vector<2x32xf32>
    %1097 = arith.negf %1096 : vector<2x32xf32>
    %1098 = math.exp %1097 : vector<2x32xf32>
    %cst_264 = arith.constant 1.000000e+00 : f32
    %1099 = vector.broadcast %cst_264 : f32 to vector<2x32xf32>
    %1100 = arith.addf %1099, %1098 : vector<2x32xf32>
    %1101 = arith.divf %1099, %1100 : vector<2x32xf32>
    %1102 = vector.extract_strided_slice %1095 {offsets = [0, 32], sizes = [2, 32], strides = [1, 1]} : vector<2x128xf32> to vector<2x32xf32>
    %1103 = arith.negf %1102 : vector<2x32xf32>
    %1104 = math.exp %1103 : vector<2x32xf32>
    %cst_265 = arith.constant 1.000000e+00 : f32
    %1105 = vector.broadcast %cst_265 : f32 to vector<2x32xf32>
    %1106 = arith.addf %1105, %1104 : vector<2x32xf32>
    %1107 = arith.divf %1105, %1106 : vector<2x32xf32>
    %1108 = vector.extract_strided_slice %1095 {offsets = [0, 64], sizes = [2, 32], strides = [1, 1]} : vector<2x128xf32> to vector<2x32xf32>
    %1109 = math.tanh %1108 : vector<2x32xf32>
    %1110 = vector.extract_strided_slice %1095 {offsets = [0, 96], sizes = [2, 32], strides = [1, 1]} : vector<2x128xf32> to vector<2x32xf32>
    %1111 = arith.negf %1110 : vector<2x32xf32>
    %1112 = math.exp %1111 : vector<2x32xf32>
    %cst_266 = arith.constant 1.000000e+00 : f32
    %1113 = vector.broadcast %cst_266 : f32 to vector<2x32xf32>
    %1114 = arith.addf %1113, %1112 : vector<2x32xf32>
    %1115 = arith.divf %1113, %1114 : vector<2x32xf32>
    %1116 = arith.mulf %1107, %1087 : vector<2x32xf32>
    %1117 = arith.mulf %1101, %1109 : vector<2x32xf32>
    %1118 = arith.addf %1116, %1117 : vector<2x32xf32>
    %1119 = math.tanh %1118 : vector<2x32xf32>
    %1120 = arith.mulf %1115, %1119 : vector<2x32xf32>
    %c0_267 = arith.constant 0 : index
    %c3_268 = arith.constant 3 : index
    %c0_269 = arith.constant 0 : index
    %1121 = vector.load %arg27[%c0_267, %c3_268, %c0_269] : memref<2x7x32xf32, #tpu.memory_space<vmem>>, vector<2x1x32xf32>
    %1122 = vector.shape_cast %1121 : vector<2x1x32xf32> to vector<2x32xf32>
    %1123 = vector.shape_cast %1120 : vector<2x32xf32> to vector<2x1x32xf32>
    tpu.vector_store %arg27[%c0_267, %c3_268, %c0_269], %1123 {strides = array<i32>} : memref<2x7x32xf32, #tpu.memory_space<vmem>>, vector<2x1x32xf32>,
    %1124 = vector.extract_strided_slice %998 {offsets = [8, 0], sizes = [2, 128], strides = [1, 1]} : vector<14x128xf32> to vector<2x128xf32>
    %cst_270 = arith.constant dense<0.000000e+00> : vector<2x128xf32>
    %1125 = tpu.matmul %1120, %999, %cst_270 {dimension_numbers = #tpu.dot_dimension_numbers<[1], [0], [0], [1], [0, 0, 1, 1], [], []>} : vector<2x32xf32>, vector<32x128xf32>, vector<2x128xf32> -> vector<2x128xf32>
    %1126 = arith.addf %1124, %1125 : vector<2x128xf32>
    %1127 = vector.extract_strided_slice %1126 {offsets = [0, 0], sizes = [2, 32], strides = [1, 1]} : vector<2x128xf32> to vector<2x32xf32>
    %1128 = arith.negf %1127 : vector<2x32xf32>
    %1129 = math.exp %1128 : vector<2x32xf32>
    %cst_271 = arith.constant 1.000000e+00 : f32
    %1130 = vector.broadcast %cst_271 : f32 to vector<2x32xf32>
    %1131 = arith.addf %1130, %1129 : vector<2x32xf32>
    %1132 = arith.divf %1130, %1131 : vector<2x32xf32>
    %1133 = vector.extract_strided_slice %1126 {offsets = [0, 32], sizes = [2, 32], strides = [1, 1]} : vector<2x128xf32> to vector<2x32xf32>
    %1134 = arith.negf %1133 : vector<2x32xf32>
    %1135 = math.exp %1134 : vector<2x32xf32>
    %cst_272 = arith.constant 1.000000e+00 : f32
    %1136 = vector.broadcast %cst_272 : f32 to vector<2x32xf32>
    %1137 = arith.addf %1136, %1135 : vector<2x32xf32>
    %1138 = arith.divf %1136, %1137 : vector<2x32xf32>
    %1139 = vector.extract_strided_slice %1126 {offsets = [0, 64], sizes = [2, 32], strides = [1, 1]} : vector<2x128xf32> to vector<2x32xf32>
    %1140 = math.tanh %1139 : vector<2x32xf32>
    %1141 = vector.extract_strided_slice %1126 {offsets = [0, 96], sizes = [2, 32], strides = [1, 1]} : vector<2x128xf32> to vector<2x32xf32>
    %1142 = arith.negf %1141 : vector<2x32xf32>
    %1143 = math.exp %1142 : vector<2x32xf32>
    %cst_273 = arith.constant 1.000000e+00 : f32
    %1144 = vector.broadcast %cst_273 : f32 to vector<2x32xf32>
    %1145 = arith.addf %1144, %1143 : vector<2x32xf32>
    %1146 = arith.divf %1144, %1145 : vector<2x32xf32>
    %1147 = arith.mulf %1138, %1118 : vector<2x32xf32>
    %1148 = arith.mulf %1132, %1140 : vector<2x32xf32>
    %1149 = arith.addf %1147, %1148 : vector<2x32xf32>
    %1150 = math.tanh %1149 : vector<2x32xf32>
    %1151 = arith.mulf %1146, %1150 : vector<2x32xf32>
    %c0_274 = arith.constant 0 : index
    %c4_275 = arith.constant 4 : index
    %c0_276 = arith.constant 0 : index
    %1152 = vector.load %arg27[%c0_274, %c4_275, %c0_276] : memref<2x7x32xf32, #tpu.memory_space<vmem>>, vector<2x1x32xf32>
    %1153 = vector.shape_cast %1152 : vector<2x1x32xf32> to vector<2x32xf32>
    %1154 = vector.shape_cast %1151 : vector<2x32xf32> to vector<2x1x32xf32>
    tpu.vector_store %arg27[%c0_274, %c4_275, %c0_276], %1154 {strides = array<i32>} : memref<2x7x32xf32, #tpu.memory_space<vmem>>, vector<2x1x32xf32>,
    %1155 = vector.extract_strided_slice %998 {offsets = [10, 0], sizes = [2, 128], strides = [1, 1]} : vector<14x128xf32> to vector<2x128xf32>
    %cst_277 = arith.constant dense<0.000000e+00> : vector<2x128xf32>
    %1156 = tpu.matmul %1151, %999, %cst_277 {dimension_numbers = #tpu.dot_dimension_numbers<[1], [0], [0], [1], [0, 0, 1, 1], [], []>} : vector<2x32xf32>, vector<32x128xf32>, vector<2x128xf32> -> vector<2x128xf32>
    %1157 = arith.addf %1155, %1156 : vector<2x128xf32>
    %1158 = vector.extract_strided_slice %1157 {offsets = [0, 0], sizes = [2, 32], strides = [1, 1]} : vector<2x128xf32> to vector<2x32xf32>
    %1159 = arith.negf %1158 : vector<2x32xf32>
    %1160 = math.exp %1159 : vector<2x32xf32>
    %cst_278 = arith.constant 1.000000e+00 : f32
    %1161 = vector.broadcast %cst_278 : f32 to vector<2x32xf32>
    %1162 = arith.addf %1161, %1160 : vector<2x32xf32>
    %1163 = arith.divf %1161, %1162 : vector<2x32xf32>
    %1164 = vector.extract_strided_slice %1157 {offsets = [0, 32], sizes = [2, 32], strides = [1, 1]} : vector<2x128xf32> to vector<2x32xf32>
    %1165 = arith.negf %1164 : vector<2x32xf32>
    %1166 = math.exp %1165 : vector<2x32xf32>
    %cst_279 = arith.constant 1.000000e+00 : f32
    %1167 = vector.broadcast %cst_279 : f32 to vector<2x32xf32>
    %1168 = arith.addf %1167, %1166 : vector<2x32xf32>
    %1169 = arith.divf %1167, %1168 : vector<2x32xf32>
    %1170 = vector.extract_strided_slice %1157 {offsets = [0, 64], sizes = [2, 32], strides = [1, 1]} : vector<2x128xf32> to vector<2x32xf32>
    %1171 = math.tanh %1170 : vector<2x32xf32>
    %1172 = vector.extract_strided_slice %1157 {offsets = [0, 96], sizes = [2, 32], strides = [1, 1]} : vector<2x128xf32> to vector<2x32xf32>
    %1173 = arith.negf %1172 : vector<2x32xf32>
    %1174 = math.exp %1173 : vector<2x32xf32>
    %cst_280 = arith.constant 1.000000e+00 : f32
    %1175 = vector.broadcast %cst_280 : f32 to vector<2x32xf32>
    %1176 = arith.addf %1175, %1174 : vector<2x32xf32>
    %1177 = arith.divf %1175, %1176 : vector<2x32xf32>
    %1178 = arith.mulf %1169, %1149 : vector<2x32xf32>
    %1179 = arith.mulf %1163, %1171 : vector<2x32xf32>
    %1180 = arith.addf %1178, %1179 : vector<2x32xf32>
    %1181 = math.tanh %1180 : vector<2x32xf32>
    %1182 = arith.mulf %1177, %1181 : vector<2x32xf32>
    %c0_281 = arith.constant 0 : index
    %c5_282 = arith.constant 5 : index
    %c0_283 = arith.constant 0 : index
    %1183 = vector.load %arg27[%c0_281, %c5_282, %c0_283] : memref<2x7x32xf32, #tpu.memory_space<vmem>>, vector<2x1x32xf32>
    %1184 = vector.shape_cast %1183 : vector<2x1x32xf32> to vector<2x32xf32>
    %1185 = vector.shape_cast %1182 : vector<2x32xf32> to vector<2x1x32xf32>
    tpu.vector_store %arg27[%c0_281, %c5_282, %c0_283], %1185 {strides = array<i32>} : memref<2x7x32xf32, #tpu.memory_space<vmem>>, vector<2x1x32xf32>,
    %1186 = vector.extract_strided_slice %998 {offsets = [12, 0], sizes = [2, 128], strides = [1, 1]} : vector<14x128xf32> to vector<2x128xf32>
    %cst_284 = arith.constant dense<0.000000e+00> : vector<2x128xf32>
    %1187 = tpu.matmul %1182, %999, %cst_284 {dimension_numbers = #tpu.dot_dimension_numbers<[1], [0], [0], [1], [0, 0, 1, 1], [], []>} : vector<2x32xf32>, vector<32x128xf32>, vector<2x128xf32> -> vector<2x128xf32>
    %1188 = arith.addf %1186, %1187 : vector<2x128xf32>
    %1189 = vector.extract_strided_slice %1188 {offsets = [0, 0], sizes = [2, 32], strides = [1, 1]} : vector<2x128xf32> to vector<2x32xf32>
    %1190 = arith.negf %1189 : vector<2x32xf32>
    %1191 = math.exp %1190 : vector<2x32xf32>
    %cst_285 = arith.constant 1.000000e+00 : f32
    %1192 = vector.broadcast %cst_285 : f32 to vector<2x32xf32>
    %1193 = arith.addf %1192, %1191 : vector<2x32xf32>
    %1194 = arith.divf %1192, %1193 : vector<2x32xf32>
    %1195 = vector.extract_strided_slice %1188 {offsets = [0, 32], sizes = [2, 32], strides = [1, 1]} : vector<2x128xf32> to vector<2x32xf32>
    %1196 = arith.negf %1195 : vector<2x32xf32>
    %1197 = math.exp %1196 : vector<2x32xf32>
    %cst_286 = arith.constant 1.000000e+00 : f32
    %1198 = vector.broadcast %cst_286 : f32 to vector<2x32xf32>
    %1199 = arith.addf %1198, %1197 : vector<2x32xf32>
    %1200 = arith.divf %1198, %1199 : vector<2x32xf32>
    %1201 = vector.extract_strided_slice %1188 {offsets = [0, 64], sizes = [2, 32], strides = [1, 1]} : vector<2x128xf32> to vector<2x32xf32>
    %1202 = math.tanh %1201 : vector<2x32xf32>
    %1203 = vector.extract_strided_slice %1188 {offsets = [0, 96], sizes = [2, 32], strides = [1, 1]} : vector<2x128xf32> to vector<2x32xf32>
    %1204 = arith.negf %1203 : vector<2x32xf32>
    %1205 = math.exp %1204 : vector<2x32xf32>
    %cst_287 = arith.constant 1.000000e+00 : f32
    %1206 = vector.broadcast %cst_287 : f32 to vector<2x32xf32>
    %1207 = arith.addf %1206, %1205 : vector<2x32xf32>
    %1208 = arith.divf %1206, %1207 : vector<2x32xf32>
    %1209 = arith.mulf %1200, %1180 : vector<2x32xf32>
    %1210 = arith.mulf %1194, %1202 : vector<2x32xf32>
    %1211 = arith.addf %1209, %1210 : vector<2x32xf32>
    %1212 = math.tanh %1211 : vector<2x32xf32>
    %1213 = arith.mulf %1208, %1212 : vector<2x32xf32>
    %c0_288 = arith.constant 0 : index
    %c6_289 = arith.constant 6 : index
    %c0_290 = arith.constant 0 : index
    %1214 = vector.load %arg27[%c0_288, %c6_289, %c0_290] : memref<2x7x32xf32, #tpu.memory_space<vmem>>, vector<2x1x32xf32>
    %1215 = vector.shape_cast %1214 : vector<2x1x32xf32> to vector<2x32xf32>
    %1216 = vector.shape_cast %1213 : vector<2x32xf32> to vector<2x1x32xf32>
    tpu.vector_store %arg27[%c0_288, %c6_289, %c0_290], %1216 {strides = array<i32>} : memref<2x7x32xf32, #tpu.memory_space<vmem>>, vector<2x1x32xf32>,
    %c0_291 = arith.constant 0 : index
    %c0_292 = arith.constant 0 : index
    %1217 = vector.load %arg20[%c0_291, %c0_292] : memref<32x32xf32, #tpu.memory_space<vmem>>, vector<32x32xf32>
    %c0_293 = arith.constant 0 : index
    %c0_294 = arith.constant 0 : index
    %1218 = vector.load %arg21[%c0_293, %c0_294] : memref<64x32xf32, #tpu.memory_space<vmem>>, vector<64x32xf32>
    %c0_295 = arith.constant 0 : index
    %c0_296 = arith.constant 0 : index
    %1219 = vector.load %arg22[%c0_295, %c0_296] : memref<32x128xf32, #tpu.memory_space<vmem>>, vector<32x128xf32>
    %c0_297 = arith.constant 0 : index
    %c0_298 = arith.constant 0 : index
    %1220 = vector.load %arg23[%c0_297, %c0_298] : memref<1x128xf32, #tpu.memory_space<vmem>>, vector<1x128xf32>
    %c0_299 = arith.constant 0 : index
    %c0_300 = arith.constant 0 : index
    %c0_301 = arith.constant 0 : index
    %1221 = vector.load %arg27[%c0_299, %c0_300, %c0_301] : memref<2x7x32xf32, #tpu.memory_space<vmem>>, vector<1x7x32xf32>
    %1222 = vector.shape_cast %1221 : vector<1x7x32xf32> to vector<7x32xf32>
    %c0_302 = arith.constant 0 : index
    %c0_303 = arith.constant 0 : index
    %c0_304 = arith.constant 0 : index
    %1223 = vector.load %arg26[%c0_302, %c0_303, %c0_304] : memref<2x8x32xf32, #tpu.memory_space<vmem>>, vector<1x8x32xf32>
    %1224 = vector.shape_cast %1223 : vector<1x8x32xf32> to vector<8x32xf32>
    %c0_305 = arith.constant 0 : index
    %c0_306 = arith.constant 0 : index
    %c0_307 = arith.constant 0 : index
    %1225 = vector.load %arg2[%c0_305, %c0_306, %c0_307] : memref<2x1x8xf32, #tpu.memory_space<vmem>>, vector<1x1x8xf32>
    %1226 = vector.shape_cast %1225 : vector<1x1x8xf32> to vector<1x8xf32>
    %cst_308 = arith.constant dense<0.000000e+00> : vector<7x32xf32>
    %1227 = tpu.matmul %1222, %1217, %cst_308 {dimension_numbers = #tpu.dot_dimension_numbers<[1], [0], [0], [1], [0, 0, 1, 1], [], []>} : vector<7x32xf32>, vector<32x32xf32>, vector<7x32xf32> -> vector<7x32xf32>
    %cst_309 = arith.constant dense<0.000000e+00> : vector<7x8xf32>
    %1228 = tpu.matmul %1227, %1224, %cst_309 {dimension_numbers = #tpu.dot_dimension_numbers<[1], [1], [0], [0], [0, 0, 1, 0], [], []>} : vector<7x32xf32>, vector<8x32xf32>, vector<7x8xf32> -> vector<7x8xf32>
    %cst_310 = arith.constant 1.000000e+00 : f32
    %1229 = vector.broadcast %cst_310 : f32 to vector<1x8xf32>
    %1230 = arith.subf %1229, %1226 : vector<1x8xf32>
    %cst_311 = arith.constant -1.000000e+30 : f32
    %1231 = vector.broadcast %cst_311 : f32 to vector<1x8xf32>
    %1232 = arith.mulf %1230, %1231 : vector<1x8xf32>
    %1233 = vector.broadcast %1232 : vector<1x8xf32> to vector<7x8xf32>
    %1234 = arith.addf %1233, %1228 : vector<7x8xf32>
    %cst_312 = arith.constant dense<0xFF800000> : vector<7xf32>
    %1235 = vector.multi_reduction <maximumf>, %1234, %cst_312 [1] : vector<7x8xf32> to vector<7xf32>
    %1236 = vector.shape_cast %1235 : vector<7xf32> to vector<7x1xf32>
    %1237 = vector.broadcast %1236 : vector<7x1xf32> to vector<7x8xf32>
    %1238 = arith.subf %1234, %1237 : vector<7x8xf32>
    %1239 = math.exp %1238 : vector<7x8xf32>
    %cst_313 = arith.constant dense<0.000000e+00> : vector<7xf32>
    %1240 = vector.multi_reduction <add>, %1239, %cst_313 [1] : vector<7x8xf32> to vector<7xf32>
    %1241 = vector.shape_cast %1240 : vector<7xf32> to vector<7x1xf32>
    %1242 = vector.broadcast %1241 : vector<7x1xf32> to vector<7x8xf32>
    %1243 = arith.divf %1239, %1242 : vector<7x8xf32>
    %cst_314 = arith.constant dense<0.000000e+00> : vector<7x32xf32>
    %1244 = tpu.matmul %1243, %1224, %cst_314 {dimension_numbers = #tpu.dot_dimension_numbers<[1], [0], [0], [1], [0, 0, 1, 1], [], []>} : vector<7x8xf32>, vector<8x32xf32>, vector<7x32xf32> -> vector<7x32xf32>
    %1245 = tpu.concatenate %1244, %1222 in 1 : vector<7x32xf32>, vector<7x32xf32> -> vector<7x64xf32>
    %cst_315 = arith.constant dense<0.000000e+00> : vector<7x32xf32>
    %1246 = tpu.matmul %1245, %1218, %cst_315 {dimension_numbers = #tpu.dot_dimension_numbers<[1], [0], [0], [1], [0, 0, 1, 1], [], []>} : vector<7x64xf32>, vector<64x32xf32>, vector<7x32xf32> -> vector<7x32xf32>
    %1247 = math.tanh %1246 : vector<7x32xf32>
    %cst_316 = arith.constant dense<0.000000e+00> : vector<7x128xf32>
    %1248 = tpu.matmul %1247, %1219, %cst_316 {dimension_numbers = #tpu.dot_dimension_numbers<[1], [0], [0], [1], [0, 0, 1, 1], [], []>} : vector<7x32xf32>, vector<32x128xf32>, vector<7x128xf32> -> vector<7x128xf32>
    %1249 = vector.broadcast %1220 : vector<1x128xf32> to vector<7x128xf32>
    %1250 = arith.addf %1248, %1249 : vector<7x128xf32>
    %c0_317 = arith.constant 0 : index
    %c0_318 = arith.constant 0 : index
    %c0_319 = arith.constant 0 : index
    %1251 = vector.load %arg24[%c0_317, %c0_318, %c0_319] : memref<2x7x128xf32, #tpu.memory_space<vmem>>, vector<1x7x128xf32>
    %1252 = vector.shape_cast %1251 : vector<1x7x128xf32> to vector<7x128xf32>
    %1253 = vector.shape_cast %1250 : vector<7x128xf32> to vector<1x7x128xf32>
    tpu.vector_store %arg24[%c0_317, %c0_318, %c0_319], %1253 {strides = array<i32>} : memref<2x7x128xf32, #tpu.memory_space<vmem>>, vector<1x7x128xf32>,
    %c1_320 = arith.constant 1 : index
    %c0_321 = arith.constant 0 : index
    %c0_322 = arith.constant 0 : index
    %1254 = vector.load %arg27[%c1_320, %c0_321, %c0_322] : memref<2x7x32xf32, #tpu.memory_space<vmem>>, vector<1x7x32xf32>
    %1255 = vector.shape_cast %1254 : vector<1x7x32xf32> to vector<7x32xf32>
    %c1_323 = arith.constant 1 : index
    %c0_324 = arith.constant 0 : index
    %c0_325 = arith.constant 0 : index
    %1256 = vector.load %arg26[%c1_323, %c0_324, %c0_325] : memref<2x8x32xf32, #tpu.memory_space<vmem>>, vector<1x8x32xf32>
    %1257 = vector.shape_cast %1256 : vector<1x8x32xf32> to vector<8x32xf32>
    %c1_326 = arith.constant 1 : index
    %c0_327 = arith.constant 0 : index
    %c0_328 = arith.constant 0 : index
    %1258 = vector.load %arg2[%c1_326, %c0_327, %c0_328] : memref<2x1x8xf32, #tpu.memory_space<vmem>>, vector<1x1x8xf32>
    %1259 = vector.shape_cast %1258 : vector<1x1x8xf32> to vector<1x8xf32>
    %cst_329 = arith.constant dense<0.000000e+00> : vector<7x32xf32>
    %1260 = tpu.matmul %1255, %1217, %cst_329 {dimension_numbers = #tpu.dot_dimension_numbers<[1], [0], [0], [1], [0, 0, 1, 1], [], []>} : vector<7x32xf32>, vector<32x32xf32>, vector<7x32xf32> -> vector<7x32xf32>
    %cst_330 = arith.constant dense<0.000000e+00> : vector<7x8xf32>
    %1261 = tpu.matmul %1260, %1257, %cst_330 {dimension_numbers = #tpu.dot_dimension_numbers<[1], [1], [0], [0], [0, 0, 1, 0], [], []>} : vector<7x32xf32>, vector<8x32xf32>, vector<7x8xf32> -> vector<7x8xf32>
    %cst_331 = arith.constant 1.000000e+00 : f32
    %1262 = vector.broadcast %cst_331 : f32 to vector<1x8xf32>
    %1263 = arith.subf %1262, %1259 : vector<1x8xf32>
    %cst_332 = arith.constant -1.000000e+30 : f32
    %1264 = vector.broadcast %cst_332 : f32 to vector<1x8xf32>
    %1265 = arith.mulf %1263, %1264 : vector<1x8xf32>
    %1266 = vector.broadcast %1265 : vector<1x8xf32> to vector<7x8xf32>
    %1267 = arith.addf %1266, %1261 : vector<7x8xf32>
    %cst_333 = arith.constant dense<0xFF800000> : vector<7xf32>
    %1268 = vector.multi_reduction <maximumf>, %1267, %cst_333 [1] : vector<7x8xf32> to vector<7xf32>
    %1269 = vector.shape_cast %1268 : vector<7xf32> to vector<7x1xf32>
    %1270 = vector.broadcast %1269 : vector<7x1xf32> to vector<7x8xf32>
    %1271 = arith.subf %1267, %1270 : vector<7x8xf32>
    %1272 = math.exp %1271 : vector<7x8xf32>
    %cst_334 = arith.constant dense<0.000000e+00> : vector<7xf32>
    %1273 = vector.multi_reduction <add>, %1272, %cst_334 [1] : vector<7x8xf32> to vector<7xf32>
    %1274 = vector.shape_cast %1273 : vector<7xf32> to vector<7x1xf32>
    %1275 = vector.broadcast %1274 : vector<7x1xf32> to vector<7x8xf32>
    %1276 = arith.divf %1272, %1275 : vector<7x8xf32>
    %cst_335 = arith.constant dense<0.000000e+00> : vector<7x32xf32>
    %1277 = tpu.matmul %1276, %1257, %cst_335 {dimension_numbers = #tpu.dot_dimension_numbers<[1], [0], [0], [1], [0, 0, 1, 1], [], []>} : vector<7x8xf32>, vector<8x32xf32>, vector<7x32xf32> -> vector<7x32xf32>
    %1278 = tpu.concatenate %1277, %1255 in 1 : vector<7x32xf32>, vector<7x32xf32> -> vector<7x64xf32>
    %cst_336 = arith.constant dense<0.000000e+00> : vector<7x32xf32>
    %1279 = tpu.matmul %1278, %1218, %cst_336 {dimension_numbers = #tpu.dot_dimension_numbers<[1], [0], [0], [1], [0, 0, 1, 1], [], []>} : vector<7x64xf32>, vector<64x32xf32>, vector<7x32xf32> -> vector<7x32xf32>
    %1280 = math.tanh %1279 : vector<7x32xf32>
    %cst_337 = arith.constant dense<0.000000e+00> : vector<7x128xf32>
    %1281 = tpu.matmul %1280, %1219, %cst_337 {dimension_numbers = #tpu.dot_dimension_numbers<[1], [0], [0], [1], [0, 0, 1, 1], [], []>} : vector<7x32xf32>, vector<32x128xf32>, vector<7x128xf32> -> vector<7x128xf32>
    %1282 = vector.broadcast %1220 : vector<1x128xf32> to vector<7x128xf32>
    %1283 = arith.addf %1281, %1282 : vector<7x128xf32>
    %c1_338 = arith.constant 1 : index
    %c0_339 = arith.constant 0 : index
    %c0_340 = arith.constant 0 : index
    %1284 = vector.load %arg24[%c1_338, %c0_339, %c0_340] : memref<2x7x128xf32, #tpu.memory_space<vmem>>, vector<1x7x128xf32>
    %1285 = vector.shape_cast %1284 : vector<1x7x128xf32> to vector<7x128xf32>
    %1286 = vector.shape_cast %1283 : vector<7x128xf32> to vector<1x7x128xf32>
    tpu.vector_store %arg24[%c1_338, %c0_339, %c0_340], %1286 {strides = array<i32>} : memref<2x7x128xf32, #tpu.memory_space<vmem>>, vector<1x7x128xf32>,
    return
  }
}

</mosaic_0001>

<llo_original>
// kernel: forward.1
$region0: #{forward.1}
  #allocation0 [shape = 'u32[]', space=smem, size = 0x4, offset = 0x4, fixed_abs, tag = 'smem constant byte address 0x4 - core index']
  #allocation1 [shape = 'u32[144,128]{1,0:T(1,128)}', space=vmem, size = 0x12000, scoped, tag = 'internal scratch']
  #allocation2 [shape = 'f32[16,32]{1,0:T(8,128)}', space=vmem, size = 0x2000, scoped, tag = 'scratch operand']
  #allocation3 [shape = 'f32[2,8,32]{2,1,0:T(8,128)}', space=vmem, size = 0x2000, scoped, tag = 'scratch operand']
  #allocation4 [shape = 'f32[2,7,32]{2,1,0:T(8,128)}', space=vmem, size = 0x2000, scoped, tag = 'scratch operand']
  %s0 = inlined_call_operand.vmem [shape: f32[16,24], index: 0, kind: input, shape index: {}]
  %s1 = inlined_call_operand.vmem [shape: f32[14,24], index: 1, kind: input, shape index: {}]
  %s2 = inlined_call_operand.vmem [shape: f32[2,1,8], index: 2, kind: input, shape index: {}]
  %s3 = inlined_call_operand.vmem [shape: f32[24,64], index: 3, kind: input, shape index: {}]
  %s4 = inlined_call_operand.vmem [shape: f32[16,64], index: 4, kind: input, shape index: {}]
  %s5 = inlined_call_operand.vmem [shape: f32[1,64], index: 5, kind: input, shape index: {}]
  %s6 = inlined_call_operand.vmem [shape: f32[24,64], index: 6, kind: input, shape index: {}]
  %s7 = inlined_call_operand.vmem [shape: f32[16,64], index: 7, kind: input, shape index: {}]
  %s8 = inlined_call_operand.vmem [shape: f32[1,64], index: 8, kind: input, shape index: {}]
  %s9 = inlined_call_operand.vmem [shape: f32[32,64], index: 9, kind: input, shape index: {}]
  %s10 = inlined_call_operand.vmem [shape: f32[16,64], index: 10, kind: input, shape index: {}]
  %s11 = inlined_call_operand.vmem [shape: f32[1,64], index: 11, kind: input, shape index: {}]
  %s12 = inlined_call_operand.vmem [shape: f32[32,64], index: 12, kind: input, shape index: {}]
  %s13 = inlined_call_operand.vmem [shape: f32[16,64], index: 13, kind: input, shape index: {}]
  %s14 = inlined_call_operand.vmem [shape: f32[1,64], index: 14, kind: input, shape index: {}]
  %s15 = inlined_call_operand.vmem [shape: f32[24,128], index: 15, kind: input, shape index: {}]
  %s16 = inlined_call_operand.vmem [shape: f32[32,128], index: 16, kind: input, shape index: {}]
  %s17 = inlined_call_operand.vmem [shape: f32[1,128], index: 17, kind: input, shape index: {}]
  %s18 = inlined_call_operand.vmem [shape: f32[32,32], index: 18, kind: input, shape index: {}]
  %s19 = inlined_call_operand.vmem [shape: f32[32,32], index: 19, kind: input, shape index: {}]
  %s20 = inlined_call_operand.vmem [shape: f32[32,32], index: 20, kind: input, shape index: {}]
  %s21 = inlined_call_operand.vmem [shape: f32[64,32], index: 21, kind: input, shape index: {}]
  %s22 = inlined_call_operand.vmem [shape: f32[32,128], index: 22, kind: input, shape index: {}]
  %s23 = inlined_call_operand.vmem [shape: f32[1,128], index: 23, kind: input, shape index: {}]
  %s24 = inlined_call_operand.vmem [shape: f32[2,7,128], index: 24, kind: output, shape index: {}]
  %s25 = sld [smem:[#allocation0]]
  $region106: #{forward.1} parent=0
    _
  %s27 = ssub.s32 1, %s25
  %s28 = scalar_select 0, %s27, %s25
  // Predicated region
  $region2: #{forward.1} parent=0 // pred_check
    _
  $region3: #{forward.1} parent=0 // pred_check_branch
    %30 = sbr.rel (0) target = $region5
  $region4: #{forward.1} parent=0 // pred_region
    _
  $region5: #{forward.1} parent=0 // pred_fallthru
    _
  // Predicated region
  $region6: #{forward.1} parent=0 // pred_check
    _
  $region7: #{forward.1} parent=0 // pred_check_branch
    %32 = sbr.rel (0) target = $region9
  $region8: #{forward.1} parent=0 // pred_region
    _
  $region9: #{forward.1} parent=0 // pred_fallthru
    _
  // Predicated region
  $region10: #{forward.1} parent=0 // pred_check
    _
  $region11: #{forward.1} parent=0 // pred_check_branch
    %34 = sbr.rel (0) target = $region13
  $region12: #{forward.1} parent=0 // pred_region
    _
  $region13: #{forward.1} parent=0 // pred_fallthru
    _
  // Predicated region
  $region14: #{forward.1} parent=0 // pred_check
    _
  $region15: #{forward.1} parent=0 // pred_check_branch
    %36 = sbr.rel (0) target = $region17
  $region16: #{forward.1} parent=0 // pred_region
    _
  $region17: #{forward.1} parent=0 // pred_fallthru
    _
  // Predicated region
  $region18: #{forward.1} parent=0 // pred_check
    _
  $region19: #{forward.1} parent=0 // pred_check_branch
    %38 = sbr.rel (0) target = $region21
  $region20: #{forward.1} parent=0 // pred_region
    _
  $region21: #{forward.1} parent=0 // pred_fallthru
    _
  // Predicated region
  $region22: #{forward.1} parent=0 // pred_check
    _
  $region23: #{forward.1} parent=0 // pred_check_branch
    %40 = sbr.rel (0) target = $region25
  $region24: #{forward.1} parent=0 // pred_region
    _
  $region25: #{forward.1} parent=0 // pred_fallthru
    _
  // Predicated region
  $region26: #{forward.1} parent=0 // pred_check
    _
  $region27: #{forward.1} parent=0 // pred_check_branch
    %42 = sbr.rel (0) target = $region29
  $region28: #{forward.1} parent=0 // pred_region
    _
  $region29: #{forward.1} parent=0 // pred_fallthru
    _
  // Predicated region
  $region30: #{forward.1} parent=0 // pred_check
    _
  $region31: #{forward.1} parent=0 // pred_check_branch
    %44 = sbr.rel (0) target = $region33
  $region32: #{forward.1} parent=0 // pred_region
    _
  $region33: #{forward.1} parent=0 // pred_fallthru
    _
  // Predicated region
  $region34: #{forward.1} parent=0 // pred_check
    _
  $region35: #{forward.1} parent=0 // pred_check_branch
    %46 = sbr.rel (0) target = $region37
  $region36: #{forward.1} parent=0 // pred_region
    _
  $region37: #{forward.1} parent=0 // pred_fallthru
    _
  // Predicated region
  $region38: #{forward.1} parent=0 // pred_check
    _
  $region39: #{forward.1} parent=0 // pred_check_branch
    %48 = sbr.rel (0) target = $region41
  $region40: #{forward.1} parent=0 // pred_region
    _
  $region41: #{forward.1} parent=0 // pred_fallthru
    _
  // Predicated region
  $region42: #{forward.1} parent=0 // pred_check
    _
  $region43: #{forward.1} parent=0 // pred_check_branch
    %50 = sbr.rel (0) target = $region45
  $region44: #{forward.1} parent=0 // pred_region
    _
  $region45: #{forward.1} parent=0 // pred_fallthru
    _
  // Predicated region
  $region46: #{forward.1} parent=0 // pred_check
    _
  $region47: #{forward.1} parent=0 // pred_check_branch
    %52 = sbr.rel (0) target = $region49
  $region48: #{forward.1} parent=0 // pred_region
    _
  $region49: #{forward.1} parent=0 // pred_fallthru
    _
  // Predicated region
  $region50: #{forward.1} parent=0 // pred_check
    _
  $region51: #{forward.1} parent=0 // pred_check_branch
    %54 = sbr.rel (0) target = $region53
  $region52: #{forward.1} parent=0 // pred_region
    _
  $region53: #{forward.1} parent=0 // pred_fallthru
    _
  // Predicated region
  $region54: #{forward.1} parent=0 // pred_check
    _
  $region55: #{forward.1} parent=0 // pred_check_branch
    %56 = sbr.rel (0) target = $region57
  $region56: #{forward.1} parent=0 // pred_region
    _
  $region57: #{forward.1} parent=0 // pred_fallthru
    _
  // Predicated region
  $region58: #{forward.1} parent=0 // pred_check
    _
  $region59: #{forward.1} parent=0 // pred_check_branch
    %58 = sbr.rel (0) target = $region61
  $region60: #{forward.1} parent=0 // pred_region
    _
  $region61: #{forward.1} parent=0 // pred_fallthru
    _
  // Predicated region
  $region62: #{forward.1} parent=0 // pred_check
    _
  $region63: #{forward.1} parent=0 // pred_check_branch
    %60 = sbr.rel (0) target = $region65
  $region64: #{forward.1} parent=0 // pred_region
    _
  $region65: #{forward.1} parent=0 // pred_fallthru
    _
  // Predicated region
  $region66: #{forward.1} parent=0 // pred_check
    _
  $region67: #{forward.1} parent=0 // pred_check_branch
    %62 = sbr.rel (0) target = $region69
  $region68: #{forward.1} parent=0 // pred_region
    _
  $region69: #{forward.1} parent=0 // pred_fallthru
    _
  // Predicated region
  $region70: #{forward.1} parent=0 // pred_check
    _
  $region71: #{forward.1} parent=0 // pred_check_branch
    %64 = sbr.rel (0) target = $region73
  $region72: #{forward.1} parent=0 // pred_region
    _
  $region73: #{forward.1} parent=0 // pred_fallthru
    _
  // Predicated region
  $region74: #{forward.1} parent=0 // pred_check
    _
  $region75: #{forward.1} parent=0 // pred_check_branch
    %66 = sbr.rel (0) target = $region77
  $region76: #{forward.1} parent=0 // pred_region
    _
  $region77: #{forward.1} parent=0 // pred_fallthru
    _
  // Predicated region
  $region78: #{forward.1} parent=0 // pred_check
    _
  $region79: #{forward.1} parent=0 // pred_check_branch
    %68 = sbr.rel (0) target = $region81
  $region80: #{forward.1} parent=0 // pred_region
    _
  $region81: #{forward.1} parent=0 // pred_fallthru
    _
  // Predicated region
  $region82: #{forward.1} parent=0 // pred_check
    _
  $region83: #{forward.1} parent=0 // pred_check_branch
    %70 = sbr.rel (0) target = $region85
  $region84: #{forward.1} parent=0 // pred_region
    _
  $region85: #{forward.1} parent=0 // pred_fallthru
    _
  // Predicated region
  $region86: #{forward.1} parent=0 // pred_check
    _
  $region87: #{forward.1} parent=0 // pred_check_branch
    %72 = sbr.rel (0) target = $region89
  $region88: #{forward.1} parent=0 // pred_region
    _
  $region89: #{forward.1} parent=0 // pred_fallthru
    _
  // Predicated region
  $region90: #{forward.1} parent=0 // pred_check
    _
  $region91: #{forward.1} parent=0 // pred_check_branch
    %74 = sbr.rel (0) target = $region93
  $region92: #{forward.1} parent=0 // pred_region
    _
  $region93: #{forward.1} parent=0 // pred_fallthru
    _
  // Predicated region
  $region94: #{forward.1} parent=0 // pred_check
    _
  $region95: #{forward.1} parent=0 // pred_check_branch
    %76 = sbr.rel (0) target = $region97
  $region96: #{forward.1} parent=0 // pred_region
    _
  $region97: #{forward.1} parent=0 // pred_fallthru
    _
  %v77 = vld [vmem:[%s0] sm:$0xff]
  %v78 = vld [vmem:[%s0 + $0x8] sm:$0xff]
  %v79 = vld [vmem:[%s3] sm:$0xff]
  %v80 = vld [vmem:[%s3 + $0x8] sm:$0xff]
  %v81 = vld [vmem:[%s3 + $0x10] sm:$0xff]
  %v82 = vld [vmem:[%s5] sm:$0x1]
  %v84 = vlaneseq
  %v85 = vshrl.u32 %v84, 7
  %v86 = vsub.s32 0, %v85
  %v87 = vrot.slane %v82, %v86
  %vm89 = vcmask 195584
  %v91 = vsel %vm89, %v77, 0
  %v94 = vsel %vm89, %v78, 0
  %96 = vmatprep.subr.mxu0 0.0
  %97 = vmatpush1.msra.mxu0 0.0
  %98 = vmatprep.subr.mxu0 0.0
  %99 = vmatpush1.msra.mxu0 0.0
  %100 = vmatprep.subr.mxu0 0.0
  %101 = vmatpush1.msra.mxu0 0.0
  %102 = vmatprep.subr.mxu0 0.0
  %103 = vmatpush1.msra.mxu0 0.0
  %104 = vmatprep.subr.mxu0 0.0
  %105 = vmatpush1.msra.mxu0 0.0
  %106 = vmatprep.subr.mxu0 0.0
  %107 = vmatpush1.msra.mxu0 0.0
  %108 = vmatprep.subr.mxu0 0.0
  %109 = vmatpush1.msra.mxu0 0.0
  %110 = vmatprep.subr.mxu0 0.0
  %111 = vmatpush1.msra.mxu0 0.0
  %112 = vmatprep.subr.mxu0 0.0
  %113 = vmatpush1.msra.mxu0 0.0
  %114 = vmatprep.subr.mxu0 0.0
  %115 = vmatpush1.msra.mxu0 0.0
  %116 = vmatprep.subr.mxu0 0.0
  %117 = vmatpush1.msra.mxu0 0.0
  %118 = vmatprep.subr.mxu0 0.0
  %119 = vmatpush1.msra.mxu0 0.0
  %120 = vmatprep.subr.mxu0 0.0
  %121 = vmatpush1.msra.mxu0 0.0
  %122 = vmatprep.subr.mxu0 0.0
  %123 = vmatpush1.msra.mxu0 %v81
  %124 = vmatprep.subr.mxu0 0.0
  %125 = vmatpush1.msra.mxu0 %v80
  %126 = vmatprep.subr.mxu0 0.0
  %127 = vmatpush1.msra.mxu0 %v79
  %128 = vmatprep.subr.mxu0 0.0
  %129 = vmatpush2.msra.mxu0 0.0
  %130 = vmatprep.subr.mxu0 0.0
  %131 = vmatpush2.msra.mxu0 0.0
  %132 = vmatprep.subr.mxu0 0.0
  %133 = vmatpush2.msra.mxu0 0.0
  %134 = vmatprep.subr.mxu0 0.0
  %135 = vmatpush2.msra.mxu0 0.0
  %136 = vmatprep.subr.mxu0 0.0
  %137 = vmatpush2.msra.mxu0 0.0
  %138 = vmatprep.subr.mxu0 0.0
  %139 = vmatpush2.msra.mxu0 0.0
  %140 = vmatprep.subr.mxu0 0.0
  %141 = vmatpush2.msra.mxu0 0.0
  %142 = vmatprep.subr.mxu0 0.0
  %143 = vmatpush2.msra.mxu0 0.0
  %144 = vmatprep.subr.mxu0 0.0
  %145 = vmatpush2.msra.mxu0 0.0
  %146 = vmatprep.subr.mxu0 0.0
  %147 = vmatpush2.msra.mxu0 0.0
  %148 = vmatprep.subr.mxu0 0.0
  %149 = vmatpush2.msra.mxu0 0.0
  %150 = vmatprep.subr.mxu0 0.0
  %151 = vmatpush2.msra.mxu0 0.0
  %152 = vmatprep.subr.mxu0 0.0
  %153 = vmatpush2.msra.mxu0 0.0
  %154 = vmatprep.subr.mxu0 0.0
  %155 = vmatpush2.msra.mxu0 0.0
  %156 = vmatprep.subr.mxu0 0.0
  %157 = vmatpush2.msra.mxu0 0.0
  %158 = vmatprep.subr.mxu0 0.0
  %159 = vmatpush2.msra.mxu0 0.0
  %160 = vmatprep.mubr.f32.mxu0 0.0
  %161 = vmatmul.mubr.f32.gmra.mxu0 %v91
  %v162 = vpop.f32.mrf.mxu0
  %v163 = vadd.f32 %v87, %v162
  %v164 = vpop.f32.mrf.mxu0
  %165 = vmatprep.mubr.f32.mxu0 0.0
  %166 = vmatmul.mubr.f32.gmra.mxu0 %v94
  %v167 = vpop.f32.mrf.mxu0
  %v168 = vadd.f32 %v87, %v167
  %v169 = vpop.f32.mrf.mxu0
  %170 = vdwg.mxu0
  %v171 = vld [vmem:[%s6] sm:$0xff]
  %v172 = vld [vmem:[%s6 + $0x8] sm:$0xff]
  %v173 = vld [vmem:[%s6 + $0x10] sm:$0xff]
  %v174 = vld [vmem:[%s8] sm:$0x1]
  %v176 = vlaneseq
  %v177 = vshrl.u32 %v176, 7
  %v178 = vsub.s32 0, %v177
  %v179 = vrot.slane %v174, %v178
  %181 = vmatprep.subr.mxu0 0.0
  %182 = vmatpush1.msra.mxu0 0.0
  %183 = vmatprep.subr.mxu0 0.0
  %184 = vmatpush1.msra.mxu0 0.0
  %185 = vmatprep.subr.mxu0 0.0
  %186 = vmatpush1.msra.mxu0 0.0
  %187 = vmatprep.subr.mxu0 0.0
  %188 = vmatpush1.msra.mxu0 0.0
  %189 = vmatprep.subr.mxu0 0.0
  %190 = vmatpush1.msra.mxu0 0.0
  %191 = vmatprep.subr.mxu0 0.0
  %192 = vmatpush1.msra.mxu0 0.0
  %193 = vmatprep.subr.mxu0 0.0
  %194 = vmatpush1.msra.mxu0 0.0
  %195 = vmatprep.subr.mxu0 0.0
  %196 = vmatpush1.msra.mxu0 0.0
  %197 = vmatprep.subr.mxu0 0.0
  %198 = vmatpush1.msra.mxu0 0.0
  %199 = vmatprep.subr.mxu0 0.0
  %200 = vmatpush1.msra.mxu0 0.0
  %201 = vmatprep.subr.mxu0 0.0
  %202 = vmatpush1.msra.mxu0 0.0
  %203 = vmatprep.subr.mxu0 0.0
  %204 = vmatpush1.msra.mxu0 0.0
  %205 = vmatprep.subr.mxu0 0.0
  %206 = vmatpush1.msra.mxu0 0.0
  %207 = vmatprep.subr.mxu0 0.0
  %208 = vmatpush1.msra.mxu0 %v173
  %209 = vmatprep.subr.mxu0 0.0
  %210 = vmatpush1.msra.mxu0 %v172
  %211 = vmatprep.subr.mxu0 0.0
  %212 = vmatpush1.msra.mxu0 %v171
  %213 = vmatprep.subr.mxu0 0.0
  %214 = vmatpush2.msra.mxu0 0.0
  %215 = vmatprep.subr.mxu0 0.0
  %216 = vmatpush2.msra.mxu0 0.0
  %217 = vmatprep.subr.mxu0 0.0
  %218 = vmatpush2.msra.mxu0 0.0
  %219 = vmatprep.subr.mxu0 0.0
  %220 = vmatpush2.msra.mxu0 0.0
  %221 = vmatprep.subr.mxu0 0.0
  %222 = vmatpush2.msra.mxu0 0.0
  %223 = vmatprep.subr.mxu0 0.0
  %224 = vmatpush2.msra.mxu0 0.0
  %225 = vmatprep.subr.mxu0 0.0
  %226 = vmatpush2.msra.mxu0 0.0
  %227 = vmatprep.subr.mxu0 0.0
  %228 = vmatpush2.msra.mxu0 0.0
  %229 = vmatprep.subr.mxu0 0.0
  %230 = vmatpush2.msra.mxu0 0.0
  %231 = vmatprep.subr.mxu0 0.0
  %232 = vmatpush2.msra.mxu0 0.0
  %233 = vmatprep.subr.mxu0 0.0
  %234 = vmatpush2.msra.mxu0 0.0
  %235 = vmatprep.subr.mxu0 0.0
  %236 = vmatpush2.msra.mxu0 0.0
  %237 = vmatprep.subr.mxu0 0.0
  %238 = vmatpush2.msra.mxu0 0.0
  %239 = vmatprep.subr.mxu0 0.0
  %240 = vmatpush2.msra.mxu0 0.0
  %241 = vmatprep.subr.mxu0 0.0
  %242 = vmatpush2.msra.mxu0 0.0
  %243 = vmatprep.subr.mxu0 0.0
  %244 = vmatpush2.msra.mxu0 0.0
  %245 = vmatprep.mubr.f32.mxu0 0.0
  %246 = vmatmul.mubr.f32.gmra.mxu0 %v91
  %v247 = vpop.f32.mrf.mxu0
  %v248 = vadd.f32 %v179, %v247
  %v249 = vpop.f32.mrf.mxu0
  %250 = vmatprep.mubr.f32.mxu0 0.0
  %251 = vmatmul.mubr.f32.gmra.mxu0 %v94
  %v252 = vpop.f32.mrf.mxu0
  %v253 = vadd.f32 %v179, %v252
  %v254 = vpop.f32.mrf.mxu0
  %255 = vdwg.mxu0
  %v256 = vld [vmem:[%s4] sm:$0xff]
  %v257 = vld [vmem:[%s4 + $0x8] sm:$0xff]
  %v258 = vld [vmem:[%s7] sm:$0xff]
  %v259 = vld [vmem:[%s7 + $0x8] sm:$0xff]
  %vm260 = vcmask 130048
  %v262 = vsel %vm260, 0.0, 0
  %264 = vmatprep.subr.mxu0 0.0
  %265 = vmatpush1.msra.mxu0 0.0
  %266 = vmatprep.subr.mxu0 0.0
  %267 = vmatpush1.msra.mxu0 0.0
  %268 = vmatprep.subr.mxu0 0.0
  %269 = vmatpush1.msra.mxu0 0.0
  %270 = vmatprep.subr.mxu0 0.0
  %271 = vmatpush1.msra.mxu0 0.0
  %272 = vmatprep.subr.mxu0 0.0
  %273 = vmatpush1.msra.mxu0 0.0
  %274 = vmatprep.subr.mxu0 0.0
  %275 = vmatpush1.msra.mxu0 0.0
  %276 = vmatprep.subr.mxu0 0.0
  %277 = vmatpush1.msra.mxu0 0.0
  %278 = vmatprep.subr.mxu0 0.0
  %279 = vmatpush1.msra.mxu0 0.0
  %280 = vmatprep.subr.mxu0 0.0
  %281 = vmatpush1.msra.mxu0 0.0
  %282 = vmatprep.subr.mxu0 0.0
  %283 = vmatpush1.msra.mxu0 0.0
  %284 = vmatprep.subr.mxu0 0.0
  %285 = vmatpush1.msra.mxu0 0.0
  %286 = vmatprep.subr.mxu0 0.0
  %287 = vmatpush1.msra.mxu0 0.0
  %288 = vmatprep.subr.mxu0 0.0
  %289 = vmatpush1.msra.mxu0 0.0
  %290 = vmatprep.subr.mxu0 0.0
  %291 = vmatpush1.msra.mxu0 0.0
  %292 = vmatprep.subr.mxu0 0.0
  %293 = vmatpush1.msra.mxu0 %v257
  %294 = vmatprep.subr.mxu0 0.0
  %295 = vmatpush1.msra.mxu0 %v256
  %296 = vmatprep.subr.mxu0 0.0
  %297 = vmatpush2.msra.mxu0 0.0
  %298 = vmatprep.subr.mxu0 0.0
  %299 = vmatpush2.msra.mxu0 0.0
  %300 = vmatprep.subr.mxu0 0.0
  %301 = vmatpush2.msra.mxu0 0.0
  %302 = vmatprep.subr.mxu0 0.0
  %303 = vmatpush2.msra.mxu0 0.0
  %304 = vmatprep.subr.mxu0 0.0
  %305 = vmatpush2.msra.mxu0 0.0
  %306 = vmatprep.subr.mxu0 0.0
  %307 = vmatpush2.msra.mxu0 0.0
  %308 = vmatprep.subr.mxu0 0.0
  %309 = vmatpush2.msra.mxu0 0.0
  %310 = vmatprep.subr.mxu0 0.0
  %311 = vmatpush2.msra.mxu0 0.0
  %312 = vmatprep.subr.mxu0 0.0
  %313 = vmatpush2.msra.mxu0 0.0
  %314 = vmatprep.subr.mxu0 0.0
  %315 = vmatpush2.msra.mxu0 0.0
  %316 = vmatprep.subr.mxu0 0.0
  %317 = vmatpush2.msra.mxu0 0.0
  %318 = vmatprep.subr.mxu0 0.0
  %319 = vmatpush2.msra.mxu0 0.0
  %320 = vmatprep.subr.mxu0 0.0
  %321 = vmatpush2.msra.mxu0 0.0
  %322 = vmatprep.subr.mxu0 0.0
  %323 = vmatpush2.msra.mxu0 0.0
  %324 = vmatprep.subr.mxu0 0.0
  %325 = vmatpush2.msra.mxu0 0.0
  %326 = vmatprep.subr.mxu0 0.0
  %327 = vmatpush2.msra.mxu0 0.0
  %328 = vmatprep.mubr.f32.mxu0 0.0
  %329 = vmatmul.mubr.f32.gmra.mxu0 %v262
  %v330 = vpop.f32.mrf.mxu0
  %v331 = vadd.f32 0.0, %v330
  %v332 = vpop.f32.mrf.mxu0
  %333 = vdwg.mxu0
  %v334 = vadd.f32 %v163, %v331
  %v335 = vxor.u32 %v334, 2147483648
  %v336 = vmul.f32 %v335, 1.442695
  %v337 = vpow.pop %v336
  %v338 = vadd.f32 %v337, 1.0
  %v339 = vrcp.pop %v338
  %v340 = vmul.f32 1.0, %v339
  %v341 = vtanh.pop %v334
  %v342 = vmul.f32 %v340, 0.0
  %344 = vrot.lane.b32.xlu0 %v341, 96
  %v345 = vpop.permute.xlu0 %344
  %v347 = vmul.f32 %v340, %v345
  %349 = vrot.lane.b32.xlu0 %v347, 16
  %v350 = vpop.permute.xlu0 %349
  %v352 = vadd.f32 %v342, %v350
  %v353 = vtanh.pop %v352
  %355 = vrot.lane.b32.xlu0 %v353, 32
  %v356 = vpop.permute.xlu0 %355
  %v358 = vmul.f32 %v340, %v356
  %359 = vmatprep.subr.mxu0 0.0
  %360 = vmatpush1.msra.mxu0 0.0
  %361 = vmatprep.subr.mxu0 0.0
  %362 = vmatpush1.msra.mxu0 0.0
  %363 = vmatprep.subr.mxu0 0.0
  %364 = vmatpush1.msra.mxu0 0.0
  %365 = vmatprep.subr.mxu0 0.0
  %366 = vmatpush1.msra.mxu0 0.0
  %367 = vmatprep.subr.mxu0 0.0
  %368 = vmatpush1.msra.mxu0 0.0
  %369 = vmatprep.subr.mxu0 0.0
  %370 = vmatpush1.msra.mxu0 0.0
  %371 = vmatprep.subr.mxu0 0.0
  %372 = vmatpush1.msra.mxu0 0.0
  %373 = vmatprep.subr.mxu0 0.0
  %374 = vmatpush1.msra.mxu0 0.0
  %375 = vmatprep.subr.mxu0 0.0
  %376 = vmatpush1.msra.mxu0 0.0
  %377 = vmatprep.subr.mxu0 0.0
  %378 = vmatpush1.msra.mxu0 0.0
  %379 = vmatprep.subr.mxu0 0.0
  %380 = vmatpush1.msra.mxu0 0.0
  %381 = vmatprep.subr.mxu0 0.0
  %382 = vmatpush1.msra.mxu0 0.0
  %383 = vmatprep.subr.mxu0 0.0
  %384 = vmatpush1.msra.mxu0 0.0
  %385 = vmatprep.subr.mxu0 0.0
  %386 = vmatpush1.msra.mxu0 0.0
  %387 = vmatprep.subr.mxu0 0.0
  %388 = vmatpush1.msra.mxu0 %v259
  %389 = vmatprep.subr.mxu0 0.0
  %390 = vmatpush1.msra.mxu0 %v258
  %391 = vmatprep.subr.mxu0 0.0
  %392 = vmatpush2.msra.mxu0 0.0
  %393 = vmatprep.subr.mxu0 0.0
  %394 = vmatpush2.msra.mxu0 0.0
  %395 = vmatprep.subr.mxu0 0.0
  %396 = vmatpush2.msra.mxu0 0.0
  %397 = vmatprep.subr.mxu0 0.0
  %398 = vmatpush2.msra.mxu0 0.0
  %399 = vmatprep.subr.mxu0 0.0
  %400 = vmatpush2.msra.mxu0 0.0
  %401 = vmatprep.subr.mxu0 0.0
  %402 = vmatpush2.msra.mxu0 0.0
  %403 = vmatprep.subr.mxu0 0.0
  %404 = vmatpush2.msra.mxu0 0.0
  %405 = vmatprep.subr.mxu0 0.0
  %406 = vmatpush2.msra.mxu0 0.0
  %407 = vmatprep.subr.mxu0 0.0
  %408 = vmatpush2.msra.mxu0 0.0
  %409 = vmatprep.subr.mxu0 0.0
  %410 = vmatpush2.msra.mxu0 0.0
  %411 = vmatprep.subr.mxu0 0.0
  %412 = vmatpush2.msra.mxu0 0.0
  %413 = vmatprep.subr.mxu0 0.0
  %414 = vmatpush2.msra.mxu0 0.0
  %415 = vmatprep.subr.mxu0 0.0
  %416 = vmatpush2.msra.mxu0 0.0
  %417 = vmatprep.subr.mxu0 0.0
  %418 = vmatpush2.msra.mxu0 0.0
  %419 = vmatprep.subr.mxu0 0.0
  %420 = vmatpush2.msra.mxu0 0.0
  %421 = vmatprep.subr.mxu0 0.0
  %422 = vmatpush2.msra.mxu0 0.0
  %423 = vmatprep.mubr.f32.mxu0 0.0
  %424 = vmatmul.mubr.f32.gmra.mxu0 %v262
  %v425 = vpop.f32.mrf.mxu0
  %v426 = vadd.f32 0.0, %v425
  %v427 = vpop.f32.mrf.mxu0
  %428 = vdwg.mxu0
  %v430 = vrot.slane %v426, 2
  %v432 = vadd.f32 %v253, %v430
  %v433 = vxor.u32 %v432, 2147483648
  %v434 = vmul.f32 %v433, 1.442695
  %v435 = vpow.pop %v434
  %v436 = vadd.f32 %v435, 1.0
  %v437 = vrcp.pop %v436
  %v438 = vmul.f32 1.0, %v437
  %v439 = vtanh.pop %v432
  %v440 = vmul.f32 %v438, 0.0
  %442 = vrot.lane.b32.xlu0 %v439, 96
  %v443 = vpop.permute.xlu0 %442
  %v445 = vmul.f32 %v438, %v443
  %447 = vrot.lane.b32.xlu0 %v445, 16
  %v448 = vpop.permute.xlu0 %447
  %v450 = vadd.f32 %v440, %v448
  %v451 = vtanh.pop %v450
  %453 = vrot.lane.b32.xlu0 %v451, 32
  %v454 = vpop.permute.xlu0 %453
  %v456 = vmul.f32 %v438, %v454
  %458 = vrot.lane.b32.xlu0 %v358, 80
  %v459 = vpop.permute.xlu0 %458
  %vm461 = vcmask 123904
  %462 = vst.msk [vmem:[#allocation2] sm:$0x3] %vm461, %v459
  %464 = vrot.lane.b32.xlu0 %v456, 96
  %v465 = vpop.permute.xlu0 %464
  %vm467 = vcmask 261254
  %468 = vst.msk [vmem:[#allocation2 + $0x8] sm:$0xc0] %vm467, %v465
  %v469 = vsel %vm260, %v459, 0
  %471 = vmatprep.subr.mxu0 0.0
  %472 = vmatpush1.msra.mxu0 0.0
  %473 = vmatprep.subr.mxu0 0.0
  %474 = vmatpush1.msra.mxu0 0.0
  %475 = vmatprep.subr.mxu0 0.0
  %476 = vmatpush1.msra.mxu0 0.0
  %477 = vmatprep.subr.mxu0 0.0
  %478 = vmatpush1.msra.mxu0 0.0
  %479 = vmatprep.subr.mxu0 0.0
  %480 = vmatpush1.msra.mxu0 0.0
  %481 = vmatprep.subr.mxu0 0.0
  %482 = vmatpush1.msra.mxu0 0.0
  %483 = vmatprep.subr.mxu0 0.0
  %484 = vmatpush1.msra.mxu0 0.0
  %485 = vmatprep.subr.mxu0 0.0
  %486 = vmatpush1.msra.mxu0 0.0
  %487 = vmatprep.subr.mxu0 0.0
  %488 = vmatpush1.msra.mxu0 0.0
  %489 = vmatprep.subr.mxu0 0.0
  %490 = vmatpush1.msra.mxu0 0.0
  %491 = vmatprep.subr.mxu0 0.0
  %492 = vmatpush1.msra.mxu0 0.0
  %493 = vmatprep.subr.mxu0 0.0
  %494 = vmatpush1.msra.mxu0 0.0
  %495 = vmatprep.subr.mxu0 0.0
  %496 = vmatpush1.msra.mxu0 0.0
  %497 = vmatprep.subr.mxu0 0.0
  %498 = vmatpush1.msra.mxu0 0.0
  %499 = vmatprep.subr.mxu0 0.0
  %500 = vmatpush1.msra.mxu0 %v257
  %501 = vmatprep.subr.mxu0 0.0
  %502 = vmatpush1.msra.mxu0 %v256
  %503 = vmatprep.subr.mxu0 0.0
  %504 = vmatpush2.msra.mxu0 0.0
  %505 = vmatprep.subr.mxu0 0.0
  %506 = vmatpush2.msra.mxu0 0.0
  %507 = vmatprep.subr.mxu0 0.0
  %508 = vmatpush2.msra.mxu0 0.0
  %509 = vmatprep.subr.mxu0 0.0
  %510 = vmatpush2.msra.mxu0 0.0
  %511 = vmatprep.subr.mxu0 0.0
  %512 = vmatpush2.msra.mxu0 0.0
  %513 = vmatprep.subr.mxu0 0.0
  %514 = vmatpush2.msra.mxu0 0.0
  %515 = vmatprep.subr.mxu0 0.0
  %516 = vmatpush2.msra.mxu0 0.0
  %517 = vmatprep.subr.mxu0 0.0
  %518 = vmatpush2.msra.mxu0 0.0
  %519 = vmatprep.subr.mxu0 0.0
  %520 = vmatpush2.msra.mxu0 0.0
  %521 = vmatprep.subr.mxu0 0.0
  %522 = vmatpush2.msra.mxu0 0.0
  %523 = vmatprep.subr.mxu0 0.0
  %524 = vmatpush2.msra.mxu0 0.0
  %525 = vmatprep.subr.mxu0 0.0
  %526 = vmatpush2.msra.mxu0 0.0
  %527 = vmatprep.subr.mxu0 0.0
  %528 = vmatpush2.msra.mxu0 0.0
  %529 = vmatprep.subr.mxu0 0.0
  %530 = vmatpush2.msra.mxu0 0.0
  %531 = vmatprep.subr.mxu0 0.0
  %532 = vmatpush2.msra.mxu0 0.0
  %533 = vmatprep.subr.mxu0 0.0
  %534 = vmatpush2.msra.mxu0 0.0
  %535 = vmatprep.mubr.f32.mxu0 0.0
  %536 = vmatmul.mubr.f32.gmra.mxu0 %v469
  %v537 = vpop.f32.mrf.mxu0
  %v538 = vadd.f32 0.0, %v537
  %v539 = vpop.f32.mrf.mxu0
  %540 = vdwg.mxu0
  %v542 = vrot.slane %v538, 6
  %v544 = vadd.f32 %v163, %v542
  %v545 = vxor.u32 %v544, 2147483648
  %v546 = vmul.f32 %v545, 1.442695
  %v547 = vpow.pop %v546
  %v548 = vadd.f32 %v547, 1.0
  %v549 = vrcp.pop %v548
  %v550 = vmul.f32 1.0, %v549
  %v551 = vtanh.pop %v544
  %v553 = vrot.slane %v352, 6
  %v555 = vmul.f32 %v550, %v553
  %557 = vrot.lane.b32.xlu0 %v551, 96
  %v558 = vpop.permute.xlu0 %557
  %v560 = vmul.f32 %v550, %v558
  %562 = vrot.lane.b32.xlu0 %v560, 16
  %v563 = vpop.permute.xlu0 %562
  %v565 = vadd.f32 %v555, %v563
  %v566 = vtanh.pop %v565
  %568 = vrot.lane.b32.xlu0 %v566, 32
  %v569 = vpop.permute.xlu0 %568
  %v571 = vmul.f32 %v550, %v569
  %v572 = vrot.slane %v456, 6
  %573 = vrot.lane.b32.xlu0 %v572, 80
  %v574 = vpop.permute.xlu0 %573
  %v575 = vsel %vm260, %v574, 0
  %577 = vmatprep.subr.mxu0 0.0
  %578 = vmatpush1.msra.mxu0 0.0
  %579 = vmatprep.subr.mxu0 0.0
  %580 = vmatpush1.msra.mxu0 0.0
  %581 = vmatprep.subr.mxu0 0.0
  %582 = vmatpush1.msra.mxu0 0.0
  %583 = vmatprep.subr.mxu0 0.0
  %584 = vmatpush1.msra.mxu0 0.0
  %585 = vmatprep.subr.mxu0 0.0
  %586 = vmatpush1.msra.mxu0 0.0
  %587 = vmatprep.subr.mxu0 0.0
  %588 = vmatpush1.msra.mxu0 0.0
  %589 = vmatprep.subr.mxu0 0.0
  %590 = vmatpush1.msra.mxu0 0.0
  %591 = vmatprep.subr.mxu0 0.0
  %592 = vmatpush1.msra.mxu0 0.0
  %593 = vmatprep.subr.mxu0 0.0
  %594 = vmatpush1.msra.mxu0 0.0
  %595 = vmatprep.subr.mxu0 0.0
  %596 = vmatpush1.msra.mxu0 0.0
  %597 = vmatprep.subr.mxu0 0.0
  %598 = vmatpush1.msra.mxu0 0.0
  %599 = vmatprep.subr.mxu0 0.0
  %600 = vmatpush1.msra.mxu0 0.0
  %601 = vmatprep.subr.mxu0 0.0
  %602 = vmatpush1.msra.mxu0 0.0
  %603 = vmatprep.subr.mxu0 0.0
  %604 = vmatpush1.msra.mxu0 0.0
  %605 = vmatprep.subr.mxu0 0.0
  %606 = vmatpush1.msra.mxu0 %v259
  %607 = vmatprep.subr.mxu0 0.0
  %608 = vmatpush1.msra.mxu0 %v258
  %609 = vmatprep.subr.mxu0 0.0
  %610 = vmatpush2.msra.mxu0 0.0
  %611 = vmatprep.subr.mxu0 0.0
  %612 = vmatpush2.msra.mxu0 0.0
  %613 = vmatprep.subr.mxu0 0.0
  %614 = vmatpush2.msra.mxu0 0.0
  %615 = vmatprep.subr.mxu0 0.0
  %616 = vmatpush2.msra.mxu0 0.0
  %617 = vmatprep.subr.mxu0 0.0
  %618 = vmatpush2.msra.mxu0 0.0
  %619 = vmatprep.subr.mxu0 0.0
  %620 = vmatpush2.msra.mxu0 0.0
  %621 = vmatprep.subr.mxu0 0.0
  %622 = vmatpush2.msra.mxu0 0.0
  %623 = vmatprep.subr.mxu0 0.0
  %624 = vmatpush2.msra.mxu0 0.0
  %625 = vmatprep.subr.mxu0 0.0
  %626 = vmatpush2.msra.mxu0 0.0
  %627 = vmatprep.subr.mxu0 0.0
  %628 = vmatpush2.msra.mxu0 0.0
  %629 = vmatprep.subr.mxu0 0.0
  %630 = vmatpush2.msra.mxu0 0.0
  %631 = vmatprep.subr.mxu0 0.0
  %632 = vmatpush2.msra.mxu0 0.0
  %633 = vmatprep.subr.mxu0 0.0
  %634 = vmatpush2.msra.mxu0 0.0
  %635 = vmatprep.subr.mxu0 0.0
  %636 = vmatpush2.msra.mxu0 0.0
  %637 = vmatprep.subr.mxu0 0.0
  %638 = vmatpush2.msra.mxu0 0.0
  %639 = vmatprep.subr.mxu0 0.0
  %640 = vmatpush2.msra.mxu0 0.0
  %641 = vmatprep.mubr.f32.mxu0 0.0
  %642 = vmatmul.mubr.f32.gmra.mxu0 %v575
  %v643 = vpop.f32.mrf.mxu0
  %v644 = vadd.f32 0.0, %v643
  %v645 = vpop.f32.mrf.mxu0
  %646 = vdwg.mxu0
  %v648 = vrot.slane %v644, 4
  %v650 = vadd.f32 %v253, %v648
  %v651 = vxor.u32 %v650, 2147483648
  %v652 = vmul.f32 %v651, 1.442695
  %v653 = vpow.pop %v652
  %v654 = vadd.f32 %v653, 1.0
  %v655 = vrcp.pop %v654
  %v656 = vmul.f32 1.0, %v655
  %v657 = vtanh.pop %v650
  %v659 = vrot.slane %v450, 2
  %v661 = vmul.f32 %v656, %v659
  %663 = vrot.lane.b32.xlu0 %v657, 96
  %v664 = vpop.permute.xlu0 %663
  %v666 = vmul.f32 %v656, %v664
  %668 = vrot.lane.b32.xlu0 %v666, 16
  %v669 = vpop.permute.xlu0 %668
  %v671 = vadd.f32 %v661, %v669
  %v672 = vtanh.pop %v671
  %674 = vrot.lane.b32.xlu0 %v672, 32
  %v675 = vpop.permute.xlu0 %674
  %v677 = vmul.f32 %v656, %v675
  %679 = vrot.lane.b32.xlu0 %v571, 80
  %v680 = vpop.permute.xlu0 %679
  %vm682 = vcmask 125954
  %683 = vst.msk [vmem:[#allocation2] sm:$0xc] %vm682, %v680
  %685 = vrot.lane.b32.xlu0 %v677, 96
  %v686 = vpop.permute.xlu0 %685
  %vm688 = vcmask 259204
  %689 = vst.msk [vmem:[#allocation2 + $0x8] sm:$0x30] %vm688, %v686
  %v690 = vrot.slane %v571, 2
  %691 = vrot.lane.b32.xlu0 %v690, 80
  %v692 = vpop.permute.xlu0 %691
  %v693 = vsel %vm260, %v692, 0
  %695 = vmatprep.subr.mxu0 0.0
  %696 = vmatpush1.msra.mxu0 0.0
  %697 = vmatprep.subr.mxu0 0.0
  %698 = vmatpush1.msra.mxu0 0.0
  %699 = vmatprep.subr.mxu0 0.0
  %700 = vmatpush1.msra.mxu0 0.0
  %701 = vmatprep.subr.mxu0 0.0
  %702 = vmatpush1.msra.mxu0 0.0
  %703 = vmatprep.subr.mxu0 0.0
  %704 = vmatpush1.msra.mxu0 0.0
  %705 = vmatprep.subr.mxu0 0.0
  %706 = vmatpush1.msra.mxu0 0.0
  %707 = vmatprep.subr.mxu0 0.0
  %708 = vmatpush1.msra.mxu0 0.0
  %709 = vmatprep.subr.mxu0 0.0
  %710 = vmatpush1.msra.mxu0 0.0
  %711 = vmatprep.subr.mxu0 0.0
  %712 = vmatpush1.msra.mxu0 0.0
  %713 = vmatprep.subr.mxu0 0.0
  %714 = vmatpush1.msra.mxu0 0.0
  %715 = vmatprep.subr.mxu0 0.0
  %716 = vmatpush1.msra.mxu0 0.0
  %717 = vmatprep.subr.mxu0 0.0
  %718 = vmatpush1.msra.mxu0 0.0
  %719 = vmatprep.subr.mxu0 0.0
  %720 = vmatpush1.msra.mxu0 0.0
  %721 = vmatprep.subr.mxu0 0.0
  %722 = vmatpush1.msra.mxu0 0.0
  %723 = vmatprep.subr.mxu0 0.0
  %724 = vmatpush1.msra.mxu0 %v257
  %725 = vmatprep.subr.mxu0 0.0
  %726 = vmatpush1.msra.mxu0 %v256
  %727 = vmatprep.subr.mxu0 0.0
  %728 = vmatpush2.msra.mxu0 0.0
  %729 = vmatprep.subr.mxu0 0.0
  %730 = vmatpush2.msra.mxu0 0.0
  %731 = vmatprep.subr.mxu0 0.0
  %732 = vmatpush2.msra.mxu0 0.0
  %733 = vmatprep.subr.mxu0 0.0
  %734 = vmatpush2.msra.mxu0 0.0
  %735 = vmatprep.subr.mxu0 0.0
  %736 = vmatpush2.msra.mxu0 0.0
  %737 = vmatprep.subr.mxu0 0.0
  %738 = vmatpush2.msra.mxu0 0.0
  %739 = vmatprep.subr.mxu0 0.0
  %740 = vmatpush2.msra.mxu0 0.0
  %741 = vmatprep.subr.mxu0 0.0
  %742 = vmatpush2.msra.mxu0 0.0
  %743 = vmatprep.subr.mxu0 0.0
  %744 = vmatpush2.msra.mxu0 0.0
  %745 = vmatprep.subr.mxu0 0.0
  %746 = vmatpush2.msra.mxu0 0.0
  %747 = vmatprep.subr.mxu0 0.0
  %748 = vmatpush2.msra.mxu0 0.0
  %749 = vmatprep.subr.mxu0 0.0
  %750 = vmatpush2.msra.mxu0 0.0
  %751 = vmatprep.subr.mxu0 0.0
  %752 = vmatpush2.msra.mxu0 0.0
  %753 = vmatprep.subr.mxu0 0.0
  %754 = vmatpush2.msra.mxu0 0.0
  %755 = vmatprep.subr.mxu0 0.0
  %756 = vmatpush2.msra.mxu0 0.0
  %757 = vmatprep.subr.mxu0 0.0
  %758 = vmatpush2.msra.mxu0 0.0
  %759 = vmatprep.mubr.f32.mxu0 0.0
  %760 = vmatmul.mubr.f32.gmra.mxu0 %v693
  %v761 = vpop.f32.mrf.mxu0
  %v762 = vadd.f32 0.0, %v761
  %v763 = vpop.f32.mrf.mxu0
  %764 = vdwg.mxu0
  %v766 = vrot.slane %v762, 4
  %v768 = vadd.f32 %v163, %v766
  %v769 = vxor.u32 %v768, 2147483648
  %v770 = vmul.f32 %v769, 1.442695
  %v771 = vpow.pop %v770
  %v772 = vadd.f32 %v771, 1.0
  %v773 = vrcp.pop %v772
  %v774 = vmul.f32 1.0, %v773
  %v775 = vtanh.pop %v768
  %v777 = vrot.slane %v565, 6
  %v779 = vmul.f32 %v774, %v777
  %781 = vrot.lane.b32.xlu0 %v775, 96
  %v782 = vpop.permute.xlu0 %781
  %v784 = vmul.f32 %v774, %v782
  %786 = vrot.lane.b32.xlu0 %v784, 16
  %v787 = vpop.permute.xlu0 %786
  %v789 = vadd.f32 %v779, %v787
  %v790 = vtanh.pop %v789
  %792 = vrot.lane.b32.xlu0 %v790, 32
  %v793 = vpop.permute.xlu0 %792
  %v795 = vmul.f32 %v774, %v793
  %v796 = vrot.slane %v677, 4
  %797 = vrot.lane.b32.xlu0 %v796, 80
  %v798 = vpop.permute.xlu0 %797
  %v799 = vsel %vm260, %v798, 0
  %801 = vmatprep.subr.mxu0 0.0
  %802 = vmatpush1.msra.mxu0 0.0
  %803 = vmatprep.subr.mxu0 0.0
  %804 = vmatpush1.msra.mxu0 0.0
  %805 = vmatprep.subr.mxu0 0.0
  %806 = vmatpush1.msra.mxu0 0.0
  %807 = vmatprep.subr.mxu0 0.0
  %808 = vmatpush1.msra.mxu0 0.0
  %809 = vmatprep.subr.mxu0 0.0
  %810 = vmatpush1.msra.mxu0 0.0
  %811 = vmatprep.subr.mxu0 0.0
  %812 = vmatpush1.msra.mxu0 0.0
  %813 = vmatprep.subr.mxu0 0.0
  %814 = vmatpush1.msra.mxu0 0.0
  %815 = vmatprep.subr.mxu0 0.0
  %816 = vmatpush1.msra.mxu0 0.0
  %817 = vmatprep.subr.mxu0 0.0
  %818 = vmatpush1.msra.mxu0 0.0
  %819 = vmatprep.subr.mxu0 0.0
  %820 = vmatpush1.msra.mxu0 0.0
  %821 = vmatprep.subr.mxu0 0.0
  %822 = vmatpush1.msra.mxu0 0.0
  %823 = vmatprep.subr.mxu0 0.0
  %824 = vmatpush1.msra.mxu0 0.0
  %825 = vmatprep.subr.mxu0 0.0
  %826 = vmatpush1.msra.mxu0 0.0
  %827 = vmatprep.subr.mxu0 0.0
  %828 = vmatpush1.msra.mxu0 0.0
  %829 = vmatprep.subr.mxu0 0.0
  %830 = vmatpush1.msra.mxu0 %v259
  %831 = vmatprep.subr.mxu0 0.0
  %832 = vmatpush1.msra.mxu0 %v258
  %833 = vmatprep.subr.mxu0 0.0
  %834 = vmatpush2.msra.mxu0 0.0
  %835 = vmatprep.subr.mxu0 0.0
  %836 = vmatpush2.msra.mxu0 0.0
  %837 = vmatprep.subr.mxu0 0.0
  %838 = vmatpush2.msra.mxu0 0.0
  %839 = vmatprep.subr.mxu0 0.0
  %840 = vmatpush2.msra.mxu0 0.0
  %841 = vmatprep.subr.mxu0 0.0
  %842 = vmatpush2.msra.mxu0 0.0
  %843 = vmatprep.subr.mxu0 0.0
  %844 = vmatpush2.msra.mxu0 0.0
  %845 = vmatprep.subr.mxu0 0.0
  %846 = vmatpush2.msra.mxu0 0.0
  %847 = vmatprep.subr.mxu0 0.0
  %848 = vmatpush2.msra.mxu0 0.0
  %849 = vmatprep.subr.mxu0 0.0
  %850 = vmatpush2.msra.mxu0 0.0
  %851 = vmatprep.subr.mxu0 0.0
  %852 = vmatpush2.msra.mxu0 0.0
  %853 = vmatprep.subr.mxu0 0.0
  %854 = vmatpush2.msra.mxu0 0.0
  %855 = vmatprep.subr.mxu0 0.0
  %856 = vmatpush2.msra.mxu0 0.0
  %857 = vmatprep.subr.mxu0 0.0
  %858 = vmatpush2.msra.mxu0 0.0
  %859 = vmatprep.subr.mxu0 0.0
  %860 = vmatpush2.msra.mxu0 0.0
  %861 = vmatprep.subr.mxu0 0.0
  %862 = vmatpush2.msra.mxu0 0.0
  %863 = vmatprep.subr.mxu0 0.0
  %864 = vmatpush2.msra.mxu0 0.0
  %865 = vmatprep.mubr.f32.mxu0 0.0
  %866 = vmatmul.mubr.f32.gmra.mxu0 %v799
  %v867 = vpop.f32.mrf.mxu0
  %v868 = vadd.f32 0.0, %v867
  %v869 = vpop.f32.mrf.mxu0
  %870 = vdwg.mxu0
  %v872 = vrot.slane %v868, 6
  %v874 = vadd.f32 %v253, %v872
  %v875 = vxor.u32 %v874, 2147483648
  %v876 = vmul.f32 %v875, 1.442695
  %v877 = vpow.pop %v876
  %v878 = vadd.f32 %v877, 1.0
  %v879 = vrcp.pop %v878
  %v880 = vmul.f32 1.0, %v879
  %v881 = vtanh.pop %v874
  %v883 = vrot.slane %v671, 2
  %v885 = vmul.f32 %v880, %v883
  %887 = vrot.lane.b32.xlu0 %v881, 96
  %v888 = vpop.permute.xlu0 %887
  %v890 = vmul.f32 %v880, %v888
  %892 = vrot.lane.b32.xlu0 %v890, 16
  %v893 = vpop.permute.xlu0 %892
  %v895 = vadd.f32 %v885, %v893
  %v896 = vtanh.pop %v895
  %898 = vrot.lane.b32.xlu0 %v896, 32
  %v899 = vpop.permute.xlu0 %898
  %v901 = vmul.f32 %v880, %v899
  %903 = vrot.lane.b32.xlu0 %v795, 80
  %v904 = vpop.permute.xlu0 %903
  %vm906 = vcmask 128004
  %907 = vst.msk [vmem:[#allocation2] sm:$0x30] %vm906, %v904
  %909 = vrot.lane.b32.xlu0 %v901, 96
  %v910 = vpop.permute.xlu0 %909
  %vm912 = vcmask 257154
  %913 = vst.msk [vmem:[#allocation2 + $0x8] sm:$0xc] %vm912, %v910
  %v914 = vrot.slane %v795, 4
  %915 = vrot.lane.b32.xlu0 %v914, 80
  %v916 = vpop.permute.xlu0 %915
  %v917 = vsel %vm260, %v916, 0
  %919 = vmatprep.subr.mxu0 0.0
  %920 = vmatpush1.msra.mxu0 0.0
  %921 = vmatprep.subr.mxu0 0.0
  %922 = vmatpush1.msra.mxu0 0.0
  %923 = vmatprep.subr.mxu0 0.0
  %924 = vmatpush1.msra.mxu0 0.0
  %925 = vmatprep.subr.mxu0 0.0
  %926 = vmatpush1.msra.mxu0 0.0
  %927 = vmatprep.subr.mxu0 0.0
  %928 = vmatpush1.msra.mxu0 0.0
  %929 = vmatprep.subr.mxu0 0.0
  %930 = vmatpush1.msra.mxu0 0.0
  %931 = vmatprep.subr.mxu0 0.0
  %932 = vmatpush1.msra.mxu0 0.0
  %933 = vmatprep.subr.mxu0 0.0
  %934 = vmatpush1.msra.mxu0 0.0
  %935 = vmatprep.subr.mxu0 0.0
  %936 = vmatpush1.msra.mxu0 0.0
  %937 = vmatprep.subr.mxu0 0.0
  %938 = vmatpush1.msra.mxu0 0.0
  %939 = vmatprep.subr.mxu0 0.0
  %940 = vmatpush1.msra.mxu0 0.0
  %941 = vmatprep.subr.mxu0 0.0
  %942 = vmatpush1.msra.mxu0 0.0
  %943 = vmatprep.subr.mxu0 0.0
  %944 = vmatpush1.msra.mxu0 0.0
  %945 = vmatprep.subr.mxu0 0.0
  %946 = vmatpush1.msra.mxu0 0.0
  %947 = vmatprep.subr.mxu0 0.0
  %948 = vmatpush1.msra.mxu0 %v257
  %949 = vmatprep.subr.mxu0 0.0
  %950 = vmatpush1.msra.mxu0 %v256
  %951 = vmatprep.subr.mxu0 0.0
  %952 = vmatpush2.msra.mxu0 0.0
  %953 = vmatprep.subr.mxu0 0.0
  %954 = vmatpush2.msra.mxu0 0.0
  %955 = vmatprep.subr.mxu0 0.0
  %956 = vmatpush2.msra.mxu0 0.0
  %957 = vmatprep.subr.mxu0 0.0
  %958 = vmatpush2.msra.mxu0 0.0
  %959 = vmatprep.subr.mxu0 0.0
  %960 = vmatpush2.msra.mxu0 0.0
  %961 = vmatprep.subr.mxu0 0.0
  %962 = vmatpush2.msra.mxu0 0.0
  %963 = vmatprep.subr.mxu0 0.0
  %964 = vmatpush2.msra.mxu0 0.0
  %965 = vmatprep.subr.mxu0 0.0
  %966 = vmatpush2.msra.mxu0 0.0
  %967 = vmatprep.subr.mxu0 0.0
  %968 = vmatpush2.msra.mxu0 0.0
  %969 = vmatprep.subr.mxu0 0.0
  %970 = vmatpush2.msra.mxu0 0.0
  %971 = vmatprep.subr.mxu0 0.0
  %972 = vmatpush2.msra.mxu0 0.0
  %973 = vmatprep.subr.mxu0 0.0
  %974 = vmatpush2.msra.mxu0 0.0
  %975 = vmatprep.subr.mxu0 0.0
  %976 = vmatpush2.msra.mxu0 0.0
  %977 = vmatprep.subr.mxu0 0.0
  %978 = vmatpush2.msra.mxu0 0.0
  %979 = vmatprep.subr.mxu0 0.0
  %980 = vmatpush2.msra.mxu0 0.0
  %981 = vmatprep.subr.mxu0 0.0
  %982 = vmatpush2.msra.mxu0 0.0
  %983 = vmatprep.mubr.f32.mxu0 0.0
  %984 = vmatmul.mubr.f32.gmra.mxu0 %v917
  %v985 = vpop.f32.mrf.mxu0
  %v986 = vadd.f32 0.0, %v985
  %v987 = vpop.f32.mrf.mxu0
  %988 = vdwg.mxu0
  %v990 = vrot.slane %v986, 2
  %v992 = vadd.f32 %v163, %v990
  %v993 = vxor.u32 %v992, 2147483648
  %v994 = vmul.f32 %v993, 1.442695
  %v995 = vpow.pop %v994
  %v996 = vadd.f32 %v995, 1.0
  %v997 = vrcp.pop %v996
  %v998 = vmul.f32 1.0, %v997
  %v999 = vtanh.pop %v992
  %v1001 = vrot.slane %v789, 6
  %v1003 = vmul.f32 %v998, %v1001
  %1005 = vrot.lane.b32.xlu0 %v999, 96
  %v1006 = vpop.permute.xlu0 %1005
  %v1008 = vmul.f32 %v998, %v1006
  %1010 = vrot.lane.b32.xlu0 %v1008, 16
  %v1011 = vpop.permute.xlu0 %1010
  %v1013 = vadd.f32 %v1003, %v1011
  %v1014 = vtanh.pop %v1013
  %1016 = vrot.lane.b32.xlu0 %v1014, 32
  %v1017 = vpop.permute.xlu0 %1016
  %v1019 = vmul.f32 %v998, %v1017
  %v1020 = vrot.slane %v901, 2
  %1021 = vrot.lane.b32.xlu0 %v1020, 80
  %v1022 = vpop.permute.xlu0 %1021
  %v1023 = vsel %vm260, %v1022, 0
  %1025 = vmatprep.subr.mxu0 0.0
  %1026 = vmatpush1.msra.mxu0 0.0
  %1027 = vmatprep.subr.mxu0 0.0
  %1028 = vmatpush1.msra.mxu0 0.0
  %1029 = vmatprep.subr.mxu0 0.0
  %1030 = vmatpush1.msra.mxu0 0.0
  %1031 = vmatprep.subr.mxu0 0.0
  %1032 = vmatpush1.msra.mxu0 0.0
  %1033 = vmatprep.subr.mxu0 0.0
  %1034 = vmatpush1.msra.mxu0 0.0
  %1035 = vmatprep.subr.mxu0 0.0
  %1036 = vmatpush1.msra.mxu0 0.0
  %1037 = vmatprep.subr.mxu0 0.0
  %1038 = vmatpush1.msra.mxu0 0.0
  %1039 = vmatprep.subr.mxu0 0.0
  %1040 = vmatpush1.msra.mxu0 0.0
  %1041 = vmatprep.subr.mxu0 0.0
  %1042 = vmatpush1.msra.mxu0 0.0
  %1043 = vmatprep.subr.mxu0 0.0
  %1044 = vmatpush1.msra.mxu0 0.0
  %1045 = vmatprep.subr.mxu0 0.0
  %1046 = vmatpush1.msra.mxu0 0.0
  %1047 = vmatprep.subr.mxu0 0.0
  %1048 = vmatpush1.msra.mxu0 0.0
  %1049 = vmatprep.subr.mxu0 0.0
  %1050 = vmatpush1.msra.mxu0 0.0
  %1051 = vmatprep.subr.mxu0 0.0
  %1052 = vmatpush1.msra.mxu0 0.0
  %1053 = vmatprep.subr.mxu0 0.0
  %1054 = vmatpush1.msra.mxu0 %v259
  %1055 = vmatprep.subr.mxu0 0.0
  %1056 = vmatpush1.msra.mxu0 %v258
  %1057 = vmatprep.subr.mxu0 0.0
  %1058 = vmatpush2.msra.mxu0 0.0
  %1059 = vmatprep.subr.mxu0 0.0
  %1060 = vmatpush2.msra.mxu0 0.0
  %1061 = vmatprep.subr.mxu0 0.0
  %1062 = vmatpush2.msra.mxu0 0.0
  %1063 = vmatprep.subr.mxu0 0.0
  %1064 = vmatpush2.msra.mxu0 0.0
  %1065 = vmatprep.subr.mxu0 0.0
  %1066 = vmatpush2.msra.mxu0 0.0
  %1067 = vmatprep.subr.mxu0 0.0
  %1068 = vmatpush2.msra.mxu0 0.0
  %1069 = vmatprep.subr.mxu0 0.0
  %1070 = vmatpush2.msra.mxu0 0.0
  %1071 = vmatprep.subr.mxu0 0.0
  %1072 = vmatpush2.msra.mxu0 0.0
  %1073 = vmatprep.subr.mxu0 0.0
  %1074 = vmatpush2.msra.mxu0 0.0
  %1075 = vmatprep.subr.mxu0 0.0
  %1076 = vmatpush2.msra.mxu0 0.0
  %1077 = vmatprep.subr.mxu0 0.0
  %1078 = vmatpush2.msra.mxu0 0.0
  %1079 = vmatprep.subr.mxu0 0.0
  %1080 = vmatpush2.msra.mxu0 0.0
  %1081 = vmatprep.subr.mxu0 0.0
  %1082 = vmatpush2.msra.mxu0 0.0
  %1083 = vmatprep.subr.mxu0 0.0
  %1084 = vmatpush2.msra.mxu0 0.0
  %1085 = vmatprep.subr.mxu0 0.0
  %1086 = vmatpush2.msra.mxu0 0.0
  %1087 = vmatprep.subr.mxu0 0.0
  %1088 = vmatpush2.msra.mxu0 0.0
  %1089 = vmatprep.mubr.f32.mxu0 0.0
  %1090 = vmatmul.mubr.f32.gmra.mxu0 %v1023
  %v1091 = vpop.f32.mrf.mxu0
  %v1092 = vadd.f32 0.0, %v1091
  %v1093 = vpop.f32.mrf.mxu0
  %1094 = vdwg.mxu0
  %v1095 = vadd.f32 %v253, %v1092
  %v1096 = vxor.u32 %v1095, 2147483648
  %v1097 = vmul.f32 %v1096, 1.442695
  %v1098 = vpow.pop %v1097
  %v1099 = vadd.f32 %v1098, 1.0
  %v1100 = vrcp.pop %v1099
  %v1101 = vmul.f32 1.0, %v1100
  %v1102 = vtanh.pop %v1095
  %v1104 = vrot.slane %v895, 2
  %v1106 = vmul.f32 %v1101, %v1104
  %1108 = vrot.lane.b32.xlu0 %v1102, 96
  %v1109 = vpop.permute.xlu0 %1108
  %v1111 = vmul.f32 %v1101, %v1109
  %1113 = vrot.lane.b32.xlu0 %v1111, 16
  %v1114 = vpop.permute.xlu0 %1113
  %v1116 = vadd.f32 %v1106, %v1114
  %v1117 = vtanh.pop %v1116
  %1119 = vrot.lane.b32.xlu0 %v1117, 32
  %v1120 = vpop.permute.xlu0 %1119
  %v1122 = vmul.f32 %v1101, %v1120
  %1124 = vrot.lane.b32.xlu0 %v1019, 80
  %v1125 = vpop.permute.xlu0 %1124
  %vm1127 = vcmask 130054
  %1128 = vst.msk [vmem:[#allocation2] sm:$0xc0] %vm1127, %v1125
  %1130 = vrot.lane.b32.xlu0 %v1122, 96
  %v1131 = vpop.permute.xlu0 %1130
  %vm1133 = vcmask 255104
  %1134 = vst.msk [vmem:[#allocation2 + $0x8] sm:$0x3] %vm1133, %v1131
  %v1135 = vrot.slane %v1019, 6
  %1136 = vrot.lane.b32.xlu0 %v1135, 80
  %v1137 = vpop.permute.xlu0 %1136
  %v1138 = vsel %vm260, %v1137, 0
  %1140 = vmatprep.subr.mxu0 0.0
  %1141 = vmatpush1.msra.mxu0 0.0
  %1142 = vmatprep.subr.mxu0 0.0
  %1143 = vmatpush1.msra.mxu0 0.0
  %1144 = vmatprep.subr.mxu0 0.0
  %1145 = vmatpush1.msra.mxu0 0.0
  %1146 = vmatprep.subr.mxu0 0.0
  %1147 = vmatpush1.msra.mxu0 0.0
  %1148 = vmatprep.subr.mxu0 0.0
  %1149 = vmatpush1.msra.mxu0 0.0
  %1150 = vmatprep.subr.mxu0 0.0
  %1151 = vmatpush1.msra.mxu0 0.0
  %1152 = vmatprep.subr.mxu0 0.0
  %1153 = vmatpush1.msra.mxu0 0.0
  %1154 = vmatprep.subr.mxu0 0.0
  %1155 = vmatpush1.msra.mxu0 0.0
  %1156 = vmatprep.subr.mxu0 0.0
  %1157 = vmatpush1.msra.mxu0 0.0
  %1158 = vmatprep.subr.mxu0 0.0
  %1159 = vmatpush1.msra.mxu0 0.0
  %1160 = vmatprep.subr.mxu0 0.0
  %1161 = vmatpush1.msra.mxu0 0.0
  %1162 = vmatprep.subr.mxu0 0.0
  %1163 = vmatpush1.msra.mxu0 0.0
  %1164 = vmatprep.subr.mxu0 0.0
  %1165 = vmatpush1.msra.mxu0 0.0
  %1166 = vmatprep.subr.mxu0 0.0
  %1167 = vmatpush1.msra.mxu0 0.0
  %1168 = vmatprep.subr.mxu0 0.0
  %1169 = vmatpush1.msra.mxu0 %v257
  %1170 = vmatprep.subr.mxu0 0.0
  %1171 = vmatpush1.msra.mxu0 %v256
  %1172 = vmatprep.subr.mxu0 0.0
  %1173 = vmatpush2.msra.mxu0 0.0
  %1174 = vmatprep.subr.mxu0 0.0
  %1175 = vmatpush2.msra.mxu0 0.0
  %1176 = vmatprep.subr.mxu0 0.0
  %1177 = vmatpush2.msra.mxu0 0.0
  %1178 = vmatprep.subr.mxu0 0.0
  %1179 = vmatpush2.msra.mxu0 0.0
  %1180 = vmatprep.subr.mxu0 0.0
  %1181 = vmatpush2.msra.mxu0 0.0
  %1182 = vmatprep.subr.mxu0 0.0
  %1183 = vmatpush2.msra.mxu0 0.0
  %1184 = vmatprep.subr.mxu0 0.0
  %1185 = vmatpush2.msra.mxu0 0.0
  %1186 = vmatprep.subr.mxu0 0.0
  %1187 = vmatpush2.msra.mxu0 0.0
  %1188 = vmatprep.subr.mxu0 0.0
  %1189 = vmatpush2.msra.mxu0 0.0
  %1190 = vmatprep.subr.mxu0 0.0
  %1191 = vmatpush2.msra.mxu0 0.0
  %1192 = vmatprep.subr.mxu0 0.0
  %1193 = vmatpush2.msra.mxu0 0.0
  %1194 = vmatprep.subr.mxu0 0.0
  %1195 = vmatpush2.msra.mxu0 0.0
  %1196 = vmatprep.subr.mxu0 0.0
  %1197 = vmatpush2.msra.mxu0 0.0
  %1198 = vmatprep.subr.mxu0 0.0
  %1199 = vmatpush2.msra.mxu0 0.0
  %1200 = vmatprep.subr.mxu0 0.0
  %1201 = vmatpush2.msra.mxu0 0.0
  %1202 = vmatprep.subr.mxu0 0.0
  %1203 = vmatpush2.msra.mxu0 0.0
  %1204 = vmatprep.mubr.f32.mxu0 0.0
  %1205 = vmatmul.mubr.f32.gmra.mxu0 %v1138
  %v1206 = vpop.f32.mrf.mxu0
  %v1207 = vadd.f32 0.0, %v1206
  %v1208 = vpop.f32.mrf.mxu0
  %1209 = vdwg.mxu0
  %v1210 = vadd.f32 %v168, %v1207
  %v1211 = vxor.u32 %v1210, 2147483648
  %v1212 = vmul.f32 %v1211, 1.442695
  %v1213 = vpow.pop %v1212
  %v1214 = vadd.f32 %v1213, 1.0
  %v1215 = vrcp.pop %v1214
  %v1216 = vmul.f32 1.0, %v1215
  %v1217 = vtanh.pop %v1210
  %v1219 = vrot.slane %v1013, 6
  %v1221 = vmul.f32 %v1216, %v1219
  %1223 = vrot.lane.b32.xlu0 %v1217, 96
  %v1224 = vpop.permute.xlu0 %1223
  %v1226 = vmul.f32 %v1216, %v1224
  %1228 = vrot.lane.b32.xlu0 %v1226, 16
  %v1229 = vpop.permute.xlu0 %1228
  %v1231 = vadd.f32 %v1221, %v1229
  %v1232 = vtanh.pop %v1231
  %1234 = vrot.lane.b32.xlu0 %v1232, 32
  %v1235 = vpop.permute.xlu0 %1234
  %v1237 = vmul.f32 %v1216, %v1235
  %1238 = vrot.lane.b32.xlu0 %v1122, 80
  %v1239 = vpop.permute.xlu0 %1238
  %v1240 = vsel %vm260, %v1239, 0
  %1242 = vmatprep.subr.mxu0 0.0
  %1243 = vmatpush1.msra.mxu0 0.0
  %1244 = vmatprep.subr.mxu0 0.0
  %1245 = vmatpush1.msra.mxu0 0.0
  %1246 = vmatprep.subr.mxu0 0.0
  %1247 = vmatpush1.msra.mxu0 0.0
  %1248 = vmatprep.subr.mxu0 0.0
  %1249 = vmatpush1.msra.mxu0 0.0
  %1250 = vmatprep.subr.mxu0 0.0
  %1251 = vmatpush1.msra.mxu0 0.0
  %1252 = vmatprep.subr.mxu0 0.0
  %1253 = vmatpush1.msra.mxu0 0.0
  %1254 = vmatprep.subr.mxu0 0.0
  %1255 = vmatpush1.msra.mxu0 0.0
  %1256 = vmatprep.subr.mxu0 0.0
  %1257 = vmatpush1.msra.mxu0 0.0
  %1258 = vmatprep.subr.mxu0 0.0
  %1259 = vmatpush1.msra.mxu0 0.0
  %1260 = vmatprep.subr.mxu0 0.0
  %1261 = vmatpush1.msra.mxu0 0.0
  %1262 = vmatprep.subr.mxu0 0.0
  %1263 = vmatpush1.msra.mxu0 0.0
  %1264 = vmatprep.subr.mxu0 0.0
  %1265 = vmatpush1.msra.mxu0 0.0
  %1266 = vmatprep.subr.mxu0 0.0
  %1267 = vmatpush1.msra.mxu0 0.0
  %1268 = vmatprep.subr.mxu0 0.0
  %1269 = vmatpush1.msra.mxu0 0.0
  %1270 = vmatprep.subr.mxu0 0.0
  %1271 = vmatpush1.msra.mxu0 %v259
  %1272 = vmatprep.subr.mxu0 0.0
  %1273 = vmatpush1.msra.mxu0 %v258
  %1274 = vmatprep.subr.mxu0 0.0
  %1275 = vmatpush2.msra.mxu0 0.0
  %1276 = vmatprep.subr.mxu0 0.0
  %1277 = vmatpush2.msra.mxu0 0.0
  %1278 = vmatprep.subr.mxu0 0.0
  %1279 = vmatpush2.msra.mxu0 0.0
  %1280 = vmatprep.subr.mxu0 0.0
  %1281 = vmatpush2.msra.mxu0 0.0
  %1282 = vmatprep.subr.mxu0 0.0
  %1283 = vmatpush2.msra.mxu0 0.0
  %1284 = vmatprep.subr.mxu0 0.0
  %1285 = vmatpush2.msra.mxu0 0.0
  %1286 = vmatprep.subr.mxu0 0.0
  %1287 = vmatpush2.msra.mxu0 0.0
  %1288 = vmatprep.subr.mxu0 0.0
  %1289 = vmatpush2.msra.mxu0 0.0
  %1290 = vmatprep.subr.mxu0 0.0
  %1291 = vmatpush2.msra.mxu0 0.0
  %1292 = vmatprep.subr.mxu0 0.0
  %1293 = vmatpush2.msra.mxu0 0.0
  %1294 = vmatprep.subr.mxu0 0.0
  %1295 = vmatpush2.msra.mxu0 0.0
  %1296 = vmatprep.subr.mxu0 0.0
  %1297 = vmatpush2.msra.mxu0 0.0
  %1298 = vmatprep.subr.mxu0 0.0
  %1299 = vmatpush2.msra.mxu0 0.0
  %1300 = vmatprep.subr.mxu0 0.0
  %1301 = vmatpush2.msra.mxu0 0.0
  %1302 = vmatprep.subr.mxu0 0.0
  %1303 = vmatpush2.msra.mxu0 0.0
  %1304 = vmatprep.subr.mxu0 0.0
  %1305 = vmatpush2.msra.mxu0 0.0
  %1306 = vmatprep.mubr.f32.mxu0 0.0
  %1307 = vmatmul.mubr.f32.gmra.mxu0 %v1240
  %v1308 = vpop.f32.mrf.mxu0
  %v1309 = vadd.f32 0.0, %v1308
  %v1310 = vpop.f32.mrf.mxu0
  %1311 = vdwg.mxu0
  %v1313 = vrot.slane %v1309, 2
  %v1315 = vadd.f32 %v248, %v1313
  %v1316 = vxor.u32 %v1315, 2147483648
  %v1317 = vmul.f32 %v1316, 1.442695
  %v1318 = vpow.pop %v1317
  %v1319 = vadd.f32 %v1318, 1.0
  %v1320 = vrcp.pop %v1319
  %v1321 = vmul.f32 1.0, %v1320
  %v1322 = vtanh.pop %v1315
  %v1324 = vrot.slane %v1116, 2
  %v1326 = vmul.f32 %v1321, %v1324
  %1328 = vrot.lane.b32.xlu0 %v1322, 96
  %v1329 = vpop.permute.xlu0 %1328
  %v1331 = vmul.f32 %v1321, %v1329
  %1333 = vrot.lane.b32.xlu0 %v1331, 16
  %v1334 = vpop.permute.xlu0 %1333
  %v1336 = vadd.f32 %v1326, %v1334
  %v1337 = vtanh.pop %v1336
  %1339 = vrot.lane.b32.xlu0 %v1337, 32
  %v1340 = vpop.permute.xlu0 %1339
  %v1342 = vmul.f32 %v1321, %v1340
  %1344 = vrot.lane.b32.xlu0 %v1237, 80
  %v1345 = vpop.permute.xlu0 %1344
  %1347 = vst.msk [vmem:[#allocation2 + $0x8] sm:$0x3] %vm461, %v1345
  %1349 = vrot.lane.b32.xlu0 %v1342, 96
  %v1350 = vpop.permute.xlu0 %1349
  %1352 = vst.msk [vmem:[#allocation2] sm:$0xc0] %vm467, %v1350
  %v1353 = vsel %vm260, %v1345, 0
  %1355 = vmatprep.subr.mxu0 0.0
  %1356 = vmatpush1.msra.mxu0 0.0
  %1357 = vmatprep.subr.mxu0 0.0
  %1358 = vmatpush1.msra.mxu0 0.0
  %1359 = vmatprep.subr.mxu0 0.0
  %1360 = vmatpush1.msra.mxu0 0.0
  %1361 = vmatprep.subr.mxu0 0.0
  %1362 = vmatpush1.msra.mxu0 0.0
  %1363 = vmatprep.subr.mxu0 0.0
  %1364 = vmatpush1.msra.mxu0 0.0
  %1365 = vmatprep.subr.mxu0 0.0
  %1366 = vmatpush1.msra.mxu0 0.0
  %1367 = vmatprep.subr.mxu0 0.0
  %1368 = vmatpush1.msra.mxu0 0.0
  %1369 = vmatprep.subr.mxu0 0.0
  %1370 = vmatpush1.msra.mxu0 0.0
  %1371 = vmatprep.subr.mxu0 0.0
  %1372 = vmatpush1.msra.mxu0 0.0
  %1373 = vmatprep.subr.mxu0 0.0
  %1374 = vmatpush1.msra.mxu0 0.0
  %1375 = vmatprep.subr.mxu0 0.0
  %1376 = vmatpush1.msra.mxu0 0.0
  %1377 = vmatprep.subr.mxu0 0.0
  %1378 = vmatpush1.msra.mxu0 0.0
  %1379 = vmatprep.subr.mxu0 0.0
  %1380 = vmatpush1.msra.mxu0 0.0
  %1381 = vmatprep.subr.mxu0 0.0
  %1382 = vmatpush1.msra.mxu0 0.0
  %1383 = vmatprep.subr.mxu0 0.0
  %1384 = vmatpush1.msra.mxu0 %v257
  %1385 = vmatprep.subr.mxu0 0.0
  %1386 = vmatpush1.msra.mxu0 %v256
  %1387 = vmatprep.subr.mxu0 0.0
  %1388 = vmatpush2.msra.mxu0 0.0
  %1389 = vmatprep.subr.mxu0 0.0
  %1390 = vmatpush2.msra.mxu0 0.0
  %1391 = vmatprep.subr.mxu0 0.0
  %1392 = vmatpush2.msra.mxu0 0.0
  %1393 = vmatprep.subr.mxu0 0.0
  %1394 = vmatpush2.msra.mxu0 0.0
  %1395 = vmatprep.subr.mxu0 0.0
  %1396 = vmatpush2.msra.mxu0 0.0
  %1397 = vmatprep.subr.mxu0 0.0
  %1398 = vmatpush2.msra.mxu0 0.0
  %1399 = vmatprep.subr.mxu0 0.0
  %1400 = vmatpush2.msra.mxu0 0.0
  %1401 = vmatprep.subr.mxu0 0.0
  %1402 = vmatpush2.msra.mxu0 0.0
  %1403 = vmatprep.subr.mxu0 0.0
  %1404 = vmatpush2.msra.mxu0 0.0
  %1405 = vmatprep.subr.mxu0 0.0
  %1406 = vmatpush2.msra.mxu0 0.0
  %1407 = vmatprep.subr.mxu0 0.0
  %1408 = vmatpush2.msra.mxu0 0.0
  %1409 = vmatprep.subr.mxu0 0.0
  %1410 = vmatpush2.msra.mxu0 0.0
  %1411 = vmatprep.subr.mxu0 0.0
  %1412 = vmatpush2.msra.mxu0 0.0
  %1413 = vmatprep.subr.mxu0 0.0
  %1414 = vmatpush2.msra.mxu0 0.0
  %1415 = vmatprep.subr.mxu0 0.0
  %1416 = vmatpush2.msra.mxu0 0.0
  %1417 = vmatprep.subr.mxu0 0.0
  %1418 = vmatpush2.msra.mxu0 0.0
  %1419 = vmatprep.mubr.f32.mxu0 0.0
  %1420 = vmatmul.mubr.f32.gmra.mxu0 %v1353
  %v1421 = vpop.f32.mrf.mxu0
  %v1422 = vadd.f32 0.0, %v1421
  %v1423 = vpop.f32.mrf.mxu0
  %1424 = vdwg.mxu0
  %v1426 = vrot.slane %v1422, 6
  %v1428 = vadd.f32 %v168, %v1426
  %v1429 = vxor.u32 %v1428, 2147483648
  %v1430 = vmul.f32 %v1429, 1.442695
  %v1431 = vpow.pop %v1430
  %v1432 = vadd.f32 %v1431, 1.0
  %v1433 = vrcp.pop %v1432
  %v1434 = vmul.f32 1.0, %v1433
  %v1435 = vtanh.pop %v1428
  %v1437 = vrot.slane %v1231, 6
  %v1439 = vmul.f32 %v1434, %v1437
  %1441 = vrot.lane.b32.xlu0 %v1435, 96
  %v1442 = vpop.permute.xlu0 %1441
  %v1444 = vmul.f32 %v1434, %v1442
  %1446 = vrot.lane.b32.xlu0 %v1444, 16
  %v1447 = vpop.permute.xlu0 %1446
  %v1449 = vadd.f32 %v1439, %v1447
  %v1450 = vtanh.pop %v1449
  %1452 = vrot.lane.b32.xlu0 %v1450, 32
  %v1453 = vpop.permute.xlu0 %1452
  %v1455 = vmul.f32 %v1434, %v1453
  %v1456 = vrot.slane %v1342, 6
  %1457 = vrot.lane.b32.xlu0 %v1456, 80
  %v1458 = vpop.permute.xlu0 %1457
  %v1459 = vsel %vm260, %v1458, 0
  %1461 = vmatprep.subr.mxu0 0.0
  %1462 = vmatpush1.msra.mxu0 0.0
  %1463 = vmatprep.subr.mxu0 0.0
  %1464 = vmatpush1.msra.mxu0 0.0
  %1465 = vmatprep.subr.mxu0 0.0
  %1466 = vmatpush1.msra.mxu0 0.0
  %1467 = vmatprep.subr.mxu0 0.0
  %1468 = vmatpush1.msra.mxu0 0.0
  %1469 = vmatprep.subr.mxu0 0.0
  %1470 = vmatpush1.msra.mxu0 0.0
  %1471 = vmatprep.subr.mxu0 0.0
  %1472 = vmatpush1.msra.mxu0 0.0
  %1473 = vmatprep.subr.mxu0 0.0
  %1474 = vmatpush1.msra.mxu0 0.0
  %1475 = vmatprep.subr.mxu0 0.0
  %1476 = vmatpush1.msra.mxu0 0.0
  %1477 = vmatprep.subr.mxu0 0.0
  %1478 = vmatpush1.msra.mxu0 0.0
  %1479 = vmatprep.subr.mxu0 0.0
  %1480 = vmatpush1.msra.mxu0 0.0
  %1481 = vmatprep.subr.mxu0 0.0
  %1482 = vmatpush1.msra.mxu0 0.0
  %1483 = vmatprep.subr.mxu0 0.0
  %1484 = vmatpush1.msra.mxu0 0.0
  %1485 = vmatprep.subr.mxu0 0.0
  %1486 = vmatpush1.msra.mxu0 0.0
  %1487 = vmatprep.subr.mxu0 0.0
  %1488 = vmatpush1.msra.mxu0 0.0
  %1489 = vmatprep.subr.mxu0 0.0
  %1490 = vmatpush1.msra.mxu0 %v259
  %1491 = vmatprep.subr.mxu0 0.0
  %1492 = vmatpush1.msra.mxu0 %v258
  %1493 = vmatprep.subr.mxu0 0.0
  %1494 = vmatpush2.msra.mxu0 0.0
  %1495 = vmatprep.subr.mxu0 0.0
  %1496 = vmatpush2.msra.mxu0 0.0
  %1497 = vmatprep.subr.mxu0 0.0
  %1498 = vmatpush2.msra.mxu0 0.0
  %1499 = vmatprep.subr.mxu0 0.0
  %1500 = vmatpush2.msra.mxu0 0.0
  %1501 = vmatprep.subr.mxu0 0.0
  %1502 = vmatpush2.msra.mxu0 0.0
  %1503 = vmatprep.subr.mxu0 0.0
  %1504 = vmatpush2.msra.mxu0 0.0
  %1505 = vmatprep.subr.mxu0 0.0
  %1506 = vmatpush2.msra.mxu0 0.0
  %1507 = vmatprep.subr.mxu0 0.0
  %1508 = vmatpush2.msra.mxu0 0.0
  %1509 = vmatprep.subr.mxu0 0.0
  %1510 = vmatpush2.msra.mxu0 0.0
  %1511 = vmatprep.subr.mxu0 0.0
  %1512 = vmatpush2.msra.mxu0 0.0
  %1513 = vmatprep.subr.mxu0 0.0
  %1514 = vmatpush2.msra.mxu0 0.0
  %1515 = vmatprep.subr.mxu0 0.0
  %1516 = vmatpush2.msra.mxu0 0.0
  %1517 = vmatprep.subr.mxu0 0.0
  %1518 = vmatpush2.msra.mxu0 0.0
  %1519 = vmatprep.subr.mxu0 0.0
  %1520 = vmatpush2.msra.mxu0 0.0
  %1521 = vmatprep.subr.mxu0 0.0
  %1522 = vmatpush2.msra.mxu0 0.0
  %1523 = vmatprep.subr.mxu0 0.0
  %1524 = vmatpush2.msra.mxu0 0.0
  %1525 = vmatprep.mubr.f32.mxu0 0.0
  %1526 = vmatmul.mubr.f32.gmra.mxu0 %v1459
  %v1527 = vpop.f32.mrf.mxu0
  %v1528 = vadd.f32 0.0, %v1527
  %v1529 = vpop.f32.mrf.mxu0
  %1530 = vdwg.mxu0
  %v1532 = vrot.slane %v1528, 4
  %v1534 = vadd.f32 %v248, %v1532
  %v1535 = vxor.u32 %v1534, 2147483648
  %v1536 = vmul.f32 %v1535, 1.442695
  %v1537 = vpow.pop %v1536
  %v1538 = vadd.f32 %v1537, 1.0
  %v1539 = vrcp.pop %v1538
  %v1540 = vmul.f32 1.0, %v1539
  %v1541 = vtanh.pop %v1534
  %v1543 = vrot.slane %v1336, 2
  %v1545 = vmul.f32 %v1540, %v1543
  %1547 = vrot.lane.b32.xlu0 %v1541, 96
  %v1548 = vpop.permute.xlu0 %1547
  %v1550 = vmul.f32 %v1540, %v1548
  %1552 = vrot.lane.b32.xlu0 %v1550, 16
  %v1553 = vpop.permute.xlu0 %1552
  %v1555 = vadd.f32 %v1545, %v1553
  %v1556 = vtanh.pop %v1555
  %1558 = vrot.lane.b32.xlu0 %v1556, 32
  %v1559 = vpop.permute.xlu0 %1558
  %v1561 = vmul.f32 %v1540, %v1559
  %1563 = vrot.lane.b32.xlu0 %v1455, 80
  %v1564 = vpop.permute.xlu0 %1563
  %1566 = vst.msk [vmem:[#allocation2 + $0x8] sm:$0xc] %vm682, %v1564
  %1568 = vrot.lane.b32.xlu0 %v1561, 96
  %v1569 = vpop.permute.xlu0 %1568
  %1571 = vst.msk [vmem:[#allocation2] sm:$0x30] %vm688, %v1569
  %v1572 = vrot.slane %v1455, 2
  %1573 = vrot.lane.b32.xlu0 %v1572, 80
  %v1574 = vpop.permute.xlu0 %1573
  %v1575 = vsel %vm260, %v1574, 0
  %1577 = vmatprep.subr.mxu0 0.0
  %1578 = vmatpush1.msra.mxu0 0.0
  %1579 = vmatprep.subr.mxu0 0.0
  %1580 = vmatpush1.msra.mxu0 0.0
  %1581 = vmatprep.subr.mxu0 0.0
  %1582 = vmatpush1.msra.mxu0 0.0
  %1583 = vmatprep.subr.mxu0 0.0
  %1584 = vmatpush1.msra.mxu0 0.0
  %1585 = vmatprep.subr.mxu0 0.0
  %1586 = vmatpush1.msra.mxu0 0.0
  %1587 = vmatprep.subr.mxu0 0.0
  %1588 = vmatpush1.msra.mxu0 0.0
  %1589 = vmatprep.subr.mxu0 0.0
  %1590 = vmatpush1.msra.mxu0 0.0
  %1591 = vmatprep.subr.mxu0 0.0
  %1592 = vmatpush1.msra.mxu0 0.0
  %1593 = vmatprep.subr.mxu0 0.0
  %1594 = vmatpush1.msra.mxu0 0.0
  %1595 = vmatprep.subr.mxu0 0.0
  %1596 = vmatpush1.msra.mxu0 0.0
  %1597 = vmatprep.subr.mxu0 0.0
  %1598 = vmatpush1.msra.mxu0 0.0
  %1599 = vmatprep.subr.mxu0 0.0
  %1600 = vmatpush1.msra.mxu0 0.0
  %1601 = vmatprep.subr.mxu0 0.0
  %1602 = vmatpush1.msra.mxu0 0.0
  %1603 = vmatprep.subr.mxu0 0.0
  %1604 = vmatpush1.msra.mxu0 0.0
  %1605 = vmatprep.subr.mxu0 0.0
  %1606 = vmatpush1.msra.mxu0 %v257
  %1607 = vmatprep.subr.mxu0 0.0
  %1608 = vmatpush1.msra.mxu0 %v256
  %1609 = vmatprep.subr.mxu0 0.0
  %1610 = vmatpush2.msra.mxu0 0.0
  %1611 = vmatprep.subr.mxu0 0.0
  %1612 = vmatpush2.msra.mxu0 0.0
  %1613 = vmatprep.subr.mxu0 0.0
  %1614 = vmatpush2.msra.mxu0 0.0
  %1615 = vmatprep.subr.mxu0 0.0
  %1616 = vmatpush2.msra.mxu0 0.0
  %1617 = vmatprep.subr.mxu0 0.0
  %1618 = vmatpush2.msra.mxu0 0.0
  %1619 = vmatprep.subr.mxu0 0.0
  %1620 = vmatpush2.msra.mxu0 0.0
  %1621 = vmatprep.subr.mxu0 0.0
  %1622 = vmatpush2.msra.mxu0 0.0
  %1623 = vmatprep.subr.mxu0 0.0
  %1624 = vmatpush2.msra.mxu0 0.0
  %1625 = vmatprep.subr.mxu0 0.0
  %1626 = vmatpush2.msra.mxu0 0.0
  %1627 = vmatprep.subr.mxu0 0.0
  %1628 = vmatpush2.msra.mxu0 0.0
  %1629 = vmatprep.subr.mxu0 0.0
  %1630 = vmatpush2.msra.mxu0 0.0
  %1631 = vmatprep.subr.mxu0 0.0
  %1632 = vmatpush2.msra.mxu0 0.0
  %1633 = vmatprep.subr.mxu0 0.0
  %1634 = vmatpush2.msra.mxu0 0.0
  %1635 = vmatprep.subr.mxu0 0.0
  %1636 = vmatpush2.msra.mxu0 0.0
  %1637 = vmatprep.subr.mxu0 0.0
  %1638 = vmatpush2.msra.mxu0 0.0
  %1639 = vmatprep.subr.mxu0 0.0
  %1640 = vmatpush2.msra.mxu0 0.0
  %1641 = vmatprep.mubr.f32.mxu0 0.0
  %1642 = vmatmul.mubr.f32.gmra.mxu0 %v1575
  %v1643 = vpop.f32.mrf.mxu0
  %v1644 = vadd.f32 0.0, %v1643
  %v1645 = vpop.f32.mrf.mxu0
  %1646 = vdwg.mxu0
  %v1648 = vrot.slane %v1644, 4
  %v1650 = vadd.f32 %v168, %v1648
  %v1651 = vxor.u32 %v1650, 2147483648
  %v1652 = vmul.f32 %v1651, 1.442695
  %v1653 = vpow.pop %v1652
  %v1654 = vadd.f32 %v1653, 1.0
  %v1655 = vrcp.pop %v1654
  %v1656 = vmul.f32 1.0, %v1655
  %v1657 = vtanh.pop %v1650
  %v1659 = vrot.slane %v1449, 6
  %v1661 = vmul.f32 %v1656, %v1659
  %1663 = vrot.lane.b32.xlu0 %v1657, 96
  %v1664 = vpop.permute.xlu0 %1663
  %v1666 = vmul.f32 %v1656, %v1664
  %1668 = vrot.lane.b32.xlu0 %v1666, 16
  %v1669 = vpop.permute.xlu0 %1668
  %v1671 = vadd.f32 %v1661, %v1669
  %v1672 = vtanh.pop %v1671
  %1674 = vrot.lane.b32.xlu0 %v1672, 32
  %v1675 = vpop.permute.xlu0 %1674
  %v1677 = vmul.f32 %v1656, %v1675
  %v1678 = vrot.slane %v1561, 4
  %1679 = vrot.lane.b32.xlu0 %v1678, 80
  %v1680 = vpop.permute.xlu0 %1679
  %v1681 = vsel %vm260, %v1680, 0
  %1683 = vmatprep.subr.mxu0 0.0
  %1684 = vmatpush1.msra.mxu0 0.0
  %1685 = vmatprep.subr.mxu0 0.0
  %1686 = vmatpush1.msra.mxu0 0.0
  %1687 = vmatprep.subr.mxu0 0.0
  %1688 = vmatpush1.msra.mxu0 0.0
  %1689 = vmatprep.subr.mxu0 0.0
  %1690 = vmatpush1.msra.mxu0 0.0
  %1691 = vmatprep.subr.mxu0 0.0
  %1692 = vmatpush1.msra.mxu0 0.0
  %1693 = vmatprep.subr.mxu0 0.0
  %1694 = vmatpush1.msra.mxu0 0.0
  %1695 = vmatprep.subr.mxu0 0.0
  %1696 = vmatpush1.msra.mxu0 0.0
  %1697 = vmatprep.subr.mxu0 0.0
  %1698 = vmatpush1.msra.mxu0 0.0
  %1699 = vmatprep.subr.mxu0 0.0
  %1700 = vmatpush1.msra.mxu0 0.0
  %1701 = vmatprep.subr.mxu0 0.0
  %1702 = vmatpush1.msra.mxu0 0.0
  %1703 = vmatprep.subr.mxu0 0.0
  %1704 = vmatpush1.msra.mxu0 0.0
  %1705 = vmatprep.subr.mxu0 0.0
  %1706 = vmatpush1.msra.mxu0 0.0
  %1707 = vmatprep.subr.mxu0 0.0
  %1708 = vmatpush1.msra.mxu0 0.0
  %1709 = vmatprep.subr.mxu0 0.0
  %1710 = vmatpush1.msra.mxu0 0.0
  %1711 = vmatprep.subr.mxu0 0.0
  %1712 = vmatpush1.msra.mxu0 %v259
  %1713 = vmatprep.subr.mxu0 0.0
  %1714 = vmatpush1.msra.mxu0 %v258
  %1715 = vmatprep.subr.mxu0 0.0
  %1716 = vmatpush2.msra.mxu0 0.0
  %1717 = vmatprep.subr.mxu0 0.0
  %1718 = vmatpush2.msra.mxu0 0.0
  %1719 = vmatprep.subr.mxu0 0.0
  %1720 = vmatpush2.msra.mxu0 0.0
  %1721 = vmatprep.subr.mxu0 0.0
  %1722 = vmatpush2.msra.mxu0 0.0
  %1723 = vmatprep.subr.mxu0 0.0
  %1724 = vmatpush2.msra.mxu0 0.0
  %1725 = vmatprep.subr.mxu0 0.0
  %1726 = vmatpush2.msra.mxu0 0.0
  %1727 = vmatprep.subr.mxu0 0.0
  %1728 = vmatpush2.msra.mxu0 0.0
  %1729 = vmatprep.subr.mxu0 0.0
  %1730 = vmatpush2.msra.mxu0 0.0
  %1731 = vmatprep.subr.mxu0 0.0
  %1732 = vmatpush2.msra.mxu0 0.0
  %1733 = vmatprep.subr.mxu0 0.0
  %1734 = vmatpush2.msra.mxu0 0.0
  %1735 = vmatprep.subr.mxu0 0.0
  %1736 = vmatpush2.msra.mxu0 0.0
  %1737 = vmatprep.subr.mxu0 0.0
  %1738 = vmatpush2.msra.mxu0 0.0
  %1739 = vmatprep.subr.mxu0 0.0
  %1740 = vmatpush2.msra.mxu0 0.0
  %1741 = vmatprep.subr.mxu0 0.0
  %1742 = vmatpush2.msra.mxu0 0.0
  %1743 = vmatprep.subr.mxu0 0.0
  %1744 = vmatpush2.msra.mxu0 0.0
  %1745 = vmatprep.subr.mxu0 0.0
  %1746 = vmatpush2.msra.mxu0 0.0
  %1747 = vmatprep.mubr.f32.mxu0 0.0
  %1748 = vmatmul.mubr.f32.gmra.mxu0 %v1681
  %v1749 = vpop.f32.mrf.mxu0
  %v1750 = vadd.f32 0.0, %v1749
  %v1751 = vpop.f32.mrf.mxu0
  %1752 = vdwg.mxu0
  %v1754 = vrot.slane %v1750, 6
  %v1756 = vadd.f32 %v248, %v1754
  %v1757 = vxor.u32 %v1756, 2147483648
  %v1758 = vmul.f32 %v1757, 1.442695
  %v1759 = vpow.pop %v1758
  %v1760 = vadd.f32 %v1759, 1.0
  %v1761 = vrcp.pop %v1760
  %v1762 = vmul.f32 1.0, %v1761
  %v1763 = vtanh.pop %v1756
  %v1765 = vrot.slane %v1555, 2
  %v1767 = vmul.f32 %v1762, %v1765
  %1769 = vrot.lane.b32.xlu0 %v1763, 96
  %v1770 = vpop.permute.xlu0 %1769
  %v1772 = vmul.f32 %v1762, %v1770
  %1774 = vrot.lane.b32.xlu0 %v1772, 16
  %v1775 = vpop.permute.xlu0 %1774
  %v1777 = vadd.f32 %v1767, %v1775
  %v1778 = vtanh.pop %v1777
  %1780 = vrot.lane.b32.xlu0 %v1778, 32
  %v1781 = vpop.permute.xlu0 %1780
  %v1783 = vmul.f32 %v1762, %v1781
  %1785 = vrot.lane.b32.xlu0 %v1677, 80
  %v1786 = vpop.permute.xlu0 %1785
  %1788 = vst.msk [vmem:[#allocation2 + $0x8] sm:$0x30] %vm906, %v1786
  %1790 = vrot.lane.b32.xlu0 %v1783, 96
  %v1791 = vpop.permute.xlu0 %1790
  %1793 = vst.msk [vmem:[#allocation2] sm:$0xc] %vm912, %v1791
  %v1794 = vrot.slane %v1677, 4
  %1795 = vrot.lane.b32.xlu0 %v1794, 80
  %v1796 = vpop.permute.xlu0 %1795
  %v1797 = vsel %vm260, %v1796, 0
  %1799 = vmatprep.subr.mxu0 0.0
  %1800 = vmatpush1.msra.mxu0 0.0
  %1801 = vmatprep.subr.mxu0 0.0
  %1802 = vmatpush1.msra.mxu0 0.0
  %1803 = vmatprep.subr.mxu0 0.0
  %1804 = vmatpush1.msra.mxu0 0.0
  %1805 = vmatprep.subr.mxu0 0.0
  %1806 = vmatpush1.msra.mxu0 0.0
  %1807 = vmatprep.subr.mxu0 0.0
  %1808 = vmatpush1.msra.mxu0 0.0
  %1809 = vmatprep.subr.mxu0 0.0
  %1810 = vmatpush1.msra.mxu0 0.0
  %1811 = vmatprep.subr.mxu0 0.0
  %1812 = vmatpush1.msra.mxu0 0.0
  %1813 = vmatprep.subr.mxu0 0.0
  %1814 = vmatpush1.msra.mxu0 0.0
  %1815 = vmatprep.subr.mxu0 0.0
  %1816 = vmatpush1.msra.mxu0 0.0
  %1817 = vmatprep.subr.mxu0 0.0
  %1818 = vmatpush1.msra.mxu0 0.0
  %1819 = vmatprep.subr.mxu0 0.0
  %1820 = vmatpush1.msra.mxu0 0.0
  %1821 = vmatprep.subr.mxu0 0.0
  %1822 = vmatpush1.msra.mxu0 0.0
  %1823 = vmatprep.subr.mxu0 0.0
  %1824 = vmatpush1.msra.mxu0 0.0
  %1825 = vmatprep.subr.mxu0 0.0
  %1826 = vmatpush1.msra.mxu0 0.0
  %1827 = vmatprep.subr.mxu0 0.0
  %1828 = vmatpush1.msra.mxu0 %v257
  %1829 = vmatprep.subr.mxu0 0.0
  %1830 = vmatpush1.msra.mxu0 %v256
  %1831 = vmatprep.subr.mxu0 0.0
  %1832 = vmatpush2.msra.mxu0 0.0
  %1833 = vmatprep.subr.mxu0 0.0
  %1834 = vmatpush2.msra.mxu0 0.0
  %1835 = vmatprep.subr.mxu0 0.0
  %1836 = vmatpush2.msra.mxu0 0.0
  %1837 = vmatprep.subr.mxu0 0.0
  %1838 = vmatpush2.msra.mxu0 0.0
  %1839 = vmatprep.subr.mxu0 0.0
  %1840 = vmatpush2.msra.mxu0 0.0
  %1841 = vmatprep.subr.mxu0 0.0
  %1842 = vmatpush2.msra.mxu0 0.0
  %1843 = vmatprep.subr.mxu0 0.0
  %1844 = vmatpush2.msra.mxu0 0.0
  %1845 = vmatprep.subr.mxu0 0.0
  %1846 = vmatpush2.msra.mxu0 0.0
  %1847 = vmatprep.subr.mxu0 0.0
  %1848 = vmatpush2.msra.mxu0 0.0
  %1849 = vmatprep.subr.mxu0 0.0
  %1850 = vmatpush2.msra.mxu0 0.0
  %1851 = vmatprep.subr.mxu0 0.0
  %1852 = vmatpush2.msra.mxu0 0.0
  %1853 = vmatprep.subr.mxu0 0.0
  %1854 = vmatpush2.msra.mxu0 0.0
  %1855 = vmatprep.subr.mxu0 0.0
  %1856 = vmatpush2.msra.mxu0 0.0
  %1857 = vmatprep.subr.mxu0 0.0
  %1858 = vmatpush2.msra.mxu0 0.0
  %1859 = vmatprep.subr.mxu0 0.0
  %1860 = vmatpush2.msra.mxu0 0.0
  %1861 = vmatprep.subr.mxu0 0.0
  %1862 = vmatpush2.msra.mxu0 0.0
  %1863 = vmatprep.mubr.f32.mxu0 0.0
  %1864 = vmatmul.mubr.f32.gmra.mxu0 %v1797
  %v1865 = vpop.f32.mrf.mxu0
  %v1866 = vadd.f32 0.0, %v1865
  %v1867 = vpop.f32.mrf.mxu0
  %1868 = vdwg.mxu0
  %v1870 = vrot.slane %v1866, 2
  %v1872 = vadd.f32 %v168, %v1870
  %v1873 = vxor.u32 %v1872, 2147483648
  %v1874 = vmul.f32 %v1873, 1.442695
  %v1875 = vpow.pop %v1874
  %v1876 = vadd.f32 %v1875, 1.0
  %v1877 = vrcp.pop %v1876
  %v1878 = vmul.f32 1.0, %v1877
  %v1879 = vtanh.pop %v1872
  %v1881 = vrot.slane %v1671, 6
  %v1883 = vmul.f32 %v1878, %v1881
  %1885 = vrot.lane.b32.xlu0 %v1879, 96
  %v1886 = vpop.permute.xlu0 %1885
  %v1888 = vmul.f32 %v1878, %v1886
  %1890 = vrot.lane.b32.xlu0 %v1888, 16
  %v1891 = vpop.permute.xlu0 %1890
  %v1893 = vadd.f32 %v1883, %v1891
  %v1894 = vtanh.pop %v1893
  %1896 = vrot.lane.b32.xlu0 %v1894, 32
  %v1897 = vpop.permute.xlu0 %1896
  %v1899 = vmul.f32 %v1878, %v1897
  %v1900 = vrot.slane %v1783, 2
  %1901 = vrot.lane.b32.xlu0 %v1900, 80
  %v1902 = vpop.permute.xlu0 %1901
  %v1903 = vsel %vm260, %v1902, 0
  %1905 = vmatprep.subr.mxu0 0.0
  %1906 = vmatpush1.msra.mxu0 0.0
  %1907 = vmatprep.subr.mxu0 0.0
  %1908 = vmatpush1.msra.mxu0 0.0
  %1909 = vmatprep.subr.mxu0 0.0
  %1910 = vmatpush1.msra.mxu0 0.0
  %1911 = vmatprep.subr.mxu0 0.0
  %1912 = vmatpush1.msra.mxu0 0.0
  %1913 = vmatprep.subr.mxu0 0.0
  %1914 = vmatpush1.msra.mxu0 0.0
  %1915 = vmatprep.subr.mxu0 0.0
  %1916 = vmatpush1.msra.mxu0 0.0
  %1917 = vmatprep.subr.mxu0 0.0
  %1918 = vmatpush1.msra.mxu0 0.0
  %1919 = vmatprep.subr.mxu0 0.0
  %1920 = vmatpush1.msra.mxu0 0.0
  %1921 = vmatprep.subr.mxu0 0.0
  %1922 = vmatpush1.msra.mxu0 0.0
  %1923 = vmatprep.subr.mxu0 0.0
  %1924 = vmatpush1.msra.mxu0 0.0
  %1925 = vmatprep.subr.mxu0 0.0
  %1926 = vmatpush1.msra.mxu0 0.0
  %1927 = vmatprep.subr.mxu0 0.0
  %1928 = vmatpush1.msra.mxu0 0.0
  %1929 = vmatprep.subr.mxu0 0.0
  %1930 = vmatpush1.msra.mxu0 0.0
  %1931 = vmatprep.subr.mxu0 0.0
  %1932 = vmatpush1.msra.mxu0 0.0
  %1933 = vmatprep.subr.mxu0 0.0
  %1934 = vmatpush1.msra.mxu0 %v259
  %1935 = vmatprep.subr.mxu0 0.0
  %1936 = vmatpush1.msra.mxu0 %v258
  %1937 = vmatprep.subr.mxu0 0.0
  %1938 = vmatpush2.msra.mxu0 0.0
  %1939 = vmatprep.subr.mxu0 0.0
  %1940 = vmatpush2.msra.mxu0 0.0
  %1941 = vmatprep.subr.mxu0 0.0
  %1942 = vmatpush2.msra.mxu0 0.0
  %1943 = vmatprep.subr.mxu0 0.0
  %1944 = vmatpush2.msra.mxu0 0.0
  %1945 = vmatprep.subr.mxu0 0.0
  %1946 = vmatpush2.msra.mxu0 0.0
  %1947 = vmatprep.subr.mxu0 0.0
  %1948 = vmatpush2.msra.mxu0 0.0
  %1949 = vmatprep.subr.mxu0 0.0
  %1950 = vmatpush2.msra.mxu0 0.0
  %1951 = vmatprep.subr.mxu0 0.0
  %1952 = vmatpush2.msra.mxu0 0.0
  %1953 = vmatprep.subr.mxu0 0.0
  %1954 = vmatpush2.msra.mxu0 0.0
  %1955 = vmatprep.subr.mxu0 0.0
  %1956 = vmatpush2.msra.mxu0 0.0
  %1957 = vmatprep.subr.mxu0 0.0
  %1958 = vmatpush2.msra.mxu0 0.0
  %1959 = vmatprep.subr.mxu0 0.0
  %1960 = vmatpush2.msra.mxu0 0.0
  %1961 = vmatprep.subr.mxu0 0.0
  %1962 = vmatpush2.msra.mxu0 0.0
  %1963 = vmatprep.subr.mxu0 0.0
  %1964 = vmatpush2.msra.mxu0 0.0
  %1965 = vmatprep.subr.mxu0 0.0
  %1966 = vmatpush2.msra.mxu0 0.0
  %1967 = vmatprep.subr.mxu0 0.0
  %1968 = vmatpush2.msra.mxu0 0.0
  %1969 = vmatprep.mubr.f32.mxu0 0.0
  %1970 = vmatmul.mubr.f32.gmra.mxu0 %v1903
  %v1971 = vpop.f32.mrf.mxu0
  %v1972 = vadd.f32 0.0, %v1971
  %v1973 = vpop.f32.mrf.mxu0
  %1974 = vdwg.mxu0
  %v1975 = vadd.f32 %v248, %v1972
  %v1976 = vxor.u32 %v1975, 2147483648
  %v1977 = vmul.f32 %v1976, 1.442695
  %v1978 = vpow.pop %v1977
  %v1979 = vadd.f32 %v1978, 1.0
  %v1980 = vrcp.pop %v1979
  %v1981 = vmul.f32 1.0, %v1980
  %v1982 = vtanh.pop %v1975
  %v1984 = vrot.slane %v1777, 2
  %v1986 = vmul.f32 %v1981, %v1984
  %1988 = vrot.lane.b32.xlu0 %v1982, 96
  %v1989 = vpop.permute.xlu0 %1988
  %v1991 = vmul.f32 %v1981, %v1989
  %1993 = vrot.lane.b32.xlu0 %v1991, 16
  %v1994 = vpop.permute.xlu0 %1993
  %v1996 = vadd.f32 %v1986, %v1994
  %v1997 = vtanh.pop %v1996
  %1999 = vrot.lane.b32.xlu0 %v1997, 32
  %v2000 = vpop.permute.xlu0 %1999
  %v2002 = vmul.f32 %v1981, %v2000
  %2004 = vrot.lane.b32.xlu0 %v1899, 80
  %v2005 = vpop.permute.xlu0 %2004
  %2007 = vst.msk [vmem:[#allocation2 + $0x8] sm:$0xc0] %vm1127, %v2005
  %2009 = vrot.lane.b32.xlu0 %v2002, 96
  %v2010 = vpop.permute.xlu0 %2009
  %2012 = vst.msk [vmem:[#allocation2] sm:$0x3] %vm1133, %v2010
  %v2013 = vld [vmem:[#allocation2] sm:$0xff]
  %v2014 = vld [vmem:[#allocation2 + $0x8] sm:$0xff]
  %v2015 = vld [vmem:[%s9] sm:$0xff]
  %v2016 = vld [vmem:[%s9 + $0x8] sm:$0xff]
  %v2017 = vld [vmem:[%s9 + $0x10] sm:$0xff]
  %v2018 = vld [vmem:[%s9 + $0x18] sm:$0xff]
  %v2019 = vld [vmem:[%s11] sm:$0x1]
  %v2021 = vlaneseq
  %v2022 = vshrl.u32 %v2021, 7
  %v2023 = vsub.s32 0, %v2022
  %v2024 = vrot.slane %v2019, %v2023
  %vm2026 = vcmask 261120
  %v2028 = vsel %vm2026, %v2013, 0
  %v2031 = vsel %vm2026, %v2014, 0
  %2033 = vmatprep.subr.mxu0 0.0
  %2034 = vmatpush1.msra.mxu0 0.0
  %2035 = vmatprep.subr.mxu0 0.0
  %2036 = vmatpush1.msra.mxu0 0.0
  %2037 = vmatprep.subr.mxu0 0.0
  %2038 = vmatpush1.msra.mxu0 0.0
  %2039 = vmatprep.subr.mxu0 0.0
  %2040 = vmatpush1.msra.mxu0 0.0
  %2041 = vmatprep.subr.mxu0 0.0
  %2042 = vmatpush1.msra.mxu0 0.0
  %2043 = vmatprep.subr.mxu0 0.0
  %2044 = vmatpush1.msra.mxu0 0.0
  %2045 = vmatprep.subr.mxu0 0.0
  %2046 = vmatpush1.msra.mxu0 0.0
  %2047 = vmatprep.subr.mxu0 0.0
  %2048 = vmatpush1.msra.mxu0 0.0
  %2049 = vmatprep.subr.mxu0 0.0
  %2050 = vmatpush1.msra.mxu0 0.0
  %2051 = vmatprep.subr.mxu0 0.0
  %2052 = vmatpush1.msra.mxu0 0.0
  %2053 = vmatprep.subr.mxu0 0.0
  %2054 = vmatpush1.msra.mxu0 0.0
  %2055 = vmatprep.subr.mxu0 0.0
  %2056 = vmatpush1.msra.mxu0 0.0
  %2057 = vmatprep.subr.mxu0 0.0
  %2058 = vmatpush1.msra.mxu0 %v2018
  %2059 = vmatprep.subr.mxu0 0.0
  %2060 = vmatpush1.msra.mxu0 %v2017
  %2061 = vmatprep.subr.mxu0 0.0
  %2062 = vmatpush1.msra.mxu0 %v2016
  %2063 = vmatprep.subr.mxu0 0.0
  %2064 = vmatpush1.msra.mxu0 %v2015
  %2065 = vmatprep.subr.mxu0 0.0
  %2066 = vmatpush2.msra.mxu0 0.0
  %2067 = vmatprep.subr.mxu0 0.0
  %2068 = vmatpush2.msra.mxu0 0.0
  %2069 = vmatprep.subr.mxu0 0.0
  %2070 = vmatpush2.msra.mxu0 0.0
  %2071 = vmatprep.subr.mxu0 0.0
  %2072 = vmatpush2.msra.mxu0 0.0
  %2073 = vmatprep.subr.mxu0 0.0
  %2074 = vmatpush2.msra.mxu0 0.0
  %2075 = vmatprep.subr.mxu0 0.0
  %2076 = vmatpush2.msra.mxu0 0.0
  %2077 = vmatprep.subr.mxu0 0.0
  %2078 = vmatpush2.msra.mxu0 0.0
  %2079 = vmatprep.subr.mxu0 0.0
  %2080 = vmatpush2.msra.mxu0 0.0
  %2081 = vmatprep.subr.mxu0 0.0
  %2082 = vmatpush2.msra.mxu0 0.0
  %2083 = vmatprep.subr.mxu0 0.0
  %2084 = vmatpush2.msra.mxu0 0.0
  %2085 = vmatprep.subr.mxu0 0.0
  %2086 = vmatpush2.msra.mxu0 0.0
  %2087 = vmatprep.subr.mxu0 0.0
  %2088 = vmatpush2.msra.mxu0 0.0
  %2089 = vmatprep.subr.mxu0 0.0
  %2090 = vmatpush2.msra.mxu0 0.0
  %2091 = vmatprep.subr.mxu0 0.0
  %2092 = vmatpush2.msra.mxu0 0.0
  %2093 = vmatprep.subr.mxu0 0.0
  %2094 = vmatpush2.msra.mxu0 0.0
  %2095 = vmatprep.subr.mxu0 0.0
  %2096 = vmatpush2.msra.mxu0 0.0
  %2097 = vmatprep.mubr.f32.mxu0 0.0
  %2098 = vmatmul.mubr.f32.gmra.mxu0 %v2028
  %v2099 = vpop.f32.mrf.mxu0
  %v2100 = vadd.f32 %v2024, %v2099
  %v2101 = vpop.f32.mrf.mxu0
  %2102 = vmatprep.mubr.f32.mxu0 0.0
  %2103 = vmatmul.mubr.f32.gmra.mxu0 %v2031
  %v2104 = vpop.f32.mrf.mxu0
  %v2105 = vadd.f32 %v2024, %v2104
  %v2106 = vpop.f32.mrf.mxu0
  %2107 = vdwg.mxu0
  %v2108 = vld [vmem:[%s12] sm:$0xff]
  %v2109 = vld [vmem:[%s12 + $0x8] sm:$0xff]
  %v2110 = vld [vmem:[%s12 + $0x10] sm:$0xff]
  %v2111 = vld [vmem:[%s12 + $0x18] sm:$0xff]
  %v2112 = vld [vmem:[%s14] sm:$0x1]
  %v2114 = vlaneseq
  %v2115 = vshrl.u32 %v2114, 7
  %v2116 = vsub.s32 0, %v2115
  %v2117 = vrot.slane %v2112, %v2116
  %2119 = vmatprep.subr.mxu0 0.0
  %2120 = vmatpush1.msra.mxu0 0.0
  %2121 = vmatprep.subr.mxu0 0.0
  %2122 = vmatpush1.msra.mxu0 0.0
  %2123 = vmatprep.subr.mxu0 0.0
  %2124 = vmatpush1.msra.mxu0 0.0
  %2125 = vmatprep.subr.mxu0 0.0
  %2126 = vmatpush1.msra.mxu0 0.0
  %2127 = vmatprep.subr.mxu0 0.0
  %2128 = vmatpush1.msra.mxu0 0.0
  %2129 = vmatprep.subr.mxu0 0.0
  %2130 = vmatpush1.msra.mxu0 0.0
  %2131 = vmatprep.subr.mxu0 0.0
  %2132 = vmatpush1.msra.mxu0 0.0
  %2133 = vmatprep.subr.mxu0 0.0
  %2134 = vmatpush1.msra.mxu0 0.0
  %2135 = vmatprep.subr.mxu0 0.0
  %2136 = vmatpush1.msra.mxu0 0.0
  %2137 = vmatprep.subr.mxu0 0.0
  %2138 = vmatpush1.msra.mxu0 0.0
  %2139 = vmatprep.subr.mxu0 0.0
  %2140 = vmatpush1.msra.mxu0 0.0
  %2141 = vmatprep.subr.mxu0 0.0
  %2142 = vmatpush1.msra.mxu0 0.0
  %2143 = vmatprep.subr.mxu0 0.0
  %2144 = vmatpush1.msra.mxu0 %v2111
  %2145 = vmatprep.subr.mxu0 0.0
  %2146 = vmatpush1.msra.mxu0 %v2110
  %2147 = vmatprep.subr.mxu0 0.0
  %2148 = vmatpush1.msra.mxu0 %v2109
  %2149 = vmatprep.subr.mxu0 0.0
  %2150 = vmatpush1.msra.mxu0 %v2108
  %2151 = vmatprep.subr.mxu0 0.0
  %2152 = vmatpush2.msra.mxu0 0.0
  %2153 = vmatprep.subr.mxu0 0.0
  %2154 = vmatpush2.msra.mxu0 0.0
  %2155 = vmatprep.subr.mxu0 0.0
  %2156 = vmatpush2.msra.mxu0 0.0
  %2157 = vmatprep.subr.mxu0 0.0
  %2158 = vmatpush2.msra.mxu0 0.0
  %2159 = vmatprep.subr.mxu0 0.0
  %2160 = vmatpush2.msra.mxu0 0.0
  %2161 = vmatprep.subr.mxu0 0.0
  %2162 = vmatpush2.msra.mxu0 0.0
  %2163 = vmatprep.subr.mxu0 0.0
  %2164 = vmatpush2.msra.mxu0 0.0
  %2165 = vmatprep.subr.mxu0 0.0
  %2166 = vmatpush2.msra.mxu0 0.0
  %2167 = vmatprep.subr.mxu0 0.0
  %2168 = vmatpush2.msra.mxu0 0.0
  %2169 = vmatprep.subr.mxu0 0.0
  %2170 = vmatpush2.msra.mxu0 0.0
  %2171 = vmatprep.subr.mxu0 0.0
  %2172 = vmatpush2.msra.mxu0 0.0
  %2173 = vmatprep.subr.mxu0 0.0
  %2174 = vmatpush2.msra.mxu0 0.0
  %2175 = vmatprep.subr.mxu0 0.0
  %2176 = vmatpush2.msra.mxu0 0.0
  %2177 = vmatprep.subr.mxu0 0.0
  %2178 = vmatpush2.msra.mxu0 0.0
  %2179 = vmatprep.subr.mxu0 0.0
  %2180 = vmatpush2.msra.mxu0 0.0
  %2181 = vmatprep.subr.mxu0 0.0
  %2182 = vmatpush2.msra.mxu0 0.0
  %2183 = vmatprep.mubr.f32.mxu0 0.0
  %2184 = vmatmul.mubr.f32.gmra.mxu0 %v2028
  %v2185 = vpop.f32.mrf.mxu0
  %v2186 = vadd.f32 %v2117, %v2185
  %v2187 = vpop.f32.mrf.mxu0
  %2188 = vmatprep.mubr.f32.mxu0 0.0
  %2189 = vmatmul.mubr.f32.gmra.mxu0 %v2031
  %v2190 = vpop.f32.mrf.mxu0
  %v2191 = vadd.f32 %v2117, %v2190
  %v2192 = vpop.f32.mrf.mxu0
  %2193 = vdwg.mxu0
  %v2194 = vld [vmem:[%s10] sm:$0xff]
  %v2195 = vld [vmem:[%s10 + $0x8] sm:$0xff]
  %v2196 = vld [vmem:[%s13] sm:$0xff]
  %v2197 = vld [vmem:[%s13 + $0x8] sm:$0xff]
  %2198 = vmatprep.subr.mxu0 0.0
  %2199 = vmatpush1.msra.mxu0 0.0
  %2200 = vmatprep.subr.mxu0 0.0
  %2201 = vmatpush1.msra.mxu0 0.0
  %2202 = vmatprep.subr.mxu0 0.0
  %2203 = vmatpush1.msra.mxu0 0.0
  %2204 = vmatprep.subr.mxu0 0.0
  %2205 = vmatpush1.msra.mxu0 0.0
  %2206 = vmatprep.subr.mxu0 0.0
  %2207 = vmatpush1.msra.mxu0 0.0
  %2208 = vmatprep.subr.mxu0 0.0
  %2209 = vmatpush1.msra.mxu0 0.0
  %2210 = vmatprep.subr.mxu0 0.0
  %2211 = vmatpush1.msra.mxu0 0.0
  %2212 = vmatprep.subr.mxu0 0.0
  %2213 = vmatpush1.msra.mxu0 0.0
  %2214 = vmatprep.subr.mxu0 0.0
  %2215 = vmatpush1.msra.mxu0 0.0
  %2216 = vmatprep.subr.mxu0 0.0
  %2217 = vmatpush1.msra.mxu0 0.0
  %2218 = vmatprep.subr.mxu0 0.0
  %2219 = vmatpush1.msra.mxu0 0.0
  %2220 = vmatprep.subr.mxu0 0.0
  %2221 = vmatpush1.msra.mxu0 0.0
  %2222 = vmatprep.subr.mxu0 0.0
  %2223 = vmatpush1.msra.mxu0 0.0
  %2224 = vmatprep.subr.mxu0 0.0
  %2225 = vmatpush1.msra.mxu0 0.0
  %2226 = vmatprep.subr.mxu0 0.0
  %2227 = vmatpush1.msra.mxu0 %v2195
  %2228 = vmatprep.subr.mxu0 0.0
  %2229 = vmatpush1.msra.mxu0 %v2194
  %2230 = vmatprep.subr.mxu0 0.0
  %2231 = vmatpush2.msra.mxu0 0.0
  %2232 = vmatprep.subr.mxu0 0.0
  %2233 = vmatpush2.msra.mxu0 0.0
  %2234 = vmatprep.subr.mxu0 0.0
  %2235 = vmatpush2.msra.mxu0 0.0
  %2236 = vmatprep.subr.mxu0 0.0
  %2237 = vmatpush2.msra.mxu0 0.0
  %2238 = vmatprep.subr.mxu0 0.0
  %2239 = vmatpush2.msra.mxu0 0.0
  %2240 = vmatprep.subr.mxu0 0.0
  %2241 = vmatpush2.msra.mxu0 0.0
  %2242 = vmatprep.subr.mxu0 0.0
  %2243 = vmatpush2.msra.mxu0 0.0
  %2244 = vmatprep.subr.mxu0 0.0
  %2245 = vmatpush2.msra.mxu0 0.0
  %2246 = vmatprep.subr.mxu0 0.0
  %2247 = vmatpush2.msra.mxu0 0.0
  %2248 = vmatprep.subr.mxu0 0.0
  %2249 = vmatpush2.msra.mxu0 0.0
  %2250 = vmatprep.subr.mxu0 0.0
  %2251 = vmatpush2.msra.mxu0 0.0
  %2252 = vmatprep.subr.mxu0 0.0
  %2253 = vmatpush2.msra.mxu0 0.0
  %2254 = vmatprep.subr.mxu0 0.0
  %2255 = vmatpush2.msra.mxu0 0.0
  %2256 = vmatprep.subr.mxu0 0.0
  %2257 = vmatpush2.msra.mxu0 0.0
  %2258 = vmatprep.subr.mxu0 0.0
  %2259 = vmatpush2.msra.mxu0 0.0
  %2260 = vmatprep.subr.mxu0 0.0
  %2261 = vmatpush2.msra.mxu0 0.0
  %2262 = vmatprep.mubr.f32.mxu0 0.0
  %2263 = vmatmul.mubr.f32.gmra.mxu0 %v262
  %v2264 = vpop.f32.mrf.mxu0
  %v2265 = vadd.f32 0.0, %v2264
  %v2266 = vpop.f32.mrf.mxu0
  %2267 = vdwg.mxu0
  %v2268 = vadd.f32 %v2100, %v2265
  %v2269 = vxor.u32 %v2268, 2147483648
  %v2270 = vmul.f32 %v2269, 1.442695
  %v2271 = vpow.pop %v2270
  %v2272 = vadd.f32 %v2271, 1.0
  %v2273 = vrcp.pop %v2272
  %v2274 = vmul.f32 1.0, %v2273
  %v2275 = vtanh.pop %v2268
  %v2276 = vmul.f32 %v2274, 0.0
  %2278 = vrot.lane.b32.xlu0 %v2275, 96
  %v2279 = vpop.permute.xlu0 %2278
  %v2281 = vmul.f32 %v2274, %v2279
  %2283 = vrot.lane.b32.xlu0 %v2281, 16
  %v2284 = vpop.permute.xlu0 %2283
  %v2286 = vadd.f32 %v2276, %v2284
  %v2287 = vtanh.pop %v2286
  %2289 = vrot.lane.b32.xlu0 %v2287, 32
  %v2290 = vpop.permute.xlu0 %2289
  %v2292 = vmul.f32 %v2274, %v2290
  %2293 = vmatprep.subr.mxu0 0.0
  %2294 = vmatpush1.msra.mxu0 0.0
  %2295 = vmatprep.subr.mxu0 0.0
  %2296 = vmatpush1.msra.mxu0 0.0
  %2297 = vmatprep.subr.mxu0 0.0
  %2298 = vmatpush1.msra.mxu0 0.0
  %2299 = vmatprep.subr.mxu0 0.0
  %2300 = vmatpush1.msra.mxu0 0.0
  %2301 = vmatprep.subr.mxu0 0.0
  %2302 = vmatpush1.msra.mxu0 0.0
  %2303 = vmatprep.subr.mxu0 0.0
  %2304 = vmatpush1.msra.mxu0 0.0
  %2305 = vmatprep.subr.mxu0 0.0
  %2306 = vmatpush1.msra.mxu0 0.0
  %2307 = vmatprep.subr.mxu0 0.0
  %2308 = vmatpush1.msra.mxu0 0.0
  %2309 = vmatprep.subr.mxu0 0.0
  %2310 = vmatpush1.msra.mxu0 0.0
  %2311 = vmatprep.subr.mxu0 0.0
  %2312 = vmatpush1.msra.mxu0 0.0
  %2313 = vmatprep.subr.mxu0 0.0
  %2314 = vmatpush1.msra.mxu0 0.0
  %2315 = vmatprep.subr.mxu0 0.0
  %2316 = vmatpush1.msra.mxu0 0.0
  %2317 = vmatprep.subr.mxu0 0.0
  %2318 = vmatpush1.msra.mxu0 0.0
  %2319 = vmatprep.subr.mxu0 0.0
  %2320 = vmatpush1.msra.mxu0 0.0
  %2321 = vmatprep.subr.mxu0 0.0
  %2322 = vmatpush1.msra.mxu0 %v2197
  %2323 = vmatprep.subr.mxu0 0.0
  %2324 = vmatpush1.msra.mxu0 %v2196
  %2325 = vmatprep.subr.mxu0 0.0
  %2326 = vmatpush2.msra.mxu0 0.0
  %2327 = vmatprep.subr.mxu0 0.0
  %2328 = vmatpush2.msra.mxu0 0.0
  %2329 = vmatprep.subr.mxu0 0.0
  %2330 = vmatpush2.msra.mxu0 0.0
  %2331 = vmatprep.subr.mxu0 0.0
  %2332 = vmatpush2.msra.mxu0 0.0
  %2333 = vmatprep.subr.mxu0 0.0
  %2334 = vmatpush2.msra.mxu0 0.0
  %2335 = vmatprep.subr.mxu0 0.0
  %2336 = vmatpush2.msra.mxu0 0.0
  %2337 = vmatprep.subr.mxu0 0.0
  %2338 = vmatpush2.msra.mxu0 0.0
  %2339 = vmatprep.subr.mxu0 0.0
  %2340 = vmatpush2.msra.mxu0 0.0
  %2341 = vmatprep.subr.mxu0 0.0
  %2342 = vmatpush2.msra.mxu0 0.0
  %2343 = vmatprep.subr.mxu0 0.0
  %2344 = vmatpush2.msra.mxu0 0.0
  %2345 = vmatprep.subr.mxu0 0.0
  %2346 = vmatpush2.msra.mxu0 0.0
  %2347 = vmatprep.subr.mxu0 0.0
  %2348 = vmatpush2.msra.mxu0 0.0
  %2349 = vmatprep.subr.mxu0 0.0
  %2350 = vmatpush2.msra.mxu0 0.0
  %2351 = vmatprep.subr.mxu0 0.0
  %2352 = vmatpush2.msra.mxu0 0.0
  %2353 = vmatprep.subr.mxu0 0.0
  %2354 = vmatpush2.msra.mxu0 0.0
  %2355 = vmatprep.subr.mxu0 0.0
  %2356 = vmatpush2.msra.mxu0 0.0
  %2357 = vmatprep.mubr.f32.mxu0 0.0
  %2358 = vmatmul.mubr.f32.gmra.mxu0 %v262
  %v2359 = vpop.f32.mrf.mxu0
  %v2360 = vadd.f32 0.0, %v2359
  %v2361 = vpop.f32.mrf.mxu0
  %2362 = vdwg.mxu0
  %v2364 = vrot.slane %v2360, 2
  %v2366 = vadd.f32 %v2191, %v2364
  %v2367 = vxor.u32 %v2366, 2147483648
  %v2368 = vmul.f32 %v2367, 1.442695
  %v2369 = vpow.pop %v2368
  %v2370 = vadd.f32 %v2369, 1.0
  %v2371 = vrcp.pop %v2370
  %v2372 = vmul.f32 1.0, %v2371
  %v2373 = vtanh.pop %v2366
  %v2374 = vmul.f32 %v2372, 0.0
  %2376 = vrot.lane.b32.xlu0 %v2373, 96
  %v2377 = vpop.permute.xlu0 %2376
  %v2379 = vmul.f32 %v2372, %v2377
  %2381 = vrot.lane.b32.xlu0 %v2379, 16
  %v2382 = vpop.permute.xlu0 %2381
  %v2384 = vadd.f32 %v2374, %v2382
  %v2385 = vtanh.pop %v2384
  %2387 = vrot.lane.b32.xlu0 %v2385, 32
  %v2388 = vpop.permute.xlu0 %2387
  %v2390 = vmul.f32 %v2372, %v2388
  %v2393 = vunpack.c.l.s4 1966171168
  %v2394 = vunpack.c.0.s8 %v2393
  %v2395 = vlaneseq
  %v2396 = vshrl.u32 %v2395, 7
  %v2397 = vsub.s32 %v2394, %v2396
  %v2398 = vrot.slane %v2292, %v2397
  %v2399 = vcombine.high %v2398, %v2398
  %v2401 = vunpack.c.l.s4 1966171168
  %v2402 = vunpack.c.0.s8 %v2401
  %v2403 = vlaneseq
  %v2404 = vshrl.u32 %v2403, 7
  %v2405 = vsub.s32 %v2402, %v2404
  %v2406 = vrot.slane %v2398, %v2405
  %v2408 = vunpack.c.l.s4 1966171168
  %v2409 = vunpack.c.0.s8 %v2408
  %v2410 = vlaneseq
  %v2411 = vshrl.u32 %v2410, 7
  %v2412 = vsub.s32 %v2409, %v2411
  %v2413 = vrot.slane %v2399, %v2412
  %v2414 = vlaneseq
  %v2415 = vshrl.u32 %v2414, 7
  %v2416 = vsub.s32 0, %v2415
  %v2417 = vrot.slane %v2406, %v2416
  %v2418 = vlaneseq
  %v2419 = vshrl.u32 %v2418, 7
  %v2420 = vsub.s32 0, %v2419
  %v2421 = vrot.slane %v2413, %v2420
  %2422 = vrot.lane.b32.xlu0 %v2417, 80
  %v2423 = vpop.permute.xlu0 %2422
  %2424 = vrot.lane.b32.xlu0 %v2421, 80
  %v2425 = vpop.permute.xlu0 %2424
  %vm2428 = vcmask 122880
  %2429 = vst.msk [vmem:[#allocation3] sm:$0x1] %vm2428, %v2423
  %2430 = vst.msk [vmem:[#allocation3 + $0x8] sm:$0x1] %vm2428, %v2425
  %v2432 = vcombine.high %v2390, %v2390
  %v2434 = vunpack.c.l.s4 1966171168
  %v2435 = vunpack.c.0.s8 %v2434
  %v2436 = vlaneseq
  %v2437 = vshrl.u32 %v2436, 7
  %v2438 = vsub.s32 %v2435, %v2437
  %v2439 = vrot.slane %v2432, %v2438
  %v2440 = vcombine.high %v2439, %v2439
  %v2442 = vunpack.c.l.s4 1966171168
  %v2443 = vunpack.c.0.s8 %v2442
  %v2444 = vlaneseq
  %v2445 = vshrl.u32 %v2444, 7
  %v2446 = vsub.s32 %v2443, %v2445
  %v2447 = vrot.slane %v2439, %v2446
  %v2449 = vunpack.c.l.s4 1966171168
  %v2450 = vunpack.c.0.s8 %v2449
  %v2451 = vlaneseq
  %v2452 = vshrl.u32 %v2451, 7
  %v2453 = vsub.s32 %v2450, %v2452
  %v2454 = vrot.slane %v2440, %v2453
  %v2455 = vcombine.high %v2447, %v2447
  %v2456 = vcombine.high %v2454, %v2454
  %v2457 = vlaneseq
  %v2458 = vshrl.u32 %v2457, 7
  %v2459 = vsub.s32 0, %v2458
  %v2460 = vrot.slane %v2455, %v2459
  %v2461 = vlaneseq
  %v2462 = vshrl.u32 %v2461, 7
  %v2463 = vsub.s32 0, %v2462
  %v2464 = vrot.slane %v2456, %v2463
  %2465 = vrot.lane.b32.xlu0 %v2460, 96
  %v2466 = vpop.permute.xlu0 %2465
  %2467 = vrot.lane.b32.xlu0 %v2464, 96
  %v2468 = vpop.permute.xlu0 %2467
  %vm2471 = vcmask 254080
  %2472 = vst.msk [vmem:[#allocation3 + $0x7] sm:$0x1] %vm2471, %v2466
  %2473 = vst.msk [vmem:[#allocation3 + $0xf] sm:$0x1] %vm2471, %v2468
  %2474 = vrot.lane.b32.xlu0 %v2292, 80
  %v2475 = vpop.permute.xlu0 %2474
  %v2476 = vsel %vm260, %v2475, 0
  %2478 = vmatprep.subr.mxu0 0.0
  %2479 = vmatpush1.msra.mxu0 0.0
  %2480 = vmatprep.subr.mxu0 0.0
  %2481 = vmatpush1.msra.mxu0 0.0
  %2482 = vmatprep.subr.mxu0 0.0
  %2483 = vmatpush1.msra.mxu0 0.0
  %2484 = vmatprep.subr.mxu0 0.0
  %2485 = vmatpush1.msra.mxu0 0.0
  %2486 = vmatprep.subr.mxu0 0.0
  %2487 = vmatpush1.msra.mxu0 0.0
  %2488 = vmatprep.subr.mxu0 0.0
  %2489 = vmatpush1.msra.mxu0 0.0
  %2490 = vmatprep.subr.mxu0 0.0
  %2491 = vmatpush1.msra.mxu0 0.0
  %2492 = vmatprep.subr.mxu0 0.0
  %2493 = vmatpush1.msra.mxu0 0.0
  %2494 = vmatprep.subr.mxu0 0.0
  %2495 = vmatpush1.msra.mxu0 0.0
  %2496 = vmatprep.subr.mxu0 0.0
  %2497 = vmatpush1.msra.mxu0 0.0
  %2498 = vmatprep.subr.mxu0 0.0
  %2499 = vmatpush1.msra.mxu0 0.0
  %2500 = vmatprep.subr.mxu0 0.0
  %2501 = vmatpush1.msra.mxu0 0.0
  %2502 = vmatprep.subr.mxu0 0.0
  %2503 = vmatpush1.msra.mxu0 0.0
  %2504 = vmatprep.subr.mxu0 0.0
  %2505 = vmatpush1.msra.mxu0 0.0
  %2506 = vmatprep.subr.mxu0 0.0
  %2507 = vmatpush1.msra.mxu0 %v2195
  %2508 = vmatprep.subr.mxu0 0.0
  %2509 = vmatpush1.msra.mxu0 %v2194
  %2510 = vmatprep.subr.mxu0 0.0
  %2511 = vmatpush2.msra.mxu0 0.0
  %2512 = vmatprep.subr.mxu0 0.0
  %2513 = vmatpush2.msra.mxu0 0.0
  %2514 = vmatprep.subr.mxu0 0.0
  %2515 = vmatpush2.msra.mxu0 0.0
  %2516 = vmatprep.subr.mxu0 0.0
  %2517 = vmatpush2.msra.mxu0 0.0
  %2518 = vmatprep.subr.mxu0 0.0
  %2519 = vmatpush2.msra.mxu0 0.0
  %2520 = vmatprep.subr.mxu0 0.0
  %2521 = vmatpush2.msra.mxu0 0.0
  %2522 = vmatprep.subr.mxu0 0.0
  %2523 = vmatpush2.msra.mxu0 0.0
  %2524 = vmatprep.subr.mxu0 0.0
  %2525 = vmatpush2.msra.mxu0 0.0
  %2526 = vmatprep.subr.mxu0 0.0
  %2527 = vmatpush2.msra.mxu0 0.0
  %2528 = vmatprep.subr.mxu0 0.0
  %2529 = vmatpush2.msra.mxu0 0.0
  %2530 = vmatprep.subr.mxu0 0.0
  %2531 = vmatpush2.msra.mxu0 0.0
  %2532 = vmatprep.subr.mxu0 0.0
  %2533 = vmatpush2.msra.mxu0 0.0
  %2534 = vmatprep.subr.mxu0 0.0
  %2535 = vmatpush2.msra.mxu0 0.0
  %2536 = vmatprep.subr.mxu0 0.0
  %2537 = vmatpush2.msra.mxu0 0.0
  %2538 = vmatprep.subr.mxu0 0.0
  %2539 = vmatpush2.msra.mxu0 0.0
  %2540 = vmatprep.subr.mxu0 0.0
  %2541 = vmatpush2.msra.mxu0 0.0
  %2542 = vmatprep.mubr.f32.mxu0 0.0
  %2543 = vmatmul.mubr.f32.gmra.mxu0 %v2476
  %v2544 = vpop.f32.mrf.mxu0
  %v2545 = vadd.f32 0.0, %v2544
  %v2546 = vpop.f32.mrf.mxu0
  %2547 = vdwg.mxu0
  %v2549 = vrot.slane %v2545, 6
  %v2551 = vadd.f32 %v2100, %v2549
  %v2552 = vxor.u32 %v2551, 2147483648
  %v2553 = vmul.f32 %v2552, 1.442695
  %v2554 = vpow.pop %v2553
  %v2555 = vadd.f32 %v2554, 1.0
  %v2556 = vrcp.pop %v2555
  %v2557 = vmul.f32 1.0, %v2556
  %v2558 = vtanh.pop %v2551
  %v2560 = vrot.slane %v2286, 6
  %v2562 = vmul.f32 %v2557, %v2560
  %2564 = vrot.lane.b32.xlu0 %v2558, 96
  %v2565 = vpop.permute.xlu0 %2564
  %v2567 = vmul.f32 %v2557, %v2565
  %2569 = vrot.lane.b32.xlu0 %v2567, 16
  %v2570 = vpop.permute.xlu0 %2569
  %v2572 = vadd.f32 %v2562, %v2570
  %v2573 = vtanh.pop %v2572
  %2575 = vrot.lane.b32.xlu0 %v2573, 32
  %v2576 = vpop.permute.xlu0 %2575
  %v2578 = vmul.f32 %v2557, %v2576
  %v2579 = vrot.slane %v2390, 6
  %2580 = vrot.lane.b32.xlu0 %v2579, 80
  %v2581 = vpop.permute.xlu0 %2580
  %v2582 = vsel %vm260, %v2581, 0
  %2584 = vmatprep.subr.mxu0 0.0
  %2585 = vmatpush1.msra.mxu0 0.0
  %2586 = vmatprep.subr.mxu0 0.0
  %2587 = vmatpush1.msra.mxu0 0.0
  %2588 = vmatprep.subr.mxu0 0.0
  %2589 = vmatpush1.msra.mxu0 0.0
  %2590 = vmatprep.subr.mxu0 0.0
  %2591 = vmatpush1.msra.mxu0 0.0
  %2592 = vmatprep.subr.mxu0 0.0
  %2593 = vmatpush1.msra.mxu0 0.0
  %2594 = vmatprep.subr.mxu0 0.0
  %2595 = vmatpush1.msra.mxu0 0.0
  %2596 = vmatprep.subr.mxu0 0.0
  %2597 = vmatpush1.msra.mxu0 0.0
  %2598 = vmatprep.subr.mxu0 0.0
  %2599 = vmatpush1.msra.mxu0 0.0
  %2600 = vmatprep.subr.mxu0 0.0
  %2601 = vmatpush1.msra.mxu0 0.0
  %2602 = vmatprep.subr.mxu0 0.0
  %2603 = vmatpush1.msra.mxu0 0.0
  %2604 = vmatprep.subr.mxu0 0.0
  %2605 = vmatpush1.msra.mxu0 0.0
  %2606 = vmatprep.subr.mxu0 0.0
  %2607 = vmatpush1.msra.mxu0 0.0
  %2608 = vmatprep.subr.mxu0 0.0
  %2609 = vmatpush1.msra.mxu0 0.0
  %2610 = vmatprep.subr.mxu0 0.0
  %2611 = vmatpush1.msra.mxu0 0.0
  %2612 = vmatprep.subr.mxu0 0.0
  %2613 = vmatpush1.msra.mxu0 %v2197
  %2614 = vmatprep.subr.mxu0 0.0
  %2615 = vmatpush1.msra.mxu0 %v2196
  %2616 = vmatprep.subr.mxu0 0.0
  %2617 = vmatpush2.msra.mxu0 0.0
  %2618 = vmatprep.subr.mxu0 0.0
  %2619 = vmatpush2.msra.mxu0 0.0
  %2620 = vmatprep.subr.mxu0 0.0
  %2621 = vmatpush2.msra.mxu0 0.0
  %2622 = vmatprep.subr.mxu0 0.0
  %2623 = vmatpush2.msra.mxu0 0.0
  %2624 = vmatprep.subr.mxu0 0.0
  %2625 = vmatpush2.msra.mxu0 0.0
  %2626 = vmatprep.subr.mxu0 0.0
  %2627 = vmatpush2.msra.mxu0 0.0
  %2628 = vmatprep.subr.mxu0 0.0
  %2629 = vmatpush2.msra.mxu0 0.0
  %2630 = vmatprep.subr.mxu0 0.0
  %2631 = vmatpush2.msra.mxu0 0.0
  %2632 = vmatprep.subr.mxu0 0.0
  %2633 = vmatpush2.msra.mxu0 0.0
  %2634 = vmatprep.subr.mxu0 0.0
  %2635 = vmatpush2.msra.mxu0 0.0
  %2636 = vmatprep.subr.mxu0 0.0
  %2637 = vmatpush2.msra.mxu0 0.0
  %2638 = vmatprep.subr.mxu0 0.0
  %2639 = vmatpush2.msra.mxu0 0.0
  %2640 = vmatprep.subr.mxu0 0.0
  %2641 = vmatpush2.msra.mxu0 0.0
  %2642 = vmatprep.subr.mxu0 0.0
  %2643 = vmatpush2.msra.mxu0 0.0
  %2644 = vmatprep.subr.mxu0 0.0
  %2645 = vmatpush2.msra.mxu0 0.0
  %2646 = vmatprep.subr.mxu0 0.0
  %2647 = vmatpush2.msra.mxu0 0.0
  %2648 = vmatprep.mubr.f32.mxu0 0.0
  %2649 = vmatmul.mubr.f32.gmra.mxu0 %v2582
  %v2650 = vpop.f32.mrf.mxu0
  %v2651 = vadd.f32 0.0, %v2650
  %v2652 = vpop.f32.mrf.mxu0
  %2653 = vdwg.mxu0
  %v2655 = vrot.slane %v2651, 4
  %v2657 = vadd.f32 %v2191, %v2655
  %v2658 = vxor.u32 %v2657, 2147483648
  %v2659 = vmul.f32 %v2658, 1.442695
  %v2660 = vpow.pop %v2659
  %v2661 = vadd.f32 %v2660, 1.0
  %v2662 = vrcp.pop %v2661
  %v2663 = vmul.f32 1.0, %v2662
  %v2664 = vtanh.pop %v2657
  %v2666 = vrot.slane %v2384, 2
  %v2668 = vmul.f32 %v2663, %v2666
  %2670 = vrot.lane.b32.xlu0 %v2664, 96
  %v2671 = vpop.permute.xlu0 %2670
  %v2673 = vmul.f32 %v2663, %v2671
  %2675 = vrot.lane.b32.xlu0 %v2673, 16
  %v2676 = vpop.permute.xlu0 %2675
  %v2678 = vadd.f32 %v2668, %v2676
  %v2679 = vtanh.pop %v2678
  %2681 = vrot.lane.b32.xlu0 %v2679, 32
  %v2682 = vpop.permute.xlu0 %2681
  %v2684 = vmul.f32 %v2663, %v2682
  %v2687 = vunpack.c.l.s4 1966171168
  %v2688 = vunpack.c.0.s8 %v2687
  %v2689 = vlaneseq
  %v2690 = vshrl.u32 %v2689, 7
  %v2691 = vsub.s32 %v2688, %v2690
  %v2692 = vrot.slane %v2578, %v2691
  %v2693 = vcombine.high %v2692, %v2692
  %v2695 = vunpack.c.l.s4 1966171168
  %v2696 = vunpack.c.0.s8 %v2695
  %v2697 = vlaneseq
  %v2698 = vshrl.u32 %v2697, 7
  %v2699 = vsub.s32 %v2696, %v2698
  %v2700 = vrot.slane %v2692, %v2699
  %v2702 = vunpack.c.l.s4 1966171168
  %v2703 = vunpack.c.0.s8 %v2702
  %v2704 = vlaneseq
  %v2705 = vshrl.u32 %v2704, 7
  %v2706 = vsub.s32 %v2703, %v2705
  %v2707 = vrot.slane %v2693, %v2706
  %v2708 = vcombine.high %v2700, %v2700
  %v2709 = vcombine.high %v2707, %v2707
  %v2710 = vlaneseq
  %v2711 = vshrl.u32 %v2710, 7
  %v2712 = vsub.s32 0, %v2711
  %v2713 = vrot.slane %v2708, %v2712
  %v2714 = vlaneseq
  %v2715 = vshrl.u32 %v2714, 7
  %v2716 = vsub.s32 0, %v2715
  %v2717 = vrot.slane %v2709, %v2716
  %2718 = vrot.lane.b32.xlu0 %v2713, 80
  %v2719 = vpop.permute.xlu0 %2718
  %2720 = vrot.lane.b32.xlu0 %v2717, 80
  %v2721 = vpop.permute.xlu0 %2720
  %2724 = vst.msk [vmem:[#allocation3 + $0x1] sm:$0x1] %vm2428, %v2719
  %2725 = vst.msk [vmem:[#allocation3 + $0x9] sm:$0x1] %vm2428, %v2721
  %v2727 = vcombine.high %v2684, %v2684
  %v2729 = vunpack.c.l.s4 1966171168
  %v2730 = vunpack.c.0.s8 %v2729
  %v2731 = vlaneseq
  %v2732 = vshrl.u32 %v2731, 7
  %v2733 = vsub.s32 %v2730, %v2732
  %v2734 = vrot.slane %v2727, %v2733
  %v2735 = vcombine.high %v2734, %v2734
  %v2737 = vunpack.c.l.s4 1966171168
  %v2738 = vunpack.c.0.s8 %v2737
  %v2739 = vlaneseq
  %v2740 = vshrl.u32 %v2739, 7
  %v2741 = vsub.s32 %v2738, %v2740
  %v2742 = vrot.slane %v2734, %v2741
  %v2744 = vunpack.c.l.s4 1966171168
  %v2745 = vunpack.c.0.s8 %v2744
  %v2746 = vlaneseq
  %v2747 = vshrl.u32 %v2746, 7
  %v2748 = vsub.s32 %v2745, %v2747
  %v2749 = vrot.slane %v2735, %v2748
  %v2750 = vlaneseq
  %v2751 = vshrl.u32 %v2750, 7
  %v2752 = vsub.s32 0, %v2751
  %v2753 = vrot.slane %v2742, %v2752
  %v2754 = vlaneseq
  %v2755 = vshrl.u32 %v2754, 7
  %v2756 = vsub.s32 0, %v2755
  %v2757 = vrot.slane %v2749, %v2756
  %2758 = vrot.lane.b32.xlu0 %v2753, 96
  %v2759 = vpop.permute.xlu0 %2758
  %2760 = vrot.lane.b32.xlu0 %v2757, 96
  %v2761 = vpop.permute.xlu0 %2760
  %2764 = vst.msk [vmem:[#allocation3 + $0x6] sm:$0x1] %vm2471, %v2759
  %2765 = vst.msk [vmem:[#allocation3 + $0xe] sm:$0x1] %vm2471, %v2761
  %v2766 = vrot.slane %v2578, 2
  %2767 = vrot.lane.b32.xlu0 %v2766, 80
  %v2768 = vpop.permute.xlu0 %2767
  %v2769 = vsel %vm260, %v2768, 0
  %2771 = vmatprep.subr.mxu0 0.0
  %2772 = vmatpush1.msra.mxu0 0.0
  %2773 = vmatprep.subr.mxu0 0.0
  %2774 = vmatpush1.msra.mxu0 0.0
  %2775 = vmatprep.subr.mxu0 0.0
  %2776 = vmatpush1.msra.mxu0 0.0
  %2777 = vmatprep.subr.mxu0 0.0
  %2778 = vmatpush1.msra.mxu0 0.0
  %2779 = vmatprep.subr.mxu0 0.0
  %2780 = vmatpush1.msra.mxu0 0.0
  %2781 = vmatprep.subr.mxu0 0.0
  %2782 = vmatpush1.msra.mxu0 0.0
  %2783 = vmatprep.subr.mxu0 0.0
  %2784 = vmatpush1.msra.mxu0 0.0
  %2785 = vmatprep.subr.mxu0 0.0
  %2786 = vmatpush1.msra.mxu0 0.0
  %2787 = vmatprep.subr.mxu0 0.0
  %2788 = vmatpush1.msra.mxu0 0.0
  %2789 = vmatprep.subr.mxu0 0.0
  %2790 = vmatpush1.msra.mxu0 0.0
  %2791 = vmatprep.subr.mxu0 0.0
  %2792 = vmatpush1.msra.mxu0 0.0
  %2793 = vmatprep.subr.mxu0 0.0
  %2794 = vmatpush1.msra.mxu0 0.0
  %2795 = vmatprep.subr.mxu0 0.0
  %2796 = vmatpush1.msra.mxu0 0.0
  %2797 = vmatprep.subr.mxu0 0.0
  %2798 = vmatpush1.msra.mxu0 0.0
  %2799 = vmatprep.subr.mxu0 0.0
  %2800 = vmatpush1.msra.mxu0 %v2195
  %2801 = vmatprep.subr.mxu0 0.0
  %2802 = vmatpush1.msra.mxu0 %v2194
  %2803 = vmatprep.subr.mxu0 0.0
  %2804 = vmatpush2.msra.mxu0 0.0
  %2805 = vmatprep.subr.mxu0 0.0
  %2806 = vmatpush2.msra.mxu0 0.0
  %2807 = vmatprep.subr.mxu0 0.0
  %2808 = vmatpush2.msra.mxu0 0.0
  %2809 = vmatprep.subr.mxu0 0.0
  %2810 = vmatpush2.msra.mxu0 0.0
  %2811 = vmatprep.subr.mxu0 0.0
  %2812 = vmatpush2.msra.mxu0 0.0
  %2813 = vmatprep.subr.mxu0 0.0
  %2814 = vmatpush2.msra.mxu0 0.0
  %2815 = vmatprep.subr.mxu0 0.0
  %2816 = vmatpush2.msra.mxu0 0.0
  %2817 = vmatprep.subr.mxu0 0.0
  %2818 = vmatpush2.msra.mxu0 0.0
  %2819 = vmatprep.subr.mxu0 0.0
  %2820 = vmatpush2.msra.mxu0 0.0
  %2821 = vmatprep.subr.mxu0 0.0
  %2822 = vmatpush2.msra.mxu0 0.0
  %2823 = vmatprep.subr.mxu0 0.0
  %2824 = vmatpush2.msra.mxu0 0.0
  %2825 = vmatprep.subr.mxu0 0.0
  %2826 = vmatpush2.msra.mxu0 0.0
  %2827 = vmatprep.subr.mxu0 0.0
  %2828 = vmatpush2.msra.mxu0 0.0
  %2829 = vmatprep.subr.mxu0 0.0
  %2830 = vmatpush2.msra.mxu0 0.0
  %2831 = vmatprep.subr.mxu0 0.0
  %2832 = vmatpush2.msra.mxu0 0.0
  %2833 = vmatprep.subr.mxu0 0.0
  %2834 = vmatpush2.msra.mxu0 0.0
  %2835 = vmatprep.mubr.f32.mxu0 0.0
  %2836 = vmatmul.mubr.f32.gmra.mxu0 %v2769
  %v2837 = vpop.f32.mrf.mxu0
  %v2838 = vadd.f32 0.0, %v2837
  %v2839 = vpop.f32.mrf.mxu0
  %2840 = vdwg.mxu0
  %v2842 = vrot.slane %v2838, 4
  %v2844 = vadd.f32 %v2100, %v2842
  %v2845 = vxor.u32 %v2844, 2147483648
  %v2846 = vmul.f32 %v2845, 1.442695
  %v2847 = vpow.pop %v2846
  %v2848 = vadd.f32 %v2847, 1.0
  %v2849 = vrcp.pop %v2848
  %v2850 = vmul.f32 1.0, %v2849
  %v2851 = vtanh.pop %v2844
  %v2853 = vrot.slane %v2572, 6
  %v2855 = vmul.f32 %v2850, %v2853
  %2857 = vrot.lane.b32.xlu0 %v2851, 96
  %v2858 = vpop.permute.xlu0 %2857
  %v2860 = vmul.f32 %v2850, %v2858
  %2862 = vrot.lane.b32.xlu0 %v2860, 16
  %v2863 = vpop.permute.xlu0 %2862
  %v2865 = vadd.f32 %v2855, %v2863
  %v2866 = vtanh.pop %v2865
  %2868 = vrot.lane.b32.xlu0 %v2866, 32
  %v2869 = vpop.permute.xlu0 %2868
  %v2871 = vmul.f32 %v2850, %v2869
  %v2872 = vrot.slane %v2684, 4
  %2873 = vrot.lane.b32.xlu0 %v2872, 80
  %v2874 = vpop.permute.xlu0 %2873
  %v2875 = vsel %vm260, %v2874, 0
  %2877 = vmatprep.subr.mxu0 0.0
  %2878 = vmatpush1.msra.mxu0 0.0
  %2879 = vmatprep.subr.mxu0 0.0
  %2880 = vmatpush1.msra.mxu0 0.0
  %2881 = vmatprep.subr.mxu0 0.0
  %2882 = vmatpush1.msra.mxu0 0.0
  %2883 = vmatprep.subr.mxu0 0.0
  %2884 = vmatpush1.msra.mxu0 0.0
  %2885 = vmatprep.subr.mxu0 0.0
  %2886 = vmatpush1.msra.mxu0 0.0
  %2887 = vmatprep.subr.mxu0 0.0
  %2888 = vmatpush1.msra.mxu0 0.0
  %2889 = vmatprep.subr.mxu0 0.0
  %2890 = vmatpush1.msra.mxu0 0.0
  %2891 = vmatprep.subr.mxu0 0.0
  %2892 = vmatpush1.msra.mxu0 0.0
  %2893 = vmatprep.subr.mxu0 0.0
  %2894 = vmatpush1.msra.mxu0 0.0
  %2895 = vmatprep.subr.mxu0 0.0
  %2896 = vmatpush1.msra.mxu0 0.0
  %2897 = vmatprep.subr.mxu0 0.0
  %2898 = vmatpush1.msra.mxu0 0.0
  %2899 = vmatprep.subr.mxu0 0.0
  %2900 = vmatpush1.msra.mxu0 0.0
  %2901 = vmatprep.subr.mxu0 0.0
  %2902 = vmatpush1.msra.mxu0 0.0
  %2903 = vmatprep.subr.mxu0 0.0
  %2904 = vmatpush1.msra.mxu0 0.0
  %2905 = vmatprep.subr.mxu0 0.0
  %2906 = vmatpush1.msra.mxu0 %v2197
  %2907 = vmatprep.subr.mxu0 0.0
  %2908 = vmatpush1.msra.mxu0 %v2196
  %2909 = vmatprep.subr.mxu0 0.0
  %2910 = vmatpush2.msra.mxu0 0.0
  %2911 = vmatprep.subr.mxu0 0.0
  %2912 = vmatpush2.msra.mxu0 0.0
  %2913 = vmatprep.subr.mxu0 0.0
  %2914 = vmatpush2.msra.mxu0 0.0
  %2915 = vmatprep.subr.mxu0 0.0
  %2916 = vmatpush2.msra.mxu0 0.0
  %2917 = vmatprep.subr.mxu0 0.0
  %2918 = vmatpush2.msra.mxu0 0.0
  %2919 = vmatprep.subr.mxu0 0.0
  %2920 = vmatpush2.msra.mxu0 0.0
  %2921 = vmatprep.subr.mxu0 0.0
  %2922 = vmatpush2.msra.mxu0 0.0
  %2923 = vmatprep.subr.mxu0 0.0
  %2924 = vmatpush2.msra.mxu0 0.0
  %2925 = vmatprep.subr.mxu0 0.0
  %2926 = vmatpush2.msra.mxu0 0.0
  %2927 = vmatprep.subr.mxu0 0.0
  %2928 = vmatpush2.msra.mxu0 0.0
  %2929 = vmatprep.subr.mxu0 0.0
  %2930 = vmatpush2.msra.mxu0 0.0
  %2931 = vmatprep.subr.mxu0 0.0
  %2932 = vmatpush2.msra.mxu0 0.0
  %2933 = vmatprep.subr.mxu0 0.0
  %2934 = vmatpush2.msra.mxu0 0.0
  %2935 = vmatprep.subr.mxu0 0.0
  %2936 = vmatpush2.msra.mxu0 0.0
  %2937 = vmatprep.subr.mxu0 0.0
  %2938 = vmatpush2.msra.mxu0 0.0
  %2939 = vmatprep.subr.mxu0 0.0
  %2940 = vmatpush2.msra.mxu0 0.0
  %2941 = vmatprep.mubr.f32.mxu0 0.0
  %2942 = vmatmul.mubr.f32.gmra.mxu0 %v2875
  %v2943 = vpop.f32.mrf.mxu0
  %v2944 = vadd.f32 0.0, %v2943
  %v2945 = vpop.f32.mrf.mxu0
  %2946 = vdwg.mxu0
  %v2948 = vrot.slane %v2944, 6
  %v2950 = vadd.f32 %v2191, %v2948
  %v2951 = vxor.u32 %v2950, 2147483648
  %v2952 = vmul.f32 %v2951, 1.442695
  %v2953 = vpow.pop %v2952
  %v2954 = vadd.f32 %v2953, 1.0
  %v2955 = vrcp.pop %v2954
  %v2956 = vmul.f32 1.0, %v2955
  %v2957 = vtanh.pop %v2950
  %v2959 = vrot.slane %v2678, 2
  %v2961 = vmul.f32 %v2956, %v2959
  %2963 = vrot.lane.b32.xlu0 %v2957, 96
  %v2964 = vpop.permute.xlu0 %2963
  %v2966 = vmul.f32 %v2956, %v2964
  %2968 = vrot.lane.b32.xlu0 %v2966, 16
  %v2969 = vpop.permute.xlu0 %2968
  %v2971 = vadd.f32 %v2961, %v2969
  %v2972 = vtanh.pop %v2971
  %2974 = vrot.lane.b32.xlu0 %v2972, 32
  %v2975 = vpop.permute.xlu0 %2974
  %v2977 = vmul.f32 %v2956, %v2975
  %v2979 = vcombine.high %v2871, %v2871
  %v2981 = vunpack.c.l.s4 1966171168
  %v2982 = vunpack.c.0.s8 %v2981
  %v2983 = vlaneseq
  %v2984 = vshrl.u32 %v2983, 7
  %v2985 = vsub.s32 %v2982, %v2984
  %v2986 = vrot.slane %v2979, %v2985
  %v2987 = vcombine.high %v2986, %v2986
  %v2989 = vunpack.c.l.s4 1966171168
  %v2990 = vunpack.c.0.s8 %v2989
  %v2991 = vlaneseq
  %v2992 = vshrl.u32 %v2991, 7
  %v2993 = vsub.s32 %v2990, %v2992
  %v2994 = vrot.slane %v2986, %v2993
  %v2996 = vunpack.c.l.s4 1966171168
  %v2997 = vunpack.c.0.s8 %v2996
  %v2998 = vlaneseq
  %v2999 = vshrl.u32 %v2998, 7
  %v3000 = vsub.s32 %v2997, %v2999
  %v3001 = vrot.slane %v2987, %v3000
  %v3002 = vlaneseq
  %v3003 = vshrl.u32 %v3002, 7
  %v3004 = vsub.s32 0, %v3003
  %v3005 = vrot.slane %v2994, %v3004
  %v3006 = vlaneseq
  %v3007 = vshrl.u32 %v3006, 7
  %v3008 = vsub.s32 0, %v3007
  %v3009 = vrot.slane %v3001, %v3008
  %3010 = vrot.lane.b32.xlu0 %v3005, 80
  %v3011 = vpop.permute.xlu0 %3010
  %3012 = vrot.lane.b32.xlu0 %v3009, 80
  %v3013 = vpop.permute.xlu0 %3012
  %3016 = vst.msk [vmem:[#allocation3 + $0x2] sm:$0x1] %vm2428, %v3011
  %3017 = vst.msk [vmem:[#allocation3 + $0xa] sm:$0x1] %vm2428, %v3013
  %v3020 = vunpack.c.l.s4 1966171168
  %v3021 = vunpack.c.0.s8 %v3020
  %v3022 = vlaneseq
  %v3023 = vshrl.u32 %v3022, 7
  %v3024 = vsub.s32 %v3021, %v3023
  %v3025 = vrot.slane %v2977, %v3024
  %v3026 = vcombine.high %v3025, %v3025
  %v3028 = vunpack.c.l.s4 1966171168
  %v3029 = vunpack.c.0.s8 %v3028
  %v3030 = vlaneseq
  %v3031 = vshrl.u32 %v3030, 7
  %v3032 = vsub.s32 %v3029, %v3031
  %v3033 = vrot.slane %v3025, %v3032
  %v3035 = vunpack.c.l.s4 1966171168
  %v3036 = vunpack.c.0.s8 %v3035
  %v3037 = vlaneseq
  %v3038 = vshrl.u32 %v3037, 7
  %v3039 = vsub.s32 %v3036, %v3038
  %v3040 = vrot.slane %v3026, %v3039
  %v3041 = vcombine.high %v3033, %v3033
  %v3042 = vcombine.high %v3040, %v3040
  %v3043 = vlaneseq
  %v3044 = vshrl.u32 %v3043, 7
  %v3045 = vsub.s32 0, %v3044
  %v3046 = vrot.slane %v3041, %v3045
  %v3047 = vlaneseq
  %v3048 = vshrl.u32 %v3047, 7
  %v3049 = vsub.s32 0, %v3048
  %v3050 = vrot.slane %v3042, %v3049
  %3051 = vrot.lane.b32.xlu0 %v3046, 96
  %v3052 = vpop.permute.xlu0 %3051
  %3053 = vrot.lane.b32.xlu0 %v3050, 96
  %v3054 = vpop.permute.xlu0 %3053
  %3057 = vst.msk [vmem:[#allocation3 + $0x5] sm:$0x1] %vm2471, %v3052
  %3058 = vst.msk [vmem:[#allocation3 + $0xd] sm:$0x1] %vm2471, %v3054
  %v3059 = vrot.slane %v2871, 4
  %3060 = vrot.lane.b32.xlu0 %v3059, 80
  %v3061 = vpop.permute.xlu0 %3060
  %v3062 = vsel %vm260, %v3061, 0
  %3064 = vmatprep.subr.mxu0 0.0
  %3065 = vmatpush1.msra.mxu0 0.0
  %3066 = vmatprep.subr.mxu0 0.0
  %3067 = vmatpush1.msra.mxu0 0.0
  %3068 = vmatprep.subr.mxu0 0.0
  %3069 = vmatpush1.msra.mxu0 0.0
  %3070 = vmatprep.subr.mxu0 0.0
  %3071 = vmatpush1.msra.mxu0 0.0
  %3072 = vmatprep.subr.mxu0 0.0
  %3073 = vmatpush1.msra.mxu0 0.0
  %3074 = vmatprep.subr.mxu0 0.0
  %3075 = vmatpush1.msra.mxu0 0.0
  %3076 = vmatprep.subr.mxu0 0.0
  %3077 = vmatpush1.msra.mxu0 0.0
  %3078 = vmatprep.subr.mxu0 0.0
  %3079 = vmatpush1.msra.mxu0 0.0
  %3080 = vmatprep.subr.mxu0 0.0
  %3081 = vmatpush1.msra.mxu0 0.0
  %3082 = vmatprep.subr.mxu0 0.0
  %3083 = vmatpush1.msra.mxu0 0.0
  %3084 = vmatprep.subr.mxu0 0.0
  %3085 = vmatpush1.msra.mxu0 0.0
  %3086 = vmatprep.subr.mxu0 0.0
  %3087 = vmatpush1.msra.mxu0 0.0
  %3088 = vmatprep.subr.mxu0 0.0
  %3089 = vmatpush1.msra.mxu0 0.0
  %3090 = vmatprep.subr.mxu0 0.0
  %3091 = vmatpush1.msra.mxu0 0.0
  %3092 = vmatprep.subr.mxu0 0.0
  %3093 = vmatpush1.msra.mxu0 %v2195
  %3094 = vmatprep.subr.mxu0 0.0
  %3095 = vmatpush1.msra.mxu0 %v2194
  %3096 = vmatprep.subr.mxu0 0.0
  %3097 = vmatpush2.msra.mxu0 0.0
  %3098 = vmatprep.subr.mxu0 0.0
  %3099 = vmatpush2.msra.mxu0 0.0
  %3100 = vmatprep.subr.mxu0 0.0
  %3101 = vmatpush2.msra.mxu0 0.0
  %3102 = vmatprep.subr.mxu0 0.0
  %3103 = vmatpush2.msra.mxu0 0.0
  %3104 = vmatprep.subr.mxu0 0.0
  %3105 = vmatpush2.msra.mxu0 0.0
  %3106 = vmatprep.subr.mxu0 0.0
  %3107 = vmatpush2.msra.mxu0 0.0
  %3108 = vmatprep.subr.mxu0 0.0
  %3109 = vmatpush2.msra.mxu0 0.0
  %3110 = vmatprep.subr.mxu0 0.0
  %3111 = vmatpush2.msra.mxu0 0.0
  %3112 = vmatprep.subr.mxu0 0.0
  %3113 = vmatpush2.msra.mxu0 0.0
  %3114 = vmatprep.subr.mxu0 0.0
  %3115 = vmatpush2.msra.mxu0 0.0
  %3116 = vmatprep.subr.mxu0 0.0
  %3117 = vmatpush2.msra.mxu0 0.0
  %3118 = vmatprep.subr.mxu0 0.0
  %3119 = vmatpush2.msra.mxu0 0.0
  %3120 = vmatprep.subr.mxu0 0.0
  %3121 = vmatpush2.msra.mxu0 0.0
  %3122 = vmatprep.subr.mxu0 0.0
  %3123 = vmatpush2.msra.mxu0 0.0
  %3124 = vmatprep.subr.mxu0 0.0
  %3125 = vmatpush2.msra.mxu0 0.0
  %3126 = vmatprep.subr.mxu0 0.0
  %3127 = vmatpush2.msra.mxu0 0.0
  %3128 = vmatprep.mubr.f32.mxu0 0.0
  %3129 = vmatmul.mubr.f32.gmra.mxu0 %v3062
  %v3130 = vpop.f32.mrf.mxu0
  %v3131 = vadd.f32 0.0, %v3130
  %v3132 = vpop.f32.mrf.mxu0
  %3133 = vdwg.mxu0
  %v3135 = vrot.slane %v3131, 2
  %v3137 = vadd.f32 %v2100, %v3135
  %v3138 = vxor.u32 %v3137, 2147483648
  %v3139 = vmul.f32 %v3138, 1.442695
  %v3140 = vpow.pop %v3139
  %v3141 = vadd.f32 %v3140, 1.0
  %v3142 = vrcp.pop %v3141
  %v3143 = vmul.f32 1.0, %v3142
  %v3144 = vtanh.pop %v3137
  %v3146 = vrot.slane %v2865, 6
  %v3148 = vmul.f32 %v3143, %v3146
  %3150 = vrot.lane.b32.xlu0 %v3144, 96
  %v3151 = vpop.permute.xlu0 %3150
  %v3153 = vmul.f32 %v3143, %v3151
  %3155 = vrot.lane.b32.xlu0 %v3153, 16
  %v3156 = vpop.permute.xlu0 %3155
  %v3158 = vadd.f32 %v3148, %v3156
  %v3159 = vtanh.pop %v3158
  %3161 = vrot.lane.b32.xlu0 %v3159, 32
  %v3162 = vpop.permute.xlu0 %3161
  %v3164 = vmul.f32 %v3143, %v3162
  %v3165 = vrot.slane %v2977, 2
  %3166 = vrot.lane.b32.xlu0 %v3165, 80
  %v3167 = vpop.permute.xlu0 %3166
  %v3168 = vsel %vm260, %v3167, 0
  %3170 = vmatprep.subr.mxu0 0.0
  %3171 = vmatpush1.msra.mxu0 0.0
  %3172 = vmatprep.subr.mxu0 0.0
  %3173 = vmatpush1.msra.mxu0 0.0
  %3174 = vmatprep.subr.mxu0 0.0
  %3175 = vmatpush1.msra.mxu0 0.0
  %3176 = vmatprep.subr.mxu0 0.0
  %3177 = vmatpush1.msra.mxu0 0.0
  %3178 = vmatprep.subr.mxu0 0.0
  %3179 = vmatpush1.msra.mxu0 0.0
  %3180 = vmatprep.subr.mxu0 0.0
  %3181 = vmatpush1.msra.mxu0 0.0
  %3182 = vmatprep.subr.mxu0 0.0
  %3183 = vmatpush1.msra.mxu0 0.0
  %3184 = vmatprep.subr.mxu0 0.0
  %3185 = vmatpush1.msra.mxu0 0.0
  %3186 = vmatprep.subr.mxu0 0.0
  %3187 = vmatpush1.msra.mxu0 0.0
  %3188 = vmatprep.subr.mxu0 0.0
  %3189 = vmatpush1.msra.mxu0 0.0
  %3190 = vmatprep.subr.mxu0 0.0
  %3191 = vmatpush1.msra.mxu0 0.0
  %3192 = vmatprep.subr.mxu0 0.0
  %3193 = vmatpush1.msra.mxu0 0.0
  %3194 = vmatprep.subr.mxu0 0.0
  %3195 = vmatpush1.msra.mxu0 0.0
  %3196 = vmatprep.subr.mxu0 0.0
  %3197 = vmatpush1.msra.mxu0 0.0
  %3198 = vmatprep.subr.mxu0 0.0
  %3199 = vmatpush1.msra.mxu0 %v2197
  %3200 = vmatprep.subr.mxu0 0.0
  %3201 = vmatpush1.msra.mxu0 %v2196
  %3202 = vmatprep.subr.mxu0 0.0
  %3203 = vmatpush2.msra.mxu0 0.0
  %3204 = vmatprep.subr.mxu0 0.0
  %3205 = vmatpush2.msra.mxu0 0.0
  %3206 = vmatprep.subr.mxu0 0.0
  %3207 = vmatpush2.msra.mxu0 0.0
  %3208 = vmatprep.subr.mxu0 0.0
  %3209 = vmatpush2.msra.mxu0 0.0
  %3210 = vmatprep.subr.mxu0 0.0
  %3211 = vmatpush2.msra.mxu0 0.0
  %3212 = vmatprep.subr.mxu0 0.0
  %3213 = vmatpush2.msra.mxu0 0.0
  %3214 = vmatprep.subr.mxu0 0.0
  %3215 = vmatpush2.msra.mxu0 0.0
  %3216 = vmatprep.subr.mxu0 0.0
  %3217 = vmatpush2.msra.mxu0 0.0
  %3218 = vmatprep.subr.mxu0 0.0
  %3219 = vmatpush2.msra.mxu0 0.0
  %3220 = vmatprep.subr.mxu0 0.0
  %3221 = vmatpush2.msra.mxu0 0.0
  %3222 = vmatprep.subr.mxu0 0.0
  %3223 = vmatpush2.msra.mxu0 0.0
  %3224 = vmatprep.subr.mxu0 0.0
  %3225 = vmatpush2.msra.mxu0 0.0
  %3226 = vmatprep.subr.mxu0 0.0
  %3227 = vmatpush2.msra.mxu0 0.0
  %3228 = vmatprep.subr.mxu0 0.0
  %3229 = vmatpush2.msra.mxu0 0.0
  %3230 = vmatprep.subr.mxu0 0.0
  %3231 = vmatpush2.msra.mxu0 0.0
  %3232 = vmatprep.subr.mxu0 0.0
  %3233 = vmatpush2.msra.mxu0 0.0
  %3234 = vmatprep.mubr.f32.mxu0 0.0
  %3235 = vmatmul.mubr.f32.gmra.mxu0 %v3168
  %v3236 = vpop.f32.mrf.mxu0
  %v3237 = vadd.f32 0.0, %v3236
  %v3238 = vpop.f32.mrf.mxu0
  %3239 = vdwg.mxu0
  %v3240 = vadd.f32 %v2191, %v3237
  %v3241 = vxor.u32 %v3240, 2147483648
  %v3242 = vmul.f32 %v3241, 1.442695
  %v3243 = vpow.pop %v3242
  %v3244 = vadd.f32 %v3243, 1.0
  %v3245 = vrcp.pop %v3244
  %v3246 = vmul.f32 1.0, %v3245
  %v3247 = vtanh.pop %v3240
  %v3249 = vrot.slane %v2971, 2
  %v3251 = vmul.f32 %v3246, %v3249
  %3253 = vrot.lane.b32.xlu0 %v3247, 96
  %v3254 = vpop.permute.xlu0 %3253
  %v3256 = vmul.f32 %v3246, %v3254
  %3258 = vrot.lane.b32.xlu0 %v3256, 16
  %v3259 = vpop.permute.xlu0 %3258
  %v3261 = vadd.f32 %v3251, %v3259
  %v3262 = vtanh.pop %v3261
  %3264 = vrot.lane.b32.xlu0 %v3262, 32
  %v3265 = vpop.permute.xlu0 %3264
  %v3267 = vmul.f32 %v3246, %v3265
  %v3269 = vcombine.high %v3164, %v3164
  %v3271 = vunpack.c.l.s4 1966171168
  %v3272 = vunpack.c.0.s8 %v3271
  %v3273 = vlaneseq
  %v3274 = vshrl.u32 %v3273, 7
  %v3275 = vsub.s32 %v3272, %v3274
  %v3276 = vrot.slane %v3269, %v3275
  %v3277 = vcombine.high %v3276, %v3276
  %v3279 = vunpack.c.l.s4 1966171168
  %v3280 = vunpack.c.0.s8 %v3279
  %v3281 = vlaneseq
  %v3282 = vshrl.u32 %v3281, 7
  %v3283 = vsub.s32 %v3280, %v3282
  %v3284 = vrot.slane %v3276, %v3283
  %v3286 = vunpack.c.l.s4 1966171168
  %v3287 = vunpack.c.0.s8 %v3286
  %v3288 = vlaneseq
  %v3289 = vshrl.u32 %v3288, 7
  %v3290 = vsub.s32 %v3287, %v3289
  %v3291 = vrot.slane %v3277, %v3290
  %v3292 = vcombine.high %v3284, %v3284
  %v3293 = vcombine.high %v3291, %v3291
  %v3294 = vlaneseq
  %v3295 = vshrl.u32 %v3294, 7
  %v3296 = vsub.s32 0, %v3295
  %v3297 = vrot.slane %v3292, %v3296
  %v3298 = vlaneseq
  %v3299 = vshrl.u32 %v3298, 7
  %v3300 = vsub.s32 0, %v3299
  %v3301 = vrot.slane %v3293, %v3300
  %3302 = vrot.lane.b32.xlu0 %v3297, 80
  %v3303 = vpop.permute.xlu0 %3302
  %3304 = vrot.lane.b32.xlu0 %v3301, 80
  %v3305 = vpop.permute.xlu0 %3304
  %3308 = vst.msk [vmem:[#allocation3 + $0x3] sm:$0x1] %vm2428, %v3303
  %3309 = vst.msk [vmem:[#allocation3 + $0xb] sm:$0x1] %vm2428, %v3305
  %v3312 = vunpack.c.l.s4 1966171168
  %v3313 = vunpack.c.0.s8 %v3312
  %v3314 = vlaneseq
  %v3315 = vshrl.u32 %v3314, 7
  %v3316 = vsub.s32 %v3313, %v3315
  %v3317 = vrot.slane %v3267, %v3316
  %v3318 = vcombine.high %v3317, %v3317
  %v3320 = vunpack.c.l.s4 1966171168
  %v3321 = vunpack.c.0.s8 %v3320
  %v3322 = vlaneseq
  %v3323 = vshrl.u32 %v3322, 7
  %v3324 = vsub.s32 %v3321, %v3323
  %v3325 = vrot.slane %v3317, %v3324
  %v3327 = vunpack.c.l.s4 1966171168
  %v3328 = vunpack.c.0.s8 %v3327
  %v3329 = vlaneseq
  %v3330 = vshrl.u32 %v3329, 7
  %v3331 = vsub.s32 %v3328, %v3330
  %v3332 = vrot.slane %v3318, %v3331
  %v3333 = vlaneseq
  %v3334 = vshrl.u32 %v3333, 7
  %v3335 = vsub.s32 0, %v3334
  %v3336 = vrot.slane %v3325, %v3335
  %v3337 = vlaneseq
  %v3338 = vshrl.u32 %v3337, 7
  %v3339 = vsub.s32 0, %v3338
  %v3340 = vrot.slane %v3332, %v3339
  %3341 = vrot.lane.b32.xlu0 %v3336, 96
  %v3342 = vpop.permute.xlu0 %3341
  %3343 = vrot.lane.b32.xlu0 %v3340, 96
  %v3344 = vpop.permute.xlu0 %3343
  %3347 = vst.msk [vmem:[#allocation3 + $0x4] sm:$0x1] %vm2471, %v3342
  %3348 = vst.msk [vmem:[#allocation3 + $0xc] sm:$0x1] %vm2471, %v3344
  %v3349 = vrot.slane %v3164, 6
  %3350 = vrot.lane.b32.xlu0 %v3349, 80
  %v3351 = vpop.permute.xlu0 %3350
  %v3352 = vsel %vm260, %v3351, 0
  %3354 = vmatprep.subr.mxu0 0.0
  %3355 = vmatpush1.msra.mxu0 0.0
  %3356 = vmatprep.subr.mxu0 0.0
  %3357 = vmatpush1.msra.mxu0 0.0
  %3358 = vmatprep.subr.mxu0 0.0
  %3359 = vmatpush1.msra.mxu0 0.0
  %3360 = vmatprep.subr.mxu0 0.0
  %3361 = vmatpush1.msra.mxu0 0.0
  %3362 = vmatprep.subr.mxu0 0.0
  %3363 = vmatpush1.msra.mxu0 0.0
  %3364 = vmatprep.subr.mxu0 0.0
  %3365 = vmatpush1.msra.mxu0 0.0
  %3366 = vmatprep.subr.mxu0 0.0
  %3367 = vmatpush1.msra.mxu0 0.0
  %3368 = vmatprep.subr.mxu0 0.0
  %3369 = vmatpush1.msra.mxu0 0.0
  %3370 = vmatprep.subr.mxu0 0.0
  %3371 = vmatpush1.msra.mxu0 0.0
  %3372 = vmatprep.subr.mxu0 0.0
  %3373 = vmatpush1.msra.mxu0 0.0
  %3374 = vmatprep.subr.mxu0 0.0
  %3375 = vmatpush1.msra.mxu0 0.0
  %3376 = vmatprep.subr.mxu0 0.0
  %3377 = vmatpush1.msra.mxu0 0.0
  %3378 = vmatprep.subr.mxu0 0.0
  %3379 = vmatpush1.msra.mxu0 0.0
  %3380 = vmatprep.subr.mxu0 0.0
  %3381 = vmatpush1.msra.mxu0 0.0
  %3382 = vmatprep.subr.mxu0 0.0
  %3383 = vmatpush1.msra.mxu0 %v2195
  %3384 = vmatprep.subr.mxu0 0.0
  %3385 = vmatpush1.msra.mxu0 %v2194
  %3386 = vmatprep.subr.mxu0 0.0
  %3387 = vmatpush2.msra.mxu0 0.0
  %3388 = vmatprep.subr.mxu0 0.0
  %3389 = vmatpush2.msra.mxu0 0.0
  %3390 = vmatprep.subr.mxu0 0.0
  %3391 = vmatpush2.msra.mxu0 0.0
  %3392 = vmatprep.subr.mxu0 0.0
  %3393 = vmatpush2.msra.mxu0 0.0
  %3394 = vmatprep.subr.mxu0 0.0
  %3395 = vmatpush2.msra.mxu0 0.0
  %3396 = vmatprep.subr.mxu0 0.0
  %3397 = vmatpush2.msra.mxu0 0.0
  %3398 = vmatprep.subr.mxu0 0.0
  %3399 = vmatpush2.msra.mxu0 0.0
  %3400 = vmatprep.subr.mxu0 0.0
  %3401 = vmatpush2.msra.mxu0 0.0
  %3402 = vmatprep.subr.mxu0 0.0
  %3403 = vmatpush2.msra.mxu0 0.0
  %3404 = vmatprep.subr.mxu0 0.0
  %3405 = vmatpush2.msra.mxu0 0.0
  %3406 = vmatprep.subr.mxu0 0.0
  %3407 = vmatpush2.msra.mxu0 0.0
  %3408 = vmatprep.subr.mxu0 0.0
  %3409 = vmatpush2.msra.mxu0 0.0
  %3410 = vmatprep.subr.mxu0 0.0
  %3411 = vmatpush2.msra.mxu0 0.0
  %3412 = vmatprep.subr.mxu0 0.0
  %3413 = vmatpush2.msra.mxu0 0.0
  %3414 = vmatprep.subr.mxu0 0.0
  %3415 = vmatpush2.msra.mxu0 0.0
  %3416 = vmatprep.subr.mxu0 0.0
  %3417 = vmatpush2.msra.mxu0 0.0
  %3418 = vmatprep.mubr.f32.mxu0 0.0
  %3419 = vmatmul.mubr.f32.gmra.mxu0 %v3352
  %v3420 = vpop.f32.mrf.mxu0
  %v3421 = vadd.f32 0.0, %v3420
  %v3422 = vpop.f32.mrf.mxu0
  %3423 = vdwg.mxu0
  %v3424 = vadd.f32 %v2105, %v3421
  %v3425 = vxor.u32 %v3424, 2147483648
  %v3426 = vmul.f32 %v3425, 1.442695
  %v3427 = vpow.pop %v3426
  %v3428 = vadd.f32 %v3427, 1.0
  %v3429 = vrcp.pop %v3428
  %v3430 = vmul.f32 1.0, %v3429
  %v3431 = vtanh.pop %v3424
  %v3433 = vrot.slane %v3158, 6
  %v3435 = vmul.f32 %v3430, %v3433
  %3437 = vrot.lane.b32.xlu0 %v3431, 96
  %v3438 = vpop.permute.xlu0 %3437
  %v3440 = vmul.f32 %v3430, %v3438
  %3442 = vrot.lane.b32.xlu0 %v3440, 16
  %v3443 = vpop.permute.xlu0 %3442
  %v3445 = vadd.f32 %v3435, %v3443
  %v3446 = vtanh.pop %v3445
  %3448 = vrot.lane.b32.xlu0 %v3446, 32
  %v3449 = vpop.permute.xlu0 %3448
  %v3451 = vmul.f32 %v3430, %v3449
  %3452 = vrot.lane.b32.xlu0 %v3267, 80
  %v3453 = vpop.permute.xlu0 %3452
  %v3454 = vsel %vm260, %v3453, 0
  %3456 = vmatprep.subr.mxu0 0.0
  %3457 = vmatpush1.msra.mxu0 0.0
  %3458 = vmatprep.subr.mxu0 0.0
  %3459 = vmatpush1.msra.mxu0 0.0
  %3460 = vmatprep.subr.mxu0 0.0
  %3461 = vmatpush1.msra.mxu0 0.0
  %3462 = vmatprep.subr.mxu0 0.0
  %3463 = vmatpush1.msra.mxu0 0.0
  %3464 = vmatprep.subr.mxu0 0.0
  %3465 = vmatpush1.msra.mxu0 0.0
  %3466 = vmatprep.subr.mxu0 0.0
  %3467 = vmatpush1.msra.mxu0 0.0
  %3468 = vmatprep.subr.mxu0 0.0
  %3469 = vmatpush1.msra.mxu0 0.0
  %3470 = vmatprep.subr.mxu0 0.0
  %3471 = vmatpush1.msra.mxu0 0.0
  %3472 = vmatprep.subr.mxu0 0.0
  %3473 = vmatpush1.msra.mxu0 0.0
  %3474 = vmatprep.subr.mxu0 0.0
  %3475 = vmatpush1.msra.mxu0 0.0
  %3476 = vmatprep.subr.mxu0 0.0
  %3477 = vmatpush1.msra.mxu0 0.0
  %3478 = vmatprep.subr.mxu0 0.0
  %3479 = vmatpush1.msra.mxu0 0.0
  %3480 = vmatprep.subr.mxu0 0.0
  %3481 = vmatpush1.msra.mxu0 0.0
  %3482 = vmatprep.subr.mxu0 0.0
  %3483 = vmatpush1.msra.mxu0 0.0
  %3484 = vmatprep.subr.mxu0 0.0
  %3485 = vmatpush1.msra.mxu0 %v2197
  %3486 = vmatprep.subr.mxu0 0.0
  %3487 = vmatpush1.msra.mxu0 %v2196
  %3488 = vmatprep.subr.mxu0 0.0
  %3489 = vmatpush2.msra.mxu0 0.0
  %3490 = vmatprep.subr.mxu0 0.0
  %3491 = vmatpush2.msra.mxu0 0.0
  %3492 = vmatprep.subr.mxu0 0.0
  %3493 = vmatpush2.msra.mxu0 0.0
  %3494 = vmatprep.subr.mxu0 0.0
  %3495 = vmatpush2.msra.mxu0 0.0
  %3496 = vmatprep.subr.mxu0 0.0
  %3497 = vmatpush2.msra.mxu0 0.0
  %3498 = vmatprep.subr.mxu0 0.0
  %3499 = vmatpush2.msra.mxu0 0.0
  %3500 = vmatprep.subr.mxu0 0.0
  %3501 = vmatpush2.msra.mxu0 0.0
  %3502 = vmatprep.subr.mxu0 0.0
  %3503 = vmatpush2.msra.mxu0 0.0
  %3504 = vmatprep.subr.mxu0 0.0
  %3505 = vmatpush2.msra.mxu0 0.0
  %3506 = vmatprep.subr.mxu0 0.0
  %3507 = vmatpush2.msra.mxu0 0.0
  %3508 = vmatprep.subr.mxu0 0.0
  %3509 = vmatpush2.msra.mxu0 0.0
  %3510 = vmatprep.subr.mxu0 0.0
  %3511 = vmatpush2.msra.mxu0 0.0
  %3512 = vmatprep.subr.mxu0 0.0
  %3513 = vmatpush2.msra.mxu0 0.0
  %3514 = vmatprep.subr.mxu0 0.0
  %3515 = vmatpush2.msra.mxu0 0.0
  %3516 = vmatprep.subr.mxu0 0.0
  %3517 = vmatpush2.msra.mxu0 0.0
  %3518 = vmatprep.subr.mxu0 0.0
  %3519 = vmatpush2.msra.mxu0 0.0
  %3520 = vmatprep.mubr.f32.mxu0 0.0
  %3521 = vmatmul.mubr.f32.gmra.mxu0 %v3454
  %v3522 = vpop.f32.mrf.mxu0
  %v3523 = vadd.f32 0.0, %v3522
  %v3524 = vpop.f32.mrf.mxu0
  %3525 = vdwg.mxu0
  %v3527 = vrot.slane %v3523, 2
  %v3529 = vadd.f32 %v2186, %v3527
  %v3530 = vxor.u32 %v3529, 2147483648
  %v3531 = vmul.f32 %v3530, 1.442695
  %v3532 = vpow.pop %v3531
  %v3533 = vadd.f32 %v3532, 1.0
  %v3534 = vrcp.pop %v3533
  %v3535 = vmul.f32 1.0, %v3534
  %v3536 = vtanh.pop %v3529
  %v3538 = vrot.slane %v3261, 2
  %v3540 = vmul.f32 %v3535, %v3538
  %3542 = vrot.lane.b32.xlu0 %v3536, 96
  %v3543 = vpop.permute.xlu0 %3542
  %v3545 = vmul.f32 %v3535, %v3543
  %3547 = vrot.lane.b32.xlu0 %v3545, 16
  %v3548 = vpop.permute.xlu0 %3547
  %v3550 = vadd.f32 %v3540, %v3548
  %v3551 = vtanh.pop %v3550
  %3553 = vrot.lane.b32.xlu0 %v3551, 32
  %v3554 = vpop.permute.xlu0 %3553
  %v3556 = vmul.f32 %v3535, %v3554
  %v3559 = vunpack.c.l.s4 1966171168
  %v3560 = vunpack.c.0.s8 %v3559
  %v3561 = vlaneseq
  %v3562 = vshrl.u32 %v3561, 7
  %v3563 = vsub.s32 %v3560, %v3562
  %v3564 = vrot.slane %v3451, %v3563
  %v3565 = vcombine.high %v3564, %v3564
  %v3567 = vunpack.c.l.s4 1966171168
  %v3568 = vunpack.c.0.s8 %v3567
  %v3569 = vlaneseq
  %v3570 = vshrl.u32 %v3569, 7
  %v3571 = vsub.s32 %v3568, %v3570
  %v3572 = vrot.slane %v3564, %v3571
  %v3574 = vunpack.c.l.s4 1966171168
  %v3575 = vunpack.c.0.s8 %v3574
  %v3576 = vlaneseq
  %v3577 = vshrl.u32 %v3576, 7
  %v3578 = vsub.s32 %v3575, %v3577
  %v3579 = vrot.slane %v3565, %v3578
  %v3580 = vlaneseq
  %v3581 = vshrl.u32 %v3580, 7
  %v3582 = vsub.s32 0, %v3581
  %v3583 = vrot.slane %v3572, %v3582
  %v3584 = vlaneseq
  %v3585 = vshrl.u32 %v3584, 7
  %v3586 = vsub.s32 0, %v3585
  %v3587 = vrot.slane %v3579, %v3586
  %3588 = vrot.lane.b32.xlu0 %v3583, 80
  %v3589 = vpop.permute.xlu0 %3588
  %3590 = vrot.lane.b32.xlu0 %v3587, 80
  %v3591 = vpop.permute.xlu0 %3590
  %3594 = vst.msk [vmem:[#allocation3 + $0x4] sm:$0x1] %vm2428, %v3589
  %3595 = vst.msk [vmem:[#allocation3 + $0xc] sm:$0x1] %vm2428, %v3591
  %v3597 = vcombine.high %v3556, %v3556
  %v3599 = vunpack.c.l.s4 1966171168
  %v3600 = vunpack.c.0.s8 %v3599
  %v3601 = vlaneseq
  %v3602 = vshrl.u32 %v3601, 7
  %v3603 = vsub.s32 %v3600, %v3602
  %v3604 = vrot.slane %v3597, %v3603
  %v3605 = vcombine.high %v3604, %v3604
  %v3607 = vunpack.c.l.s4 1966171168
  %v3608 = vunpack.c.0.s8 %v3607
  %v3609 = vlaneseq
  %v3610 = vshrl.u32 %v3609, 7
  %v3611 = vsub.s32 %v3608, %v3610
  %v3612 = vrot.slane %v3604, %v3611
  %v3614 = vunpack.c.l.s4 1966171168
  %v3615 = vunpack.c.0.s8 %v3614
  %v3616 = vlaneseq
  %v3617 = vshrl.u32 %v3616, 7
  %v3618 = vsub.s32 %v3615, %v3617
  %v3619 = vrot.slane %v3605, %v3618
  %v3620 = vcombine.high %v3612, %v3612
  %v3621 = vcombine.high %v3619, %v3619
  %v3622 = vlaneseq
  %v3623 = vshrl.u32 %v3622, 7
  %v3624 = vsub.s32 0, %v3623
  %v3625 = vrot.slane %v3620, %v3624
  %v3626 = vlaneseq
  %v3627 = vshrl.u32 %v3626, 7
  %v3628 = vsub.s32 0, %v3627
  %v3629 = vrot.slane %v3621, %v3628
  %3630 = vrot.lane.b32.xlu0 %v3625, 96
  %v3631 = vpop.permute.xlu0 %3630
  %3632 = vrot.lane.b32.xlu0 %v3629, 96
  %v3633 = vpop.permute.xlu0 %3632
  %3636 = vst.msk [vmem:[#allocation3 + $0x3] sm:$0x1] %vm2471, %v3631
  %3637 = vst.msk [vmem:[#allocation3 + $0xb] sm:$0x1] %vm2471, %v3633
  %3638 = vrot.lane.b32.xlu0 %v3451, 80
  %v3639 = vpop.permute.xlu0 %3638
  %v3640 = vsel %vm260, %v3639, 0
  %3642 = vmatprep.subr.mxu0 0.0
  %3643 = vmatpush1.msra.mxu0 0.0
  %3644 = vmatprep.subr.mxu0 0.0
  %3645 = vmatpush1.msra.mxu0 0.0
  %3646 = vmatprep.subr.mxu0 0.0
  %3647 = vmatpush1.msra.mxu0 0.0
  %3648 = vmatprep.subr.mxu0 0.0
  %3649 = vmatpush1.msra.mxu0 0.0
  %3650 = vmatprep.subr.mxu0 0.0
  %3651 = vmatpush1.msra.mxu0 0.0
  %3652 = vmatprep.subr.mxu0 0.0
  %3653 = vmatpush1.msra.mxu0 0.0
  %3654 = vmatprep.subr.mxu0 0.0
  %3655 = vmatpush1.msra.mxu0 0.0
  %3656 = vmatprep.subr.mxu0 0.0
  %3657 = vmatpush1.msra.mxu0 0.0
  %3658 = vmatprep.subr.mxu0 0.0
  %3659 = vmatpush1.msra.mxu0 0.0
  %3660 = vmatprep.subr.mxu0 0.0
  %3661 = vmatpush1.msra.mxu0 0.0
  %3662 = vmatprep.subr.mxu0 0.0
  %3663 = vmatpush1.msra.mxu0 0.0
  %3664 = vmatprep.subr.mxu0 0.0
  %3665 = vmatpush1.msra.mxu0 0.0
  %3666 = vmatprep.subr.mxu0 0.0
  %3667 = vmatpush1.msra.mxu0 0.0
  %3668 = vmatprep.subr.mxu0 0.0
  %3669 = vmatpush1.msra.mxu0 0.0
  %3670 = vmatprep.subr.mxu0 0.0
  %3671 = vmatpush1.msra.mxu0 %v2195
  %3672 = vmatprep.subr.mxu0 0.0
  %3673 = vmatpush1.msra.mxu0 %v2194
  %3674 = vmatprep.subr.mxu0 0.0
  %3675 = vmatpush2.msra.mxu0 0.0
  %3676 = vmatprep.subr.mxu0 0.0
  %3677 = vmatpush2.msra.mxu0 0.0
  %3678 = vmatprep.subr.mxu0 0.0
  %3679 = vmatpush2.msra.mxu0 0.0
  %3680 = vmatprep.subr.mxu0 0.0
  %3681 = vmatpush2.msra.mxu0 0.0
  %3682 = vmatprep.subr.mxu0 0.0
  %3683 = vmatpush2.msra.mxu0 0.0
  %3684 = vmatprep.subr.mxu0 0.0
  %3685 = vmatpush2.msra.mxu0 0.0
  %3686 = vmatprep.subr.mxu0 0.0
  %3687 = vmatpush2.msra.mxu0 0.0
  %3688 = vmatprep.subr.mxu0 0.0
  %3689 = vmatpush2.msra.mxu0 0.0
  %3690 = vmatprep.subr.mxu0 0.0
  %3691 = vmatpush2.msra.mxu0 0.0
  %3692 = vmatprep.subr.mxu0 0.0
  %3693 = vmatpush2.msra.mxu0 0.0
  %3694 = vmatprep.subr.mxu0 0.0
  %3695 = vmatpush2.msra.mxu0 0.0
  %3696 = vmatprep.subr.mxu0 0.0
  %3697 = vmatpush2.msra.mxu0 0.0
  %3698 = vmatprep.subr.mxu0 0.0
  %3699 = vmatpush2.msra.mxu0 0.0
  %3700 = vmatprep.subr.mxu0 0.0
  %3701 = vmatpush2.msra.mxu0 0.0
  %3702 = vmatprep.subr.mxu0 0.0
  %3703 = vmatpush2.msra.mxu0 0.0
  %3704 = vmatprep.subr.mxu0 0.0
  %3705 = vmatpush2.msra.mxu0 0.0
  %3706 = vmatprep.mubr.f32.mxu0 0.0
  %3707 = vmatmul.mubr.f32.gmra.mxu0 %v3640
  %v3708 = vpop.f32.mrf.mxu0
  %v3709 = vadd.f32 0.0, %v3708
  %v3710 = vpop.f32.mrf.mxu0
  %3711 = vdwg.mxu0
  %v3713 = vrot.slane %v3709, 6
  %v3715 = vadd.f32 %v2105, %v3713
  %v3716 = vxor.u32 %v3715, 2147483648
  %v3717 = vmul.f32 %v3716, 1.442695
  %v3718 = vpow.pop %v3717
  %v3719 = vadd.f32 %v3718, 1.0
  %v3720 = vrcp.pop %v3719
  %v3721 = vmul.f32 1.0, %v3720
  %v3722 = vtanh.pop %v3715
  %v3724 = vrot.slane %v3445, 6
  %v3726 = vmul.f32 %v3721, %v3724
  %3728 = vrot.lane.b32.xlu0 %v3722, 96
  %v3729 = vpop.permute.xlu0 %3728
  %v3731 = vmul.f32 %v3721, %v3729
  %3733 = vrot.lane.b32.xlu0 %v3731, 16
  %v3734 = vpop.permute.xlu0 %3733
  %v3736 = vadd.f32 %v3726, %v3734
  %v3737 = vtanh.pop %v3736
  %3739 = vrot.lane.b32.xlu0 %v3737, 32
  %v3740 = vpop.permute.xlu0 %3739
  %v3742 = vmul.f32 %v3721, %v3740
  %v3743 = vrot.slane %v3556, 6
  %3744 = vrot.lane.b32.xlu0 %v3743, 80
  %v3745 = vpop.permute.xlu0 %3744
  %v3746 = vsel %vm260, %v3745, 0
  %3748 = vmatprep.subr.mxu0 0.0
  %3749 = vmatpush1.msra.mxu0 0.0
  %3750 = vmatprep.subr.mxu0 0.0
  %3751 = vmatpush1.msra.mxu0 0.0
  %3752 = vmatprep.subr.mxu0 0.0
  %3753 = vmatpush1.msra.mxu0 0.0
  %3754 = vmatprep.subr.mxu0 0.0
  %3755 = vmatpush1.msra.mxu0 0.0
  %3756 = vmatprep.subr.mxu0 0.0
  %3757 = vmatpush1.msra.mxu0 0.0
  %3758 = vmatprep.subr.mxu0 0.0
  %3759 = vmatpush1.msra.mxu0 0.0
  %3760 = vmatprep.subr.mxu0 0.0
  %3761 = vmatpush1.msra.mxu0 0.0
  %3762 = vmatprep.subr.mxu0 0.0
  %3763 = vmatpush1.msra.mxu0 0.0
  %3764 = vmatprep.subr.mxu0 0.0
  %3765 = vmatpush1.msra.mxu0 0.0
  %3766 = vmatprep.subr.mxu0 0.0
  %3767 = vmatpush1.msra.mxu0 0.0
  %3768 = vmatprep.subr.mxu0 0.0
  %3769 = vmatpush1.msra.mxu0 0.0
  %3770 = vmatprep.subr.mxu0 0.0
  %3771 = vmatpush1.msra.mxu0 0.0
  %3772 = vmatprep.subr.mxu0 0.0
  %3773 = vmatpush1.msra.mxu0 0.0
  %3774 = vmatprep.subr.mxu0 0.0
  %3775 = vmatpush1.msra.mxu0 0.0
  %3776 = vmatprep.subr.mxu0 0.0
  %3777 = vmatpush1.msra.mxu0 %v2197
  %3778 = vmatprep.subr.mxu0 0.0
  %3779 = vmatpush1.msra.mxu0 %v2196
  %3780 = vmatprep.subr.mxu0 0.0
  %3781 = vmatpush2.msra.mxu0 0.0
  %3782 = vmatprep.subr.mxu0 0.0
  %3783 = vmatpush2.msra.mxu0 0.0
  %3784 = vmatprep.subr.mxu0 0.0
  %3785 = vmatpush2.msra.mxu0 0.0
  %3786 = vmatprep.subr.mxu0 0.0
  %3787 = vmatpush2.msra.mxu0 0.0
  %3788 = vmatprep.subr.mxu0 0.0
  %3789 = vmatpush2.msra.mxu0 0.0
  %3790 = vmatprep.subr.mxu0 0.0
  %3791 = vmatpush2.msra.mxu0 0.0
  %3792 = vmatprep.subr.mxu0 0.0
  %3793 = vmatpush2.msra.mxu0 0.0
  %3794 = vmatprep.subr.mxu0 0.0
  %3795 = vmatpush2.msra.mxu0 0.0
  %3796 = vmatprep.subr.mxu0 0.0
  %3797 = vmatpush2.msra.mxu0 0.0
  %3798 = vmatprep.subr.mxu0 0.0
  %3799 = vmatpush2.msra.mxu0 0.0
  %3800 = vmatprep.subr.mxu0 0.0
  %3801 = vmatpush2.msra.mxu0 0.0
  %3802 = vmatprep.subr.mxu0 0.0
  %3803 = vmatpush2.msra.mxu0 0.0
  %3804 = vmatprep.subr.mxu0 0.0
  %3805 = vmatpush2.msra.mxu0 0.0
  %3806 = vmatprep.subr.mxu0 0.0
  %3807 = vmatpush2.msra.mxu0 0.0
  %3808 = vmatprep.subr.mxu0 0.0
  %3809 = vmatpush2.msra.mxu0 0.0
  %3810 = vmatprep.subr.mxu0 0.0
  %3811 = vmatpush2.msra.mxu0 0.0
  %3812 = vmatprep.mubr.f32.mxu0 0.0
  %3813 = vmatmul.mubr.f32.gmra.mxu0 %v3746
  %v3814 = vpop.f32.mrf.mxu0
  %v3815 = vadd.f32 0.0, %v3814
  %v3816 = vpop.f32.mrf.mxu0
  %3817 = vdwg.mxu0
  %v3819 = vrot.slane %v3815, 4
  %v3821 = vadd.f32 %v2186, %v3819
  %v3822 = vxor.u32 %v3821, 2147483648
  %v3823 = vmul.f32 %v3822, 1.442695
  %v3824 = vpow.pop %v3823
  %v3825 = vadd.f32 %v3824, 1.0
  %v3826 = vrcp.pop %v3825
  %v3827 = vmul.f32 1.0, %v3826
  %v3828 = vtanh.pop %v3821
  %v3830 = vrot.slane %v3550, 2
  %v3832 = vmul.f32 %v3827, %v3830
  %3834 = vrot.lane.b32.xlu0 %v3828, 96
  %v3835 = vpop.permute.xlu0 %3834
  %v3837 = vmul.f32 %v3827, %v3835
  %3839 = vrot.lane.b32.xlu0 %v3837, 16
  %v3840 = vpop.permute.xlu0 %3839
  %v3842 = vadd.f32 %v3832, %v3840
  %v3843 = vtanh.pop %v3842
  %3845 = vrot.lane.b32.xlu0 %v3843, 32
  %v3846 = vpop.permute.xlu0 %3845
  %v3848 = vmul.f32 %v3827, %v3846
  %v3851 = vunpack.c.l.s4 1966171168
  %v3852 = vunpack.c.0.s8 %v3851
  %v3853 = vlaneseq
  %v3854 = vshrl.u32 %v3853, 7
  %v3855 = vsub.s32 %v3852, %v3854
  %v3856 = vrot.slane %v3742, %v3855
  %v3857 = vcombine.high %v3856, %v3856
  %v3859 = vunpack.c.l.s4 1966171168
  %v3860 = vunpack.c.0.s8 %v3859
  %v3861 = vlaneseq
  %v3862 = vshrl.u32 %v3861, 7
  %v3863 = vsub.s32 %v3860, %v3862
  %v3864 = vrot.slane %v3856, %v3863
  %v3866 = vunpack.c.l.s4 1966171168
  %v3867 = vunpack.c.0.s8 %v3866
  %v3868 = vlaneseq
  %v3869 = vshrl.u32 %v3868, 7
  %v3870 = vsub.s32 %v3867, %v3869
  %v3871 = vrot.slane %v3857, %v3870
  %v3872 = vcombine.high %v3864, %v3864
  %v3873 = vcombine.high %v3871, %v3871
  %v3874 = vlaneseq
  %v3875 = vshrl.u32 %v3874, 7
  %v3876 = vsub.s32 0, %v3875
  %v3877 = vrot.slane %v3872, %v3876
  %v3878 = vlaneseq
  %v3879 = vshrl.u32 %v3878, 7
  %v3880 = vsub.s32 0, %v3879
  %v3881 = vrot.slane %v3873, %v3880
  %3882 = vrot.lane.b32.xlu0 %v3877, 80
  %v3883 = vpop.permute.xlu0 %3882
  %3884 = vrot.lane.b32.xlu0 %v3881, 80
  %v3885 = vpop.permute.xlu0 %3884
  %3888 = vst.msk [vmem:[#allocation3 + $0x5] sm:$0x1] %vm2428, %v3883
  %3889 = vst.msk [vmem:[#allocation3 + $0xd] sm:$0x1] %vm2428, %v3885
  %v3891 = vcombine.high %v3848, %v3848
  %v3893 = vunpack.c.l.s4 1966171168
  %v3894 = vunpack.c.0.s8 %v3893
  %v3895 = vlaneseq
  %v3896 = vshrl.u32 %v3895, 7
  %v3897 = vsub.s32 %v3894, %v3896
  %v3898 = vrot.slane %v3891, %v3897
  %v3899 = vcombine.high %v3898, %v3898
  %v3901 = vunpack.c.l.s4 1966171168
  %v3902 = vunpack.c.0.s8 %v3901
  %v3903 = vlaneseq
  %v3904 = vshrl.u32 %v3903, 7
  %v3905 = vsub.s32 %v3902, %v3904
  %v3906 = vrot.slane %v3898, %v3905
  %v3908 = vunpack.c.l.s4 1966171168
  %v3909 = vunpack.c.0.s8 %v3908
  %v3910 = vlaneseq
  %v3911 = vshrl.u32 %v3910, 7
  %v3912 = vsub.s32 %v3909, %v3911
  %v3913 = vrot.slane %v3899, %v3912
  %v3914 = vlaneseq
  %v3915 = vshrl.u32 %v3914, 7
  %v3916 = vsub.s32 0, %v3915
  %v3917 = vrot.slane %v3906, %v3916
  %v3918 = vlaneseq
  %v3919 = vshrl.u32 %v3918, 7
  %v3920 = vsub.s32 0, %v3919
  %v3921 = vrot.slane %v3913, %v3920
  %3922 = vrot.lane.b32.xlu0 %v3917, 96
  %v3923 = vpop.permute.xlu0 %3922
  %3924 = vrot.lane.b32.xlu0 %v3921, 96
  %v3925 = vpop.permute.xlu0 %3924
  %3928 = vst.msk [vmem:[#allocation3 + $0x2] sm:$0x1] %vm2471, %v3923
  %3929 = vst.msk [vmem:[#allocation3 + $0xa] sm:$0x1] %vm2471, %v3925
  %v3930 = vrot.slane %v3742, 2
  %3931 = vrot.lane.b32.xlu0 %v3930, 80
  %v3932 = vpop.permute.xlu0 %3931
  %v3933 = vsel %vm260, %v3932, 0
  %3935 = vmatprep.subr.mxu0 0.0
  %3936 = vmatpush1.msra.mxu0 0.0
  %3937 = vmatprep.subr.mxu0 0.0
  %3938 = vmatpush1.msra.mxu0 0.0
  %3939 = vmatprep.subr.mxu0 0.0
  %3940 = vmatpush1.msra.mxu0 0.0
  %3941 = vmatprep.subr.mxu0 0.0
  %3942 = vmatpush1.msra.mxu0 0.0
  %3943 = vmatprep.subr.mxu0 0.0
  %3944 = vmatpush1.msra.mxu0 0.0
  %3945 = vmatprep.subr.mxu0 0.0
  %3946 = vmatpush1.msra.mxu0 0.0
  %3947 = vmatprep.subr.mxu0 0.0
  %3948 = vmatpush1.msra.mxu0 0.0
  %3949 = vmatprep.subr.mxu0 0.0
  %3950 = vmatpush1.msra.mxu0 0.0
  %3951 = vmatprep.subr.mxu0 0.0
  %3952 = vmatpush1.msra.mxu0 0.0
  %3953 = vmatprep.subr.mxu0 0.0
  %3954 = vmatpush1.msra.mxu0 0.0
  %3955 = vmatprep.subr.mxu0 0.0
  %3956 = vmatpush1.msra.mxu0 0.0
  %3957 = vmatprep.subr.mxu0 0.0
  %3958 = vmatpush1.msra.mxu0 0.0
  %3959 = vmatprep.subr.mxu0 0.0
  %3960 = vmatpush1.msra.mxu0 0.0
  %3961 = vmatprep.subr.mxu0 0.0
  %3962 = vmatpush1.msra.mxu0 0.0
  %3963 = vmatprep.subr.mxu0 0.0
  %3964 = vmatpush1.msra.mxu0 %v2195
  %3965 = vmatprep.subr.mxu0 0.0
  %3966 = vmatpush1.msra.mxu0 %v2194
  %3967 = vmatprep.subr.mxu0 0.0
  %3968 = vmatpush2.msra.mxu0 0.0
  %3969 = vmatprep.subr.mxu0 0.0
  %3970 = vmatpush2.msra.mxu0 0.0
  %3971 = vmatprep.subr.mxu0 0.0
  %3972 = vmatpush2.msra.mxu0 0.0
  %3973 = vmatprep.subr.mxu0 0.0
  %3974 = vmatpush2.msra.mxu0 0.0
  %3975 = vmatprep.subr.mxu0 0.0
  %3976 = vmatpush2.msra.mxu0 0.0
  %3977 = vmatprep.subr.mxu0 0.0
  %3978 = vmatpush2.msra.mxu0 0.0
  %3979 = vmatprep.subr.mxu0 0.0
  %3980 = vmatpush2.msra.mxu0 0.0
  %3981 = vmatprep.subr.mxu0 0.0
  %3982 = vmatpush2.msra.mxu0 0.0
  %3983 = vmatprep.subr.mxu0 0.0
  %3984 = vmatpush2.msra.mxu0 0.0
  %3985 = vmatprep.subr.mxu0 0.0
  %3986 = vmatpush2.msra.mxu0 0.0
  %3987 = vmatprep.subr.mxu0 0.0
  %3988 = vmatpush2.msra.mxu0 0.0
  %3989 = vmatprep.subr.mxu0 0.0
  %3990 = vmatpush2.msra.mxu0 0.0
  %3991 = vmatprep.subr.mxu0 0.0
  %3992 = vmatpush2.msra.mxu0 0.0
  %3993 = vmatprep.subr.mxu0 0.0
  %3994 = vmatpush2.msra.mxu0 0.0
  %3995 = vmatprep.subr.mxu0 0.0
  %3996 = vmatpush2.msra.mxu0 0.0
  %3997 = vmatprep.subr.mxu0 0.0
  %3998 = vmatpush2.msra.mxu0 0.0
  %3999 = vmatprep.mubr.f32.mxu0 0.0
  %4000 = vmatmul.mubr.f32.gmra.mxu0 %v3933
  %v4001 = vpop.f32.mrf.mxu0
  %v4002 = vadd.f32 0.0, %v4001
  %v4003 = vpop.f32.mrf.mxu0
  %4004 = vdwg.mxu0
  %v4006 = vrot.slane %v4002, 4
  %v4008 = vadd.f32 %v2105, %v4006
  %v4009 = vxor.u32 %v4008, 2147483648
  %v4010 = vmul.f32 %v4009, 1.442695
  %v4011 = vpow.pop %v4010
  %v4012 = vadd.f32 %v4011, 1.0
  %v4013 = vrcp.pop %v4012
  %v4014 = vmul.f32 1.0, %v4013
  %v4015 = vtanh.pop %v4008
  %v4017 = vrot.slane %v3736, 6
  %v4019 = vmul.f32 %v4014, %v4017
  %4021 = vrot.lane.b32.xlu0 %v4015, 96
  %v4022 = vpop.permute.xlu0 %4021
  %v4024 = vmul.f32 %v4014, %v4022
  %4026 = vrot.lane.b32.xlu0 %v4024, 16
  %v4027 = vpop.permute.xlu0 %4026
  %v4029 = vadd.f32 %v4019, %v4027
  %v4030 = vtanh.pop %v4029
  %4032 = vrot.lane.b32.xlu0 %v4030, 32
  %v4033 = vpop.permute.xlu0 %4032
  %v4035 = vmul.f32 %v4014, %v4033
  %v4036 = vrot.slane %v3848, 4
  %4037 = vrot.lane.b32.xlu0 %v4036, 80
  %v4038 = vpop.permute.xlu0 %4037
  %v4039 = vsel %vm260, %v4038, 0
  %4041 = vmatprep.subr.mxu0 0.0
  %4042 = vmatpush1.msra.mxu0 0.0
  %4043 = vmatprep.subr.mxu0 0.0
  %4044 = vmatpush1.msra.mxu0 0.0
  %4045 = vmatprep.subr.mxu0 0.0
  %4046 = vmatpush1.msra.mxu0 0.0
  %4047 = vmatprep.subr.mxu0 0.0
  %4048 = vmatpush1.msra.mxu0 0.0
  %4049 = vmatprep.subr.mxu0 0.0
  %4050 = vmatpush1.msra.mxu0 0.0
  %4051 = vmatprep.subr.mxu0 0.0
  %4052 = vmatpush1.msra.mxu0 0.0
  %4053 = vmatprep.subr.mxu0 0.0
  %4054 = vmatpush1.msra.mxu0 0.0
  %4055 = vmatprep.subr.mxu0 0.0
  %4056 = vmatpush1.msra.mxu0 0.0
  %4057 = vmatprep.subr.mxu0 0.0
  %4058 = vmatpush1.msra.mxu0 0.0
  %4059 = vmatprep.subr.mxu0 0.0
  %4060 = vmatpush1.msra.mxu0 0.0
  %4061 = vmatprep.subr.mxu0 0.0
  %4062 = vmatpush1.msra.mxu0 0.0
  %4063 = vmatprep.subr.mxu0 0.0
  %4064 = vmatpush1.msra.mxu0 0.0
  %4065 = vmatprep.subr.mxu0 0.0
  %4066 = vmatpush1.msra.mxu0 0.0
  %4067 = vmatprep.subr.mxu0 0.0
  %4068 = vmatpush1.msra.mxu0 0.0
  %4069 = vmatprep.subr.mxu0 0.0
  %4070 = vmatpush1.msra.mxu0 %v2197
  %4071 = vmatprep.subr.mxu0 0.0
  %4072 = vmatpush1.msra.mxu0 %v2196
  %4073 = vmatprep.subr.mxu0 0.0
  %4074 = vmatpush2.msra.mxu0 0.0
  %4075 = vmatprep.subr.mxu0 0.0
  %4076 = vmatpush2.msra.mxu0 0.0
  %4077 = vmatprep.subr.mxu0 0.0
  %4078 = vmatpush2.msra.mxu0 0.0
  %4079 = vmatprep.subr.mxu0 0.0
  %4080 = vmatpush2.msra.mxu0 0.0
  %4081 = vmatprep.subr.mxu0 0.0
  %4082 = vmatpush2.msra.mxu0 0.0
  %4083 = vmatprep.subr.mxu0 0.0
  %4084 = vmatpush2.msra.mxu0 0.0
  %4085 = vmatprep.subr.mxu0 0.0
  %4086 = vmatpush2.msra.mxu0 0.0
  %4087 = vmatprep.subr.mxu0 0.0
  %4088 = vmatpush2.msra.mxu0 0.0
  %4089 = vmatprep.subr.mxu0 0.0
  %4090 = vmatpush2.msra.mxu0 0.0
  %4091 = vmatprep.subr.mxu0 0.0
  %4092 = vmatpush2.msra.mxu0 0.0
  %4093 = vmatprep.subr.mxu0 0.0
  %4094 = vmatpush2.msra.mxu0 0.0
  %4095 = vmatprep.subr.mxu0 0.0
  %4096 = vmatpush2.msra.mxu0 0.0
  %4097 = vmatprep.subr.mxu0 0.0
  %4098 = vmatpush2.msra.mxu0 0.0
  %4099 = vmatprep.subr.mxu0 0.0
  %4100 = vmatpush2.msra.mxu0 0.0
  %4101 = vmatprep.subr.mxu0 0.0
  %4102 = vmatpush2.msra.mxu0 0.0
  %4103 = vmatprep.subr.mxu0 0.0
  %4104 = vmatpush2.msra.mxu0 0.0
  %4105 = vmatprep.mubr.f32.mxu0 0.0
  %4106 = vmatmul.mubr.f32.gmra.mxu0 %v4039
  %v4107 = vpop.f32.mrf.mxu0
  %v4108 = vadd.f32 0.0, %v4107
  %v4109 = vpop.f32.mrf.mxu0
  %4110 = vdwg.mxu0
  %v4112 = vrot.slane %v4108, 6
  %v4114 = vadd.f32 %v2186, %v4112
  %v4115 = vxor.u32 %v4114, 2147483648
  %v4116 = vmul.f32 %v4115, 1.442695
  %v4117 = vpow.pop %v4116
  %v4118 = vadd.f32 %v4117, 1.0
  %v4119 = vrcp.pop %v4118
  %v4120 = vmul.f32 1.0, %v4119
  %v4121 = vtanh.pop %v4114
  %v4123 = vrot.slane %v3842, 2
  %v4125 = vmul.f32 %v4120, %v4123
  %4127 = vrot.lane.b32.xlu0 %v4121, 96
  %v4128 = vpop.permute.xlu0 %4127
  %v4130 = vmul.f32 %v4120, %v4128
  %4132 = vrot.lane.b32.xlu0 %v4130, 16
  %v4133 = vpop.permute.xlu0 %4132
  %v4135 = vadd.f32 %v4125, %v4133
  %v4136 = vtanh.pop %v4135
  %4138 = vrot.lane.b32.xlu0 %v4136, 32
  %v4139 = vpop.permute.xlu0 %4138
  %v4141 = vmul.f32 %v4120, %v4139
  %v4143 = vcombine.high %v4035, %v4035
  %v4145 = vunpack.c.l.s4 1966171168
  %v4146 = vunpack.c.0.s8 %v4145
  %v4147 = vlaneseq
  %v4148 = vshrl.u32 %v4147, 7
  %v4149 = vsub.s32 %v4146, %v4148
  %v4150 = vrot.slane %v4143, %v4149
  %v4151 = vcombine.high %v4150, %v4150
  %v4153 = vunpack.c.l.s4 1966171168
  %v4154 = vunpack.c.0.s8 %v4153
  %v4155 = vlaneseq
  %v4156 = vshrl.u32 %v4155, 7
  %v4157 = vsub.s32 %v4154, %v4156
  %v4158 = vrot.slane %v4150, %v4157
  %v4160 = vunpack.c.l.s4 1966171168
  %v4161 = vunpack.c.0.s8 %v4160
  %v4162 = vlaneseq
  %v4163 = vshrl.u32 %v4162, 7
  %v4164 = vsub.s32 %v4161, %v4163
  %v4165 = vrot.slane %v4151, %v4164
  %v4166 = vlaneseq
  %v4167 = vshrl.u32 %v4166, 7
  %v4168 = vsub.s32 0, %v4167
  %v4169 = vrot.slane %v4158, %v4168
  %v4170 = vlaneseq
  %v4171 = vshrl.u32 %v4170, 7
  %v4172 = vsub.s32 0, %v4171
  %v4173 = vrot.slane %v4165, %v4172
  %4174 = vrot.lane.b32.xlu0 %v4169, 80
  %v4175 = vpop.permute.xlu0 %4174
  %4176 = vrot.lane.b32.xlu0 %v4173, 80
  %v4177 = vpop.permute.xlu0 %4176
  %4180 = vst.msk [vmem:[#allocation3 + $0x6] sm:$0x1] %vm2428, %v4175
  %4181 = vst.msk [vmem:[#allocation3 + $0xe] sm:$0x1] %vm2428, %v4177
  %v4184 = vunpack.c.l.s4 1966171168
  %v4185 = vunpack.c.0.s8 %v4184
  %v4186 = vlaneseq
  %v4187 = vshrl.u32 %v4186, 7
  %v4188 = vsub.s32 %v4185, %v4187
  %v4189 = vrot.slane %v4141, %v4188
  %v4190 = vcombine.high %v4189, %v4189
  %v4192 = vunpack.c.l.s4 1966171168
  %v4193 = vunpack.c.0.s8 %v4192
  %v4194 = vlaneseq
  %v4195 = vshrl.u32 %v4194, 7
  %v4196 = vsub.s32 %v4193, %v4195
  %v4197 = vrot.slane %v4189, %v4196
  %v4199 = vunpack.c.l.s4 1966171168
  %v4200 = vunpack.c.0.s8 %v4199
  %v4201 = vlaneseq
  %v4202 = vshrl.u32 %v4201, 7
  %v4203 = vsub.s32 %v4200, %v4202
  %v4204 = vrot.slane %v4190, %v4203
  %v4205 = vcombine.high %v4197, %v4197
  %v4206 = vcombine.high %v4204, %v4204
  %v4207 = vlaneseq
  %v4208 = vshrl.u32 %v4207, 7
  %v4209 = vsub.s32 0, %v4208
  %v4210 = vrot.slane %v4205, %v4209
  %v4211 = vlaneseq
  %v4212 = vshrl.u32 %v4211, 7
  %v4213 = vsub.s32 0, %v4212
  %v4214 = vrot.slane %v4206, %v4213
  %4215 = vrot.lane.b32.xlu0 %v4210, 96
  %v4216 = vpop.permute.xlu0 %4215
  %4217 = vrot.lane.b32.xlu0 %v4214, 96
  %v4218 = vpop.permute.xlu0 %4217
  %4221 = vst.msk [vmem:[#allocation3 + $0x1] sm:$0x1] %vm2471, %v4216
  %4222 = vst.msk [vmem:[#allocation3 + $0x9] sm:$0x1] %vm2471, %v4218
  %v4223 = vrot.slane %v4035, 4
  %4224 = vrot.lane.b32.xlu0 %v4223, 80
  %v4225 = vpop.permute.xlu0 %4224
  %v4226 = vsel %vm260, %v4225, 0
  %4228 = vmatprep.subr.mxu0 0.0
  %4229 = vmatpush1.msra.mxu0 0.0
  %4230 = vmatprep.subr.mxu0 0.0
  %4231 = vmatpush1.msra.mxu0 0.0
  %4232 = vmatprep.subr.mxu0 0.0
  %4233 = vmatpush1.msra.mxu0 0.0
  %4234 = vmatprep.subr.mxu0 0.0
  %4235 = vmatpush1.msra.mxu0 0.0
  %4236 = vmatprep.subr.mxu0 0.0
  %4237 = vmatpush1.msra.mxu0 0.0
  %4238 = vmatprep.subr.mxu0 0.0
  %4239 = vmatpush1.msra.mxu0 0.0
  %4240 = vmatprep.subr.mxu0 0.0
  %4241 = vmatpush1.msra.mxu0 0.0
  %4242 = vmatprep.subr.mxu0 0.0
  %4243 = vmatpush1.msra.mxu0 0.0
  %4244 = vmatprep.subr.mxu0 0.0
  %4245 = vmatpush1.msra.mxu0 0.0
  %4246 = vmatprep.subr.mxu0 0.0
  %4247 = vmatpush1.msra.mxu0 0.0
  %4248 = vmatprep.subr.mxu0 0.0
  %4249 = vmatpush1.msra.mxu0 0.0
  %4250 = vmatprep.subr.mxu0 0.0
  %4251 = vmatpush1.msra.mxu0 0.0
  %4252 = vmatprep.subr.mxu0 0.0
  %4253 = vmatpush1.msra.mxu0 0.0
  %4254 = vmatprep.subr.mxu0 0.0
  %4255 = vmatpush1.msra.mxu0 0.0
  %4256 = vmatprep.subr.mxu0 0.0
  %4257 = vmatpush1.msra.mxu0 %v2195
  %4258 = vmatprep.subr.mxu0 0.0
  %4259 = vmatpush1.msra.mxu0 %v2194
  %4260 = vmatprep.subr.mxu0 0.0
  %4261 = vmatpush2.msra.mxu0 0.0
  %4262 = vmatprep.subr.mxu0 0.0
  %4263 = vmatpush2.msra.mxu0 0.0
  %4264 = vmatprep.subr.mxu0 0.0
  %4265 = vmatpush2.msra.mxu0 0.0
  %4266 = vmatprep.subr.mxu0 0.0
  %4267 = vmatpush2.msra.mxu0 0.0
  %4268 = vmatprep.subr.mxu0 0.0
  %4269 = vmatpush2.msra.mxu0 0.0
  %4270 = vmatprep.subr.mxu0 0.0
  %4271 = vmatpush2.msra.mxu0 0.0
  %4272 = vmatprep.subr.mxu0 0.0
  %4273 = vmatpush2.msra.mxu0 0.0
  %4274 = vmatprep.subr.mxu0 0.0
  %4275 = vmatpush2.msra.mxu0 0.0
  %4276 = vmatprep.subr.mxu0 0.0
  %4277 = vmatpush2.msra.mxu0 0.0
  %4278 = vmatprep.subr.mxu0 0.0
  %4279 = vmatpush2.msra.mxu0 0.0
  %4280 = vmatprep.subr.mxu0 0.0
  %4281 = vmatpush2.msra.mxu0 0.0
  %4282 = vmatprep.subr.mxu0 0.0
  %4283 = vmatpush2.msra.mxu0 0.0
  %4284 = vmatprep.subr.mxu0 0.0
  %4285 = vmatpush2.msra.mxu0 0.0
  %4286 = vmatprep.subr.mxu0 0.0
  %4287 = vmatpush2.msra.mxu0 0.0
  %4288 = vmatprep.subr.mxu0 0.0
  %4289 = vmatpush2.msra.mxu0 0.0
  %4290 = vmatprep.subr.mxu0 0.0
  %4291 = vmatpush2.msra.mxu0 0.0
  %4292 = vmatprep.mubr.f32.mxu0 0.0
  %4293 = vmatmul.mubr.f32.gmra.mxu0 %v4226
  %v4294 = vpop.f32.mrf.mxu0
  %v4295 = vadd.f32 0.0, %v4294
  %v4296 = vpop.f32.mrf.mxu0
  %4297 = vdwg.mxu0
  %v4299 = vrot.slane %v4295, 2
  %v4301 = vadd.f32 %v2105, %v4299
  %v4302 = vxor.u32 %v4301, 2147483648
  %v4303 = vmul.f32 %v4302, 1.442695
  %v4304 = vpow.pop %v4303
  %v4305 = vadd.f32 %v4304, 1.0
  %v4306 = vrcp.pop %v4305
  %v4307 = vmul.f32 1.0, %v4306
  %v4308 = vtanh.pop %v4301
  %v4310 = vrot.slane %v4029, 6
  %v4312 = vmul.f32 %v4307, %v4310
  %4314 = vrot.lane.b32.xlu0 %v4308, 96
  %v4315 = vpop.permute.xlu0 %4314
  %v4317 = vmul.f32 %v4307, %v4315
  %4319 = vrot.lane.b32.xlu0 %v4317, 16
  %v4320 = vpop.permute.xlu0 %4319
  %v4322 = vadd.f32 %v4312, %v4320
  %v4323 = vtanh.pop %v4322
  %4325 = vrot.lane.b32.xlu0 %v4323, 32
  %v4326 = vpop.permute.xlu0 %4325
  %v4328 = vmul.f32 %v4307, %v4326
  %v4329 = vrot.slane %v4141, 2
  %4330 = vrot.lane.b32.xlu0 %v4329, 80
  %v4331 = vpop.permute.xlu0 %4330
  %v4332 = vsel %vm260, %v4331, 0
  %4334 = vmatprep.subr.mxu0 0.0
  %4335 = vmatpush1.msra.mxu0 0.0
  %4336 = vmatprep.subr.mxu0 0.0
  %4337 = vmatpush1.msra.mxu0 0.0
  %4338 = vmatprep.subr.mxu0 0.0
  %4339 = vmatpush1.msra.mxu0 0.0
  %4340 = vmatprep.subr.mxu0 0.0
  %4341 = vmatpush1.msra.mxu0 0.0
  %4342 = vmatprep.subr.mxu0 0.0
  %4343 = vmatpush1.msra.mxu0 0.0
  %4344 = vmatprep.subr.mxu0 0.0
  %4345 = vmatpush1.msra.mxu0 0.0
  %4346 = vmatprep.subr.mxu0 0.0
  %4347 = vmatpush1.msra.mxu0 0.0
  %4348 = vmatprep.subr.mxu0 0.0
  %4349 = vmatpush1.msra.mxu0 0.0
  %4350 = vmatprep.subr.mxu0 0.0
  %4351 = vmatpush1.msra.mxu0 0.0
  %4352 = vmatprep.subr.mxu0 0.0
  %4353 = vmatpush1.msra.mxu0 0.0
  %4354 = vmatprep.subr.mxu0 0.0
  %4355 = vmatpush1.msra.mxu0 0.0
  %4356 = vmatprep.subr.mxu0 0.0
  %4357 = vmatpush1.msra.mxu0 0.0
  %4358 = vmatprep.subr.mxu0 0.0
  %4359 = vmatpush1.msra.mxu0 0.0
  %4360 = vmatprep.subr.mxu0 0.0
  %4361 = vmatpush1.msra.mxu0 0.0
  %4362 = vmatprep.subr.mxu0 0.0
  %4363 = vmatpush1.msra.mxu0 %v2197
  %4364 = vmatprep.subr.mxu0 0.0
  %4365 = vmatpush1.msra.mxu0 %v2196
  %4366 = vmatprep.subr.mxu0 0.0
  %4367 = vmatpush2.msra.mxu0 0.0
  %4368 = vmatprep.subr.mxu0 0.0
  %4369 = vmatpush2.msra.mxu0 0.0
  %4370 = vmatprep.subr.mxu0 0.0
  %4371 = vmatpush2.msra.mxu0 0.0
  %4372 = vmatprep.subr.mxu0 0.0
  %4373 = vmatpush2.msra.mxu0 0.0
  %4374 = vmatprep.subr.mxu0 0.0
  %4375 = vmatpush2.msra.mxu0 0.0
  %4376 = vmatprep.subr.mxu0 0.0
  %4377 = vmatpush2.msra.mxu0 0.0
  %4378 = vmatprep.subr.mxu0 0.0
  %4379 = vmatpush2.msra.mxu0 0.0
  %4380 = vmatprep.subr.mxu0 0.0
  %4381 = vmatpush2.msra.mxu0 0.0
  %4382 = vmatprep.subr.mxu0 0.0
  %4383 = vmatpush2.msra.mxu0 0.0
  %4384 = vmatprep.subr.mxu0 0.0
  %4385 = vmatpush2.msra.mxu0 0.0
  %4386 = vmatprep.subr.mxu0 0.0
  %4387 = vmatpush2.msra.mxu0 0.0
  %4388 = vmatprep.subr.mxu0 0.0
  %4389 = vmatpush2.msra.mxu0 0.0
  %4390 = vmatprep.subr.mxu0 0.0
  %4391 = vmatpush2.msra.mxu0 0.0
  %4392 = vmatprep.subr.mxu0 0.0
  %4393 = vmatpush2.msra.mxu0 0.0
  %4394 = vmatprep.subr.mxu0 0.0
  %4395 = vmatpush2.msra.mxu0 0.0
  %4396 = vmatprep.subr.mxu0 0.0
  %4397 = vmatpush2.msra.mxu0 0.0
  %4398 = vmatprep.mubr.f32.mxu0 0.0
  %4399 = vmatmul.mubr.f32.gmra.mxu0 %v4332
  %v4400 = vpop.f32.mrf.mxu0
  %v4401 = vadd.f32 0.0, %v4400
  %v4402 = vpop.f32.mrf.mxu0
  %4403 = vdwg.mxu0
  %v4404 = vadd.f32 %v2186, %v4401
  %v4405 = vxor.u32 %v4404, 2147483648
  %v4406 = vmul.f32 %v4405, 1.442695
  %v4407 = vpow.pop %v4406
  %v4408 = vadd.f32 %v4407, 1.0
  %v4409 = vrcp.pop %v4408
  %v4410 = vmul.f32 1.0, %v4409
  %v4411 = vtanh.pop %v4404
  %v4413 = vrot.slane %v4135, 2
  %v4415 = vmul.f32 %v4410, %v4413
  %4417 = vrot.lane.b32.xlu0 %v4411, 96
  %v4418 = vpop.permute.xlu0 %4417
  %v4420 = vmul.f32 %v4410, %v4418
  %4422 = vrot.lane.b32.xlu0 %v4420, 16
  %v4423 = vpop.permute.xlu0 %4422
  %v4425 = vadd.f32 %v4415, %v4423
  %v4426 = vtanh.pop %v4425
  %4428 = vrot.lane.b32.xlu0 %v4426, 32
  %v4429 = vpop.permute.xlu0 %4428
  %v4431 = vmul.f32 %v4410, %v4429
  %v4433 = vcombine.high %v4328, %v4328
  %v4435 = vunpack.c.l.s4 1966171168
  %v4436 = vunpack.c.0.s8 %v4435
  %v4437 = vlaneseq
  %v4438 = vshrl.u32 %v4437, 7
  %v4439 = vsub.s32 %v4436, %v4438
  %v4440 = vrot.slane %v4433, %v4439
  %v4441 = vcombine.high %v4440, %v4440
  %v4443 = vunpack.c.l.s4 1966171168
  %v4444 = vunpack.c.0.s8 %v4443
  %v4445 = vlaneseq
  %v4446 = vshrl.u32 %v4445, 7
  %v4447 = vsub.s32 %v4444, %v4446
  %v4448 = vrot.slane %v4440, %v4447
  %v4450 = vunpack.c.l.s4 1966171168
  %v4451 = vunpack.c.0.s8 %v4450
  %v4452 = vlaneseq
  %v4453 = vshrl.u32 %v4452, 7
  %v4454 = vsub.s32 %v4451, %v4453
  %v4455 = vrot.slane %v4441, %v4454
  %v4456 = vcombine.high %v4448, %v4448
  %v4457 = vcombine.high %v4455, %v4455
  %v4458 = vlaneseq
  %v4459 = vshrl.u32 %v4458, 7
  %v4460 = vsub.s32 0, %v4459
  %v4461 = vrot.slane %v4456, %v4460
  %v4462 = vlaneseq
  %v4463 = vshrl.u32 %v4462, 7
  %v4464 = vsub.s32 0, %v4463
  %v4465 = vrot.slane %v4457, %v4464
  %4466 = vrot.lane.b32.xlu0 %v4461, 80
  %v4467 = vpop.permute.xlu0 %4466
  %4468 = vrot.lane.b32.xlu0 %v4465, 80
  %v4469 = vpop.permute.xlu0 %4468
  %4472 = vst.msk [vmem:[#allocation3 + $0x7] sm:$0x1] %vm2428, %v4467
  %4473 = vst.msk [vmem:[#allocation3 + $0xf] sm:$0x1] %vm2428, %v4469
  %v4476 = vunpack.c.l.s4 1966171168
  %v4477 = vunpack.c.0.s8 %v4476
  %v4478 = vlaneseq
  %v4479 = vshrl.u32 %v4478, 7
  %v4480 = vsub.s32 %v4477, %v4479
  %v4481 = vrot.slane %v4431, %v4480
  %v4482 = vcombine.high %v4481, %v4481
  %v4484 = vunpack.c.l.s4 1966171168
  %v4485 = vunpack.c.0.s8 %v4484
  %v4486 = vlaneseq
  %v4487 = vshrl.u32 %v4486, 7
  %v4488 = vsub.s32 %v4485, %v4487
  %v4489 = vrot.slane %v4481, %v4488
  %v4491 = vunpack.c.l.s4 1966171168
  %v4492 = vunpack.c.0.s8 %v4491
  %v4493 = vlaneseq
  %v4494 = vshrl.u32 %v4493, 7
  %v4495 = vsub.s32 %v4492, %v4494
  %v4496 = vrot.slane %v4482, %v4495
  %v4497 = vlaneseq
  %v4498 = vshrl.u32 %v4497, 7
  %v4499 = vsub.s32 0, %v4498
  %v4500 = vrot.slane %v4489, %v4499
  %v4501 = vlaneseq
  %v4502 = vshrl.u32 %v4501, 7
  %v4503 = vsub.s32 0, %v4502
  %v4504 = vrot.slane %v4496, %v4503
  %4505 = vrot.lane.b32.xlu0 %v4500, 96
  %v4506 = vpop.permute.xlu0 %4505
  %4507 = vrot.lane.b32.xlu0 %v4504, 96
  %v4508 = vpop.permute.xlu0 %4507
  %4511 = vst.msk [vmem:[#allocation3] sm:$0x1] %vm2471, %v4506
  %4512 = vst.msk [vmem:[#allocation3 + $0x8] sm:$0x1] %vm2471, %v4508
  %4513 = vrot.lane.b32.xlu0 %v4431, 80
  %v4514 = vpop.permute.xlu0 %4513
  %v4516 = vrot.slane %v4328, 6
  %4517 = vrot.lane.b32.xlu0 %v4516, 96
  %v4518 = vpop.permute.xlu0 %4517
  %v4520 = vsel %vm260, %v4514, %v4518
  %4522 = vrot.lane.b32.xlu0 %v4425, 112
  %v4523 = vpop.permute.xlu0 %4522
  %v4526 = vrot.slane %v4322, 6
  %v4528 = vsel %vm260, %v4523, %v4526
  %v4529 = vld [vmem:[%s18] sm:$0xff]
  %v4530 = vld [vmem:[%s18 + $0x8] sm:$0xff]
  %v4531 = vld [vmem:[%s18 + $0x10] sm:$0xff]
  %v4532 = vld [vmem:[%s18 + $0x18] sm:$0xff]
  %v4534 = vsel %vm2026, %v4520, 0
  %4536 = vmatprep.subr.mxu0 0.0
  %4537 = vmatpush1.msra.mxu0 0.0
  %4538 = vmatprep.subr.mxu0 0.0
  %4539 = vmatpush1.msra.mxu0 0.0
  %4540 = vmatprep.subr.mxu0 0.0
  %4541 = vmatpush1.msra.mxu0 0.0
  %4542 = vmatprep.subr.mxu0 0.0
  %4543 = vmatpush1.msra.mxu0 0.0
  %4544 = vmatprep.subr.mxu0 0.0
  %4545 = vmatpush1.msra.mxu0 0.0
  %4546 = vmatprep.subr.mxu0 0.0
  %4547 = vmatpush1.msra.mxu0 0.0
  %4548 = vmatprep.subr.mxu0 0.0
  %4549 = vmatpush1.msra.mxu0 0.0
  %4550 = vmatprep.subr.mxu0 0.0
  %4551 = vmatpush1.msra.mxu0 0.0
  %4552 = vmatprep.subr.mxu0 0.0
  %4553 = vmatpush1.msra.mxu0 0.0
  %4554 = vmatprep.subr.mxu0 0.0
  %4555 = vmatpush1.msra.mxu0 0.0
  %4556 = vmatprep.subr.mxu0 0.0
  %4557 = vmatpush1.msra.mxu0 0.0
  %4558 = vmatprep.subr.mxu0 0.0
  %4559 = vmatpush1.msra.mxu0 0.0
  %4560 = vmatprep.subr.mxu0 0.0
  %4561 = vmatpush1.msra.mxu0 %v4532
  %4562 = vmatprep.subr.mxu0 0.0
  %4563 = vmatpush1.msra.mxu0 %v4531
  %4564 = vmatprep.subr.mxu0 0.0
  %4565 = vmatpush1.msra.mxu0 %v4530
  %4566 = vmatprep.subr.mxu0 0.0
  %4567 = vmatpush1.msra.mxu0 %v4529
  %4568 = vmatprep.subr.mxu0 0.0
  %4569 = vmatpush2.msra.mxu0 0.0
  %4570 = vmatprep.subr.mxu0 0.0
  %4571 = vmatpush2.msra.mxu0 0.0
  %4572 = vmatprep.subr.mxu0 0.0
  %4573 = vmatpush2.msra.mxu0 0.0
  %4574 = vmatprep.subr.mxu0 0.0
  %4575 = vmatpush2.msra.mxu0 0.0
  %4576 = vmatprep.subr.mxu0 0.0
  %4577 = vmatpush2.msra.mxu0 0.0
  %4578 = vmatprep.subr.mxu0 0.0
  %4579 = vmatpush2.msra.mxu0 0.0
  %4580 = vmatprep.subr.mxu0 0.0
  %4581 = vmatpush2.msra.mxu0 0.0
  %4582 = vmatprep.subr.mxu0 0.0
  %4583 = vmatpush2.msra.mxu0 0.0
  %4584 = vmatprep.subr.mxu0 0.0
  %4585 = vmatpush2.msra.mxu0 0.0
  %4586 = vmatprep.subr.mxu0 0.0
  %4587 = vmatpush2.msra.mxu0 0.0
  %4588 = vmatprep.subr.mxu0 0.0
  %4589 = vmatpush2.msra.mxu0 0.0
  %4590 = vmatprep.subr.mxu0 0.0
  %4591 = vmatpush2.msra.mxu0 0.0
  %4592 = vmatprep.subr.mxu0 0.0
  %4593 = vmatpush2.msra.mxu0 0.0
  %4594 = vmatprep.subr.mxu0 0.0
  %4595 = vmatpush2.msra.mxu0 0.0
  %4596 = vmatprep.subr.mxu0 0.0
  %4597 = vmatpush2.msra.mxu0 0.0
  %4598 = vmatprep.subr.mxu0 0.0
  %4599 = vmatpush2.msra.mxu0 0.0
  %4600 = vmatprep.mubr.f32.mxu0 0.0
  %4601 = vmatmul.mubr.f32.gmra.mxu0 %v4534
  %v4602 = vpop.f32.mrf.mxu0
  %v4603 = vadd.f32 0.0, %v4602
  %v4604 = vpop.f32.mrf.mxu0
  %4605 = vdwg.mxu0
  %v4606 = vld [vmem:[%s19] sm:$0xff]
  %v4607 = vld [vmem:[%s19 + $0x8] sm:$0xff]
  %v4608 = vld [vmem:[%s19 + $0x10] sm:$0xff]
  %v4609 = vld [vmem:[%s19 + $0x18] sm:$0xff]
  %v4611 = vsel %vm2026, %v4528, 0
  %4613 = vmatprep.subr.mxu0 0.0
  %4614 = vmatpush1.msra.mxu0 0.0
  %4615 = vmatprep.subr.mxu0 0.0
  %4616 = vmatpush1.msra.mxu0 0.0
  %4617 = vmatprep.subr.mxu0 0.0
  %4618 = vmatpush1.msra.mxu0 0.0
  %4619 = vmatprep.subr.mxu0 0.0
  %4620 = vmatpush1.msra.mxu0 0.0
  %4621 = vmatprep.subr.mxu0 0.0
  %4622 = vmatpush1.msra.mxu0 0.0
  %4623 = vmatprep.subr.mxu0 0.0
  %4624 = vmatpush1.msra.mxu0 0.0
  %4625 = vmatprep.subr.mxu0 0.0
  %4626 = vmatpush1.msra.mxu0 0.0
  %4627 = vmatprep.subr.mxu0 0.0
  %4628 = vmatpush1.msra.mxu0 0.0
  %4629 = vmatprep.subr.mxu0 0.0
  %4630 = vmatpush1.msra.mxu0 0.0
  %4631 = vmatprep.subr.mxu0 0.0
  %4632 = vmatpush1.msra.mxu0 0.0
  %4633 = vmatprep.subr.mxu0 0.0
  %4634 = vmatpush1.msra.mxu0 0.0
  %4635 = vmatprep.subr.mxu0 0.0
  %4636 = vmatpush1.msra.mxu0 0.0
  %4637 = vmatprep.subr.mxu0 0.0
  %4638 = vmatpush1.msra.mxu0 %v4609
  %4639 = vmatprep.subr.mxu0 0.0
  %4640 = vmatpush1.msra.mxu0 %v4608
  %4641 = vmatprep.subr.mxu0 0.0
  %4642 = vmatpush1.msra.mxu0 %v4607
  %4643 = vmatprep.subr.mxu0 0.0
  %4644 = vmatpush1.msra.mxu0 %v4606
  %4645 = vmatprep.subr.mxu0 0.0
  %4646 = vmatpush2.msra.mxu0 0.0
  %4647 = vmatprep.subr.mxu0 0.0
  %4648 = vmatpush2.msra.mxu0 0.0
  %4649 = vmatprep.subr.mxu0 0.0
  %4650 = vmatpush2.msra.mxu0 0.0
  %4651 = vmatprep.subr.mxu0 0.0
  %4652 = vmatpush2.msra.mxu0 0.0
  %4653 = vmatprep.subr.mxu0 0.0
  %4654 = vmatpush2.msra.mxu0 0.0
  %4655 = vmatprep.subr.mxu0 0.0
  %4656 = vmatpush2.msra.mxu0 0.0
  %4657 = vmatprep.subr.mxu0 0.0
  %4658 = vmatpush2.msra.mxu0 0.0
  %4659 = vmatprep.subr.mxu0 0.0
  %4660 = vmatpush2.msra.mxu0 0.0
  %4661 = vmatprep.subr.mxu0 0.0
  %4662 = vmatpush2.msra.mxu0 0.0
  %4663 = vmatprep.subr.mxu0 0.0
  %4664 = vmatpush2.msra.mxu0 0.0
  %4665 = vmatprep.subr.mxu0 0.0
  %4666 = vmatpush2.msra.mxu0 0.0
  %4667 = vmatprep.subr.mxu0 0.0
  %4668 = vmatpush2.msra.mxu0 0.0
  %4669 = vmatprep.subr.mxu0 0.0
  %4670 = vmatpush2.msra.mxu0 0.0
  %4671 = vmatprep.subr.mxu0 0.0
  %4672 = vmatpush2.msra.mxu0 0.0
  %4673 = vmatprep.subr.mxu0 0.0
  %4674 = vmatpush2.msra.mxu0 0.0
  %4675 = vmatprep.subr.mxu0 0.0
  %4676 = vmatpush2.msra.mxu0 0.0
  %4677 = vmatprep.mubr.f32.mxu0 0.0
  %4678 = vmatmul.mubr.f32.gmra.mxu0 %v4611
  %v4679 = vpop.f32.mrf.mxu0
  %v4680 = vadd.f32 0.0, %v4679
  %v4681 = vpop.f32.mrf.mxu0
  %4682 = vdwg.mxu0
  %v4683 = vld [vmem:[%s1] sm:$0xff]
  %v4684 = vld [vmem:[%s1 + $0x8] sm:$0x3f]
  %v4685 = vld [vmem:[%s15] sm:$0xff]
  %v4686 = vld [vmem:[%s15 + $0x8] sm:$0xff]
  %v4687 = vld [vmem:[%s15 + $0x10] sm:$0xff]
  %v4688 = vld [vmem:[%s17] sm:$0x1]
  %v4690 = vlaneseq
  %v4691 = vshrl.u32 %v4690, 7
  %v4692 = vsub.s32 0, %v4691
  %v4693 = vrot.slane %v4688, %v4692
  %v4696 = vsel %vm89, %v4683, 0
  %v4699 = vsel %vm89, %v4684, 0
  %4701 = vmatprep.subr.mxu0 0.0
  %4702 = vmatpush1.msra.mxu0 0.0
  %4703 = vmatprep.subr.mxu0 0.0
  %4704 = vmatpush1.msra.mxu0 0.0
  %4705 = vmatprep.subr.mxu0 0.0
  %4706 = vmatpush1.msra.mxu0 0.0
  %4707 = vmatprep.subr.mxu0 0.0
  %4708 = vmatpush1.msra.mxu0 0.0
  %4709 = vmatprep.subr.mxu0 0.0
  %4710 = vmatpush1.msra.mxu0 0.0
  %4711 = vmatprep.subr.mxu0 0.0
  %4712 = vmatpush1.msra.mxu0 0.0
  %4713 = vmatprep.subr.mxu0 0.0
  %4714 = vmatpush1.msra.mxu0 0.0
  %4715 = vmatprep.subr.mxu0 0.0
  %4716 = vmatpush1.msra.mxu0 0.0
  %4717 = vmatprep.subr.mxu0 0.0
  %4718 = vmatpush1.msra.mxu0 0.0
  %4719 = vmatprep.subr.mxu0 0.0
  %4720 = vmatpush1.msra.mxu0 0.0
  %4721 = vmatprep.subr.mxu0 0.0
  %4722 = vmatpush1.msra.mxu0 0.0
  %4723 = vmatprep.subr.mxu0 0.0
  %4724 = vmatpush1.msra.mxu0 0.0
  %4725 = vmatprep.subr.mxu0 0.0
  %4726 = vmatpush1.msra.mxu0 0.0
  %4727 = vmatprep.subr.mxu0 0.0
  %4728 = vmatpush1.msra.mxu0 %v4687
  %4729 = vmatprep.subr.mxu0 0.0
  %4730 = vmatpush1.msra.mxu0 %v4686
  %4731 = vmatprep.subr.mxu0 0.0
  %4732 = vmatpush1.msra.mxu0 %v4685
  %4733 = vmatprep.subr.mxu0 0.0
  %4734 = vmatpush2.msra.mxu0 0.0
  %4735 = vmatprep.subr.mxu0 0.0
  %4736 = vmatpush2.msra.mxu0 0.0
  %4737 = vmatprep.subr.mxu0 0.0
  %4738 = vmatpush2.msra.mxu0 0.0
  %4739 = vmatprep.subr.mxu0 0.0
  %4740 = vmatpush2.msra.mxu0 0.0
  %4741 = vmatprep.subr.mxu0 0.0
  %4742 = vmatpush2.msra.mxu0 0.0
  %4743 = vmatprep.subr.mxu0 0.0
  %4744 = vmatpush2.msra.mxu0 0.0
  %4745 = vmatprep.subr.mxu0 0.0
  %4746 = vmatpush2.msra.mxu0 0.0
  %4747 = vmatprep.subr.mxu0 0.0
  %4748 = vmatpush2.msra.mxu0 0.0
  %4749 = vmatprep.subr.mxu0 0.0
  %4750 = vmatpush2.msra.mxu0 0.0
  %4751 = vmatprep.subr.mxu0 0.0
  %4752 = vmatpush2.msra.mxu0 0.0
  %4753 = vmatprep.subr.mxu0 0.0
  %4754 = vmatpush2.msra.mxu0 0.0
  %4755 = vmatprep.subr.mxu0 0.0
  %4756 = vmatpush2.msra.mxu0 0.0
  %4757 = vmatprep.subr.mxu0 0.0
  %4758 = vmatpush2.msra.mxu0 0.0
  %4759 = vmatprep.subr.mxu0 0.0
  %4760 = vmatpush2.msra.mxu0 0.0
  %4761 = vmatprep.subr.mxu0 0.0
  %4762 = vmatpush2.msra.mxu0 0.0
  %4763 = vmatprep.subr.mxu0 0.0
  %4764 = vmatpush2.msra.mxu0 0.0
  %4765 = vmatprep.mubr.f32.mxu0 0.0
  %4766 = vmatmul.mubr.f32.gmra.mxu0 %v4696
  %v4767 = vpop.f32.mrf.mxu0
  %v4768 = vadd.f32 %v4693, %v4767
  %v4769 = vpop.f32.mrf.mxu0
  %4770 = vmatprep.mubr.f32.mxu0 0.0
  %4771 = vmatmul.mubr.f32.gmra.mxu0 %v4699
  %v4772 = vpop.f32.mrf.mxu0
  %v4773 = vadd.f32 %v4693, %v4772
  %v4774 = vpop.f32.mrf.mxu0
  %4775 = vdwg.mxu0
  %v4776 = vld [vmem:[%s16] sm:$0xff]
  %v4777 = vld [vmem:[%s16 + $0x8] sm:$0xff]
  %v4778 = vld [vmem:[%s16 + $0x10] sm:$0xff]
  %v4779 = vld [vmem:[%s16 + $0x18] sm:$0xff]
  %v4781 = vsel %vm2026, %v4603, 0
  %4783 = vmatprep.subr.mxu0 0.0
  %4784 = vmatpush1.msra.mxu0 0.0
  %4785 = vmatprep.subr.mxu0 0.0
  %4786 = vmatpush1.msra.mxu0 0.0
  %4787 = vmatprep.subr.mxu0 0.0
  %4788 = vmatpush1.msra.mxu0 0.0
  %4789 = vmatprep.subr.mxu0 0.0
  %4790 = vmatpush1.msra.mxu0 0.0
  %4791 = vmatprep.subr.mxu0 0.0
  %4792 = vmatpush1.msra.mxu0 0.0
  %4793 = vmatprep.subr.mxu0 0.0
  %4794 = vmatpush1.msra.mxu0 0.0
  %4795 = vmatprep.subr.mxu0 0.0
  %4796 = vmatpush1.msra.mxu0 0.0
  %4797 = vmatprep.subr.mxu0 0.0
  %4798 = vmatpush1.msra.mxu0 0.0
  %4799 = vmatprep.subr.mxu0 0.0
  %4800 = vmatpush1.msra.mxu0 0.0
  %4801 = vmatprep.subr.mxu0 0.0
  %4802 = vmatpush1.msra.mxu0 0.0
  %4803 = vmatprep.subr.mxu0 0.0
  %4804 = vmatpush1.msra.mxu0 0.0
  %4805 = vmatprep.subr.mxu0 0.0
  %4806 = vmatpush1.msra.mxu0 0.0
  %4807 = vmatprep.subr.mxu0 0.0
  %4808 = vmatpush1.msra.mxu0 %v4779
  %4809 = vmatprep.subr.mxu0 0.0
  %4810 = vmatpush1.msra.mxu0 %v4778
  %4811 = vmatprep.subr.mxu0 0.0
  %4812 = vmatpush1.msra.mxu0 %v4777
  %4813 = vmatprep.subr.mxu0 0.0
  %4814 = vmatpush1.msra.mxu0 %v4776
  %4815 = vmatprep.subr.mxu0 0.0
  %4816 = vmatpush2.msra.mxu0 0.0
  %4817 = vmatprep.subr.mxu0 0.0
  %4818 = vmatpush2.msra.mxu0 0.0
  %4819 = vmatprep.subr.mxu0 0.0
  %4820 = vmatpush2.msra.mxu0 0.0
  %4821 = vmatprep.subr.mxu0 0.0
  %4822 = vmatpush2.msra.mxu0 0.0
  %4823 = vmatprep.subr.mxu0 0.0
  %4824 = vmatpush2.msra.mxu0 0.0
  %4825 = vmatprep.subr.mxu0 0.0
  %4826 = vmatpush2.msra.mxu0 0.0
  %4827 = vmatprep.subr.mxu0 0.0
  %4828 = vmatpush2.msra.mxu0 0.0
  %4829 = vmatprep.subr.mxu0 0.0
  %4830 = vmatpush2.msra.mxu0 0.0
  %4831 = vmatprep.subr.mxu0 0.0
  %4832 = vmatpush2.msra.mxu0 0.0
  %4833 = vmatprep.subr.mxu0 0.0
  %4834 = vmatpush2.msra.mxu0 0.0
  %4835 = vmatprep.subr.mxu0 0.0
  %4836 = vmatpush2.msra.mxu0 0.0
  %4837 = vmatprep.subr.mxu0 0.0
  %4838 = vmatpush2.msra.mxu0 0.0
  %4839 = vmatprep.subr.mxu0 0.0
  %4840 = vmatpush2.msra.mxu0 0.0
  %4841 = vmatprep.subr.mxu0 0.0
  %4842 = vmatpush2.msra.mxu0 0.0
  %4843 = vmatprep.subr.mxu0 0.0
  %4844 = vmatpush2.msra.mxu0 0.0
  %4845 = vmatprep.subr.mxu0 0.0
  %4846 = vmatpush2.msra.mxu0 0.0
  %4847 = vmatprep.mubr.f32.mxu0 0.0
  %4848 = vmatmul.mubr.f32.gmra.mxu0 %v4781
  %v4849 = vpop.f32.mrf.mxu0
  %v4850 = vadd.f32 0.0, %v4849
  %v4851 = vpop.f32.mrf.mxu0
  %4852 = vdwg.mxu0
  %v4853 = vadd.f32 %v4768, %v4850
  %v4854 = vxor.u32 %v4853, 2147483648
  %v4855 = vmul.f32 %v4854, 1.442695
  %v4856 = vpow.pop %v4855
  %v4857 = vadd.f32 %v4856, 1.0
  %v4858 = vrcp.pop %v4857
  %v4859 = vmul.f32 1.0, %v4858
  %v4860 = vtanh.pop %v4853
  %4862 = vrot.lane.b32.xlu0 %v4680, 32
  %v4863 = vpop.permute.xlu0 %4862
  %v4865 = vmul.f32 %v4859, %v4863
  %4867 = vrot.lane.b32.xlu0 %v4860, 64
  %v4868 = vpop.permute.xlu0 %4867
  %v4870 = vmul.f32 %v4859, %v4868
  %4872 = vrot.lane.b32.xlu0 %v4870, 32
  %v4873 = vpop.permute.xlu0 %4872
  %v4875 = vadd.f32 %v4865, %v4873
  %v4876 = vtanh.pop %v4875
  %4878 = vrot.lane.b32.xlu0 %v4876, 64
  %v4879 = vpop.permute.xlu0 %4878
  %v4881 = vmul.f32 %v4859, %v4879
  %v4884 = vunpack.c.l.s4 1966171168
  %v4885 = vunpack.c.0.s8 %v4884
  %v4886 = vlaneseq
  %v4887 = vshrl.u32 %v4886, 7
  %v4888 = vsub.s32 %v4885, %v4887
  %v4889 = vrot.slane %v4881, %v4888
  %v4890 = vcombine.high %v4889, %v4889
  %v4892 = vunpack.c.l.s4 1966171168
  %v4893 = vunpack.c.0.s8 %v4892
  %v4894 = vlaneseq
  %v4895 = vshrl.u32 %v4894, 7
  %v4896 = vsub.s32 %v4893, %v4895
  %v4897 = vrot.slane %v4889, %v4896
  %v4899 = vunpack.c.l.s4 1966171168
  %v4900 = vunpack.c.0.s8 %v4899
  %v4901 = vlaneseq
  %v4902 = vshrl.u32 %v4901, 7
  %v4903 = vsub.s32 %v4900, %v4902
  %v4904 = vrot.slane %v4890, %v4903
  %v4905 = vlaneseq
  %v4906 = vshrl.u32 %v4905, 7
  %v4907 = vsub.s32 0, %v4906
  %v4908 = vrot.slane %v4897, %v4907
  %v4909 = vlaneseq
  %v4910 = vshrl.u32 %v4909, 7
  %v4911 = vsub.s32 0, %v4910
  %v4912 = vrot.slane %v4904, %v4911
  %4913 = vrot.lane.b32.xlu0 %v4908, 32
  %v4914 = vpop.permute.xlu0 %4913
  %4915 = vrot.lane.b32.xlu0 %v4912, 32
  %v4916 = vpop.permute.xlu0 %4915
  %vm4919 = vcmask 253952
  %4920 = vst.msk [vmem:[#allocation4] sm:$0x1] %vm4919, %v4914
  %4921 = vst.msk [vmem:[#allocation4 + $0x8] sm:$0x1] %vm4919, %v4916
  %4922 = vrot.lane.b32.xlu0 %v4881, 32
  %v4923 = vpop.permute.xlu0 %4922
  %v4924 = vsel %vm2026, %v4923, 0
  %4926 = vmatprep.subr.mxu0 0.0
  %4927 = vmatpush1.msra.mxu0 0.0
  %4928 = vmatprep.subr.mxu0 0.0
  %4929 = vmatpush1.msra.mxu0 0.0
  %4930 = vmatprep.subr.mxu0 0.0
  %4931 = vmatpush1.msra.mxu0 0.0
  %4932 = vmatprep.subr.mxu0 0.0
  %4933 = vmatpush1.msra.mxu0 0.0
  %4934 = vmatprep.subr.mxu0 0.0
  %4935 = vmatpush1.msra.mxu0 0.0
  %4936 = vmatprep.subr.mxu0 0.0
  %4937 = vmatpush1.msra.mxu0 0.0
  %4938 = vmatprep.subr.mxu0 0.0
  %4939 = vmatpush1.msra.mxu0 0.0
  %4940 = vmatprep.subr.mxu0 0.0
  %4941 = vmatpush1.msra.mxu0 0.0
  %4942 = vmatprep.subr.mxu0 0.0
  %4943 = vmatpush1.msra.mxu0 0.0
  %4944 = vmatprep.subr.mxu0 0.0
  %4945 = vmatpush1.msra.mxu0 0.0
  %4946 = vmatprep.subr.mxu0 0.0
  %4947 = vmatpush1.msra.mxu0 0.0
  %4948 = vmatprep.subr.mxu0 0.0
  %4949 = vmatpush1.msra.mxu0 0.0
  %4950 = vmatprep.subr.mxu0 0.0
  %4951 = vmatpush1.msra.mxu0 %v4779
  %4952 = vmatprep.subr.mxu0 0.0
  %4953 = vmatpush1.msra.mxu0 %v4778
  %4954 = vmatprep.subr.mxu0 0.0
  %4955 = vmatpush1.msra.mxu0 %v4777
  %4956 = vmatprep.subr.mxu0 0.0
  %4957 = vmatpush1.msra.mxu0 %v4776
  %4958 = vmatprep.subr.mxu0 0.0
  %4959 = vmatpush2.msra.mxu0 0.0
  %4960 = vmatprep.subr.mxu0 0.0
  %4961 = vmatpush2.msra.mxu0 0.0
  %4962 = vmatprep.subr.mxu0 0.0
  %4963 = vmatpush2.msra.mxu0 0.0
  %4964 = vmatprep.subr.mxu0 0.0
  %4965 = vmatpush2.msra.mxu0 0.0
  %4966 = vmatprep.subr.mxu0 0.0
  %4967 = vmatpush2.msra.mxu0 0.0
  %4968 = vmatprep.subr.mxu0 0.0
  %4969 = vmatpush2.msra.mxu0 0.0
  %4970 = vmatprep.subr.mxu0 0.0
  %4971 = vmatpush2.msra.mxu0 0.0
  %4972 = vmatprep.subr.mxu0 0.0
  %4973 = vmatpush2.msra.mxu0 0.0
  %4974 = vmatprep.subr.mxu0 0.0
  %4975 = vmatpush2.msra.mxu0 0.0
  %4976 = vmatprep.subr.mxu0 0.0
  %4977 = vmatpush2.msra.mxu0 0.0
  %4978 = vmatprep.subr.mxu0 0.0
  %4979 = vmatpush2.msra.mxu0 0.0
  %4980 = vmatprep.subr.mxu0 0.0
  %4981 = vmatpush2.msra.mxu0 0.0
  %4982 = vmatprep.subr.mxu0 0.0
  %4983 = vmatpush2.msra.mxu0 0.0
  %4984 = vmatprep.subr.mxu0 0.0
  %4985 = vmatpush2.msra.mxu0 0.0
  %4986 = vmatprep.subr.mxu0 0.0
  %4987 = vmatpush2.msra.mxu0 0.0
  %4988 = vmatprep.subr.mxu0 0.0
  %4989 = vmatpush2.msra.mxu0 0.0
  %4990 = vmatprep.mubr.f32.mxu0 0.0
  %4991 = vmatmul.mubr.f32.gmra.mxu0 %v4924
  %v4992 = vpop.f32.mrf.mxu0
  %v4993 = vadd.f32 0.0, %v4992
  %v4994 = vpop.f32.mrf.mxu0
  %4995 = vdwg.mxu0
  %v4997 = vrot.slane %v4993, 6
  %v4999 = vadd.f32 %v4768, %v4997
  %v5000 = vxor.u32 %v4999, 2147483648
  %v5001 = vmul.f32 %v5000, 1.442695
  %v5002 = vpow.pop %v5001
  %v5003 = vadd.f32 %v5002, 1.0
  %v5004 = vrcp.pop %v5003
  %v5005 = vmul.f32 1.0, %v5004
  %v5006 = vtanh.pop %v4999
  %v5008 = vrot.slane %v4875, 6
  %v5010 = vmul.f32 %v5005, %v5008
  %5012 = vrot.lane.b32.xlu0 %v5006, 64
  %v5013 = vpop.permute.xlu0 %5012
  %v5015 = vmul.f32 %v5005, %v5013
  %5017 = vrot.lane.b32.xlu0 %v5015, 32
  %v5018 = vpop.permute.xlu0 %5017
  %v5020 = vadd.f32 %v5010, %v5018
  %v5021 = vtanh.pop %v5020
  %5023 = vrot.lane.b32.xlu0 %v5021, 64
  %v5024 = vpop.permute.xlu0 %5023
  %v5026 = vmul.f32 %v5005, %v5024
  %v5029 = vunpack.c.l.s4 1966171168
  %v5030 = vunpack.c.0.s8 %v5029
  %v5031 = vlaneseq
  %v5032 = vshrl.u32 %v5031, 7
  %v5033 = vsub.s32 %v5030, %v5032
  %v5034 = vrot.slane %v5026, %v5033
  %v5035 = vcombine.high %v5034, %v5034
  %v5037 = vunpack.c.l.s4 1966171168
  %v5038 = vunpack.c.0.s8 %v5037
  %v5039 = vlaneseq
  %v5040 = vshrl.u32 %v5039, 7
  %v5041 = vsub.s32 %v5038, %v5040
  %v5042 = vrot.slane %v5034, %v5041
  %v5044 = vunpack.c.l.s4 1966171168
  %v5045 = vunpack.c.0.s8 %v5044
  %v5046 = vlaneseq
  %v5047 = vshrl.u32 %v5046, 7
  %v5048 = vsub.s32 %v5045, %v5047
  %v5049 = vrot.slane %v5035, %v5048
  %v5050 = vcombine.high %v5042, %v5042
  %v5051 = vcombine.high %v5049, %v5049
  %v5052 = vlaneseq
  %v5053 = vshrl.u32 %v5052, 7
  %v5054 = vsub.s32 0, %v5053
  %v5055 = vrot.slane %v5050, %v5054
  %v5056 = vlaneseq
  %v5057 = vshrl.u32 %v5056, 7
  %v5058 = vsub.s32 0, %v5057
  %v5059 = vrot.slane %v5051, %v5058
  %5060 = vrot.lane.b32.xlu0 %v5055, 32
  %v5061 = vpop.permute.xlu0 %5060
  %5062 = vrot.lane.b32.xlu0 %v5059, 32
  %v5063 = vpop.permute.xlu0 %5062
  %5066 = vst.msk [vmem:[#allocation4 + $0x1] sm:$0x1] %vm4919, %v5061
  %5067 = vst.msk [vmem:[#allocation4 + $0x9] sm:$0x1] %vm4919, %v5063
  %v5068 = vrot.slane %v5026, 2
  %5069 = vrot.lane.b32.xlu0 %v5068, 32
  %v5070 = vpop.permute.xlu0 %5069
  %v5071 = vsel %vm2026, %v5070, 0
  %5073 = vmatprep.subr.mxu0 0.0
  %5074 = vmatpush1.msra.mxu0 0.0
  %5075 = vmatprep.subr.mxu0 0.0
  %5076 = vmatpush1.msra.mxu0 0.0
  %5077 = vmatprep.subr.mxu0 0.0
  %5078 = vmatpush1.msra.mxu0 0.0
  %5079 = vmatprep.subr.mxu0 0.0
  %5080 = vmatpush1.msra.mxu0 0.0
  %5081 = vmatprep.subr.mxu0 0.0
  %5082 = vmatpush1.msra.mxu0 0.0
  %5083 = vmatprep.subr.mxu0 0.0
  %5084 = vmatpush1.msra.mxu0 0.0
  %5085 = vmatprep.subr.mxu0 0.0
  %5086 = vmatpush1.msra.mxu0 0.0
  %5087 = vmatprep.subr.mxu0 0.0
  %5088 = vmatpush1.msra.mxu0 0.0
  %5089 = vmatprep.subr.mxu0 0.0
  %5090 = vmatpush1.msra.mxu0 0.0
  %5091 = vmatprep.subr.mxu0 0.0
  %5092 = vmatpush1.msra.mxu0 0.0
  %5093 = vmatprep.subr.mxu0 0.0
  %5094 = vmatpush1.msra.mxu0 0.0
  %5095 = vmatprep.subr.mxu0 0.0
  %5096 = vmatpush1.msra.mxu0 0.0
  %5097 = vmatprep.subr.mxu0 0.0
  %5098 = vmatpush1.msra.mxu0 %v4779
  %5099 = vmatprep.subr.mxu0 0.0
  %5100 = vmatpush1.msra.mxu0 %v4778
  %5101 = vmatprep.subr.mxu0 0.0
  %5102 = vmatpush1.msra.mxu0 %v4777
  %5103 = vmatprep.subr.mxu0 0.0
  %5104 = vmatpush1.msra.mxu0 %v4776
  %5105 = vmatprep.subr.mxu0 0.0
  %5106 = vmatpush2.msra.mxu0 0.0
  %5107 = vmatprep.subr.mxu0 0.0
  %5108 = vmatpush2.msra.mxu0 0.0
  %5109 = vmatprep.subr.mxu0 0.0
  %5110 = vmatpush2.msra.mxu0 0.0
  %5111 = vmatprep.subr.mxu0 0.0
  %5112 = vmatpush2.msra.mxu0 0.0
  %5113 = vmatprep.subr.mxu0 0.0
  %5114 = vmatpush2.msra.mxu0 0.0
  %5115 = vmatprep.subr.mxu0 0.0
  %5116 = vmatpush2.msra.mxu0 0.0
  %5117 = vmatprep.subr.mxu0 0.0
  %5118 = vmatpush2.msra.mxu0 0.0
  %5119 = vmatprep.subr.mxu0 0.0
  %5120 = vmatpush2.msra.mxu0 0.0
  %5121 = vmatprep.subr.mxu0 0.0
  %5122 = vmatpush2.msra.mxu0 0.0
  %5123 = vmatprep.subr.mxu0 0.0
  %5124 = vmatpush2.msra.mxu0 0.0
  %5125 = vmatprep.subr.mxu0 0.0
  %5126 = vmatpush2.msra.mxu0 0.0
  %5127 = vmatprep.subr.mxu0 0.0
  %5128 = vmatpush2.msra.mxu0 0.0
  %5129 = vmatprep.subr.mxu0 0.0
  %5130 = vmatpush2.msra.mxu0 0.0
  %5131 = vmatprep.subr.mxu0 0.0
  %5132 = vmatpush2.msra.mxu0 0.0
  %5133 = vmatprep.subr.mxu0 0.0
  %5134 = vmatpush2.msra.mxu0 0.0
  %5135 = vmatprep.subr.mxu0 0.0
  %5136 = vmatpush2.msra.mxu0 0.0
  %5137 = vmatprep.mubr.f32.mxu0 0.0
  %5138 = vmatmul.mubr.f32.gmra.mxu0 %v5071
  %v5139 = vpop.f32.mrf.mxu0
  %v5140 = vadd.f32 0.0, %v5139
  %v5141 = vpop.f32.mrf.mxu0
  %5142 = vdwg.mxu0
  %v5144 = vrot.slane %v5140, 4
  %v5146 = vadd.f32 %v4768, %v5144
  %v5147 = vxor.u32 %v5146, 2147483648
  %v5148 = vmul.f32 %v5147, 1.442695
  %v5149 = vpow.pop %v5148
  %v5150 = vadd.f32 %v5149, 1.0
  %v5151 = vrcp.pop %v5150
  %v5152 = vmul.f32 1.0, %v5151
  %v5153 = vtanh.pop %v5146
  %v5155 = vrot.slane %v5020, 6
  %v5157 = vmul.f32 %v5152, %v5155
  %5159 = vrot.lane.b32.xlu0 %v5153, 64
  %v5160 = vpop.permute.xlu0 %5159
  %v5162 = vmul.f32 %v5152, %v5160
  %5164 = vrot.lane.b32.xlu0 %v5162, 32
  %v5165 = vpop.permute.xlu0 %5164
  %v5167 = vadd.f32 %v5157, %v5165
  %v5168 = vtanh.pop %v5167
  %5170 = vrot.lane.b32.xlu0 %v5168, 64
  %v5171 = vpop.permute.xlu0 %5170
  %v5173 = vmul.f32 %v5152, %v5171
  %v5175 = vcombine.high %v5173, %v5173
  %v5177 = vunpack.c.l.s4 1966171168
  %v5178 = vunpack.c.0.s8 %v5177
  %v5179 = vlaneseq
  %v5180 = vshrl.u32 %v5179, 7
  %v5181 = vsub.s32 %v5178, %v5180
  %v5182 = vrot.slane %v5175, %v5181
  %v5183 = vcombine.high %v5182, %v5182
  %v5185 = vunpack.c.l.s4 1966171168
  %v5186 = vunpack.c.0.s8 %v5185
  %v5187 = vlaneseq
  %v5188 = vshrl.u32 %v5187, 7
  %v5189 = vsub.s32 %v5186, %v5188
  %v5190 = vrot.slane %v5182, %v5189
  %v5192 = vunpack.c.l.s4 1966171168
  %v5193 = vunpack.c.0.s8 %v5192
  %v5194 = vlaneseq
  %v5195 = vshrl.u32 %v5194, 7
  %v5196 = vsub.s32 %v5193, %v5195
  %v5197 = vrot.slane %v5183, %v5196
  %v5198 = vlaneseq
  %v5199 = vshrl.u32 %v5198, 7
  %v5200 = vsub.s32 0, %v5199
  %v5201 = vrot.slane %v5190, %v5200
  %v5202 = vlaneseq
  %v5203 = vshrl.u32 %v5202, 7
  %v5204 = vsub.s32 0, %v5203
  %v5205 = vrot.slane %v5197, %v5204
  %5206 = vrot.lane.b32.xlu0 %v5201, 32
  %v5207 = vpop.permute.xlu0 %5206
  %5208 = vrot.lane.b32.xlu0 %v5205, 32
  %v5209 = vpop.permute.xlu0 %5208
  %5212 = vst.msk [vmem:[#allocation4 + $0x2] sm:$0x1] %vm4919, %v5207
  %5213 = vst.msk [vmem:[#allocation4 + $0xa] sm:$0x1] %vm4919, %v5209
  %v5214 = vrot.slane %v5173, 4
  %5215 = vrot.lane.b32.xlu0 %v5214, 32
  %v5216 = vpop.permute.xlu0 %5215
  %v5217 = vsel %vm2026, %v5216, 0
  %5219 = vmatprep.subr.mxu0 0.0
  %5220 = vmatpush1.msra.mxu0 0.0
  %5221 = vmatprep.subr.mxu0 0.0
  %5222 = vmatpush1.msra.mxu0 0.0
  %5223 = vmatprep.subr.mxu0 0.0
  %5224 = vmatpush1.msra.mxu0 0.0
  %5225 = vmatprep.subr.mxu0 0.0
  %5226 = vmatpush1.msra.mxu0 0.0
  %5227 = vmatprep.subr.mxu0 0.0
  %5228 = vmatpush1.msra.mxu0 0.0
  %5229 = vmatprep.subr.mxu0 0.0
  %5230 = vmatpush1.msra.mxu0 0.0
  %5231 = vmatprep.subr.mxu0 0.0
  %5232 = vmatpush1.msra.mxu0 0.0
  %5233 = vmatprep.subr.mxu0 0.0
  %5234 = vmatpush1.msra.mxu0 0.0
  %5235 = vmatprep.subr.mxu0 0.0
  %5236 = vmatpush1.msra.mxu0 0.0
  %5237 = vmatprep.subr.mxu0 0.0
  %5238 = vmatpush1.msra.mxu0 0.0
  %5239 = vmatprep.subr.mxu0 0.0
  %5240 = vmatpush1.msra.mxu0 0.0
  %5241 = vmatprep.subr.mxu0 0.0
  %5242 = vmatpush1.msra.mxu0 0.0
  %5243 = vmatprep.subr.mxu0 0.0
  %5244 = vmatpush1.msra.mxu0 %v4779
  %5245 = vmatprep.subr.mxu0 0.0
  %5246 = vmatpush1.msra.mxu0 %v4778
  %5247 = vmatprep.subr.mxu0 0.0
  %5248 = vmatpush1.msra.mxu0 %v4777
  %5249 = vmatprep.subr.mxu0 0.0
  %5250 = vmatpush1.msra.mxu0 %v4776
  %5251 = vmatprep.subr.mxu0 0.0
  %5252 = vmatpush2.msra.mxu0 0.0
  %5253 = vmatprep.subr.mxu0 0.0
  %5254 = vmatpush2.msra.mxu0 0.0
  %5255 = vmatprep.subr.mxu0 0.0
  %5256 = vmatpush2.msra.mxu0 0.0
  %5257 = vmatprep.subr.mxu0 0.0
  %5258 = vmatpush2.msra.mxu0 0.0
  %5259 = vmatprep.subr.mxu0 0.0
  %5260 = vmatpush2.msra.mxu0 0.0
  %5261 = vmatprep.subr.mxu0 0.0
  %5262 = vmatpush2.msra.mxu0 0.0
  %5263 = vmatprep.subr.mxu0 0.0
  %5264 = vmatpush2.msra.mxu0 0.0
  %5265 = vmatprep.subr.mxu0 0.0
  %5266 = vmatpush2.msra.mxu0 0.0
  %5267 = vmatprep.subr.mxu0 0.0
  %5268 = vmatpush2.msra.mxu0 0.0
  %5269 = vmatprep.subr.mxu0 0.0
  %5270 = vmatpush2.msra.mxu0 0.0
  %5271 = vmatprep.subr.mxu0 0.0
  %5272 = vmatpush2.msra.mxu0 0.0
  %5273 = vmatprep.subr.mxu0 0.0
  %5274 = vmatpush2.msra.mxu0 0.0
  %5275 = vmatprep.subr.mxu0 0.0
  %5276 = vmatpush2.msra.mxu0 0.0
  %5277 = vmatprep.subr.mxu0 0.0
  %5278 = vmatpush2.msra.mxu0 0.0
  %5279 = vmatprep.subr.mxu0 0.0
  %5280 = vmatpush2.msra.mxu0 0.0
  %5281 = vmatprep.subr.mxu0 0.0
  %5282 = vmatpush2.msra.mxu0 0.0
  %5283 = vmatprep.mubr.f32.mxu0 0.0
  %5284 = vmatmul.mubr.f32.gmra.mxu0 %v5217
  %v5285 = vpop.f32.mrf.mxu0
  %v5286 = vadd.f32 0.0, %v5285
  %v5287 = vpop.f32.mrf.mxu0
  %5288 = vdwg.mxu0
  %v5290 = vrot.slane %v5286, 2
  %v5292 = vadd.f32 %v4768, %v5290
  %v5293 = vxor.u32 %v5292, 2147483648
  %v5294 = vmul.f32 %v5293, 1.442695
  %v5295 = vpow.pop %v5294
  %v5296 = vadd.f32 %v5295, 1.0
  %v5297 = vrcp.pop %v5296
  %v5298 = vmul.f32 1.0, %v5297
  %v5299 = vtanh.pop %v5292
  %v5301 = vrot.slane %v5167, 6
  %v5303 = vmul.f32 %v5298, %v5301
  %5305 = vrot.lane.b32.xlu0 %v5299, 64
  %v5306 = vpop.permute.xlu0 %5305
  %v5308 = vmul.f32 %v5298, %v5306
  %5310 = vrot.lane.b32.xlu0 %v5308, 32
  %v5311 = vpop.permute.xlu0 %5310
  %v5313 = vadd.f32 %v5303, %v5311
  %v5314 = vtanh.pop %v5313
  %5316 = vrot.lane.b32.xlu0 %v5314, 64
  %v5317 = vpop.permute.xlu0 %5316
  %v5319 = vmul.f32 %v5298, %v5317
  %v5321 = vcombine.high %v5319, %v5319
  %v5323 = vunpack.c.l.s4 1966171168
  %v5324 = vunpack.c.0.s8 %v5323
  %v5325 = vlaneseq
  %v5326 = vshrl.u32 %v5325, 7
  %v5327 = vsub.s32 %v5324, %v5326
  %v5328 = vrot.slane %v5321, %v5327
  %v5329 = vcombine.high %v5328, %v5328
  %v5331 = vunpack.c.l.s4 1966171168
  %v5332 = vunpack.c.0.s8 %v5331
  %v5333 = vlaneseq
  %v5334 = vshrl.u32 %v5333, 7
  %v5335 = vsub.s32 %v5332, %v5334
  %v5336 = vrot.slane %v5328, %v5335
  %v5338 = vunpack.c.l.s4 1966171168
  %v5339 = vunpack.c.0.s8 %v5338
  %v5340 = vlaneseq
  %v5341 = vshrl.u32 %v5340, 7
  %v5342 = vsub.s32 %v5339, %v5341
  %v5343 = vrot.slane %v5329, %v5342
  %v5344 = vcombine.high %v5336, %v5336
  %v5345 = vcombine.high %v5343, %v5343
  %v5346 = vlaneseq
  %v5347 = vshrl.u32 %v5346, 7
  %v5348 = vsub.s32 0, %v5347
  %v5349 = vrot.slane %v5344, %v5348
  %v5350 = vlaneseq
  %v5351 = vshrl.u32 %v5350, 7
  %v5352 = vsub.s32 0, %v5351
  %v5353 = vrot.slane %v5345, %v5352
  %5354 = vrot.lane.b32.xlu0 %v5349, 32
  %v5355 = vpop.permute.xlu0 %5354
  %5356 = vrot.lane.b32.xlu0 %v5353, 32
  %v5357 = vpop.permute.xlu0 %5356
  %5360 = vst.msk [vmem:[#allocation4 + $0x3] sm:$0x1] %vm4919, %v5355
  %5361 = vst.msk [vmem:[#allocation4 + $0xb] sm:$0x1] %vm4919, %v5357
  %v5362 = vrot.slane %v5319, 6
  %5363 = vrot.lane.b32.xlu0 %v5362, 32
  %v5364 = vpop.permute.xlu0 %5363
  %v5365 = vsel %vm2026, %v5364, 0
  %5367 = vmatprep.subr.mxu0 0.0
  %5368 = vmatpush1.msra.mxu0 0.0
  %5369 = vmatprep.subr.mxu0 0.0
  %5370 = vmatpush1.msra.mxu0 0.0
  %5371 = vmatprep.subr.mxu0 0.0
  %5372 = vmatpush1.msra.mxu0 0.0
  %5373 = vmatprep.subr.mxu0 0.0
  %5374 = vmatpush1.msra.mxu0 0.0
  %5375 = vmatprep.subr.mxu0 0.0
  %5376 = vmatpush1.msra.mxu0 0.0
  %5377 = vmatprep.subr.mxu0 0.0
  %5378 = vmatpush1.msra.mxu0 0.0
  %5379 = vmatprep.subr.mxu0 0.0
  %5380 = vmatpush1.msra.mxu0 0.0
  %5381 = vmatprep.subr.mxu0 0.0
  %5382 = vmatpush1.msra.mxu0 0.0
  %5383 = vmatprep.subr.mxu0 0.0
  %5384 = vmatpush1.msra.mxu0 0.0
  %5385 = vmatprep.subr.mxu0 0.0
  %5386 = vmatpush1.msra.mxu0 0.0
  %5387 = vmatprep.subr.mxu0 0.0
  %5388 = vmatpush1.msra.mxu0 0.0
  %5389 = vmatprep.subr.mxu0 0.0
  %5390 = vmatpush1.msra.mxu0 0.0
  %5391 = vmatprep.subr.mxu0 0.0
  %5392 = vmatpush1.msra.mxu0 %v4779
  %5393 = vmatprep.subr.mxu0 0.0
  %5394 = vmatpush1.msra.mxu0 %v4778
  %5395 = vmatprep.subr.mxu0 0.0
  %5396 = vmatpush1.msra.mxu0 %v4777
  %5397 = vmatprep.subr.mxu0 0.0
  %5398 = vmatpush1.msra.mxu0 %v4776
  %5399 = vmatprep.subr.mxu0 0.0
  %5400 = vmatpush2.msra.mxu0 0.0
  %5401 = vmatprep.subr.mxu0 0.0
  %5402 = vmatpush2.msra.mxu0 0.0
  %5403 = vmatprep.subr.mxu0 0.0
  %5404 = vmatpush2.msra.mxu0 0.0
  %5405 = vmatprep.subr.mxu0 0.0
  %5406 = vmatpush2.msra.mxu0 0.0
  %5407 = vmatprep.subr.mxu0 0.0
  %5408 = vmatpush2.msra.mxu0 0.0
  %5409 = vmatprep.subr.mxu0 0.0
  %5410 = vmatpush2.msra.mxu0 0.0
  %5411 = vmatprep.subr.mxu0 0.0
  %5412 = vmatpush2.msra.mxu0 0.0
  %5413 = vmatprep.subr.mxu0 0.0
  %5414 = vmatpush2.msra.mxu0 0.0
  %5415 = vmatprep.subr.mxu0 0.0
  %5416 = vmatpush2.msra.mxu0 0.0
  %5417 = vmatprep.subr.mxu0 0.0
  %5418 = vmatpush2.msra.mxu0 0.0
  %5419 = vmatprep.subr.mxu0 0.0
  %5420 = vmatpush2.msra.mxu0 0.0
  %5421 = vmatprep.subr.mxu0 0.0
  %5422 = vmatpush2.msra.mxu0 0.0
  %5423 = vmatprep.subr.mxu0 0.0
  %5424 = vmatpush2.msra.mxu0 0.0
  %5425 = vmatprep.subr.mxu0 0.0
  %5426 = vmatpush2.msra.mxu0 0.0
  %5427 = vmatprep.subr.mxu0 0.0
  %5428 = vmatpush2.msra.mxu0 0.0
  %5429 = vmatprep.subr.mxu0 0.0
  %5430 = vmatpush2.msra.mxu0 0.0
  %5431 = vmatprep.mubr.f32.mxu0 0.0
  %5432 = vmatmul.mubr.f32.gmra.mxu0 %v5365
  %v5433 = vpop.f32.mrf.mxu0
  %v5434 = vadd.f32 0.0, %v5433
  %v5435 = vpop.f32.mrf.mxu0
  %5436 = vdwg.mxu0
  %v5437 = vadd.f32 %v4773, %v5434
  %v5438 = vxor.u32 %v5437, 2147483648
  %v5439 = vmul.f32 %v5438, 1.442695
  %v5440 = vpow.pop %v5439
  %v5441 = vadd.f32 %v5440, 1.0
  %v5442 = vrcp.pop %v5441
  %v5443 = vmul.f32 1.0, %v5442
  %v5444 = vtanh.pop %v5437
  %v5446 = vrot.slane %v5313, 6
  %v5448 = vmul.f32 %v5443, %v5446
  %5450 = vrot.lane.b32.xlu0 %v5444, 64
  %v5451 = vpop.permute.xlu0 %5450
  %v5453 = vmul.f32 %v5443, %v5451
  %5455 = vrot.lane.b32.xlu0 %v5453, 32
  %v5456 = vpop.permute.xlu0 %5455
  %v5458 = vadd.f32 %v5448, %v5456
  %v5459 = vtanh.pop %v5458
  %5461 = vrot.lane.b32.xlu0 %v5459, 64
  %v5462 = vpop.permute.xlu0 %5461
  %v5464 = vmul.f32 %v5443, %v5462
  %v5467 = vunpack.c.l.s4 1966171168
  %v5468 = vunpack.c.0.s8 %v5467
  %v5469 = vlaneseq
  %v5470 = vshrl.u32 %v5469, 7
  %v5471 = vsub.s32 %v5468, %v5470
  %v5472 = vrot.slane %v5464, %v5471
  %v5473 = vcombine.high %v5472, %v5472
  %v5475 = vunpack.c.l.s4 1966171168
  %v5476 = vunpack.c.0.s8 %v5475
  %v5477 = vlaneseq
  %v5478 = vshrl.u32 %v5477, 7
  %v5479 = vsub.s32 %v5476, %v5478
  %v5480 = vrot.slane %v5472, %v5479
  %v5482 = vunpack.c.l.s4 1966171168
  %v5483 = vunpack.c.0.s8 %v5482
  %v5484 = vlaneseq
  %v5485 = vshrl.u32 %v5484, 7
  %v5486 = vsub.s32 %v5483, %v5485
  %v5487 = vrot.slane %v5473, %v5486
  %v5488 = vlaneseq
  %v5489 = vshrl.u32 %v5488, 7
  %v5490 = vsub.s32 0, %v5489
  %v5491 = vrot.slane %v5480, %v5490
  %v5492 = vlaneseq
  %v5493 = vshrl.u32 %v5492, 7
  %v5494 = vsub.s32 0, %v5493
  %v5495 = vrot.slane %v5487, %v5494
  %5496 = vrot.lane.b32.xlu0 %v5491, 32
  %v5497 = vpop.permute.xlu0 %5496
  %5498 = vrot.lane.b32.xlu0 %v5495, 32
  %v5499 = vpop.permute.xlu0 %5498
  %5502 = vst.msk [vmem:[#allocation4 + $0x4] sm:$0x1] %vm4919, %v5497
  %5503 = vst.msk [vmem:[#allocation4 + $0xc] sm:$0x1] %vm4919, %v5499
  %5504 = vrot.lane.b32.xlu0 %v5464, 32
  %v5505 = vpop.permute.xlu0 %5504
  %v5506 = vsel %vm2026, %v5505, 0
  %5508 = vmatprep.subr.mxu0 0.0
  %5509 = vmatpush1.msra.mxu0 0.0
  %5510 = vmatprep.subr.mxu0 0.0
  %5511 = vmatpush1.msra.mxu0 0.0
  %5512 = vmatprep.subr.mxu0 0.0
  %5513 = vmatpush1.msra.mxu0 0.0
  %5514 = vmatprep.subr.mxu0 0.0
  %5515 = vmatpush1.msra.mxu0 0.0
  %5516 = vmatprep.subr.mxu0 0.0
  %5517 = vmatpush1.msra.mxu0 0.0
  %5518 = vmatprep.subr.mxu0 0.0
  %5519 = vmatpush1.msra.mxu0 0.0
  %5520 = vmatprep.subr.mxu0 0.0
  %5521 = vmatpush1.msra.mxu0 0.0
  %5522 = vmatprep.subr.mxu0 0.0
  %5523 = vmatpush1.msra.mxu0 0.0
  %5524 = vmatprep.subr.mxu0 0.0
  %5525 = vmatpush1.msra.mxu0 0.0
  %5526 = vmatprep.subr.mxu0 0.0
  %5527 = vmatpush1.msra.mxu0 0.0
  %5528 = vmatprep.subr.mxu0 0.0
  %5529 = vmatpush1.msra.mxu0 0.0
  %5530 = vmatprep.subr.mxu0 0.0
  %5531 = vmatpush1.msra.mxu0 0.0
  %5532 = vmatprep.subr.mxu0 0.0
  %5533 = vmatpush1.msra.mxu0 %v4779
  %5534 = vmatprep.subr.mxu0 0.0
  %5535 = vmatpush1.msra.mxu0 %v4778
  %5536 = vmatprep.subr.mxu0 0.0
  %5537 = vmatpush1.msra.mxu0 %v4777
  %5538 = vmatprep.subr.mxu0 0.0
  %5539 = vmatpush1.msra.mxu0 %v4776
  %5540 = vmatprep.subr.mxu0 0.0
  %5541 = vmatpush2.msra.mxu0 0.0
  %5542 = vmatprep.subr.mxu0 0.0
  %5543 = vmatpush2.msra.mxu0 0.0
  %5544 = vmatprep.subr.mxu0 0.0
  %5545 = vmatpush2.msra.mxu0 0.0
  %5546 = vmatprep.subr.mxu0 0.0
  %5547 = vmatpush2.msra.mxu0 0.0
  %5548 = vmatprep.subr.mxu0 0.0
  %5549 = vmatpush2.msra.mxu0 0.0
  %5550 = vmatprep.subr.mxu0 0.0
  %5551 = vmatpush2.msra.mxu0 0.0
  %5552 = vmatprep.subr.mxu0 0.0
  %5553 = vmatpush2.msra.mxu0 0.0
  %5554 = vmatprep.subr.mxu0 0.0
  %5555 = vmatpush2.msra.mxu0 0.0
  %5556 = vmatprep.subr.mxu0 0.0
  %5557 = vmatpush2.msra.mxu0 0.0
  %5558 = vmatprep.subr.mxu0 0.0
  %5559 = vmatpush2.msra.mxu0 0.0
  %5560 = vmatprep.subr.mxu0 0.0
  %5561 = vmatpush2.msra.mxu0 0.0
  %5562 = vmatprep.subr.mxu0 0.0
  %5563 = vmatpush2.msra.mxu0 0.0
  %5564 = vmatprep.subr.mxu0 0.0
  %5565 = vmatpush2.msra.mxu0 0.0
  %5566 = vmatprep.subr.mxu0 0.0
  %5567 = vmatpush2.msra.mxu0 0.0
  %5568 = vmatprep.subr.mxu0 0.0
  %5569 = vmatpush2.msra.mxu0 0.0
  %5570 = vmatprep.subr.mxu0 0.0
  %5571 = vmatpush2.msra.mxu0 0.0
  %5572 = vmatprep.mubr.f32.mxu0 0.0
  %5573 = vmatmul.mubr.f32.gmra.mxu0 %v5506
  %v5574 = vpop.f32.mrf.mxu0
  %v5575 = vadd.f32 0.0, %v5574
  %v5576 = vpop.f32.mrf.mxu0
  %5577 = vdwg.mxu0
  %v5579 = vrot.slane %v5575, 6
  %v5581 = vadd.f32 %v4773, %v5579
  %v5582 = vxor.u32 %v5581, 2147483648
  %v5583 = vmul.f32 %v5582, 1.442695
  %v5584 = vpow.pop %v5583
  %v5585 = vadd.f32 %v5584, 1.0
  %v5586 = vrcp.pop %v5585
  %v5587 = vmul.f32 1.0, %v5586
  %v5588 = vtanh.pop %v5581
  %v5590 = vrot.slane %v5458, 6
  %v5592 = vmul.f32 %v5587, %v5590
  %5594 = vrot.lane.b32.xlu0 %v5588, 64
  %v5595 = vpop.permute.xlu0 %5594
  %v5597 = vmul.f32 %v5587, %v5595
  %5599 = vrot.lane.b32.xlu0 %v5597, 32
  %v5600 = vpop.permute.xlu0 %5599
  %v5602 = vadd.f32 %v5592, %v5600
  %v5603 = vtanh.pop %v5602
  %5605 = vrot.lane.b32.xlu0 %v5603, 64
  %v5606 = vpop.permute.xlu0 %5605
  %v5608 = vmul.f32 %v5587, %v5606
  %v5611 = vunpack.c.l.s4 1966171168
  %v5612 = vunpack.c.0.s8 %v5611
  %v5613 = vlaneseq
  %v5614 = vshrl.u32 %v5613, 7
  %v5615 = vsub.s32 %v5612, %v5614
  %v5616 = vrot.slane %v5608, %v5615
  %v5617 = vcombine.high %v5616, %v5616
  %v5619 = vunpack.c.l.s4 1966171168
  %v5620 = vunpack.c.0.s8 %v5619
  %v5621 = vlaneseq
  %v5622 = vshrl.u32 %v5621, 7
  %v5623 = vsub.s32 %v5620, %v5622
  %v5624 = vrot.slane %v5616, %v5623
  %v5626 = vunpack.c.l.s4 1966171168
  %v5627 = vunpack.c.0.s8 %v5626
  %v5628 = vlaneseq
  %v5629 = vshrl.u32 %v5628, 7
  %v5630 = vsub.s32 %v5627, %v5629
  %v5631 = vrot.slane %v5617, %v5630
  %v5632 = vcombine.high %v5624, %v5624
  %v5633 = vcombine.high %v5631, %v5631
  %v5634 = vlaneseq
  %v5635 = vshrl.u32 %v5634, 7
  %v5636 = vsub.s32 0, %v5635
  %v5637 = vrot.slane %v5632, %v5636
  %v5638 = vlaneseq
  %v5639 = vshrl.u32 %v5638, 7
  %v5640 = vsub.s32 0, %v5639
  %v5641 = vrot.slane %v5633, %v5640
  %5642 = vrot.lane.b32.xlu0 %v5637, 32
  %v5643 = vpop.permute.xlu0 %5642
  %5644 = vrot.lane.b32.xlu0 %v5641, 32
  %v5645 = vpop.permute.xlu0 %5644
  %5648 = vst.msk [vmem:[#allocation4 + $0x5] sm:$0x1] %vm4919, %v5643
  %5649 = vst.msk [vmem:[#allocation4 + $0xd] sm:$0x1] %vm4919, %v5645
  %v5650 = vrot.slane %v5608, 2
  %5651 = vrot.lane.b32.xlu0 %v5650, 32
  %v5652 = vpop.permute.xlu0 %5651
  %v5653 = vsel %vm2026, %v5652, 0
  %5655 = vmatprep.subr.mxu0 0.0
  %5656 = vmatpush1.msra.mxu0 0.0
  %5657 = vmatprep.subr.mxu0 0.0
  %5658 = vmatpush1.msra.mxu0 0.0
  %5659 = vmatprep.subr.mxu0 0.0
  %5660 = vmatpush1.msra.mxu0 0.0
  %5661 = vmatprep.subr.mxu0 0.0
  %5662 = vmatpush1.msra.mxu0 0.0
  %5663 = vmatprep.subr.mxu0 0.0
  %5664 = vmatpush1.msra.mxu0 0.0
  %5665 = vmatprep.subr.mxu0 0.0
  %5666 = vmatpush1.msra.mxu0 0.0
  %5667 = vmatprep.subr.mxu0 0.0
  %5668 = vmatpush1.msra.mxu0 0.0
  %5669 = vmatprep.subr.mxu0 0.0
  %5670 = vmatpush1.msra.mxu0 0.0
  %5671 = vmatprep.subr.mxu0 0.0
  %5672 = vmatpush1.msra.mxu0 0.0
  %5673 = vmatprep.subr.mxu0 0.0
  %5674 = vmatpush1.msra.mxu0 0.0
  %5675 = vmatprep.subr.mxu0 0.0
  %5676 = vmatpush1.msra.mxu0 0.0
  %5677 = vmatprep.subr.mxu0 0.0
  %5678 = vmatpush1.msra.mxu0 0.0
  %5679 = vmatprep.subr.mxu0 0.0
  %5680 = vmatpush1.msra.mxu0 %v4779
  %5681 = vmatprep.subr.mxu0 0.0
  %5682 = vmatpush1.msra.mxu0 %v4778
  %5683 = vmatprep.subr.mxu0 0.0
  %5684 = vmatpush1.msra.mxu0 %v4777
  %5685 = vmatprep.subr.mxu0 0.0
  %5686 = vmatpush1.msra.mxu0 %v4776
  %5687 = vmatprep.subr.mxu0 0.0
  %5688 = vmatpush2.msra.mxu0 0.0
  %5689 = vmatprep.subr.mxu0 0.0
  %5690 = vmatpush2.msra.mxu0 0.0
  %5691 = vmatprep.subr.mxu0 0.0
  %5692 = vmatpush2.msra.mxu0 0.0
  %5693 = vmatprep.subr.mxu0 0.0
  %5694 = vmatpush2.msra.mxu0 0.0
  %5695 = vmatprep.subr.mxu0 0.0
  %5696 = vmatpush2.msra.mxu0 0.0
  %5697 = vmatprep.subr.mxu0 0.0
  %5698 = vmatpush2.msra.mxu0 0.0
  %5699 = vmatprep.subr.mxu0 0.0
  %5700 = vmatpush2.msra.mxu0 0.0
  %5701 = vmatprep.subr.mxu0 0.0
  %5702 = vmatpush2.msra.mxu0 0.0
  %5703 = vmatprep.subr.mxu0 0.0
  %5704 = vmatpush2.msra.mxu0 0.0
  %5705 = vmatprep.subr.mxu0 0.0
  %5706 = vmatpush2.msra.mxu0 0.0
  %5707 = vmatprep.subr.mxu0 0.0
  %5708 = vmatpush2.msra.mxu0 0.0
  %5709 = vmatprep.subr.mxu0 0.0
  %5710 = vmatpush2.msra.mxu0 0.0
  %5711 = vmatprep.subr.mxu0 0.0
  %5712 = vmatpush2.msra.mxu0 0.0
  %5713 = vmatprep.subr.mxu0 0.0
  %5714 = vmatpush2.msra.mxu0 0.0
  %5715 = vmatprep.subr.mxu0 0.0
  %5716 = vmatpush2.msra.mxu0 0.0
  %5717 = vmatprep.subr.mxu0 0.0
  %5718 = vmatpush2.msra.mxu0 0.0
  %5719 = vmatprep.mubr.f32.mxu0 0.0
  %5720 = vmatmul.mubr.f32.gmra.mxu0 %v5653
  %v5721 = vpop.f32.mrf.mxu0
  %v5722 = vadd.f32 0.0, %v5721
  %v5723 = vpop.f32.mrf.mxu0
  %5724 = vdwg.mxu0
  %v5726 = vrot.slane %v5722, 4
  %v5728 = vadd.f32 %v4773, %v5726
  %v5729 = vxor.u32 %v5728, 2147483648
  %v5730 = vmul.f32 %v5729, 1.442695
  %v5731 = vpow.pop %v5730
  %v5732 = vadd.f32 %v5731, 1.0
  %v5733 = vrcp.pop %v5732
  %v5734 = vmul.f32 1.0, %v5733
  %v5735 = vtanh.pop %v5728
  %v5737 = vrot.slane %v5602, 6
  %v5739 = vmul.f32 %v5734, %v5737
  %5741 = vrot.lane.b32.xlu0 %v5735, 64
  %v5742 = vpop.permute.xlu0 %5741
  %v5744 = vmul.f32 %v5734, %v5742
  %5746 = vrot.lane.b32.xlu0 %v5744, 32
  %v5747 = vpop.permute.xlu0 %5746
  %v5749 = vadd.f32 %v5739, %v5747
  %v5750 = vtanh.pop %v5749
  %5752 = vrot.lane.b32.xlu0 %v5750, 64
  %v5753 = vpop.permute.xlu0 %5752
  %v5755 = vmul.f32 %v5734, %v5753
  %v5757 = vcombine.high %v5755, %v5755
  %v5759 = vunpack.c.l.s4 1966171168
  %v5760 = vunpack.c.0.s8 %v5759
  %v5761 = vlaneseq
  %v5762 = vshrl.u32 %v5761, 7
  %v5763 = vsub.s32 %v5760, %v5762
  %v5764 = vrot.slane %v5757, %v5763
  %v5765 = vcombine.high %v5764, %v5764
  %v5767 = vunpack.c.l.s4 1966171168
  %v5768 = vunpack.c.0.s8 %v5767
  %v5769 = vlaneseq
  %v5770 = vshrl.u32 %v5769, 7
  %v5771 = vsub.s32 %v5768, %v5770
  %v5772 = vrot.slane %v5764, %v5771
  %v5774 = vunpack.c.l.s4 1966171168
  %v5775 = vunpack.c.0.s8 %v5774
  %v5776 = vlaneseq
  %v5777 = vshrl.u32 %v5776, 7
  %v5778 = vsub.s32 %v5775, %v5777
  %v5779 = vrot.slane %v5765, %v5778
  %v5780 = vlaneseq
  %v5781 = vshrl.u32 %v5780, 7
  %v5782 = vsub.s32 0, %v5781
  %v5783 = vrot.slane %v5772, %v5782
  %v5784 = vlaneseq
  %v5785 = vshrl.u32 %v5784, 7
  %v5786 = vsub.s32 0, %v5785
  %v5787 = vrot.slane %v5779, %v5786
  %5788 = vrot.lane.b32.xlu0 %v5783, 32
  %v5789 = vpop.permute.xlu0 %5788
  %5790 = vrot.lane.b32.xlu0 %v5787, 32
  %v5791 = vpop.permute.xlu0 %5790
  %5794 = vst.msk [vmem:[#allocation4 + $0x6] sm:$0x1] %vm4919, %v5789
  %5795 = vst.msk [vmem:[#allocation4 + $0xe] sm:$0x1] %vm4919, %v5791
  %v5796 = vld [vmem:[%s20] sm:$0xff]
  %v5797 = vld [vmem:[%s20 + $0x8] sm:$0xff]
  %v5798 = vld [vmem:[%s20 + $0x10] sm:$0xff]
  %v5799 = vld [vmem:[%s20 + $0x18] sm:$0xff]
  %v5800 = vld [vmem:[%s21] sm:$0xff]
  %v5801 = vld [vmem:[%s21 + $0x8] sm:$0xff]
  %v5802 = vld [vmem:[%s21 + $0x10] sm:$0xff]
  %v5803 = vld [vmem:[%s21 + $0x18] sm:$0xff]
  %v5804 = vld [vmem:[%s21 + $0x20] sm:$0xff]
  %v5805 = vld [vmem:[%s21 + $0x28] sm:$0xff]
  %v5806 = vld [vmem:[%s21 + $0x30] sm:$0xff]
  %v5807 = vld [vmem:[%s21 + $0x38] sm:$0xff]
  %v5808 = vld [vmem:[%s22] sm:$0xff]
  %v5809 = vld [vmem:[%s22 + $0x8] sm:$0xff]
  %v5810 = vld [vmem:[%s22 + $0x10] sm:$0xff]
  %v5811 = vld [vmem:[%s22 + $0x18] sm:$0xff]
  %v5812 = vld [vmem:[%s23] sm:$0x1]
  %v5813 = vld [vmem:[#allocation4] sm:$0x7f]
  %v5814 = vld [vmem:[#allocation3] sm:$0xff]
  %v5815 = vld [vmem:[%s2] sm:$0x1]
  %v5817 = vsel %vm2026, %v5813, 0
  %5819 = vmatprep.subr.mxu0 0.0
  %5820 = vmatpush1.msra.mxu0 0.0
  %5821 = vmatprep.subr.mxu0 0.0
  %5822 = vmatpush1.msra.mxu0 0.0
  %5823 = vmatprep.subr.mxu0 0.0
  %5824 = vmatpush1.msra.mxu0 0.0
  %5825 = vmatprep.subr.mxu0 0.0
  %5826 = vmatpush1.msra.mxu0 0.0
  %5827 = vmatprep.subr.mxu0 0.0
  %5828 = vmatpush1.msra.mxu0 0.0
  %5829 = vmatprep.subr.mxu0 0.0
  %5830 = vmatpush1.msra.mxu0 0.0
  %5831 = vmatprep.subr.mxu0 0.0
  %5832 = vmatpush1.msra.mxu0 0.0
  %5833 = vmatprep.subr.mxu0 0.0
  %5834 = vmatpush1.msra.mxu0 0.0
  %5835 = vmatprep.subr.mxu0 0.0
  %5836 = vmatpush1.msra.mxu0 0.0
  %5837 = vmatprep.subr.mxu0 0.0
  %5838 = vmatpush1.msra.mxu0 0.0
  %5839 = vmatprep.subr.mxu0 0.0
  %5840 = vmatpush1.msra.mxu0 0.0
  %5841 = vmatprep.subr.mxu0 0.0
  %5842 = vmatpush1.msra.mxu0 0.0
  %5843 = vmatprep.subr.mxu0 0.0
  %5844 = vmatpush1.msra.mxu0 %v5799
  %5845 = vmatprep.subr.mxu0 0.0
  %5846 = vmatpush1.msra.mxu0 %v5798
  %5847 = vmatprep.subr.mxu0 0.0
  %5848 = vmatpush1.msra.mxu0 %v5797
  %5849 = vmatprep.subr.mxu0 0.0
  %5850 = vmatpush1.msra.mxu0 %v5796
  %5851 = vmatprep.subr.mxu0 0.0
  %5852 = vmatpush2.msra.mxu0 0.0
  %5853 = vmatprep.subr.mxu0 0.0
  %5854 = vmatpush2.msra.mxu0 0.0
  %5855 = vmatprep.subr.mxu0 0.0
  %5856 = vmatpush2.msra.mxu0 0.0
  %5857 = vmatprep.subr.mxu0 0.0
  %5858 = vmatpush2.msra.mxu0 0.0
  %5859 = vmatprep.subr.mxu0 0.0
  %5860 = vmatpush2.msra.mxu0 0.0
  %5861 = vmatprep.subr.mxu0 0.0
  %5862 = vmatpush2.msra.mxu0 0.0
  %5863 = vmatprep.subr.mxu0 0.0
  %5864 = vmatpush2.msra.mxu0 0.0
  %5865 = vmatprep.subr.mxu0 0.0
  %5866 = vmatpush2.msra.mxu0 0.0
  %5867 = vmatprep.subr.mxu0 0.0
  %5868 = vmatpush2.msra.mxu0 0.0
  %5869 = vmatprep.subr.mxu0 0.0
  %5870 = vmatpush2.msra.mxu0 0.0
  %5871 = vmatprep.subr.mxu0 0.0
  %5872 = vmatpush2.msra.mxu0 0.0
  %5873 = vmatprep.subr.mxu0 0.0
  %5874 = vmatpush2.msra.mxu0 0.0
  %5875 = vmatprep.subr.mxu0 0.0
  %5876 = vmatpush2.msra.mxu0 0.0
  %5877 = vmatprep.subr.mxu0 0.0
  %5878 = vmatpush2.msra.mxu0 0.0
  %5879 = vmatprep.subr.mxu0 0.0
  %5880 = vmatpush2.msra.mxu0 0.0
  %5881 = vmatprep.subr.mxu0 0.0
  %5882 = vmatpush2.msra.mxu0 0.0
  %5883 = vmatprep.mubr.f32.mxu0 0.0
  %5884 = vmatmul.mubr.f32.gmra.mxu0 %v5817
  %v5885 = vpop.f32.mrf.mxu0
  %v5886 = vadd.f32 0.0, %v5885
  %v5887 = vpop.f32.mrf.mxu0
  %5888 = vdwg.mxu0
  %v5890 = vsel %vm2026, %v5886, 0
  %v5893 = vsel %vm2026, %v5814, 0
  %5895 = vmatprep.subr.mxu0 0.0
  %5896 = vmatpush1.xpose.msra.mxu0 0.0
  %5897 = vmatprep.subr.mxu0 0.0
  %5898 = vmatpush1.xpose.msra.mxu0 0.0
  %5899 = vmatprep.subr.mxu0 0.0
  %5900 = vmatpush1.xpose.msra.mxu0 0.0
  %5901 = vmatprep.subr.mxu0 0.0
  %5902 = vmatpush1.xpose.msra.mxu0 0.0
  %5903 = vmatprep.subr.mxu0 0.0
  %5904 = vmatpush1.xpose.msra.mxu0 0.0
  %5905 = vmatprep.subr.mxu0 0.0
  %5906 = vmatpush1.xpose.msra.mxu0 0.0
  %5907 = vmatprep.subr.mxu0 0.0
  %5908 = vmatpush1.xpose.msra.mxu0 0.0
  %5909 = vmatprep.subr.mxu0 0.0
  %5910 = vmatpush1.xpose.msra.mxu0 0.0
  %5911 = vmatprep.subr.mxu0 0.0
  %5912 = vmatpush1.xpose.msra.mxu0 0.0
  %5913 = vmatprep.subr.mxu0 0.0
  %5914 = vmatpush1.xpose.msra.mxu0 0.0
  %5915 = vmatprep.subr.mxu0 0.0
  %5916 = vmatpush1.xpose.msra.mxu0 0.0
  %5917 = vmatprep.subr.mxu0 0.0
  %5918 = vmatpush1.xpose.msra.mxu0 0.0
  %5919 = vmatprep.subr.mxu0 0.0
  %5920 = vmatpush1.xpose.msra.mxu0 0.0
  %5921 = vmatprep.subr.mxu0 0.0
  %5922 = vmatpush1.xpose.msra.mxu0 0.0
  %5923 = vmatprep.subr.mxu0 0.0
  %5924 = vmatpush1.xpose.msra.mxu0 0.0
  %5925 = vmatprep.subr.mxu0 0.0
  %5926 = vmatpush1.xpose.msra.mxu0 %v5893
  %5927 = vmatprep.subr.mxu0 0.0
  %5928 = vmatpush2.xpose.msra.mxu0 0.0
  %5929 = vmatprep.subr.mxu0 0.0
  %5930 = vmatpush2.xpose.msra.mxu0 0.0
  %5931 = vmatprep.subr.mxu0 0.0
  %5932 = vmatpush2.xpose.msra.mxu0 0.0
  %5933 = vmatprep.subr.mxu0 0.0
  %5934 = vmatpush2.xpose.msra.mxu0 0.0
  %5935 = vmatprep.subr.mxu0 0.0
  %5936 = vmatpush2.xpose.msra.mxu0 0.0
  %5937 = vmatprep.subr.mxu0 0.0
  %5938 = vmatpush2.xpose.msra.mxu0 0.0
  %5939 = vmatprep.subr.mxu0 0.0
  %5940 = vmatpush2.xpose.msra.mxu0 0.0
  %5941 = vmatprep.subr.mxu0 0.0
  %5942 = vmatpush2.xpose.msra.mxu0 0.0
  %5943 = vmatprep.subr.mxu0 0.0
  %5944 = vmatpush2.xpose.msra.mxu0 0.0
  %5945 = vmatprep.subr.mxu0 0.0
  %5946 = vmatpush2.xpose.msra.mxu0 0.0
  %5947 = vmatprep.subr.mxu0 0.0
  %5948 = vmatpush2.xpose.msra.mxu0 0.0
  %5949 = vmatprep.subr.mxu0 0.0
  %5950 = vmatpush2.xpose.msra.mxu0 0.0
  %5951 = vmatprep.subr.mxu0 0.0
  %5952 = vmatpush2.xpose.msra.mxu0 0.0
  %5953 = vmatprep.subr.mxu0 0.0
  %5954 = vmatpush2.xpose.msra.mxu0 0.0
  %5955 = vmatprep.subr.mxu0 0.0
  %5956 = vmatpush2.xpose.msra.mxu0 0.0
  %5957 = vmatprep.subr.mxu0 0.0
  %5958 = vmatpush2.xpose.msra.mxu0 0.0
  %5959 = vmatprep.mubr.f32.mxu0 0.0
  %5960 = vmatmul.mubr.f32.gmra.mxu0 %v5890
  %v5961 = vpop.f32.mrf.mxu0
  %v5962 = vadd.f32 0.0, %v5961
  %v5963 = vpop.f32.mrf.mxu0
  %5964 = vdwg.mxu0
  %v5965 = vsub.f32 1.0, %v5815
  %v5966 = vmul.f32 %v5965, -1e+30
  %v5968 = vlaneseq
  %v5969 = vshrl.u32 %v5968, 7
  %v5970 = vsub.s32 0, %v5969
  %v5971 = vrot.slane %v5966, %v5970
  %v5973 = vadd.f32 %v5971, %v5962
  %vm5974 = vcmask 63488
  %v5975 = vsel %vm5974, %v5973, -inf
  %5976 = vmax.xlane.f32.xlu0 %v5975
  %v5977 = vpop.xlane.xlu0 %5976
  %v5978 = vsub.f32 %v5973, %v5977
  %v5979 = vmul.f32 %v5978, 1.442695
  %v5980 = vpow.pop %v5979
  %v5981 = vsel %vm5974, %v5980, 0.0
  %5982 = vadd.xlane.f32.xlu0 %v5981
  %v5983 = vpop.xlane.xlu0 %5982
  %v5984 = vrcp.pop %v5983
  %v5985 = vmul.f32 %v5980, %v5984
  %vm5986 = vcmask 64512
  %v5988 = vsel %vm5986, %v5985, 0
  %5990 = vmatprep.subr.mxu0 0.0
  %5991 = vmatpush1.msra.mxu0 0.0
  %5992 = vmatprep.subr.mxu0 0.0
  %5993 = vmatpush1.msra.mxu0 0.0
  %5994 = vmatprep.subr.mxu0 0.0
  %5995 = vmatpush1.msra.mxu0 0.0
  %5996 = vmatprep.subr.mxu0 0.0
  %5997 = vmatpush1.msra.mxu0 0.0
  %5998 = vmatprep.subr.mxu0 0.0
  %5999 = vmatpush1.msra.mxu0 0.0
  %6000 = vmatprep.subr.mxu0 0.0
  %6001 = vmatpush1.msra.mxu0 0.0
  %6002 = vmatprep.subr.mxu0 0.0
  %6003 = vmatpush1.msra.mxu0 0.0
  %6004 = vmatprep.subr.mxu0 0.0
  %6005 = vmatpush1.msra.mxu0 0.0
  %6006 = vmatprep.subr.mxu0 0.0
  %6007 = vmatpush1.msra.mxu0 0.0
  %6008 = vmatprep.subr.mxu0 0.0
  %6009 = vmatpush1.msra.mxu0 0.0
  %6010 = vmatprep.subr.mxu0 0.0
  %6011 = vmatpush1.msra.mxu0 0.0
  %6012 = vmatprep.subr.mxu0 0.0
  %6013 = vmatpush1.msra.mxu0 0.0
  %6014 = vmatprep.subr.mxu0 0.0
  %6015 = vmatpush1.msra.mxu0 0.0
  %6016 = vmatprep.subr.mxu0 0.0
  %6017 = vmatpush1.msra.mxu0 0.0
  %6018 = vmatprep.subr.mxu0 0.0
  %6019 = vmatpush1.msra.mxu0 0.0
  %6020 = vmatprep.subr.mxu0 0.0
  %6021 = vmatpush1.msra.mxu0 %v5814
  %6022 = vmatprep.subr.mxu0 0.0
  %6023 = vmatpush2.msra.mxu0 0.0
  %6024 = vmatprep.subr.mxu0 0.0
  %6025 = vmatpush2.msra.mxu0 0.0
  %6026 = vmatprep.subr.mxu0 0.0
  %6027 = vmatpush2.msra.mxu0 0.0
  %6028 = vmatprep.subr.mxu0 0.0
  %6029 = vmatpush2.msra.mxu0 0.0
  %6030 = vmatprep.subr.mxu0 0.0
  %6031 = vmatpush2.msra.mxu0 0.0
  %6032 = vmatprep.subr.mxu0 0.0
  %6033 = vmatpush2.msra.mxu0 0.0
  %6034 = vmatprep.subr.mxu0 0.0
  %6035 = vmatpush2.msra.mxu0 0.0
  %6036 = vmatprep.subr.mxu0 0.0
  %6037 = vmatpush2.msra.mxu0 0.0
  %6038 = vmatprep.subr.mxu0 0.0
  %6039 = vmatpush2.msra.mxu0 0.0
  %6040 = vmatprep.subr.mxu0 0.0
  %6041 = vmatpush2.msra.mxu0 0.0
  %6042 = vmatprep.subr.mxu0 0.0
  %6043 = vmatpush2.msra.mxu0 0.0
  %6044 = vmatprep.subr.mxu0 0.0
  %6045 = vmatpush2.msra.mxu0 0.0
  %6046 = vmatprep.subr.mxu0 0.0
  %6047 = vmatpush2.msra.mxu0 0.0
  %6048 = vmatprep.subr.mxu0 0.0
  %6049 = vmatpush2.msra.mxu0 0.0
  %6050 = vmatprep.subr.mxu0 0.0
  %6051 = vmatpush2.msra.mxu0 0.0
  %6052 = vmatprep.subr.mxu0 0.0
  %6053 = vmatpush2.msra.mxu0 0.0
  %6054 = vmatprep.mubr.f32.mxu0 0.0
  %6055 = vmatmul.mubr.f32.gmra.mxu0 %v5988
  %v6056 = vpop.f32.mrf.mxu0
  %v6057 = vadd.f32 0.0, %v6056
  %v6058 = vpop.f32.mrf.mxu0
  %6059 = vdwg.mxu0
  %6060 = vrot.lane.b32.xlu0 %v5813, 32
  %v6061 = vpop.permute.xlu0 %6060
  %v6063 = vsel %vm2026, %v6057, %v6061
  %vm6064 = vcmask 523264
  %v6066 = vsel %vm6064, %v6063, 0
  %6068 = vmatprep.subr.mxu0 0.0
  %6069 = vmatpush1.msra.mxu0 0.0
  %6070 = vmatprep.subr.mxu0 0.0
  %6071 = vmatpush1.msra.mxu0 0.0
  %6072 = vmatprep.subr.mxu0 0.0
  %6073 = vmatpush1.msra.mxu0 0.0
  %6074 = vmatprep.subr.mxu0 0.0
  %6075 = vmatpush1.msra.mxu0 0.0
  %6076 = vmatprep.subr.mxu0 0.0
  %6077 = vmatpush1.msra.mxu0 0.0
  %6078 = vmatprep.subr.mxu0 0.0
  %6079 = vmatpush1.msra.mxu0 0.0
  %6080 = vmatprep.subr.mxu0 0.0
  %6081 = vmatpush1.msra.mxu0 0.0
  %6082 = vmatprep.subr.mxu0 0.0
  %6083 = vmatpush1.msra.mxu0 0.0
  %6084 = vmatprep.subr.mxu0 0.0
  %6085 = vmatpush1.msra.mxu0 %v5807
  %6086 = vmatprep.subr.mxu0 0.0
  %6087 = vmatpush1.msra.mxu0 %v5806
  %6088 = vmatprep.subr.mxu0 0.0
  %6089 = vmatpush1.msra.mxu0 %v5805
  %6090 = vmatprep.subr.mxu0 0.0
  %6091 = vmatpush1.msra.mxu0 %v5804
  %6092 = vmatprep.subr.mxu0 0.0
  %6093 = vmatpush1.msra.mxu0 %v5803
  %6094 = vmatprep.subr.mxu0 0.0
  %6095 = vmatpush1.msra.mxu0 %v5802
  %6096 = vmatprep.subr.mxu0 0.0
  %6097 = vmatpush1.msra.mxu0 %v5801
  %6098 = vmatprep.subr.mxu0 0.0
  %6099 = vmatpush1.msra.mxu0 %v5800
  %6100 = vmatprep.subr.mxu0 0.0
  %6101 = vmatpush2.msra.mxu0 0.0
  %6102 = vmatprep.subr.mxu0 0.0
  %6103 = vmatpush2.msra.mxu0 0.0
  %6104 = vmatprep.subr.mxu0 0.0
  %6105 = vmatpush2.msra.mxu0 0.0
  %6106 = vmatprep.subr.mxu0 0.0
  %6107 = vmatpush2.msra.mxu0 0.0
  %6108 = vmatprep.subr.mxu0 0.0
  %6109 = vmatpush2.msra.mxu0 0.0
  %6110 = vmatprep.subr.mxu0 0.0
  %6111 = vmatpush2.msra.mxu0 0.0
  %6112 = vmatprep.subr.mxu0 0.0
  %6113 = vmatpush2.msra.mxu0 0.0
  %6114 = vmatprep.subr.mxu0 0.0
  %6115 = vmatpush2.msra.mxu0 0.0
  %6116 = vmatprep.subr.mxu0 0.0
  %6117 = vmatpush2.msra.mxu0 0.0
  %6118 = vmatprep.subr.mxu0 0.0
  %6119 = vmatpush2.msra.mxu0 0.0
  %6120 = vmatprep.subr.mxu0 0.0
  %6121 = vmatpush2.msra.mxu0 0.0
  %6122 = vmatprep.subr.mxu0 0.0
  %6123 = vmatpush2.msra.mxu0 0.0
  %6124 = vmatprep.subr.mxu0 0.0
  %6125 = vmatpush2.msra.mxu0 0.0
  %6126 = vmatprep.subr.mxu0 0.0
  %6127 = vmatpush2.msra.mxu0 0.0
  %6128 = vmatprep.subr.mxu0 0.0
  %6129 = vmatpush2.msra.mxu0 0.0
  %6130 = vmatprep.subr.mxu0 0.0
  %6131 = vmatpush2.msra.mxu0 0.0
  %6132 = vmatprep.mubr.f32.mxu0 0.0
  %6133 = vmatmul.mubr.f32.gmra.mxu0 %v6066
  %v6134 = vpop.f32.mrf.mxu0
  %v6135 = vadd.f32 0.0, %v6134
  %v6136 = vpop.f32.mrf.mxu0
  %6137 = vdwg.mxu0
  %v6138 = vtanh.pop %v6135
  %v6140 = vlaneseq
  %v6141 = vshrl.u32 %v6140, 7
  %v6142 = vsub.s32 0, %v6141
  %v6143 = vrot.slane %v5812, %v6142
  %v6146 = vsel %vm2026, %v6138, 0
  %6148 = vmatprep.subr.mxu0 0.0
  %6149 = vmatpush1.msra.mxu0 0.0
  %6150 = vmatprep.subr.mxu0 0.0
  %6151 = vmatpush1.msra.mxu0 0.0
  %6152 = vmatprep.subr.mxu0 0.0
  %6153 = vmatpush1.msra.mxu0 0.0
  %6154 = vmatprep.subr.mxu0 0.0
  %6155 = vmatpush1.msra.mxu0 0.0
  %6156 = vmatprep.subr.mxu0 0.0
  %6157 = vmatpush1.msra.mxu0 0.0
  %6158 = vmatprep.subr.mxu0 0.0
  %6159 = vmatpush1.msra.mxu0 0.0
  %6160 = vmatprep.subr.mxu0 0.0
  %6161 = vmatpush1.msra.mxu0 0.0
  %6162 = vmatprep.subr.mxu0 0.0
  %6163 = vmatpush1.msra.mxu0 0.0
  %6164 = vmatprep.subr.mxu0 0.0
  %6165 = vmatpush1.msra.mxu0 0.0
  %6166 = vmatprep.subr.mxu0 0.0
  %6167 = vmatpush1.msra.mxu0 0.0
  %6168 = vmatprep.subr.mxu0 0.0
  %6169 = vmatpush1.msra.mxu0 0.0
  %6170 = vmatprep.subr.mxu0 0.0
  %6171 = vmatpush1.msra.mxu0 0.0
  %6172 = vmatprep.subr.mxu0 0.0
  %6173 = vmatpush1.msra.mxu0 %v5811
  %6174 = vmatprep.subr.mxu0 0.0
  %6175 = vmatpush1.msra.mxu0 %v5810
  %6176 = vmatprep.subr.mxu0 0.0
  %6177 = vmatpush1.msra.mxu0 %v5809
  %6178 = vmatprep.subr.mxu0 0.0
  %6179 = vmatpush1.msra.mxu0 %v5808
  %6180 = vmatprep.subr.mxu0 0.0
  %6181 = vmatpush2.msra.mxu0 0.0
  %6182 = vmatprep.subr.mxu0 0.0
  %6183 = vmatpush2.msra.mxu0 0.0
  %6184 = vmatprep.subr.mxu0 0.0
  %6185 = vmatpush2.msra.mxu0 0.0
  %6186 = vmatprep.subr.mxu0 0.0
  %6187 = vmatpush2.msra.mxu0 0.0
  %6188 = vmatprep.subr.mxu0 0.0
  %6189 = vmatpush2.msra.mxu0 0.0
  %6190 = vmatprep.subr.mxu0 0.0
  %6191 = vmatpush2.msra.mxu0 0.0
  %6192 = vmatprep.subr.mxu0 0.0
  %6193 = vmatpush2.msra.mxu0 0.0
  %6194 = vmatprep.subr.mxu0 0.0
  %6195 = vmatpush2.msra.mxu0 0.0
  %6196 = vmatprep.subr.mxu0 0.0
  %6197 = vmatpush2.msra.mxu0 0.0
  %6198 = vmatprep.subr.mxu0 0.0
  %6199 = vmatpush2.msra.mxu0 0.0
  %6200 = vmatprep.subr.mxu0 0.0
  %6201 = vmatpush2.msra.mxu0 0.0
  %6202 = vmatprep.subr.mxu0 0.0
  %6203 = vmatpush2.msra.mxu0 0.0
  %6204 = vmatprep.subr.mxu0 0.0
  %6205 = vmatpush2.msra.mxu0 0.0
  %6206 = vmatprep.subr.mxu0 0.0
  %6207 = vmatpush2.msra.mxu0 0.0
  %6208 = vmatprep.subr.mxu0 0.0
  %6209 = vmatpush2.msra.mxu0 0.0
  %6210 = vmatprep.subr.mxu0 0.0
  %6211 = vmatpush2.msra.mxu0 0.0
  %6212 = vmatprep.mubr.f32.mxu0 0.0
  %6213 = vmatmul.mubr.f32.gmra.mxu0 %v6146
  %v6214 = vpop.f32.mrf.mxu0
  %v6215 = vadd.f32 %v6143, %v6214
  %v6216 = vpop.f32.mrf.mxu0
  %6217 = vdwg.mxu0
  %6218 = vst [vmem:[%s24] sm:$0x7f] %v6215
  %s6219 = scalar_lea.vmem [#allocation4], 8
  %v6220 = vld [vmem:[%s6219] sm:$0x7f]
  %s6221 = scalar_lea.vmem [#allocation3], 8
  %v6222 = vld [vmem:[%s6221] sm:$0xff]
  %s6223 = scalar_lea.vmem %s2, 1
  %v6224 = vld [vmem:[%s6223] sm:$0x1]
  %v6226 = vsel %vm2026, %v6220, 0
  %6228 = vmatprep.subr.mxu0 0.0
  %6229 = vmatpush1.msra.mxu0 0.0
  %6230 = vmatprep.subr.mxu0 0.0
  %6231 = vmatpush1.msra.mxu0 0.0
  %6232 = vmatprep.subr.mxu0 0.0
  %6233 = vmatpush1.msra.mxu0 0.0
  %6234 = vmatprep.subr.mxu0 0.0
  %6235 = vmatpush1.msra.mxu0 0.0
  %6236 = vmatprep.subr.mxu0 0.0
  %6237 = vmatpush1.msra.mxu0 0.0
  %6238 = vmatprep.subr.mxu0 0.0
  %6239 = vmatpush1.msra.mxu0 0.0
  %6240 = vmatprep.subr.mxu0 0.0
  %6241 = vmatpush1.msra.mxu0 0.0
  %6242 = vmatprep.subr.mxu0 0.0
  %6243 = vmatpush1.msra.mxu0 0.0
  %6244 = vmatprep.subr.mxu0 0.0
  %6245 = vmatpush1.msra.mxu0 0.0
  %6246 = vmatprep.subr.mxu0 0.0
  %6247 = vmatpush1.msra.mxu0 0.0
  %6248 = vmatprep.subr.mxu0 0.0
  %6249 = vmatpush1.msra.mxu0 0.0
  %6250 = vmatprep.subr.mxu0 0.0
  %6251 = vmatpush1.msra.mxu0 0.0
  %6252 = vmatprep.subr.mxu0 0.0
  %6253 = vmatpush1.msra.mxu0 %v5799
  %6254 = vmatprep.subr.mxu0 0.0
  %6255 = vmatpush1.msra.mxu0 %v5798
  %6256 = vmatprep.subr.mxu0 0.0
  %6257 = vmatpush1.msra.mxu0 %v5797
  %6258 = vmatprep.subr.mxu0 0.0
  %6259 = vmatpush1.msra.mxu0 %v5796
  %6260 = vmatprep.subr.mxu0 0.0
  %6261 = vmatpush2.msra.mxu0 0.0
  %6262 = vmatprep.subr.mxu0 0.0
  %6263 = vmatpush2.msra.mxu0 0.0
  %6264 = vmatprep.subr.mxu0 0.0
  %6265 = vmatpush2.msra.mxu0 0.0
  %6266 = vmatprep.subr.mxu0 0.0
  %6267 = vmatpush2.msra.mxu0 0.0
  %6268 = vmatprep.subr.mxu0 0.0
  %6269 = vmatpush2.msra.mxu0 0.0
  %6270 = vmatprep.subr.mxu0 0.0
  %6271 = vmatpush2.msra.mxu0 0.0
  %6272 = vmatprep.subr.mxu0 0.0
  %6273 = vmatpush2.msra.mxu0 0.0
  %6274 = vmatprep.subr.mxu0 0.0
  %6275 = vmatpush2.msra.mxu0 0.0
  %6276 = vmatprep.subr.mxu0 0.0
  %6277 = vmatpush2.msra.mxu0 0.0
  %6278 = vmatprep.subr.mxu0 0.0
  %6279 = vmatpush2.msra.mxu0 0.0
  %6280 = vmatprep.subr.mxu0 0.0
  %6281 = vmatpush2.msra.mxu0 0.0
  %6282 = vmatprep.subr.mxu0 0.0
  %6283 = vmatpush2.msra.mxu0 0.0
  %6284 = vmatprep.subr.mxu0 0.0
  %6285 = vmatpush2.msra.mxu0 0.0
  %6286 = vmatprep.subr.mxu0 0.0
  %6287 = vmatpush2.msra.mxu0 0.0
  %6288 = vmatprep.subr.mxu0 0.0
  %6289 = vmatpush2.msra.mxu0 0.0
  %6290 = vmatprep.subr.mxu0 0.0
  %6291 = vmatpush2.msra.mxu0 0.0
  %6292 = vmatprep.mubr.f32.mxu0 0.0
  %6293 = vmatmul.mubr.f32.gmra.mxu0 %v6226
  %v6294 = vpop.f32.mrf.mxu0
  %v6295 = vadd.f32 0.0, %v6294
  %v6296 = vpop.f32.mrf.mxu0
  %6297 = vdwg.mxu0
  %v6299 = vsel %vm2026, %v6295, 0
  %v6302 = vsel %vm2026, %v6222, 0
  %6304 = vmatprep.subr.mxu0 0.0
  %6305 = vmatpush1.xpose.msra.mxu0 0.0
  %6306 = vmatprep.subr.mxu0 0.0
  %6307 = vmatpush1.xpose.msra.mxu0 0.0
  %6308 = vmatprep.subr.mxu0 0.0
  %6309 = vmatpush1.xpose.msra.mxu0 0.0
  %6310 = vmatprep.subr.mxu0 0.0
  %6311 = vmatpush1.xpose.msra.mxu0 0.0
  %6312 = vmatprep.subr.mxu0 0.0
  %6313 = vmatpush1.xpose.msra.mxu0 0.0
  %6314 = vmatprep.subr.mxu0 0.0
  %6315 = vmatpush1.xpose.msra.mxu0 0.0
  %6316 = vmatprep.subr.mxu0 0.0
  %6317 = vmatpush1.xpose.msra.mxu0 0.0
  %6318 = vmatprep.subr.mxu0 0.0
  %6319 = vmatpush1.xpose.msra.mxu0 0.0
  %6320 = vmatprep.subr.mxu0 0.0
  %6321 = vmatpush1.xpose.msra.mxu0 0.0
  %6322 = vmatprep.subr.mxu0 0.0
  %6323 = vmatpush1.xpose.msra.mxu0 0.0
  %6324 = vmatprep.subr.mxu0 0.0
  %6325 = vmatpush1.xpose.msra.mxu0 0.0
  %6326 = vmatprep.subr.mxu0 0.0
  %6327 = vmatpush1.xpose.msra.mxu0 0.0
  %6328 = vmatprep.subr.mxu0 0.0
  %6329 = vmatpush1.xpose.msra.mxu0 0.0
  %6330 = vmatprep.subr.mxu0 0.0
  %6331 = vmatpush1.xpose.msra.mxu0 0.0
  %6332 = vmatprep.subr.mxu0 0.0
  %6333 = vmatpush1.xpose.msra.mxu0 0.0
  %6334 = vmatprep.subr.mxu0 0.0
  %6335 = vmatpush1.xpose.msra.mxu0 %v6302
  %6336 = vmatprep.subr.mxu0 0.0
  %6337 = vmatpush2.xpose.msra.mxu0 0.0
  %6338 = vmatprep.subr.mxu0 0.0
  %6339 = vmatpush2.xpose.msra.mxu0 0.0
  %6340 = vmatprep.subr.mxu0 0.0
  %6341 = vmatpush2.xpose.msra.mxu0 0.0
  %6342 = vmatprep.subr.mxu0 0.0
  %6343 = vmatpush2.xpose.msra.mxu0 0.0
  %6344 = vmatprep.subr.mxu0 0.0
  %6345 = vmatpush2.xpose.msra.mxu0 0.0
  %6346 = vmatprep.subr.mxu0 0.0
  %6347 = vmatpush2.xpose.msra.mxu0 0.0
  %6348 = vmatprep.subr.mxu0 0.0
  %6349 = vmatpush2.xpose.msra.mxu0 0.0
  %6350 = vmatprep.subr.mxu0 0.0
  %6351 = vmatpush2.xpose.msra.mxu0 0.0
  %6352 = vmatprep.subr.mxu0 0.0
  %6353 = vmatpush2.xpose.msra.mxu0 0.0
  %6354 = vmatprep.subr.mxu0 0.0
  %6355 = vmatpush2.xpose.msra.mxu0 0.0
  %6356 = vmatprep.subr.mxu0 0.0
  %6357 = vmatpush2.xpose.msra.mxu0 0.0
  %6358 = vmatprep.subr.mxu0 0.0
  %6359 = vmatpush2.xpose.msra.mxu0 0.0
  %6360 = vmatprep.subr.mxu0 0.0
  %6361 = vmatpush2.xpose.msra.mxu0 0.0
  %6362 = vmatprep.subr.mxu0 0.0
  %6363 = vmatpush2.xpose.msra.mxu0 0.0
  %6364 = vmatprep.subr.mxu0 0.0
  %6365 = vmatpush2.xpose.msra.mxu0 0.0
  %6366 = vmatprep.subr.mxu0 0.0
  %6367 = vmatpush2.xpose.msra.mxu0 0.0
  %6368 = vmatprep.mubr.f32.mxu0 0.0
  %6369 = vmatmul.mubr.f32.gmra.mxu0 %v6299
  %v6370 = vpop.f32.mrf.mxu0
  %v6371 = vadd.f32 0.0, %v6370
  %v6372 = vpop.f32.mrf.mxu0
  %6373 = vdwg.mxu0
  %v6374 = vsub.f32 1.0, %v6224
  %v6375 = vmul.f32 %v6374, -1e+30
  %v6377 = vlaneseq
  %v6378 = vshrl.u32 %v6377, 7
  %v6379 = vsub.s32 0, %v6378
  %v6380 = vrot.slane %v6375, %v6379
  %v6382 = vadd.f32 %v6380, %v6371
  %v6383 = vsel %vm5974, %v6382, -inf
  %6384 = vmax.xlane.f32.xlu0 %v6383
  %v6385 = vpop.xlane.xlu0 %6384
  %v6386 = vsub.f32 %v6382, %v6385
  %v6387 = vmul.f32 %v6386, 1.442695
  %v6388 = vpow.pop %v6387
  %v6389 = vsel %vm5974, %v6388, 0.0
  %6390 = vadd.xlane.f32.xlu0 %v6389
  %v6391 = vpop.xlane.xlu0 %6390
  %v6392 = vrcp.pop %v6391
  %v6393 = vmul.f32 %v6388, %v6392
  %v6395 = vsel %vm5986, %v6393, 0
  %6397 = vmatprep.subr.mxu0 0.0
  %6398 = vmatpush1.msra.mxu0 0.0
  %6399 = vmatprep.subr.mxu0 0.0
  %6400 = vmatpush1.msra.mxu0 0.0
  %6401 = vmatprep.subr.mxu0 0.0
  %6402 = vmatpush1.msra.mxu0 0.0
  %6403 = vmatprep.subr.mxu0 0.0
  %6404 = vmatpush1.msra.mxu0 0.0
  %6405 = vmatprep.subr.mxu0 0.0
  %6406 = vmatpush1.msra.mxu0 0.0
  %6407 = vmatprep.subr.mxu0 0.0
  %6408 = vmatpush1.msra.mxu0 0.0
  %6409 = vmatprep.subr.mxu0 0.0
  %6410 = vmatpush1.msra.mxu0 0.0
  %6411 = vmatprep.subr.mxu0 0.0
  %6412 = vmatpush1.msra.mxu0 0.0
  %6413 = vmatprep.subr.mxu0 0.0
  %6414 = vmatpush1.msra.mxu0 0.0
  %6415 = vmatprep.subr.mxu0 0.0
  %6416 = vmatpush1.msra.mxu0 0.0
  %6417 = vmatprep.subr.mxu0 0.0
  %6418 = vmatpush1.msra.mxu0 0.0
  %6419 = vmatprep.subr.mxu0 0.0
  %6420 = vmatpush1.msra.mxu0 0.0
  %6421 = vmatprep.subr.mxu0 0.0
  %6422 = vmatpush1.msra.mxu0 0.0
  %6423 = vmatprep.subr.mxu0 0.0
  %6424 = vmatpush1.msra.mxu0 0.0
  %6425 = vmatprep.subr.mxu0 0.0
  %6426 = vmatpush1.msra.mxu0 0.0
  %6427 = vmatprep.subr.mxu0 0.0
  %6428 = vmatpush1.msra.mxu0 %v6222
  %6429 = vmatprep.subr.mxu0 0.0
  %6430 = vmatpush2.msra.mxu0 0.0
  %6431 = vmatprep.subr.mxu0 0.0
  %6432 = vmatpush2.msra.mxu0 0.0
  %6433 = vmatprep.subr.mxu0 0.0
  %6434 = vmatpush2.msra.mxu0 0.0
  %6435 = vmatprep.subr.mxu0 0.0
  %6436 = vmatpush2.msra.mxu0 0.0
  %6437 = vmatprep.subr.mxu0 0.0
  %6438 = vmatpush2.msra.mxu0 0.0
  %6439 = vmatprep.subr.mxu0 0.0
  %6440 = vmatpush2.msra.mxu0 0.0
  %6441 = vmatprep.subr.mxu0 0.0
  %6442 = vmatpush2.msra.mxu0 0.0
  %6443 = vmatprep.subr.mxu0 0.0
  %6444 = vmatpush2.msra.mxu0 0.0
  %6445 = vmatprep.subr.mxu0 0.0
  %6446 = vmatpush2.msra.mxu0 0.0
  %6447 = vmatprep.subr.mxu0 0.0
  %6448 = vmatpush2.msra.mxu0 0.0
  %6449 = vmatprep.subr.mxu0 0.0
  %6450 = vmatpush2.msra.mxu0 0.0
  %6451 = vmatprep.subr.mxu0 0.0
  %6452 = vmatpush2.msra.mxu0 0.0
  %6453 = vmatprep.subr.mxu0 0.0
  %6454 = vmatpush2.msra.mxu0 0.0
  %6455 = vmatprep.subr.mxu0 0.0
  %6456 = vmatpush2.msra.mxu0 0.0
  %6457 = vmatprep.subr.mxu0 0.0
  %6458 = vmatpush2.msra.mxu0 0.0
  %6459 = vmatprep.subr.mxu0 0.0
  %6460 = vmatpush2.msra.mxu0 0.0
  %6461 = vmatprep.mubr.f32.mxu0 0.0
  %6462 = vmatmul.mubr.f32.gmra.mxu0 %v6395
  %v6463 = vpop.f32.mrf.mxu0
  %v6464 = vadd.f32 0.0, %v6463
  %v6465 = vpop.f32.mrf.mxu0
  %6466 = vdwg.mxu0
  %6467 = vrot.lane.b32.xlu0 %v6220, 32
  %v6468 = vpop.permute.xlu0 %6467
  %v6470 = vsel %vm2026, %v6464, %v6468
  %v6472 = vsel %vm6064, %v6470, 0
  %6474 = vmatprep.subr.mxu0 0.0
  %6475 = vmatpush1.msra.mxu0 0.0
  %6476 = vmatprep.subr.mxu0 0.0
  %6477 = vmatpush1.msra.mxu0 0.0
  %6478 = vmatprep.subr.mxu0 0.0
  %6479 = vmatpush1.msra.mxu0 0.0
  %6480 = vmatprep.subr.mxu0 0.0
  %6481 = vmatpush1.msra.mxu0 0.0
  %6482 = vmatprep.subr.mxu0 0.0
  %6483 = vmatpush1.msra.mxu0 0.0
  %6484 = vmatprep.subr.mxu0 0.0
  %6485 = vmatpush1.msra.mxu0 0.0
  %6486 = vmatprep.subr.mxu0 0.0
  %6487 = vmatpush1.msra.mxu0 0.0
  %6488 = vmatprep.subr.mxu0 0.0
  %6489 = vmatpush1.msra.mxu0 0.0
  %6490 = vmatprep.subr.mxu0 0.0
  %6491 = vmatpush1.msra.mxu0 %v5807
  %6492 = vmatprep.subr.mxu0 0.0
  %6493 = vmatpush1.msra.mxu0 %v5806
  %6494 = vmatprep.subr.mxu0 0.0
  %6495 = vmatpush1.msra.mxu0 %v5805
  %6496 = vmatprep.subr.mxu0 0.0
  %6497 = vmatpush1.msra.mxu0 %v5804
  %6498 = vmatprep.subr.mxu0 0.0
  %6499 = vmatpush1.msra.mxu0 %v5803
  %6500 = vmatprep.subr.mxu0 0.0
  %6501 = vmatpush1.msra.mxu0 %v5802
  %6502 = vmatprep.subr.mxu0 0.0
  %6503 = vmatpush1.msra.mxu0 %v5801
  %6504 = vmatprep.subr.mxu0 0.0
  %6505 = vmatpush1.msra.mxu0 %v5800
  %6506 = vmatprep.subr.mxu0 0.0
  %6507 = vmatpush2.msra.mxu0 0.0
  %6508 = vmatprep.subr.mxu0 0.0
  %6509 = vmatpush2.msra.mxu0 0.0
  %6510 = vmatprep.subr.mxu0 0.0
  %6511 = vmatpush2.msra.mxu0 0.0
  %6512 = vmatprep.subr.mxu0 0.0
  %6513 = vmatpush2.msra.mxu0 0.0
  %6514 = vmatprep.subr.mxu0 0.0
  %6515 = vmatpush2.msra.mxu0 0.0
  %6516 = vmatprep.subr.mxu0 0.0
  %6517 = vmatpush2.msra.mxu0 0.0
  %6518 = vmatprep.subr.mxu0 0.0
  %6519 = vmatpush2.msra.mxu0 0.0
  %6520 = vmatprep.subr.mxu0 0.0
  %6521 = vmatpush2.msra.mxu0 0.0
  %6522 = vmatprep.subr.mxu0 0.0
  %6523 = vmatpush2.msra.mxu0 0.0
  %6524 = vmatprep.subr.mxu0 0.0
  %6525 = vmatpush2.msra.mxu0 0.0
  %6526 = vmatprep.subr.mxu0 0.0
  %6527 = vmatpush2.msra.mxu0 0.0
  %6528 = vmatprep.subr.mxu0 0.0
  %6529 = vmatpush2.msra.mxu0 0.0
  %6530 = vmatprep.subr.mxu0 0.0
  %6531 = vmatpush2.msra.mxu0 0.0
  %6532 = vmatprep.subr.mxu0 0.0
  %6533 = vmatpush2.msra.mxu0 0.0
  %6534 = vmatprep.subr.mxu0 0.0
  %6535 = vmatpush2.msra.mxu0 0.0
  %6536 = vmatprep.subr.mxu0 0.0
  %6537 = vmatpush2.msra.mxu0 0.0
  %6538 = vmatprep.mubr.f32.mxu0 0.0
  %6539 = vmatmul.mubr.f32.gmra.mxu0 %v6472
  %v6540 = vpop.f32.mrf.mxu0
  %v6541 = vadd.f32 0.0, %v6540
  %v6542 = vpop.f32.mrf.mxu0
  %6543 = vdwg.mxu0
  %v6544 = vtanh.pop %v6541
  %v6546 = vsel %vm2026, %v6544, 0
  %6548 = vmatprep.subr.mxu0 0.0
  %6549 = vmatpush1.msra.mxu0 0.0
  %6550 = vmatprep.subr.mxu0 0.0
  %6551 = vmatpush1.msra.mxu0 0.0
  %6552 = vmatprep.subr.mxu0 0.0
  %6553 = vmatpush1.msra.mxu0 0.0
  %6554 = vmatprep.subr.mxu0 0.0
  %6555 = vmatpush1.msra.mxu0 0.0
  %6556 = vmatprep.subr.mxu0 0.0
  %6557 = vmatpush1.msra.mxu0 0.0
  %6558 = vmatprep.subr.mxu0 0.0
  %6559 = vmatpush1.msra.mxu0 0.0
  %6560 = vmatprep.subr.mxu0 0.0
  %6561 = vmatpush1.msra.mxu0 0.0
  %6562 = vmatprep.subr.mxu0 0.0
  %6563 = vmatpush1.msra.mxu0 0.0
  %6564 = vmatprep.subr.mxu0 0.0
  %6565 = vmatpush1.msra.mxu0 0.0
  %6566 = vmatprep.subr.mxu0 0.0
  %6567 = vmatpush1.msra.mxu0 0.0
  %6568 = vmatprep.subr.mxu0 0.0
  %6569 = vmatpush1.msra.mxu0 0.0
  %6570 = vmatprep.subr.mxu0 0.0
  %6571 = vmatpush1.msra.mxu0 0.0
  %6572 = vmatprep.subr.mxu0 0.0
  %6573 = vmatpush1.msra.mxu0 %v5811
  %6574 = vmatprep.subr.mxu0 0.0
  %6575 = vmatpush1.msra.mxu0 %v5810
  %6576 = vmatprep.subr.mxu0 0.0
  %6577 = vmatpush1.msra.mxu0 %v5809
  %6578 = vmatprep.subr.mxu0 0.0
  %6579 = vmatpush1.msra.mxu0 %v5808
  %6580 = vmatprep.subr.mxu0 0.0
  %6581 = vmatpush2.msra.mxu0 0.0
  %6582 = vmatprep.subr.mxu0 0.0
  %6583 = vmatpush2.msra.mxu0 0.0
  %6584 = vmatprep.subr.mxu0 0.0
  %6585 = vmatpush2.msra.mxu0 0.0
  %6586 = vmatprep.subr.mxu0 0.0
  %6587 = vmatpush2.msra.mxu0 0.0
  %6588 = vmatprep.subr.mxu0 0.0
  %6589 = vmatpush2.msra.mxu0 0.0
  %6590 = vmatprep.subr.mxu0 0.0
  %6591 = vmatpush2.msra.mxu0 0.0
  %6592 = vmatprep.subr.mxu0 0.0
  %6593 = vmatpush2.msra.mxu0 0.0
  %6594 = vmatprep.subr.mxu0 0.0
  %6595 = vmatpush2.msra.mxu0 0.0
  %6596 = vmatprep.subr.mxu0 0.0
  %6597 = vmatpush2.msra.mxu0 0.0
  %6598 = vmatprep.subr.mxu0 0.0
  %6599 = vmatpush2.msra.mxu0 0.0
  %6600 = vmatprep.subr.mxu0 0.0
  %6601 = vmatpush2.msra.mxu0 0.0
  %6602 = vmatprep.subr.mxu0 0.0
  %6603 = vmatpush2.msra.mxu0 0.0
  %6604 = vmatprep.subr.mxu0 0.0
  %6605 = vmatpush2.msra.mxu0 0.0
  %6606 = vmatprep.subr.mxu0 0.0
  %6607 = vmatpush2.msra.mxu0 0.0
  %6608 = vmatprep.subr.mxu0 0.0
  %6609 = vmatpush2.msra.mxu0 0.0
  %6610 = vmatprep.subr.mxu0 0.0
  %6611 = vmatpush2.msra.mxu0 0.0
  %6612 = vmatprep.mubr.f32.mxu0 0.0
  %6613 = vmatmul.mubr.f32.gmra.mxu0 %v6546
  %v6614 = vpop.f32.mrf.mxu0
  %v6615 = vadd.f32 %v6143, %v6614
  %v6616 = vpop.f32.mrf.mxu0
  %6617 = vdwg.mxu0
  %s6618 = scalar_lea.vmem %s24, 8
  %6619 = vst [vmem:[%s6618] sm:$0x7f] %v6615
  // Predicated region
  $region98: #{forward.1} parent=0 // pred_check
    _
  $region99: #{forward.1} parent=0 // pred_check_branch
    %6621 = sbr.rel (0) target = $region101
  $region100: #{forward.1} parent=0 // pred_region
    _
  $region101: #{forward.1} parent=0 // pred_fallthru
    _
  // Predicated region
  $region102: #{forward.1} parent=0 // pred_check
    _
  $region103: #{forward.1} parent=0 // pred_check_branch
    %6623 = sbr.rel (0) target = $region105
  $region104: #{forward.1} parent=0 // pred_region
    _
  $region105: #{forward.1} parent=0 // pred_fallthru
    _

</llo_original>
